<compile_context>
chip_gen: v5e
topology: v5e:2x2
jax: 0.10.0
libtpu: 0.0.40
codegen_flags: <defaults>
</compile_context>

<pallas_src>
import functools

import jax
import jax.numpy as jnp
from jax.experimental import pallas as pl
from jax.experimental.pallas import tpu as pltpu


# ----------------------------------------------------------------------------
# Helpers
# ----------------------------------------------------------------------------
def _round_up(x, m):
    return ((x + m - 1) // m) * m


# ----------------------------------------------------------------------------
# Pallas kernels
# ----------------------------------------------------------------------------
def _matmul_bias_kernel(a_ref, b_ref, bias_ref, o_ref, acc_ref):
    # Tiled A @ B + bias on the MXU.  A/B tiles are bf16, accumulation in an
    # f32 VMEM scratch that lives across the K grid axis.
    @pl.when(pl.program_id(2) == 0)
    def _init():
        acc_ref[...] = jnp.zeros_like(acc_ref)

    acc_ref[...] += jnp.dot(a_ref[...], b_ref[...],
                            preferred_element_type=jnp.float32)

    @pl.when(pl.program_id(2) == pl.num_programs(2) - 1)
    def _finalize():
        o_ref[...] = (acc_ref[...] + bias_ref[...]).astype(o_ref.dtype)


def _in_act_kernel(x_ref, o_ref, *, eps, act):
    # InstanceNorm2d (affine=False, biased variance) + optional activation.
    # Block layout: (1, H*W, C_blk); reduction over the spatial axis (axis=1).
    x = x_ref[...].astype(jnp.float32)
    mean = jnp.mean(x, axis=1, keepdims=True)
    var = jnp.mean((x - mean) ** 2, axis=1, keepdims=True)
    y = (x - mean) * jax.lax.rsqrt(var + eps)
    if act == "relu":
        y = jnp.maximum(y, 0.0)
    elif act == "tanh":
        y = jnp.tanh(y)
    o_ref[...] = y.astype(o_ref.dtype)


def _in_add_relu_kernel(x_ref, r_ref, o_ref, *, eps):
    # InstanceNorm(x) + residual, then ReLU (fused tail of the Residual block).
    x = x_ref[...].astype(jnp.float32)
    mean = jnp.mean(x, axis=1, keepdims=True)
    var = jnp.mean((x - mean) ** 2, axis=1, keepdims=True)
    y = (x - mean) * jax.lax.rsqrt(var + eps) + r_ref[...].astype(jnp.float32)
    o_ref[...] = jnp.maximum(y, 0.0).astype(o_ref.dtype)


# ----------------------------------------------------------------------------
# Pallas wrappers
# ----------------------------------------------------------------------------
def _matmul_bias(a, b, bias):
    """(M,K)bf16 @ (K,N)bf16 + bias(N,)f32 -> (M,N)f32, tiled/pipelined."""
    m, k = a.shape
    kb, n = b.shape
    assert k == kb

    # Tile sizes (clamped to the problem size; multiples of (8,128)).
    tm = min(256, _round_up(m, 8))
    tn = min(256, _round_up(n, 128))
    tk = min(512, _round_up(k, 128))
    mp, kp, np_ = _round_up(m, tm), _round_up(k, tk), _round_up(n, tn)

    ap = jnp.pad(a, ((0, mp - m), (0, kp - k)))
    bp = jnp.pad(b, ((0, kp - k), (0, np_ - n)))
    biasp = jnp.pad(bias.reshape(1, -1), ((0, 0), (0, np_ - n)))

    out = pl.pallas_call(
        _matmul_bias_kernel,
        out_shape=jax.ShapeDtypeStruct((mp, np_), jnp.float32),
        grid=(mp // tm, np_ // tn, kp // tk),
        in_specs=[
            pl.BlockSpec((tm, tk), lambda i, j, kk: (i, kk)),
            pl.BlockSpec((tk, tn), lambda i, j, kk: (kk, j)),
            pl.BlockSpec((1, tn), lambda i, j, kk: (0, j)),
        ],
        out_specs=pl.BlockSpec((tm, tn), lambda i, j, kk: (i, j)),
        scratch_shapes=[pltpu.VMEM((tm, tn), jnp.float32)],
        compiler_params=pltpu.CompilerParams(
            dimension_semantics=("parallel", "parallel", "arbitrary"),
            vmem_limit_bytes=48 * 1024 * 1024,
        ),
    )(ap, bp, biasp)
    return out[:m, :n]


def conv2d(xp, wmat, bias, k, stride=1):
    """Conv on an already-padded NHWC input.

    xp:   (N, Hp, Wp, Cin) float32 (padding done by the caller)
    wmat: (k*k*Cin, Cout)  bf16, rows ordered (ki, kj, cin) -- precomputed.
    Returns (N, Ho, Wo, Cout) float32.
    """
    n, hp, wp, c = xp.shape
    ho = (hp - k) // stride + 1
    wo = (wp - k) // stride + 1
    xb = xp.astype(jnp.bfloat16)
    # im2col in NHWC: no transpose needed, column order = (ki, kj, cin).
    cols = [xb[:, i:i + stride * ho:stride, j:j + stride * wo:stride, :]
            for i in range(k) for j in range(k)]
    a = jnp.stack(cols, axis=3).reshape(n * ho * wo, k * k * c)
    cout = wmat.shape[1]
    out = _matmul_bias(a, wmat, bias)              # (N*Ho*Wo, Cout) f32
    return out.reshape(n, ho, wo, cout)


def conv_transpose2d(x, wmat, bias, k=3):
    """ConvTranspose2d(k=3, stride=2, padding=1, output_padding=0) in NHWC.

    Rewritten as: dilate-by-2, zero-pad by (k-1-p)=1, stride-1 conv with the
    flipped / channel-swapped weight (weight already converted at init).
    """
    n, h, w, c = x.shape
    xd = jnp.zeros((n, 2 * h - 1, 2 * w - 1, c), x.dtype)
    xd = xd.at[:, ::2, ::2, :].set(x)
    xp = jnp.pad(xd, ((0, 0), (1, 1), (1, 1), (0, 0)))
    return conv2d(xp, wmat, bias, k=k, stride=1)


def _channel_tile(c):
    return 128 if (c % 128 == 0 and c >= 128) else c


def instnorm_act(x, act="none", eps=1e-5):
    """InstanceNorm2d(affine=False) + activation on an NHWC tensor."""
    n, h, w, c = x.shape
    hw = h * w
    xf = x.reshape(n, hw, c)
    tc = _channel_tile(c)
    out = pl.pallas_call(
        functools.partial(_in_act_kernel, eps=eps, act=act),
        out_shape=jax.ShapeDtypeStruct((n, hw, c), jnp.float32),
        grid=(n, c // tc),
        in_specs=[pl.BlockSpec((1, hw, tc), lambda i, j: (i, 0, j))],
        out_specs=pl.BlockSpec((1, hw, tc), lambda i, j: (i, 0, j)),
        compiler_params=pltpu.CompilerParams(
            dimension_semantics=("parallel", "parallel")),
    )(xf)
    return out.reshape(n, h, w, c)


def instnorm_add_relu(x, residual, eps=1e-5):
    """Fused InstanceNorm(x) + residual + ReLU on NHWC tensors."""
    n, h, w, c = x.shape
    hw = h * w
    xf = x.reshape(n, hw, c)
    rf = residual.reshape(n, hw, c)
    tc = _channel_tile(c)
    out = pl.pallas_call(
        functools.partial(_in_add_relu_kernel, eps=eps),
        out_shape=jax.ShapeDtypeStruct((n, hw, c), jnp.float32),
        grid=(n, c // tc),
        in_specs=[
            pl.BlockSpec((1, hw, tc), lambda i, j: (i, 0, j)),
            pl.BlockSpec((1, hw, tc), lambda i, j: (i, 0, j)),
        ],
        out_specs=pl.BlockSpec((1, hw, tc), lambda i, j: (i, 0, j)),
        compiler_params=pltpu.CompilerParams(
            dimension_semantics=("parallel", "parallel")),
    )(xf, rf)
    return out.reshape(n, h, w, c)


# ----------------------------------------------------------------------------
# Parameters (weights pre-converted to bf16 matmul matrices at init time)
# ----------------------------------------------------------------------------
def _conv_wmat(w):
    """(Cout, Cin, k, k) -> (k*k*Cin, Cout) bf16, rows ordered (ki, kj, cin)."""
    cout = w.shape[0]
    return jnp.transpose(w, (2, 3, 1, 0)).reshape(-1, cout).astype(jnp.bfloat16)


def _convT_wmat(w_t):
    """PyTorch ConvTranspose2d weight (Cin, Cout, k, k) -> equivalent-conv matrix."""
    w = jnp.transpose(jnp.flip(w_t, axis=(2, 3)), (1, 0, 2, 3))  # (Cout, Cin, k, k)
    return _conv_wmat(w)


def init_params(key, n_in=3, nf=8, n_out=3, n_res=9):
    state = [key]

    def nk():
        state[0], sub = jax.random.split(state[0])
        return sub

    def conv(cout, cin, k):
        w = 0.05 * jax.random.normal(nk(), (cout, cin, k, k), jnp.float32)
        b = 0.01 * jax.random.normal(nk(), (cout,), jnp.float32)
        return {"w": _conv_wmat(w), "b": b}

    def convT(cin, cout, k):
        w = 0.05 * jax.random.normal(nk(), (cin, cout, k, k), jnp.float32)
        b = 0.01 * jax.random.normal(nk(), (cout,), jnp.float32)
        return {"w": _convT_wmat(w), "b": b}

    params = {
        "init": conv(nf, n_in, 7),
        "d1": conv(nf * 2, nf, 3),
        "d2": conv(nf * 4, nf * 2, 3),
        "res": [{"c1": conv(nf * 4, nf * 4, 3),
                 "c2": conv(nf * 4, nf * 4, 3)} for _ in range(n_res)],
        "u1": convT(nf * 4, nf * 2, 3),
        "u2": convT(nf * 2, nf, 3),
        "fin": conv(n_out, nf, 7),
    }
    return params


# ----------------------------------------------------------------------------
# Full forward pass (input/output NCHW to match PyTorch; NHWC internally)
# ----------------------------------------------------------------------------
def resnet_generator_forward(x, params):
    y = jnp.transpose(x, (0, 2, 3, 1))                       # NCHW -> NHWC

    # initial_conv: ReflectionPad2d(3) -> Conv2d(k=7) -> InstanceNorm -> ReLU
    y = jnp.pad(y, ((0, 0), (3, 3), (3, 3), (0, 0)), mode="reflect")
    y = conv2d(y, params["init"]["w"], params["init"]["b"], k=7)
    y = instnorm_act(y, "relu")

    # down_sampling1: Conv2d(k=3, s=2, p=1) -> IN -> ReLU
    y = jnp.pad(y, ((0, 0), (1, 1), (1, 1), (0, 0)))
    y = conv2d(y, params["d1"]["w"], params["d1"]["b"], k=3, stride=2)
    y = instnorm_act(y, "relu")

    # down_sampling2
    y = jnp.pad(y, ((0, 0), (1, 1), (1, 1), (0, 0)))
    y = conv2d(y, params["d2"]["w"], params["d2"]["b"], k=3, stride=2)
    y = instnorm_act(y, "relu")

    # 9 residual blocks: conv -> IN -> ReLU -> conv -> (IN + x -> ReLU) fused
    for p in params["res"]:
        z = jnp.pad(y, ((0, 0), (1, 1), (1, 1), (0, 0)))
        z = conv2d(z, p["c1"]["w"], p["c1"]["b"], k=3)
        z = instnorm_act(z, "relu")
        z = jnp.pad(z, ((0, 0), (1, 1), (1, 1), (0, 0)))
        z = conv2d(z, p["c2"]["w"], p["c2"]["b"], k=3)
        y = instnorm_add_relu(z, y)

    # up_sampling1: ConvTranspose2d(k=3, s=2, p=1) -> IN -> ReLU
    y = conv_transpose2d(y, params["u1"]["w"], params["u1"]["b"], k=3)
    y = instnorm_act(y, "relu")

    # up_sampling2
    y = conv_transpose2d(y, params["u2"]["w"], params["u2"]["b"], k=3)
    y = instnorm_act(y, "relu")

    # final_conv: ReflectionPad2d(3) -> Conv2d(k=7) -> IN -> Tanh
    y = jnp.pad(y, ((0, 0), (3, 3), (3, 3), (0, 0)), mode="reflect")
    y = conv2d(y, params["fin"]["w"], params["fin"]["b"], k=7)
    y = instnorm_act(y, "tanh")

    return jnp.transpose(y, (0, 3, 1, 2))                    # NHWC -> NCHW


if __name__ == "__main__":
    key = jax.random.PRNGKey(0)
    kx, kp = jax.random.split(key)
    # Small shapes consistent with the module: batch=2, 3 input channels,
    # 16x16 spatial, n_filters=8 (the default 64 is just a width choice).
    x = jax.random.normal(kx, (2, 3, 16, 16), jnp.float32)
    params = init_params(kp, n_in=3, nf=8, n_out=3, n_res=9)

    fwd = jax.jit(resnet_generator_forward)
    y = fwd(x, params)
    jax.block_until_ready(y)

    # ConvTranspose2d(k=3, s=2, p=1, output_padding=0): H -> 2H-1, so
    # 16 -> 8 -> 4 -> 7 -> 13; final output (2, 3, 13, 13), values in (-1, 1).
    assert y.shape == (2, 3, 13, 13), y.shape
    assert bool(jnp.all(jnp.isfinite(y)))
    print("KERNEL_OK")
</pallas_src>

<mosaic_0001>
module attributes {stable_mosaic.version = 11 : i64} {
  func.func @_matmul_bias_kernel(%arg0: i32, %arg1: i32, %arg2: i32, %arg3: memref<256x256xbf16, #tpu.memory_space<vmem>>, %arg4: memref<256x128xbf16, #tpu.memory_space<vmem>>, %arg5: memref<1x128xf32, #tpu.memory_space<vmem>>, %arg6: memref<256x128xf32, #tpu.memory_space<vmem>>, %arg7: memref<256x128xf32, #tpu.memory_space<vmem>>) attributes {dimension_semantics = [#tpu.dimension_semantics<parallel>, #tpu.dimension_semantics<parallel>, #tpu.dimension_semantics<arbitrary>], iteration_bounds = array<i64: 2, 1, 1>, scalar_prefetch = 0 : i64, scratch_operands = 1 : i64, tpu.core_type = #tpu.core_type<tc>, window_params = [{transform_indices = @transform_0, window_bounds = array<i64: 256, 256>}, {transform_indices = @transform_1, window_bounds = array<i64: 256, 128>}, {transform_indices = @transform_2, window_bounds = array<i64: 1, 128>}, {transform_indices = @transform_3, window_bounds = array<i64: 256, 128>}]} {
    %c0_i32 = arith.constant 0 : i32
    %0 = arith.cmpi eq, %arg2, %c0_i32 : i32
    %1 = arith.extui %0 : i1 to i32
    %c0_i32_0 = arith.constant 0 : i32
    %2 = arith.cmpi ne, %1, %c0_i32_0 : i32
    scf.if %2 {
      %cst_10 = arith.constant 0.000000e+00 : f32
      %12 = vector.broadcast %cst_10 : f32 to vector<256x128xf32>
      %c0_11 = arith.constant 0 : index
      %c0_12 = arith.constant 0 : index
      %13 = vector.load %arg7[%c0_11, %c0_12] : memref<256x128xf32, #tpu.memory_space<vmem>>, vector<256x128xf32>
      tpu.vector_store %arg7[%c0_11, %c0_12], %12 {strides = array<i32>} : memref<256x128xf32, #tpu.memory_space<vmem>>, vector<256x128xf32>,
    } else {
    }
    %c0 = arith.constant 0 : index
    %c0_1 = arith.constant 0 : index
    %3 = vector.load %arg7[%c0, %c0_1] : memref<256x128xf32, #tpu.memory_space<vmem>>, vector<256x128xf32>
    %c0_2 = arith.constant 0 : index
    %c0_3 = arith.constant 0 : index
    %4 = vector.load %arg3[%c0_2, %c0_3] : memref<256x256xbf16, #tpu.memory_space<vmem>>, vector<256x256xbf16>
    %c0_4 = arith.constant 0 : index
    %c0_5 = arith.constant 0 : index
    %5 = vector.load %arg4[%c0_4, %c0_5] : memref<256x128xbf16, #tpu.memory_space<vmem>>, vector<256x128xbf16>
    %cst = arith.constant dense<0.000000e+00> : vector<256x128xf32>
    %6 = tpu.matmul %4, %5, %cst {dimension_numbers = #tpu.dot_dimension_numbers<[1], [0], [0], [1], [0, 0, 1, 1], [], []>} : vector<256x256xbf16>, vector<256x128xbf16>, vector<256x128xf32> -> vector<256x128xf32>
    %7 = arith.addf %3, %6 : vector<256x128xf32>
    %c0_6 = arith.constant 0 : index
    %c0_7 = arith.constant 0 : index
    %8 = vector.load %arg7[%c0_6, %c0_7] : memref<256x128xf32, #tpu.memory_space<vmem>>, vector<256x128xf32>
    tpu.vector_store %arg7[%c0_6, %c0_7], %7 {strides = array<i32>} : memref<256x128xf32, #tpu.memory_space<vmem>>, vector<256x128xf32>,
    %c0_i32_8 = arith.constant 0 : i32
    %9 = arith.cmpi eq, %arg2, %c0_i32_8 : i32
    %10 = arith.extui %9 : i1 to i32
    %c0_i32_9 = arith.constant 0 : i32
    %11 = arith.cmpi ne, %10, %c0_i32_9 : i32
    scf.if %11 {
      %c0_10 = arith.constant 0 : index
      %c0_11 = arith.constant 0 : index
      %12 = vector.load %arg7[%c0_10, %c0_11] : memref<256x128xf32, #tpu.memory_space<vmem>>, vector<256x128xf32>
      %c0_12 = arith.constant 0 : index
      %c0_13 = arith.constant 0 : index
      %13 = vector.load %arg5[%c0_12, %c0_13] : memref<1x128xf32, #tpu.memory_space<vmem>>, vector<1x128xf32>
      %14 = vector.broadcast %13 : vector<1x128xf32> to vector<256x128xf32>
      %15 = arith.addf %12, %14 : vector<256x128xf32>
      %c0_14 = arith.constant 0 : index
      %c0_15 = arith.constant 0 : index
      %16 = vector.load %arg6[%c0_14, %c0_15] : memref<256x128xf32, #tpu.memory_space<vmem>>, vector<256x128xf32>
      tpu.vector_store %arg6[%c0_14, %c0_15], %15 {strides = array<i32>} : memref<256x128xf32, #tpu.memory_space<vmem>>, vector<256x128xf32>,
    } else {
    }
    return
  }
  func.func @transform_0(%arg0: i32, %arg1: i32, %arg2: i32) -> (i32, i32) {
    %c0_i32 = arith.constant 0 : i32
    return %arg0, %arg2 : i32, i32
  }
  func.func @transform_1(%arg0: i32, %arg1: i32, %arg2: i32) -> (i32, i32) {
    %c0_i32 = arith.constant 0 : i32
    return %arg2, %arg1 : i32, i32
  }
  func.func @transform_2(%arg0: i32, %arg1: i32, %arg2: i32) -> (i32, i32) {
    %c0_i32 = arith.constant 0 : i32
    %c0_i32_0 = arith.constant 0 : i32
    return %c0_i32, %arg1 : i32, i32
  }
  func.func @transform_3(%arg0: i32, %arg1: i32, %arg2: i32) -> (i32, i32) {
    %c0_i32 = arith.constant 0 : i32
    return %arg0, %arg1 : i32, i32
  }
}

module attributes {stable_mosaic.version = 11 : i64} {
  func.func @_in_act_kernel(%arg0: i32, %arg1: i32, %arg2: memref<1x256x8xf32, #tpu.memory_space<vmem>>, %arg3: memref<1x256x8xf32, #tpu.memory_space<vmem>>) attributes {dimension_semantics = [#tpu.dimension_semantics<parallel>, #tpu.dimension_semantics<parallel>], iteration_bounds = array<i64: 2, 1>, scalar_prefetch = 0 : i64, scratch_operands = 0 : i64, tpu.core_type = #tpu.core_type<tc>, window_params = [{transform_indices = @transform_0, window_bounds = array<i64: 1, 256, 8>}, {transform_indices = @transform_1, window_bounds = array<i64: 1, 256, 8>}]} {
    %c0 = arith.constant 0 : index
    %c0_0 = arith.constant 0 : index
    %c0_1 = arith.constant 0 : index
    %0 = vector.load %arg2[%c0, %c0_0, %c0_1] : memref<1x256x8xf32, #tpu.memory_space<vmem>>, vector<1x256x8xf32>
    %cst = arith.constant dense<0.000000e+00> : vector<1x8xf32>
    %1 = vector.multi_reduction <add>, %0, %cst [1] : vector<1x256x8xf32> to vector<1x8xf32>
    %2 = vector.shape_cast %1 : vector<1x8xf32> to vector<1x1x8xf32>
    %cst_2 = arith.constant 2.560000e+02 : f32
    %3 = vector.broadcast %cst_2 : f32 to vector<1x1x8xf32>
    %4 = arith.divf %2, %3 : vector<1x1x8xf32>
    %5 = vector.broadcast %4 : vector<1x1x8xf32> to vector<1x256x8xf32>
    %6 = arith.subf %0, %5 : vector<1x256x8xf32>
    %7 = arith.mulf %6, %6 : vector<1x256x8xf32>
    %cst_3 = arith.constant dense<0.000000e+00> : vector<1x8xf32>
    %8 = vector.multi_reduction <add>, %7, %cst_3 [1] : vector<1x256x8xf32> to vector<1x8xf32>
    %9 = vector.shape_cast %8 : vector<1x8xf32> to vector<1x1x8xf32>
    %cst_4 = arith.constant 2.560000e+02 : f32
    %10 = vector.broadcast %cst_4 : f32 to vector<1x1x8xf32>
    %11 = arith.divf %9, %10 : vector<1x1x8xf32>
    %12 = vector.broadcast %4 : vector<1x1x8xf32> to vector<1x256x8xf32>
    %13 = arith.subf %0, %12 : vector<1x256x8xf32>
    %cst_5 = arith.constant 9.99999974E-6 : f32
    %14 = vector.broadcast %cst_5 : f32 to vector<1x1x8xf32>
    %15 = arith.addf %11, %14 : vector<1x1x8xf32>
    %16 = math.rsqrt %15 : vector<1x1x8xf32>
    %17 = vector.broadcast %16 : vector<1x1x8xf32> to vector<1x256x8xf32>
    %18 = arith.mulf %13, %17 : vector<1x256x8xf32>
    %cst_6 = arith.constant 0.000000e+00 : f32
    %19 = vector.broadcast %cst_6 : f32 to vector<1x256x8xf32>
    %20 = arith.maximumf %18, %19 : vector<1x256x8xf32>
    %c0_7 = arith.constant 0 : index
    %c0_8 = arith.constant 0 : index
    %c0_9 = arith.constant 0 : index
    %21 = vector.load %arg3[%c0_7, %c0_8, %c0_9] : memref<1x256x8xf32, #tpu.memory_space<vmem>>, vector<1x256x8xf32>
    tpu.vector_store %arg3[%c0_7, %c0_8, %c0_9], %20 {strides = array<i32>} : memref<1x256x8xf32, #tpu.memory_space<vmem>>, vector<1x256x8xf32>,
    return
  }
  func.func @transform_0(%arg0: i32, %arg1: i32) -> (i32, i32, i32) {
    %c0_i32 = arith.constant 0 : i32
    %c0_i32_0 = arith.constant 0 : i32
    return %arg0, %c0_i32, %arg1 : i32, i32, i32
  }
  func.func @transform_1(%arg0: i32, %arg1: i32) -> (i32, i32, i32) {
    %c0_i32 = arith.constant 0 : i32
    %c0_i32_0 = arith.constant 0 : i32
    return %arg0, %c0_i32, %arg1 : i32, i32, i32
  }
}

module attributes {stable_mosaic.version = 11 : i64} {
  func.func @_matmul_bias_kernel(%arg0: i32, %arg1: i32, %arg2: i32, %arg3: memref<128x128xbf16, #tpu.memory_space<vmem>>, %arg4: memref<128x128xbf16, #tpu.memory_space<vmem>>, %arg5: memref<1x128xf32, #tpu.memory_space<vmem>>, %arg6: memref<128x128xf32, #tpu.memory_space<vmem>>, %arg7: memref<128x128xf32, #tpu.memory_space<vmem>>) attributes {dimension_semantics = [#tpu.dimension_semantics<parallel>, #tpu.dimension_semantics<parallel>, #tpu.dimension_semantics<arbitrary>], iteration_bounds = array<i64: 1, 1, 1>, scalar_prefetch = 0 : i64, scratch_operands = 1 : i64, tpu.core_type = #tpu.core_type<tc>, window_params = [{transform_indices = @transform_0, window_bounds = array<i64: 128, 128>}, {transform_indices = @transform_1, window_bounds = array<i64: 128, 128>}, {transform_indices = @transform_2, window_bounds = array<i64: 1, 128>}, {transform_indices = @transform_3, window_bounds = array<i64: 128, 128>}]} {
    %c0_i32 = arith.constant 0 : i32
    %0 = arith.cmpi eq, %arg2, %c0_i32 : i32
    %1 = arith.extui %0 : i1 to i32
    %c0_i32_0 = arith.constant 0 : i32
    %2 = arith.cmpi ne, %1, %c0_i32_0 : i32
    scf.if %2 {
      %cst_10 = arith.constant 0.000000e+00 : f32
      %12 = vector.broadcast %cst_10 : f32 to vector<128x128xf32>
      %c0_11 = arith.constant 0 : index
      %c0_12 = arith.constant 0 : index
      %13 = vector.load %arg7[%c0_11, %c0_12] : memref<128x128xf32, #tpu.memory_space<vmem>>, vector<128x128xf32>
      tpu.vector_store %arg7[%c0_11, %c0_12], %12 {strides = array<i32>} : memref<128x128xf32, #tpu.memory_space<vmem>>, vector<128x128xf32>,
    } else {
    }
    %c0 = arith.constant 0 : index
    %c0_1 = arith.constant 0 : index
    %3 = vector.load %arg7[%c0, %c0_1] : memref<128x128xf32, #tpu.memory_space<vmem>>, vector<128x128xf32>
    %c0_2 = arith.constant 0 : index
    %c0_3 = arith.constant 0 : index
    %4 = vector.load %arg3[%c0_2, %c0_3] : memref<128x128xbf16, #tpu.memory_space<vmem>>, vector<128x128xbf16>
    %c0_4 = arith.constant 0 : index
    %c0_5 = arith.constant 0 : index
    %5 = vector.load %arg4[%c0_4, %c0_5] : memref<128x128xbf16, #tpu.memory_space<vmem>>, vector<128x128xbf16>
    %cst = arith.constant dense<0.000000e+00> : vector<128x128xf32>
    %6 = tpu.matmul %4, %5, %cst {dimension_numbers = #tpu.dot_dimension_numbers<[1], [0], [0], [1], [0, 0, 1, 1], [], []>} : vector<128x128xbf16>, vector<128x128xbf16>, vector<128x128xf32> -> vector<128x128xf32>
    %7 = arith.addf %3, %6 : vector<128x128xf32>
    %c0_6 = arith.constant 0 : index
    %c0_7 = arith.constant 0 : index
    %8 = vector.load %arg7[%c0_6, %c0_7] : memref<128x128xf32, #tpu.memory_space<vmem>>, vector<128x128xf32>
    tpu.vector_store %arg7[%c0_6, %c0_7], %7 {strides = array<i32>} : memref<128x128xf32, #tpu.memory_space<vmem>>, vector<128x128xf32>,
    %c0_i32_8 = arith.constant 0 : i32
    %9 = arith.cmpi eq, %arg2, %c0_i32_8 : i32
    %10 = arith.extui %9 : i1 to i32
    %c0_i32_9 = arith.constant 0 : i32
    %11 = arith.cmpi ne, %10, %c0_i32_9 : i32
    scf.if %11 {
      %c0_10 = arith.constant 0 : index
      %c0_11 = arith.constant 0 : index
      %12 = vector.load %arg7[%c0_10, %c0_11] : memref<128x128xf32, #tpu.memory_space<vmem>>, vector<128x128xf32>
      %c0_12 = arith.constant 0 : index
      %c0_13 = arith.constant 0 : index
      %13 = vector.load %arg5[%c0_12, %c0_13] : memref<1x128xf32, #tpu.memory_space<vmem>>, vector<1x128xf32>
      %14 = vector.broadcast %13 : vector<1x128xf32> to vector<128x128xf32>
      %15 = arith.addf %12, %14 : vector<128x128xf32>
      %c0_14 = arith.constant 0 : index
      %c0_15 = arith.constant 0 : index
      %16 = vector.load %arg6[%c0_14, %c0_15] : memref<128x128xf32, #tpu.memory_space<vmem>>, vector<128x128xf32>
      tpu.vector_store %arg6[%c0_14, %c0_15], %15 {strides = array<i32>} : memref<128x128xf32, #tpu.memory_space<vmem>>, vector<128x128xf32>,
    } else {
    }
    return
  }
  func.func @transform_0(%arg0: i32, %arg1: i32, %arg2: i32) -> (i32, i32) {
    %c0_i32 = arith.constant 0 : i32
    return %arg0, %arg2 : i32, i32
  }
  func.func @transform_1(%arg0: i32, %arg1: i32, %arg2: i32) -> (i32, i32) {
    %c0_i32 = arith.constant 0 : i32
    return %arg2, %arg1 : i32, i32
  }
  func.func @transform_2(%arg0: i32, %arg1: i32, %arg2: i32) -> (i32, i32) {
    %c0_i32 = arith.constant 0 : i32
    %c0_i32_0 = arith.constant 0 : i32
    return %c0_i32, %arg1 : i32, i32
  }
  func.func @transform_3(%arg0: i32, %arg1: i32, %arg2: i32) -> (i32, i32) {
    %c0_i32 = arith.constant 0 : i32
    return %arg0, %arg1 : i32, i32
  }
}

module attributes {stable_mosaic.version = 11 : i64} {
  func.func @_in_act_kernel(%arg0: i32, %arg1: i32, %arg2: memref<1x64x16xf32, #tpu.memory_space<vmem>>, %arg3: memref<1x64x16xf32, #tpu.memory_space<vmem>>) attributes {dimension_semantics = [#tpu.dimension_semantics<parallel>, #tpu.dimension_semantics<parallel>], iteration_bounds = array<i64: 2, 1>, scalar_prefetch = 0 : i64, scratch_operands = 0 : i64, tpu.core_type = #tpu.core_type<tc>, window_params = [{transform_indices = @transform_0, window_bounds = array<i64: 1, 64, 16>}, {transform_indices = @transform_1, window_bounds = array<i64: 1, 64, 16>}]} {
    %c0 = arith.constant 0 : index
    %c0_0 = arith.constant 0 : index
    %c0_1 = arith.constant 0 : index
    %0 = vector.load %arg2[%c0, %c0_0, %c0_1] : memref<1x64x16xf32, #tpu.memory_space<vmem>>, vector<1x64x16xf32>
    %cst = arith.constant dense<0.000000e+00> : vector<1x16xf32>
    %1 = vector.multi_reduction <add>, %0, %cst [1] : vector<1x64x16xf32> to vector<1x16xf32>
    %2 = vector.shape_cast %1 : vector<1x16xf32> to vector<1x1x16xf32>
    %cst_2 = arith.constant 6.400000e+01 : f32
    %3 = vector.broadcast %cst_2 : f32 to vector<1x1x16xf32>
    %4 = arith.divf %2, %3 : vector<1x1x16xf32>
    %5 = vector.broadcast %4 : vector<1x1x16xf32> to vector<1x64x16xf32>
    %6 = arith.subf %0, %5 : vector<1x64x16xf32>
    %7 = arith.mulf %6, %6 : vector<1x64x16xf32>
    %cst_3 = arith.constant dense<0.000000e+00> : vector<1x16xf32>
    %8 = vector.multi_reduction <add>, %7, %cst_3 [1] : vector<1x64x16xf32> to vector<1x16xf32>
    %9 = vector.shape_cast %8 : vector<1x16xf32> to vector<1x1x16xf32>
    %cst_4 = arith.constant 6.400000e+01 : f32
    %10 = vector.broadcast %cst_4 : f32 to vector<1x1x16xf32>
    %11 = arith.divf %9, %10 : vector<1x1x16xf32>
    %12 = vector.broadcast %4 : vector<1x1x16xf32> to vector<1x64x16xf32>
    %13 = arith.subf %0, %12 : vector<1x64x16xf32>
    %cst_5 = arith.constant 9.99999974E-6 : f32
    %14 = vector.broadcast %cst_5 : f32 to vector<1x1x16xf32>
    %15 = arith.addf %11, %14 : vector<1x1x16xf32>
    %16 = math.rsqrt %15 : vector<1x1x16xf32>
    %17 = vector.broadcast %16 : vector<1x1x16xf32> to vector<1x64x16xf32>
    %18 = arith.mulf %13, %17 : vector<1x64x16xf32>
    %cst_6 = arith.constant 0.000000e+00 : f32
    %19 = vector.broadcast %cst_6 : f32 to vector<1x64x16xf32>
    %20 = arith.maximumf %18, %19 : vector<1x64x16xf32>
    %c0_7 = arith.constant 0 : index
    %c0_8 = arith.constant 0 : index
    %c0_9 = arith.constant 0 : index
    %21 = vector.load %arg3[%c0_7, %c0_8, %c0_9] : memref<1x64x16xf32, #tpu.memory_space<vmem>>, vector<1x64x16xf32>
    tpu.vector_store %arg3[%c0_7, %c0_8, %c0_9], %20 {strides = array<i32>} : memref<1x64x16xf32, #tpu.memory_space<vmem>>, vector<1x64x16xf32>,
    return
  }
  func.func @transform_0(%arg0: i32, %arg1: i32) -> (i32, i32, i32) {
    %c0_i32 = arith.constant 0 : i32
    %c0_i32_0 = arith.constant 0 : i32
    return %arg0, %c0_i32, %arg1 : i32, i32, i32
  }
  func.func @transform_1(%arg0: i32, %arg1: i32) -> (i32, i32, i32) {
    %c0_i32 = arith.constant 0 : i32
    %c0_i32_0 = arith.constant 0 : i32
    return %arg0, %c0_i32, %arg1 : i32, i32, i32
  }
}

module attributes {stable_mosaic.version = 11 : i64} {
  func.func @_in_act_kernel(%arg0: i32, %arg1: i32, %arg2: memref<1x16x32xf32, #tpu.memory_space<vmem>>, %arg3: memref<1x16x32xf32, #tpu.memory_space<vmem>>) attributes {dimension_semantics = [#tpu.dimension_semantics<parallel>, #tpu.dimension_semantics<parallel>], iteration_bounds = array<i64: 2, 1>, scalar_prefetch = 0 : i64, scratch_operands = 0 : i64, tpu.core_type = #tpu.core_type<tc>, window_params = [{transform_indices = @transform_0, window_bounds = array<i64: 1, 16, 32>}, {transform_indices = @transform_1, window_bounds = array<i64: 1, 16, 32>}]} {
    %c0 = arith.constant 0 : index
    %c0_0 = arith.constant 0 : index
    %c0_1 = arith.constant 0 : index
    %0 = vector.load %arg2[%c0, %c0_0, %c0_1] : memref<1x16x32xf32, #tpu.memory_space<vmem>>, vector<1x16x32xf32>
    %cst = arith.constant dense<0.000000e+00> : vector<1x32xf32>
    %1 = vector.multi_reduction <add>, %0, %cst [1] : vector<1x16x32xf32> to vector<1x32xf32>
    %2 = vector.shape_cast %1 : vector<1x32xf32> to vector<1x1x32xf32>
    %cst_2 = arith.constant 1.600000e+01 : f32
    %3 = vector.broadcast %cst_2 : f32 to vector<1x1x32xf32>
    %4 = arith.divf %2, %3 : vector<1x1x32xf32>
    %5 = vector.broadcast %4 : vector<1x1x32xf32> to vector<1x16x32xf32>
    %6 = arith.subf %0, %5 : vector<1x16x32xf32>
    %7 = arith.mulf %6, %6 : vector<1x16x32xf32>
    %cst_3 = arith.constant dense<0.000000e+00> : vector<1x32xf32>
    %8 = vector.multi_reduction <add>, %7, %cst_3 [1] : vector<1x16x32xf32> to vector<1x32xf32>
    %9 = vector.shape_cast %8 : vector<1x32xf32> to vector<1x1x32xf32>
    %cst_4 = arith.constant 1.600000e+01 : f32
    %10 = vector.broadcast %cst_4 : f32 to vector<1x1x32xf32>
    %11 = arith.divf %9, %10 : vector<1x1x32xf32>
    %12 = vector.broadcast %4 : vector<1x1x32xf32> to vector<1x16x32xf32>
    %13 = arith.subf %0, %12 : vector<1x16x32xf32>
    %cst_5 = arith.constant 9.99999974E-6 : f32
    %14 = vector.broadcast %cst_5 : f32 to vector<1x1x32xf32>
    %15 = arith.addf %11, %14 : vector<1x1x32xf32>
    %16 = math.rsqrt %15 : vector<1x1x32xf32>
    %17 = vector.broadcast %16 : vector<1x1x32xf32> to vector<1x16x32xf32>
    %18 = arith.mulf %13, %17 : vector<1x16x32xf32>
    %cst_6 = arith.constant 0.000000e+00 : f32
    %19 = vector.broadcast %cst_6 : f32 to vector<1x16x32xf32>
    %20 = arith.maximumf %18, %19 : vector<1x16x32xf32>
    %c0_7 = arith.constant 0 : index
    %c0_8 = arith.constant 0 : index
    %c0_9 = arith.constant 0 : index
    %21 = vector.load %arg3[%c0_7, %c0_8, %c0_9] : memref<1x16x32xf32, #tpu.memory_space<vmem>>, vector<1x16x32xf32>
    tpu.vector_store %arg3[%c0_7, %c0_8, %c0_9], %20 {strides = array<i32>} : memref<1x16x32xf32, #tpu.memory_space<vmem>>, vector<1x16x32xf32>,
    return
  }
  func.func @transform_0(%arg0: i32, %arg1: i32) -> (i32, i32, i32) {
    %c0_i32 = arith.constant 0 : i32
    %c0_i32_0 = arith.constant 0 : i32
    return %arg0, %c0_i32, %arg1 : i32, i32, i32
  }
  func.func @transform_1(%arg0: i32, %arg1: i32) -> (i32, i32, i32) {
    %c0_i32 = arith.constant 0 : i32
    %c0_i32_0 = arith.constant 0 : i32
    return %arg0, %c0_i32, %arg1 : i32, i32, i32
  }
}

module attributes {stable_mosaic.version = 11 : i64} {
  func.func @_matmul_bias_kernel(%arg0: i32, %arg1: i32, %arg2: i32, %arg3: memref<32x256xbf16, #tpu.memory_space<vmem>>, %arg4: memref<256x128xbf16, #tpu.memory_space<vmem>>, %arg5: memref<1x128xf32, #tpu.memory_space<vmem>>, %arg6: memref<32x128xf32, #tpu.memory_space<vmem>>, %arg7: memref<32x128xf32, #tpu.memory_space<vmem>>) attributes {dimension_semantics = [#tpu.dimension_semantics<parallel>, #tpu.dimension_semantics<parallel>, #tpu.dimension_semantics<arbitrary>], iteration_bounds = array<i64: 1, 1, 1>, scalar_prefetch = 0 : i64, scratch_operands = 1 : i64, tpu.core_type = #tpu.core_type<tc>, window_params = [{transform_indices = @transform_0, window_bounds = array<i64: 32, 256>}, {transform_indices = @transform_1, window_bounds = array<i64: 256, 128>}, {transform_indices = @transform_2, window_bounds = array<i64: 1, 128>}, {transform_indices = @transform_3, window_bounds = array<i64: 32, 128>}]} {
    %c0_i32 = arith.constant 0 : i32
    %0 = arith.cmpi eq, %arg2, %c0_i32 : i32
    %1 = arith.extui %0 : i1 to i32
    %c0_i32_0 = arith.constant 0 : i32
    %2 = arith.cmpi ne, %1, %c0_i32_0 : i32
    scf.if %2 {
      %cst_10 = arith.constant 0.000000e+00 : f32
      %12 = vector.broadcast %cst_10 : f32 to vector<32x128xf32>
      %c0_11 = arith.constant 0 : index
      %c0_12 = arith.constant 0 : index
      %13 = vector.load %arg7[%c0_11, %c0_12] : memref<32x128xf32, #tpu.memory_space<vmem>>, vector<32x128xf32>
      tpu.vector_store %arg7[%c0_11, %c0_12], %12 {strides = array<i32>} : memref<32x128xf32, #tpu.memory_space<vmem>>, vector<32x128xf32>,
    } else {
    }
    %c0 = arith.constant 0 : index
    %c0_1 = arith.constant 0 : index
    %3 = vector.load %arg7[%c0, %c0_1] : memref<32x128xf32, #tpu.memory_space<vmem>>, vector<32x128xf32>
    %c0_2 = arith.constant 0 : index
    %c0_3 = arith.constant 0 : index
    %4 = vector.load %arg3[%c0_2, %c0_3] : memref<32x256xbf16, #tpu.memory_space<vmem>>, vector<32x256xbf16>
    %c0_4 = arith.constant 0 : index
    %c0_5 = arith.constant 0 : index
    %5 = vector.load %arg4[%c0_4, %c0_5] : memref<256x128xbf16, #tpu.memory_space<vmem>>, vector<256x128xbf16>
    %cst = arith.constant dense<0.000000e+00> : vector<32x128xf32>
    %6 = tpu.matmul %4, %5, %cst {dimension_numbers = #tpu.dot_dimension_numbers<[1], [0], [0], [1], [0, 0, 1, 1], [], []>} : vector<32x256xbf16>, vector<256x128xbf16>, vector<32x128xf32> -> vector<32x128xf32>
    %7 = arith.addf %3, %6 : vector<32x128xf32>
    %c0_6 = arith.constant 0 : index
    %c0_7 = arith.constant 0 : index
    %8 = vector.load %arg7[%c0_6, %c0_7] : memref<32x128xf32, #tpu.memory_space<vmem>>, vector<32x128xf32>
    tpu.vector_store %arg7[%c0_6, %c0_7], %7 {strides = array<i32>} : memref<32x128xf32, #tpu.memory_space<vmem>>, vector<32x128xf32>,
    %c0_i32_8 = arith.constant 0 : i32
    %9 = arith.cmpi eq, %arg2, %c0_i32_8 : i32
    %10 = arith.extui %9 : i1 to i32
    %c0_i32_9 = arith.constant 0 : i32
    %11 = arith.cmpi ne, %10, %c0_i32_9 : i32
    scf.if %11 {
      %c0_10 = arith.constant 0 : index
      %c0_11 = arith.constant 0 : index
      %12 = vector.load %arg7[%c0_10, %c0_11] : memref<32x128xf32, #tpu.memory_space<vmem>>, vector<32x128xf32>
      %c0_12 = arith.constant 0 : index
      %c0_13 = arith.constant 0 : index
      %13 = vector.load %arg5[%c0_12, %c0_13] : memref<1x128xf32, #tpu.memory_space<vmem>>, vector<1x128xf32>
      %14 = vector.broadcast %13 : vector<1x128xf32> to vector<32x128xf32>
      %15 = arith.addf %12, %14 : vector<32x128xf32>
      %c0_14 = arith.constant 0 : index
      %c0_15 = arith.constant 0 : index
      %16 = vector.load %arg6[%c0_14, %c0_15] : memref<32x128xf32, #tpu.memory_space<vmem>>, vector<32x128xf32>
      tpu.vector_store %arg6[%c0_14, %c0_15], %15 {strides = array<i32>} : memref<32x128xf32, #tpu.memory_space<vmem>>, vector<32x128xf32>,
    } else {
    }
    return
  }
  func.func @transform_0(%arg0: i32, %arg1: i32, %arg2: i32) -> (i32, i32) {
    %c0_i32 = arith.constant 0 : i32
    return %arg0, %arg2 : i32, i32
  }
  func.func @transform_1(%arg0: i32, %arg1: i32, %arg2: i32) -> (i32, i32) {
    %c0_i32 = arith.constant 0 : i32
    return %arg2, %arg1 : i32, i32
  }
  func.func @transform_2(%arg0: i32, %arg1: i32, %arg2: i32) -> (i32, i32) {
    %c0_i32 = arith.constant 0 : i32
    %c0_i32_0 = arith.constant 0 : i32
    return %c0_i32, %arg1 : i32, i32
  }
  func.func @transform_3(%arg0: i32, %arg1: i32, %arg2: i32) -> (i32, i32) {
    %c0_i32 = arith.constant 0 : i32
    return %arg0, %arg1 : i32, i32
  }
}

module attributes {stable_mosaic.version = 11 : i64} {
  func.func @_in_add_relu_kernel(%arg0: i32, %arg1: i32, %arg2: memref<1x16x32xf32, #tpu.memory_space<vmem>>, %arg3: memref<1x16x32xf32, #tpu.memory_space<vmem>>, %arg4: memref<1x16x32xf32, #tpu.memory_space<vmem>>) attributes {dimension_semantics = [#tpu.dimension_semantics<parallel>, #tpu.dimension_semantics<parallel>], iteration_bounds = array<i64: 2, 1>, scalar_prefetch = 0 : i64, scratch_operands = 0 : i64, tpu.core_type = #tpu.core_type<tc>, window_params = [{transform_indices = @transform_0, window_bounds = array<i64: 1, 16, 32>}, {transform_indices = @transform_1, window_bounds = array<i64: 1, 16, 32>}, {transform_indices = @transform_2, window_bounds = array<i64: 1, 16, 32>}]} {
    %c0 = arith.constant 0 : index
    %c0_0 = arith.constant 0 : index
    %c0_1 = arith.constant 0 : index
    %0 = vector.load %arg2[%c0, %c0_0, %c0_1] : memref<1x16x32xf32, #tpu.memory_space<vmem>>, vector<1x16x32xf32>
    %cst = arith.constant dense<0.000000e+00> : vector<1x32xf32>
    %1 = vector.multi_reduction <add>, %0, %cst [1] : vector<1x16x32xf32> to vector<1x32xf32>
    %2 = vector.shape_cast %1 : vector<1x32xf32> to vector<1x1x32xf32>
    %cst_2 = arith.constant 1.600000e+01 : f32
    %3 = vector.broadcast %cst_2 : f32 to vector<1x1x32xf32>
    %4 = arith.divf %2, %3 : vector<1x1x32xf32>
    %5 = vector.broadcast %4 : vector<1x1x32xf32> to vector<1x16x32xf32>
    %6 = arith.subf %0, %5 : vector<1x16x32xf32>
    %7 = arith.mulf %6, %6 : vector<1x16x32xf32>
    %cst_3 = arith.constant dense<0.000000e+00> : vector<1x32xf32>
    %8 = vector.multi_reduction <add>, %7, %cst_3 [1] : vector<1x16x32xf32> to vector<1x32xf32>
    %9 = vector.shape_cast %8 : vector<1x32xf32> to vector<1x1x32xf32>
    %cst_4 = arith.constant 1.600000e+01 : f32
    %10 = vector.broadcast %cst_4 : f32 to vector<1x1x32xf32>
    %11 = arith.divf %9, %10 : vector<1x1x32xf32>
    %12 = vector.broadcast %4 : vector<1x1x32xf32> to vector<1x16x32xf32>
    %13 = arith.subf %0, %12 : vector<1x16x32xf32>
    %cst_5 = arith.constant 9.99999974E-6 : f32
    %14 = vector.broadcast %cst_5 : f32 to vector<1x1x32xf32>
    %15 = arith.addf %11, %14 : vector<1x1x32xf32>
    %16 = math.rsqrt %15 : vector<1x1x32xf32>
    %17 = vector.broadcast %16 : vector<1x1x32xf32> to vector<1x16x32xf32>
    %18 = arith.mulf %13, %17 : vector<1x16x32xf32>
    %c0_6 = arith.constant 0 : index
    %c0_7 = arith.constant 0 : index
    %c0_8 = arith.constant 0 : index
    %19 = vector.load %arg3[%c0_6, %c0_7, %c0_8] : memref<1x16x32xf32, #tpu.memory_space<vmem>>, vector<1x16x32xf32>
    %20 = arith.addf %18, %19 : vector<1x16x32xf32>
    %cst_9 = arith.constant 0.000000e+00 : f32
    %21 = vector.broadcast %cst_9 : f32 to vector<1x16x32xf32>
    %22 = arith.maximumf %20, %21 : vector<1x16x32xf32>
    %c0_10 = arith.constant 0 : index
    %c0_11 = arith.constant 0 : index
    %c0_12 = arith.constant 0 : index
    %23 = vector.load %arg4[%c0_10, %c0_11, %c0_12] : memref<1x16x32xf32, #tpu.memory_space<vmem>>, vector<1x16x32xf32>
    tpu.vector_store %arg4[%c0_10, %c0_11, %c0_12], %22 {strides = array<i32>} : memref<1x16x32xf32, #tpu.memory_space<vmem>>, vector<1x16x32xf32>,
    return
  }
  func.func @transform_0(%arg0: i32, %arg1: i32) -> (i32, i32, i32) {
    %c0_i32 = arith.constant 0 : i32
    %c0_i32_0 = arith.constant 0 : i32
    return %arg0, %c0_i32, %arg1 : i32, i32, i32
  }
  func.func @transform_1(%arg0: i32, %arg1: i32) -> (i32, i32, i32) {
    %c0_i32 = arith.constant 0 : i32
    %c0_i32_0 = arith.constant 0 : i32
    return %arg0, %c0_i32, %arg1 : i32, i32, i32
  }
  func.func @transform_2(%arg0: i32, %arg1: i32) -> (i32, i32, i32) {
    %c0_i32 = arith.constant 0 : i32
    %c0_i32_0 = arith.constant 0 : i32
    return %arg0, %c0_i32, %arg1 : i32, i32, i32
  }
}

module attributes {stable_mosaic.version = 11 : i64} {
  func.func @_matmul_bias_kernel(%arg0: i32, %arg1: i32, %arg2: i32, %arg3: memref<32x384xbf16, #tpu.memory_space<vmem>>, %arg4: memref<384x128xbf16, #tpu.memory_space<vmem>>, %arg5: memref<1x128xf32, #tpu.memory_space<vmem>>, %arg6: memref<32x128xf32, #tpu.memory_space<vmem>>, %arg7: memref<32x128xf32, #tpu.memory_space<vmem>>) attributes {dimension_semantics = [#tpu.dimension_semantics<parallel>, #tpu.dimension_semantics<parallel>, #tpu.dimension_semantics<arbitrary>], iteration_bounds = array<i64: 1, 1, 1>, scalar_prefetch = 0 : i64, scratch_operands = 1 : i64, tpu.core_type = #tpu.core_type<tc>, window_params = [{transform_indices = @transform_0, window_bounds = array<i64: 32, 384>}, {transform_indices = @transform_1, window_bounds = array<i64: 384, 128>}, {transform_indices = @transform_2, window_bounds = array<i64: 1, 128>}, {transform_indices = @transform_3, window_bounds = array<i64: 32, 128>}]} {
    %c0_i32 = arith.constant 0 : i32
    %0 = arith.cmpi eq, %arg2, %c0_i32 : i32
    %1 = arith.extui %0 : i1 to i32
    %c0_i32_0 = arith.constant 0 : i32
    %2 = arith.cmpi ne, %1, %c0_i32_0 : i32
    scf.if %2 {
      %cst_10 = arith.constant 0.000000e+00 : f32
      %12 = vector.broadcast %cst_10 : f32 to vector<32x128xf32>
      %c0_11 = arith.constant 0 : index
      %c0_12 = arith.constant 0 : index
      %13 = vector.load %arg7[%c0_11, %c0_12] : memref<32x128xf32, #tpu.memory_space<vmem>>, vector<32x128xf32>
      tpu.vector_store %arg7[%c0_11, %c0_12], %12 {strides = array<i32>} : memref<32x128xf32, #tpu.memory_space<vmem>>, vector<32x128xf32>,
    } else {
    }
    %c0 = arith.constant 0 : index
    %c0_1 = arith.constant 0 : index
    %3 = vector.load %arg7[%c0, %c0_1] : memref<32x128xf32, #tpu.memory_space<vmem>>, vector<32x128xf32>
    %c0_2 = arith.constant 0 : index
    %c0_3 = arith.constant 0 : index
    %4 = vector.load %arg3[%c0_2, %c0_3] : memref<32x384xbf16, #tpu.memory_space<vmem>>, vector<32x384xbf16>
    %c0_4 = arith.constant 0 : index
    %c0_5 = arith.constant 0 : index
    %5 = vector.load %arg4[%c0_4, %c0_5] : memref<384x128xbf16, #tpu.memory_space<vmem>>, vector<384x128xbf16>
    %cst = arith.constant dense<0.000000e+00> : vector<32x128xf32>
    %6 = tpu.matmul %4, %5, %cst {dimension_numbers = #tpu.dot_dimension_numbers<[1], [0], [0], [1], [0, 0, 1, 1], [], []>} : vector<32x384xbf16>, vector<384x128xbf16>, vector<32x128xf32> -> vector<32x128xf32>
    %7 = arith.addf %3, %6 : vector<32x128xf32>
    %c0_6 = arith.constant 0 : index
    %c0_7 = arith.constant 0 : index
    %8 = vector.load %arg7[%c0_6, %c0_7] : memref<32x128xf32, #tpu.memory_space<vmem>>, vector<32x128xf32>
    tpu.vector_store %arg7[%c0_6, %c0_7], %7 {strides = array<i32>} : memref<32x128xf32, #tpu.memory_space<vmem>>, vector<32x128xf32>,
    %c0_i32_8 = arith.constant 0 : i32
    %9 = arith.cmpi eq, %arg2, %c0_i32_8 : i32
    %10 = arith.extui %9 : i1 to i32
    %c0_i32_9 = arith.constant 0 : i32
    %11 = arith.cmpi ne, %10, %c0_i32_9 : i32
    scf.if %11 {
      %c0_10 = arith.constant 0 : index
      %c0_11 = arith.constant 0 : index
      %12 = vector.load %arg7[%c0_10, %c0_11] : memref<32x128xf32, #tpu.memory_space<vmem>>, vector<32x128xf32>
      %c0_12 = arith.constant 0 : index
      %c0_13 = arith.constant 0 : index
      %13 = vector.load %arg5[%c0_12, %c0_13] : memref<1x128xf32, #tpu.memory_space<vmem>>, vector<1x128xf32>
      %14 = vector.broadcast %13 : vector<1x128xf32> to vector<32x128xf32>
      %15 = arith.addf %12, %14 : vector<32x128xf32>
      %c0_14 = arith.constant 0 : index
      %c0_15 = arith.constant 0 : index
      %16 = vector.load %arg6[%c0_14, %c0_15] : memref<32x128xf32, #tpu.memory_space<vmem>>, vector<32x128xf32>
      tpu.vector_store %arg6[%c0_14, %c0_15], %15 {strides = array<i32>} : memref<32x128xf32, #tpu.memory_space<vmem>>, vector<32x128xf32>,
    } else {
    }
    return
  }
  func.func @transform_0(%arg0: i32, %arg1: i32, %arg2: i32) -> (i32, i32) {
    %c0_i32 = arith.constant 0 : i32
    return %arg0, %arg2 : i32, i32
  }
  func.func @transform_1(%arg0: i32, %arg1: i32, %arg2: i32) -> (i32, i32) {
    %c0_i32 = arith.constant 0 : i32
    return %arg2, %arg1 : i32, i32
  }
  func.func @transform_2(%arg0: i32, %arg1: i32, %arg2: i32) -> (i32, i32) {
    %c0_i32 = arith.constant 0 : i32
    %c0_i32_0 = arith.constant 0 : i32
    return %c0_i32, %arg1 : i32, i32
  }
  func.func @transform_3(%arg0: i32, %arg1: i32, %arg2: i32) -> (i32, i32) {
    %c0_i32 = arith.constant 0 : i32
    return %arg0, %arg1 : i32, i32
  }
}

module attributes {stable_mosaic.version = 11 : i64} {
  func.func @_matmul_bias_kernel(%arg0: i32, %arg1: i32, %arg2: i32, %arg3: memref<104x384xbf16, #tpu.memory_space<vmem>>, %arg4: memref<384x128xbf16, #tpu.memory_space<vmem>>, %arg5: memref<1x128xf32, #tpu.memory_space<vmem>>, %arg6: memref<104x128xf32, #tpu.memory_space<vmem>>, %arg7: memref<104x128xf32, #tpu.memory_space<vmem>>) attributes {dimension_semantics = [#tpu.dimension_semantics<parallel>, #tpu.dimension_semantics<parallel>, #tpu.dimension_semantics<arbitrary>], iteration_bounds = array<i64: 1, 1, 1>, scalar_prefetch = 0 : i64, scratch_operands = 1 : i64, tpu.core_type = #tpu.core_type<tc>, window_params = [{transform_indices = @transform_0, window_bounds = array<i64: 104, 384>}, {transform_indices = @transform_1, window_bounds = array<i64: 384, 128>}, {transform_indices = @transform_2, window_bounds = array<i64: 1, 128>}, {transform_indices = @transform_3, window_bounds = array<i64: 104, 128>}]} {
    %c0_i32 = arith.constant 0 : i32
    %0 = arith.cmpi eq, %arg2, %c0_i32 : i32
    %1 = arith.extui %0 : i1 to i32
    %c0_i32_0 = arith.constant 0 : i32
    %2 = arith.cmpi ne, %1, %c0_i32_0 : i32
    scf.if %2 {
      %cst_10 = arith.constant 0.000000e+00 : f32
      %12 = vector.broadcast %cst_10 : f32 to vector<104x128xf32>
      %c0_11 = arith.constant 0 : index
      %c0_12 = arith.constant 0 : index
      %13 = vector.load %arg7[%c0_11, %c0_12] : memref<104x128xf32, #tpu.memory_space<vmem>>, vector<104x128xf32>
      tpu.vector_store %arg7[%c0_11, %c0_12], %12 {strides = array<i32>} : memref<104x128xf32, #tpu.memory_space<vmem>>, vector<104x128xf32>,
    } else {
    }
    %c0 = arith.constant 0 : index
    %c0_1 = arith.constant 0 : index
    %3 = vector.load %arg7[%c0, %c0_1] : memref<104x128xf32, #tpu.memory_space<vmem>>, vector<104x128xf32>
    %c0_2 = arith.constant 0 : index
    %c0_3 = arith.constant 0 : index
    %4 = vector.load %arg3[%c0_2, %c0_3] : memref<104x384xbf16, #tpu.memory_space<vmem>>, vector<104x384xbf16>
    %c0_4 = arith.constant 0 : index
    %c0_5 = arith.constant 0 : index
    %5 = vector.load %arg4[%c0_4, %c0_5] : memref<384x128xbf16, #tpu.memory_space<vmem>>, vector<384x128xbf16>
    %cst = arith.constant dense<0.000000e+00> : vector<104x128xf32>
    %6 = tpu.matmul %4, %5, %cst {dimension_numbers = #tpu.dot_dimension_numbers<[1], [0], [0], [1], [0, 0, 1, 1], [], []>} : vector<104x384xbf16>, vector<384x128xbf16>, vector<104x128xf32> -> vector<104x128xf32>
    %7 = arith.addf %3, %6 : vector<104x128xf32>
    %c0_6 = arith.constant 0 : index
    %c0_7 = arith.constant 0 : index
    %8 = vector.load %arg7[%c0_6, %c0_7] : memref<104x128xf32, #tpu.memory_space<vmem>>, vector<104x128xf32>
    tpu.vector_store %arg7[%c0_6, %c0_7], %7 {strides = array<i32>} : memref<104x128xf32, #tpu.memory_space<vmem>>, vector<104x128xf32>,
    %c0_i32_8 = arith.constant 0 : i32
    %9 = arith.cmpi eq, %arg2, %c0_i32_8 : i32
    %10 = arith.extui %9 : i1 to i32
    %c0_i32_9 = arith.constant 0 : i32
    %11 = arith.cmpi ne, %10, %c0_i32_9 : i32
    scf.if %11 {
      %c0_10 = arith.constant 0 : index
      %c0_11 = arith.constant 0 : index
      %12 = vector.load %arg7[%c0_10, %c0_11] : memref<104x128xf32, #tpu.memory_space<vmem>>, vector<104x128xf32>
      %c0_12 = arith.constant 0 : index
      %c0_13 = arith.constant 0 : index
      %13 = vector.load %arg5[%c0_12, %c0_13] : memref<1x128xf32, #tpu.memory_space<vmem>>, vector<1x128xf32>
      %14 = vector.broadcast %13 : vector<1x128xf32> to vector<104x128xf32>
      %15 = arith.addf %12, %14 : vector<104x128xf32>
      %c0_14 = arith.constant 0 : index
      %c0_15 = arith.constant 0 : index
      %16 = vector.load %arg6[%c0_14, %c0_15] : memref<104x128xf32, #tpu.memory_space<vmem>>, vector<104x128xf32>
      tpu.vector_store %arg6[%c0_14, %c0_15], %15 {strides = array<i32>} : memref<104x128xf32, #tpu.memory_space<vmem>>, vector<104x128xf32>,
    } else {
    }
    return
  }
  func.func @transform_0(%arg0: i32, %arg1: i32, %arg2: i32) -> (i32, i32) {
    %c0_i32 = arith.constant 0 : i32
    return %arg0, %arg2 : i32, i32
  }
  func.func @transform_1(%arg0: i32, %arg1: i32, %arg2: i32) -> (i32, i32) {
    %c0_i32 = arith.constant 0 : i32
    return %arg2, %arg1 : i32, i32
  }
  func.func @transform_2(%arg0: i32, %arg1: i32, %arg2: i32) -> (i32, i32) {
    %c0_i32 = arith.constant 0 : i32
    %c0_i32_0 = arith.constant 0 : i32
    return %c0_i32, %arg1 : i32, i32
  }
  func.func @transform_3(%arg0: i32, %arg1: i32, %arg2: i32) -> (i32, i32) {
    %c0_i32 = arith.constant 0 : i32
    return %arg0, %arg1 : i32, i32
  }
}

module attributes {stable_mosaic.version = 11 : i64} {
  func.func @_in_act_kernel(%arg0: i32, %arg1: i32, %arg2: memref<1x49x16xf32, #tpu.memory_space<vmem>>, %arg3: memref<1x49x16xf32, #tpu.memory_space<vmem>>) attributes {dimension_semantics = [#tpu.dimension_semantics<parallel>, #tpu.dimension_semantics<parallel>], iteration_bounds = array<i64: 2, 1>, scalar_prefetch = 0 : i64, scratch_operands = 0 : i64, tpu.core_type = #tpu.core_type<tc>, window_params = [{transform_indices = @transform_0, window_bounds = array<i64: 1, 49, 16>}, {transform_indices = @transform_1, window_bounds = array<i64: 1, 49, 16>}]} {
    %c0 = arith.constant 0 : index
    %c0_0 = arith.constant 0 : index
    %c0_1 = arith.constant 0 : index
    %0 = vector.load %arg2[%c0, %c0_0, %c0_1] : memref<1x49x16xf32, #tpu.memory_space<vmem>>, vector<1x49x16xf32>
    %cst = arith.constant dense<0.000000e+00> : vector<1x16xf32>
    %1 = vector.multi_reduction <add>, %0, %cst [1] : vector<1x49x16xf32> to vector<1x16xf32>
    %2 = vector.shape_cast %1 : vector<1x16xf32> to vector<1x1x16xf32>
    %cst_2 = arith.constant 4.900000e+01 : f32
    %3 = vector.broadcast %cst_2 : f32 to vector<1x1x16xf32>
    %4 = arith.divf %2, %3 : vector<1x1x16xf32>
    %5 = vector.broadcast %4 : vector<1x1x16xf32> to vector<1x49x16xf32>
    %6 = arith.subf %0, %5 : vector<1x49x16xf32>
    %7 = arith.mulf %6, %6 : vector<1x49x16xf32>
    %cst_3 = arith.constant dense<0.000000e+00> : vector<1x16xf32>
    %8 = vector.multi_reduction <add>, %7, %cst_3 [1] : vector<1x49x16xf32> to vector<1x16xf32>
    %9 = vector.shape_cast %8 : vector<1x16xf32> to vector<1x1x16xf32>
    %cst_4 = arith.constant 4.900000e+01 : f32
    %10 = vector.broadcast %cst_4 : f32 to vector<1x1x16xf32>
    %11 = arith.divf %9, %10 : vector<1x1x16xf32>
    %12 = vector.broadcast %4 : vector<1x1x16xf32> to vector<1x49x16xf32>
    %13 = arith.subf %0, %12 : vector<1x49x16xf32>
    %cst_5 = arith.constant 9.99999974E-6 : f32
    %14 = vector.broadcast %cst_5 : f32 to vector<1x1x16xf32>
    %15 = arith.addf %11, %14 : vector<1x1x16xf32>
    %16 = math.rsqrt %15 : vector<1x1x16xf32>
    %17 = vector.broadcast %16 : vector<1x1x16xf32> to vector<1x49x16xf32>
    %18 = arith.mulf %13, %17 : vector<1x49x16xf32>
    %cst_6 = arith.constant 0.000000e+00 : f32
    %19 = vector.broadcast %cst_6 : f32 to vector<1x49x16xf32>
    %20 = arith.maximumf %18, %19 : vector<1x49x16xf32>
    %c0_7 = arith.constant 0 : index
    %c0_8 = arith.constant 0 : index
    %c0_9 = arith.constant 0 : index
    %21 = vector.load %arg3[%c0_7, %c0_8, %c0_9] : memref<1x49x16xf32, #tpu.memory_space<vmem>>, vector<1x49x16xf32>
    tpu.vector_store %arg3[%c0_7, %c0_8, %c0_9], %20 {strides = array<i32>} : memref<1x49x16xf32, #tpu.memory_space<vmem>>, vector<1x49x16xf32>,
    return
  }
  func.func @transform_0(%arg0: i32, %arg1: i32) -> (i32, i32, i32) {
    %c0_i32 = arith.constant 0 : i32
    %c0_i32_0 = arith.constant 0 : i32
    return %arg0, %c0_i32, %arg1 : i32, i32, i32
  }
  func.func @transform_1(%arg0: i32, %arg1: i32) -> (i32, i32, i32) {
    %c0_i32 = arith.constant 0 : i32
    %c0_i32_0 = arith.constant 0 : i32
    return %arg0, %c0_i32, %arg1 : i32, i32, i32
  }
}

module attributes {stable_mosaic.version = 11 : i64} {
  func.func @_in_act_kernel(%arg0: i32, %arg1: i32, %arg2: memref<1x169x8xf32, #tpu.memory_space<vmem>>, %arg3: memref<1x169x8xf32, #tpu.memory_space<vmem>>) attributes {dimension_semantics = [#tpu.dimension_semantics<parallel>, #tpu.dimension_semantics<parallel>], iteration_bounds = array<i64: 2, 1>, scalar_prefetch = 0 : i64, scratch_operands = 0 : i64, tpu.core_type = #tpu.core_type<tc>, window_params = [{transform_indices = @transform_0, window_bounds = array<i64: 1, 169, 8>}, {transform_indices = @transform_1, window_bounds = array<i64: 1, 169, 8>}]} {
    %c0 = arith.constant 0 : index
    %c0_0 = arith.constant 0 : index
    %c0_1 = arith.constant 0 : index
    %0 = vector.load %arg2[%c0, %c0_0, %c0_1] : memref<1x169x8xf32, #tpu.memory_space<vmem>>, vector<1x169x8xf32>
    %cst = arith.constant dense<0.000000e+00> : vector<1x8xf32>
    %1 = vector.multi_reduction <add>, %0, %cst [1] : vector<1x169x8xf32> to vector<1x8xf32>
    %2 = vector.shape_cast %1 : vector<1x8xf32> to vector<1x1x8xf32>
    %cst_2 = arith.constant 1.690000e+02 : f32
    %3 = vector.broadcast %cst_2 : f32 to vector<1x1x8xf32>
    %4 = arith.divf %2, %3 : vector<1x1x8xf32>
    %5 = vector.broadcast %4 : vector<1x1x8xf32> to vector<1x169x8xf32>
    %6 = arith.subf %0, %5 : vector<1x169x8xf32>
    %7 = arith.mulf %6, %6 : vector<1x169x8xf32>
    %cst_3 = arith.constant dense<0.000000e+00> : vector<1x8xf32>
    %8 = vector.multi_reduction <add>, %7, %cst_3 [1] : vector<1x169x8xf32> to vector<1x8xf32>
    %9 = vector.shape_cast %8 : vector<1x8xf32> to vector<1x1x8xf32>
    %cst_4 = arith.constant 1.690000e+02 : f32
    %10 = vector.broadcast %cst_4 : f32 to vector<1x1x8xf32>
    %11 = arith.divf %9, %10 : vector<1x1x8xf32>
    %12 = vector.broadcast %4 : vector<1x1x8xf32> to vector<1x169x8xf32>
    %13 = arith.subf %0, %12 : vector<1x169x8xf32>
    %cst_5 = arith.constant 9.99999974E-6 : f32
    %14 = vector.broadcast %cst_5 : f32 to vector<1x1x8xf32>
    %15 = arith.addf %11, %14 : vector<1x1x8xf32>
    %16 = math.rsqrt %15 : vector<1x1x8xf32>
    %17 = vector.broadcast %16 : vector<1x1x8xf32> to vector<1x169x8xf32>
    %18 = arith.mulf %13, %17 : vector<1x169x8xf32>
    %cst_6 = arith.constant 0.000000e+00 : f32
    %19 = vector.broadcast %cst_6 : f32 to vector<1x169x8xf32>
    %20 = arith.maximumf %18, %19 : vector<1x169x8xf32>
    %c0_7 = arith.constant 0 : index
    %c0_8 = arith.constant 0 : index
    %c0_9 = arith.constant 0 : index
    %21 = vector.load %arg3[%c0_7, %c0_8, %c0_9] : memref<1x169x8xf32, #tpu.memory_space<vmem>>, vector<1x169x8xf32>
    tpu.vector_store %arg3[%c0_7, %c0_8, %c0_9], %20 {strides = array<i32>} : memref<1x169x8xf32, #tpu.memory_space<vmem>>, vector<1x169x8xf32>,
    return
  }
  func.func @transform_0(%arg0: i32, %arg1: i32) -> (i32, i32, i32) {
    %c0_i32 = arith.constant 0 : i32
    %c0_i32_0 = arith.constant 0 : i32
    return %arg0, %c0_i32, %arg1 : i32, i32, i32
  }
  func.func @transform_1(%arg0: i32, %arg1: i32) -> (i32, i32, i32) {
    %c0_i32 = arith.constant 0 : i32
    %c0_i32_0 = arith.constant 0 : i32
    return %arg0, %c0_i32, %arg1 : i32, i32, i32
  }
}

module attributes {stable_mosaic.version = 11 : i64} {
  func.func @_matmul_bias_kernel(%arg0: i32, %arg1: i32, %arg2: i32, %arg3: memref<256x512xbf16, #tpu.memory_space<vmem>>, %arg4: memref<512x128xbf16, #tpu.memory_space<vmem>>, %arg5: memref<1x128xf32, #tpu.memory_space<vmem>>, %arg6: memref<256x128xf32, #tpu.memory_space<vmem>>, %arg7: memref<256x128xf32, #tpu.memory_space<vmem>>) attributes {dimension_semantics = [#tpu.dimension_semantics<parallel>, #tpu.dimension_semantics<parallel>, #tpu.dimension_semantics<arbitrary>], iteration_bounds = array<i64: 2, 1, 1>, scalar_prefetch = 0 : i64, scratch_operands = 1 : i64, tpu.core_type = #tpu.core_type<tc>, window_params = [{transform_indices = @transform_0, window_bounds = array<i64: 256, 512>}, {transform_indices = @transform_1, window_bounds = array<i64: 512, 128>}, {transform_indices = @transform_2, window_bounds = array<i64: 1, 128>}, {transform_indices = @transform_3, window_bounds = array<i64: 256, 128>}]} {
    %c0_i32 = arith.constant 0 : i32
    %0 = arith.cmpi eq, %arg2, %c0_i32 : i32
    %1 = arith.extui %0 : i1 to i32
    %c0_i32_0 = arith.constant 0 : i32
    %2 = arith.cmpi ne, %1, %c0_i32_0 : i32
    scf.if %2 {
      %cst_10 = arith.constant 0.000000e+00 : f32
      %12 = vector.broadcast %cst_10 : f32 to vector<256x128xf32>
      %c0_11 = arith.constant 0 : index
      %c0_12 = arith.constant 0 : index
      %13 = vector.load %arg7[%c0_11, %c0_12] : memref<256x128xf32, #tpu.memory_space<vmem>>, vector<256x128xf32>
      tpu.vector_store %arg7[%c0_11, %c0_12], %12 {strides = array<i32>} : memref<256x128xf32, #tpu.memory_space<vmem>>, vector<256x128xf32>,
    } else {
    }
    %c0 = arith.constant 0 : index
    %c0_1 = arith.constant 0 : index
    %3 = vector.load %arg7[%c0, %c0_1] : memref<256x128xf32, #tpu.memory_space<vmem>>, vector<256x128xf32>
    %c0_2 = arith.constant 0 : index
    %c0_3 = arith.constant 0 : index
    %4 = vector.load %arg3[%c0_2, %c0_3] : memref<256x512xbf16, #tpu.memory_space<vmem>>, vector<256x512xbf16>
    %c0_4 = arith.constant 0 : index
    %c0_5 = arith.constant 0 : index
    %5 = vector.load %arg4[%c0_4, %c0_5] : memref<512x128xbf16, #tpu.memory_space<vmem>>, vector<512x128xbf16>
    %cst = arith.constant dense<0.000000e+00> : vector<256x128xf32>
    %6 = tpu.matmul %4, %5, %cst {dimension_numbers = #tpu.dot_dimension_numbers<[1], [0], [0], [1], [0, 0, 1, 1], [], []>} : vector<256x512xbf16>, vector<512x128xbf16>, vector<256x128xf32> -> vector<256x128xf32>
    %7 = arith.addf %3, %6 : vector<256x128xf32>
    %c0_6 = arith.constant 0 : index
    %c0_7 = arith.constant 0 : index
    %8 = vector.load %arg7[%c0_6, %c0_7] : memref<256x128xf32, #tpu.memory_space<vmem>>, vector<256x128xf32>
    tpu.vector_store %arg7[%c0_6, %c0_7], %7 {strides = array<i32>} : memref<256x128xf32, #tpu.memory_space<vmem>>, vector<256x128xf32>,
    %c0_i32_8 = arith.constant 0 : i32
    %9 = arith.cmpi eq, %arg2, %c0_i32_8 : i32
    %10 = arith.extui %9 : i1 to i32
    %c0_i32_9 = arith.constant 0 : i32
    %11 = arith.cmpi ne, %10, %c0_i32_9 : i32
    scf.if %11 {
      %c0_10 = arith.constant 0 : index
      %c0_11 = arith.constant 0 : index
      %12 = vector.load %arg7[%c0_10, %c0_11] : memref<256x128xf32, #tpu.memory_space<vmem>>, vector<256x128xf32>
      %c0_12 = arith.constant 0 : index
      %c0_13 = arith.constant 0 : index
      %13 = vector.load %arg5[%c0_12, %c0_13] : memref<1x128xf32, #tpu.memory_space<vmem>>, vector<1x128xf32>
      %14 = vector.broadcast %13 : vector<1x128xf32> to vector<256x128xf32>
      %15 = arith.addf %12, %14 : vector<256x128xf32>
      %c0_14 = arith.constant 0 : index
      %c0_15 = arith.constant 0 : index
      %16 = vector.load %arg6[%c0_14, %c0_15] : memref<256x128xf32, #tpu.memory_space<vmem>>, vector<256x128xf32>
      tpu.vector_store %arg6[%c0_14, %c0_15], %15 {strides = array<i32>} : memref<256x128xf32, #tpu.memory_space<vmem>>, vector<256x128xf32>,
    } else {
    }
    return
  }
  func.func @transform_0(%arg0: i32, %arg1: i32, %arg2: i32) -> (i32, i32) {
    %c0_i32 = arith.constant 0 : i32
    return %arg0, %arg2 : i32, i32
  }
  func.func @transform_1(%arg0: i32, %arg1: i32, %arg2: i32) -> (i32, i32) {
    %c0_i32 = arith.constant 0 : i32
    return %arg2, %arg1 : i32, i32
  }
  func.func @transform_2(%arg0: i32, %arg1: i32, %arg2: i32) -> (i32, i32) {
    %c0_i32 = arith.constant 0 : i32
    %c0_i32_0 = arith.constant 0 : i32
    return %c0_i32, %arg1 : i32, i32
  }
  func.func @transform_3(%arg0: i32, %arg1: i32, %arg2: i32) -> (i32, i32) {
    %c0_i32 = arith.constant 0 : i32
    return %arg0, %arg1 : i32, i32
  }
}

module attributes {stable_mosaic.version = 11 : i64} {
  func.func @_in_act_kernel(%arg0: i32, %arg1: i32, %arg2: memref<1x169x3xf32, #tpu.memory_space<vmem>>, %arg3: memref<1x169x3xf32, #tpu.memory_space<vmem>>) attributes {dimension_semantics = [#tpu.dimension_semantics<parallel>, #tpu.dimension_semantics<parallel>], iteration_bounds = array<i64: 2, 1>, scalar_prefetch = 0 : i64, scratch_operands = 0 : i64, tpu.core_type = #tpu.core_type<tc>, window_params = [{transform_indices = @transform_0, window_bounds = array<i64: 1, 169, 3>}, {transform_indices = @transform_1, window_bounds = array<i64: 1, 169, 3>}]} {
    %c0 = arith.constant 0 : index
    %c0_0 = arith.constant 0 : index
    %c0_1 = arith.constant 0 : index
    %0 = vector.load %arg2[%c0, %c0_0, %c0_1] : memref<1x169x3xf32, #tpu.memory_space<vmem>>, vector<1x169x3xf32>
    %cst = arith.constant dense<0.000000e+00> : vector<1x3xf32>
    %1 = vector.multi_reduction <add>, %0, %cst [1] : vector<1x169x3xf32> to vector<1x3xf32>
    %2 = vector.shape_cast %1 : vector<1x3xf32> to vector<1x1x3xf32>
    %cst_2 = arith.constant 1.690000e+02 : f32
    %3 = vector.broadcast %cst_2 : f32 to vector<1x1x3xf32>
    %4 = arith.divf %2, %3 : vector<1x1x3xf32>
    %5 = vector.broadcast %4 : vector<1x1x3xf32> to vector<1x169x3xf32>
    %6 = arith.subf %0, %5 : vector<1x169x3xf32>
    %7 = arith.mulf %6, %6 : vector<1x169x3xf32>
    %cst_3 = arith.constant dense<0.000000e+00> : vector<1x3xf32>
    %8 = vector.multi_reduction <add>, %7, %cst_3 [1] : vector<1x169x3xf32> to vector<1x3xf32>
    %9 = vector.shape_cast %8 : vector<1x3xf32> to vector<1x1x3xf32>
    %cst_4 = arith.constant 1.690000e+02 : f32
    %10 = vector.broadcast %cst_4 : f32 to vector<1x1x3xf32>
    %11 = arith.divf %9, %10 : vector<1x1x3xf32>
    %12 = vector.broadcast %4 : vector<1x1x3xf32> to vector<1x169x3xf32>
    %13 = arith.subf %0, %12 : vector<1x169x3xf32>
    %cst_5 = arith.constant 9.99999974E-6 : f32
    %14 = vector.broadcast %cst_5 : f32 to vector<1x1x3xf32>
    %15 = arith.addf %11, %14 : vector<1x1x3xf32>
    %16 = math.rsqrt %15 : vector<1x1x3xf32>
    %17 = vector.broadcast %16 : vector<1x1x3xf32> to vector<1x169x3xf32>
    %18 = arith.mulf %13, %17 : vector<1x169x3xf32>
    %19 = math.tanh %18 : vector<1x169x3xf32>
    %c0_6 = arith.constant 0 : index
    %c0_7 = arith.constant 0 : index
    %c0_8 = arith.constant 0 : index
    %20 = vector.load %arg3[%c0_6, %c0_7, %c0_8] : memref<1x169x3xf32, #tpu.memory_space<vmem>>, vector<1x169x3xf32>
    tpu.vector_store %arg3[%c0_6, %c0_7, %c0_8], %19 {strides = array<i32>} : memref<1x169x3xf32, #tpu.memory_space<vmem>>, vector<1x169x3xf32>,
    return
  }
  func.func @transform_0(%arg0: i32, %arg1: i32) -> (i32, i32, i32) {
    %c0_i32 = arith.constant 0 : i32
    %c0_i32_0 = arith.constant 0 : i32
    return %arg0, %c0_i32, %arg1 : i32, i32, i32
  }
  func.func @transform_1(%arg0: i32, %arg1: i32) -> (i32, i32, i32) {
    %c0_i32 = arith.constant 0 : i32
    %c0_i32_0 = arith.constant 0 : i32
    return %arg0, %c0_i32, %arg1 : i32, i32, i32
  }
}

</mosaic_0001>

<llo_original>
// kernel: resnet_generator_forward.49
$region0: #{resnet_generator_forward.49}
  #allocation0 [shape = 'u32[]', space=smem, size = 0x4, offset = 0x4, fixed_abs, tag = 'smem constant byte address 0x4 - core index']
  #allocation1 [shape = 'u32[72,128]{1,0:T(1,128)}', space=vmem, size = 0x9000, scoped, tag = 'internal scratch']
  %s0 = inlined_call_operand.vmem [shape: f32[2,256,8], index: 0, kind: input, shape index: {}]
  %s1 = inlined_call_operand.vmem [shape: f32[2,256,8], index: 1, kind: output, shape index: {}]
  %s2 = sld [smem:[#allocation0]]
  $region37: #{resnet_generator_forward.49} parent=0
    _
  %s4 = ssub.s32 1, %s2
  %s5 = scalar_select 0, %s4, %s2
  loop: start=0, step=1, limit=4
  $region2: #{resnet_generator_forward.49} parent=0 // loop_pre_header
    _
  $region3: #{resnet_generator_forward.49} parent=0 // loop_header
    %s7 = sphi 0, %s11
    %p8 = scmp.ge.s32.totalorder %s7, 4
    %s14 = sphi 0, %s26
    %s15 = sphi 0, %s22
    %s16 = sphi 0, %s14
    %s17 = sphi 0, %s15
    %s18 = sphi 0, %s16
    %s19 = sphi 0, %s17
    %s31 = sphi 0, %s33
    %s34 = sphi 0, %s31
    %s35 = sphi 0, %s34
    %s51 = sphi 0, %s35
    %s59 = sphi 0, %s61
    %s62 = sphi 0, %s59
    %s63 = sphi 0, %s62
    %s79 = sphi 0, %s63
  $region4: #{resnet_generator_forward.49} parent=0 // loop_header_branch
    %10 = sbr.rel (%p8) target = $region8
  $region5: #{resnet_generator_forward.49} parent=0 // loop_body
    %s12 = ssub.s32 %s7, 1
    %s13 = ssub.s32 %s7, 2
    %s20 = sadd.s32 1, %s15
    %p21 = scmp.ge.s32.totalorder %s20, 1
    %s22 = scalar_select %p21, 0, %s20
    %s23 = sadd.s32 1, %s14
    %s24 = scalar_select %p21, %s23, %s14
    %p25 = scmp.ge.s32.totalorder %s24, 2
    %s26 = scalar_select %p25, 0, %s24
    %s27 = ssub.s32 %s14, %s26
    %s28 = ssub.s32 %s15, %s22
    %s29 = sor.u32 %s27, %s28
    %p30 = scmp.eq.s32.totalorder %s29, 0
    %s32 = sadd.s32 %s31, 1
    %s33 = scalar_select %p30, %s31, %s32
    %p36 = pneg %p30
    %p37 = scmp.eq.s32.totalorder %s7, 1
    %p38 = por %p36, %p37
    %p39 = scmp.ne.s32.totalorder %s31, %s34
    %p40 = scmp.eq.s32.totalorder %s7, 0
    %p41 = por %p39, %p40
    %p42 = scmp.ne.s32.totalorder %s31, %s34
    %p43 = scmp.eq.s32.totalorder %s12, 1
    %p44 = por %p42, %p43
    %p45 = scmp.ne.s32.totalorder %s34, %s35
    %p46 = scmp.eq.s32.totalorder %s12, 0
    %p47 = por %p45, %p46
    %p48 = scmp.ne.s32.totalorder %s34, %s35
    %p49 = scmp.eq.s32.totalorder %s13, 1
    %p50 = por %p48, %p49
    %p52 = scmp.ne.s32.totalorder %s35, %s51
    %p53 = scmp.eq.s32.totalorder %s13, 0
    %p54 = por %p52, %p53
    %s55 = ssub.s32 %s14, %s26
    %s56 = ssub.s32 %s15, %s22
    %s57 = sor.u32 %s55, %s56
    %p58 = scmp.eq.s32.totalorder %s57, 0
    %s60 = sadd.s32 %s59, 1
    %s61 = scalar_select %p58, %s59, %s60
    %p64 = pneg %p58
    %p65 = scmp.eq.s32.totalorder %s7, 1
    %p66 = por %p64, %p65
    %p67 = scmp.ne.s32.totalorder %s59, %s62
    %p68 = scmp.eq.s32.totalorder %s7, 0
    %p69 = por %p67, %p68
    %p70 = scmp.ne.s32.totalorder %s59, %s62
    %p71 = scmp.eq.s32.totalorder %s12, 1
    %p72 = por %p70, %p71
    %p73 = scmp.ne.s32.totalorder %s62, %s63
    %p74 = scmp.eq.s32.totalorder %s12, 0
    %p75 = por %p73, %p74
    %p76 = scmp.ne.s32.totalorder %s62, %s63
    %p77 = scmp.eq.s32.totalorder %s13, 1
    %p78 = por %p76, %p77
    %p80 = scmp.ne.s32.totalorder %s63, %s79
    %p81 = scmp.eq.s32.totalorder %s13, 0
    %p82 = por %p80, %p81
    %p83 = scmp.le.s32.totalorder 1, %s7
    %p84 = scmp.lt.s32.totalorder %s7, 3
    %p85 = pnand %p83, %p84
    %p86 = pneg %p85
    // Predicated region
    $region9: #{resnet_generator_forward.49} parent=5 // pred_check
      _
    $region10: #{resnet_generator_forward.49} parent=5 // pred_check_branch
      %88 = sbr.rel (%p85) target = $region12
    $region11: #{resnet_generator_forward.49} parent=5 // pred_region
      %s89 = ssub.s32 %s7, 1
    $region12: #{resnet_generator_forward.49} parent=5 // pred_fallthru
      _
    %p90 = scmp.lt.s32.totalorder %s7, 2
    // Predicated region
    $region13: #{resnet_generator_forward.49} parent=5 // pred_check
      %p91 = pneg %p90
    $region14: #{resnet_generator_forward.49} parent=5 // pred_check_branch
      %93 = sbr.rel (%p91) target = $region16
    $region15: #{resnet_generator_forward.49} parent=5 // pred_region
      // Predicated region
      $region17: #{resnet_generator_forward.49} parent=15 // pred_check
        %p94 = pneg %p41
      $region18: #{resnet_generator_forward.49} parent=15 // pred_check_branch
        %96 = sbr.rel (%p94) target = $region20
      $region19: #{resnet_generator_forward.49} parent=15 // pred_region
        %p97 = scmp.lt.s32.totalorder %s14, 1
        %s98 = scalar_select %p97, %s14, 1
        %p99 = scmp.lt.s32.totalorder %s15, 0
        %s100 = scalar_select %p99, %s15, 0
        %s101 = smul.addr %s98, 32
        %s102 = sadd.s32 %s100, %s101
        %s103 = smul.addr %s102, 8
        %s104 = scalar_lea.vmem %s0, %s103
      $region20: #{resnet_generator_forward.49} parent=15 // pred_fallthru
        _
    $region16: #{resnet_generator_forward.49} parent=5 // pred_fallthru
      _
    %p105 = scmp.le.s32.totalorder 1, %s7
    %p106 = scmp.lt.s32.totalorder %s7, 3
    %p107 = pnand %p105, %p106
    %p108 = pneg %p107
    // Predicated region
    $region21: #{resnet_generator_forward.49} parent=5 // pred_check
      _
    $region22: #{resnet_generator_forward.49} parent=5 // pred_check_branch
      %110 = sbr.rel (%p107) target = $region24
    $region23: #{resnet_generator_forward.49} parent=5 // pred_region
      %s111 = ssub.s32 %s7, 1
      %p112 = scmp.lt.s32.totalorder %s16, 1
      %s113 = scalar_select %p112, %s16, 1
      %p114 = scmp.lt.s32.totalorder %s17, 0
      %s115 = scalar_select %p114, %s17, 0
      %s116 = smul.addr %s113, 32
      %s117 = sadd.s32 %s115, %s116
      %s118 = smul.addr %s117, 8
      %s119 = scalar_lea.vmem %s0, %s118
      %p120 = pneg %p47
      %p121 = pneg %p44
      %p122 = pneg %p75
      %p123 = pneg %p72
      %p124 = scmp.lt.s32.totalorder %s16, 1
      %s125 = scalar_select %p124, %s16, 1
      %p126 = scmp.lt.s32.totalorder %s17, 0
      %s127 = scalar_select %p126, %s17, 0
      %s128 = smul.addr %s125, 32
      %s129 = sadd.s32 %s127, %s128
      %s130 = smul.addr %s129, 8
      %s131 = scalar_lea.vmem %s1, %s130
      %p132 = scmp.lt.s32.totalorder %s16, 1
      %s133 = scalar_select %p132, %s16, 1
      %p134 = scmp.lt.s32.totalorder %s17, 0
      %s135 = scalar_select %p134, %s17, 0
      %s136 = smul.addr %s133, 32
      %s137 = sadd.s32 %s135, %s136
      %s138 = smul.addr %s137, 8
      %s139 = scalar_lea.vmem %s0, %s138
      %p140 = scmp.lt.s32.totalorder %s16, 1
      %s141 = scalar_select %p140, %s16, 1
      %p142 = scmp.lt.s32.totalorder %s17, 0
      %s143 = scalar_select %p142, %s17, 0
      %s144 = smul.addr %s141, 32
      %s145 = sadd.s32 %s143, %s144
      %s146 = smul.addr %s145, 8
      %s147 = scalar_lea.vmem %s1, %s146
      %v148 = vld [vmem:[%s139] sm:$0xff]
      %v149 = vld [vmem:[%s139 + $0x8] sm:$0xff]
      %v150 = vld [vmem:[%s139 + $0x10] sm:$0xff]
      %v151 = vld [vmem:[%s139 + $0x18] sm:$0xff]
      %v152 = vld [vmem:[%s139 + $0x20] sm:$0xff]
      %v153 = vld [vmem:[%s139 + $0x28] sm:$0xff]
      %v154 = vld [vmem:[%s139 + $0x30] sm:$0xff]
      %v155 = vld [vmem:[%s139 + $0x38] sm:$0xff]
      %v156 = vld [vmem:[%s139 + $0x40] sm:$0xff]
      %v157 = vld [vmem:[%s139 + $0x48] sm:$0xff]
      %v158 = vld [vmem:[%s139 + $0x50] sm:$0xff]
      %v159 = vld [vmem:[%s139 + $0x58] sm:$0xff]
      %v160 = vld [vmem:[%s139 + $0x60] sm:$0xff]
      %v161 = vld [vmem:[%s139 + $0x68] sm:$0xff]
      %v162 = vld [vmem:[%s139 + $0x70] sm:$0xff]
      %v163 = vld [vmem:[%s139 + $0x78] sm:$0xff]
      %v164 = vld [vmem:[%s139 + $0x80] sm:$0xff]
      %v165 = vld [vmem:[%s139 + $0x88] sm:$0xff]
      %v166 = vld [vmem:[%s139 + $0x90] sm:$0xff]
      %v167 = vld [vmem:[%s139 + $0x98] sm:$0xff]
      %v168 = vld [vmem:[%s139 + $0xa0] sm:$0xff]
      %v169 = vld [vmem:[%s139 + $0xa8] sm:$0xff]
      %v170 = vld [vmem:[%s139 + $0xb0] sm:$0xff]
      %v171 = vld [vmem:[%s139 + $0xb8] sm:$0xff]
      %v172 = vld [vmem:[%s139 + $0xc0] sm:$0xff]
      %v173 = vld [vmem:[%s139 + $0xc8] sm:$0xff]
      %v174 = vld [vmem:[%s139 + $0xd0] sm:$0xff]
      %v175 = vld [vmem:[%s139 + $0xd8] sm:$0xff]
      %v176 = vld [vmem:[%s139 + $0xe0] sm:$0xff]
      %v177 = vld [vmem:[%s139 + $0xe8] sm:$0xff]
      %v178 = vld [vmem:[%s139 + $0xf0] sm:$0xff]
      %v179 = vld [vmem:[%s139 + $0xf8] sm:$0xff]
      %vm180 = vcmask 64512
      %v181 = vsel %vm180, %v148, 0.0
      %v182 = vsel %vm180, %v149, 0.0
      %v183 = vadd.f32 %v181, %v182
      %v184 = vsel %vm180, %v150, 0.0
      %v185 = vadd.f32 %v183, %v184
      %v186 = vsel %vm180, %v151, 0.0
      %v187 = vadd.f32 %v185, %v186
      %v188 = vsel %vm180, %v152, 0.0
      %v189 = vadd.f32 %v187, %v188
      %v190 = vsel %vm180, %v153, 0.0
      %v191 = vadd.f32 %v189, %v190
      %v192 = vsel %vm180, %v154, 0.0
      %v193 = vadd.f32 %v191, %v192
      %v194 = vsel %vm180, %v155, 0.0
      %v195 = vadd.f32 %v193, %v194
      %v196 = vsel %vm180, %v156, 0.0
      %v197 = vadd.f32 %v195, %v196
      %v198 = vsel %vm180, %v157, 0.0
      %v199 = vadd.f32 %v197, %v198
      %v200 = vsel %vm180, %v158, 0.0
      %v201 = vadd.f32 %v199, %v200
      %v202 = vsel %vm180, %v159, 0.0
      %v203 = vadd.f32 %v201, %v202
      %v204 = vsel %vm180, %v160, 0.0
      %v205 = vadd.f32 %v203, %v204
      %v206 = vsel %vm180, %v161, 0.0
      %v207 = vadd.f32 %v205, %v206
      %v208 = vsel %vm180, %v162, 0.0
      %v209 = vadd.f32 %v207, %v208
      %v210 = vsel %vm180, %v163, 0.0
      %v211 = vadd.f32 %v209, %v210
      %v212 = vsel %vm180, %v164, 0.0
      %v213 = vadd.f32 %v211, %v212
      %v214 = vsel %vm180, %v165, 0.0
      %v215 = vadd.f32 %v213, %v214
      %v216 = vsel %vm180, %v166, 0.0
      %v217 = vadd.f32 %v215, %v216
      %v218 = vsel %vm180, %v167, 0.0
      %v219 = vadd.f32 %v217, %v218
      %v220 = vsel %vm180, %v168, 0.0
      %v221 = vadd.f32 %v219, %v220
      %v222 = vsel %vm180, %v169, 0.0
      %v223 = vadd.f32 %v221, %v222
      %v224 = vsel %vm180, %v170, 0.0
      %v225 = vadd.f32 %v223, %v224
      %v226 = vsel %vm180, %v171, 0.0
      %v227 = vadd.f32 %v225, %v226
      %v228 = vsel %vm180, %v172, 0.0
      %v229 = vadd.f32 %v227, %v228
      %v230 = vsel %vm180, %v173, 0.0
      %v231 = vadd.f32 %v229, %v230
      %v232 = vsel %vm180, %v174, 0.0
      %v233 = vadd.f32 %v231, %v232
      %v234 = vsel %vm180, %v175, 0.0
      %v235 = vadd.f32 %v233, %v234
      %v236 = vsel %vm180, %v176, 0.0
      %v237 = vadd.f32 %v235, %v236
      %v238 = vsel %vm180, %v177, 0.0
      %v239 = vadd.f32 %v237, %v238
      %v240 = vsel %vm180, %v178, 0.0
      %v241 = vadd.f32 %v239, %v240
      %v242 = vsel %vm180, %v179, 0.0
      %v243 = vadd.f32 %v241, %v242
      %v244 = vrot.slane %v243, 4
      %v245 = vadd.f32 %v243, %v244
      %v246 = vrot.slane %v245, 2
      %v247 = vadd.f32 %v245, %v246
      %v248 = vrot.slane %v247, 1
      %v249 = vadd.f32 %v247, %v248
      %v250 = vrcp.pop 256.0
      %v251 = vmul.f32 256.0, %v250
      %v252 = vsub.f32 1.0, %v251
      %v253 = vmul.f32 %v250, %v252
      %v254 = vadd.f32 %v250, %v253
      %vm255 = vweird.f32 %v250
      %v256 = vsel %vm255, %v250, %v254
      %v257 = vmul.f32 %v249, %v256
      %v258 = vsub.f32 %v148, %v257
      %v259 = vsub.f32 %v149, %v257
      %v260 = vsub.f32 %v150, %v257
      %v261 = vsub.f32 %v151, %v257
      %v262 = vsub.f32 %v152, %v257
      %v263 = vsub.f32 %v153, %v257
      %v264 = vsub.f32 %v154, %v257
      %v265 = vsub.f32 %v155, %v257
      %v266 = vsub.f32 %v156, %v257
      %v267 = vsub.f32 %v157, %v257
      %v268 = vsub.f32 %v158, %v257
      %v269 = vsub.f32 %v159, %v257
      %v270 = vsub.f32 %v160, %v257
      %v271 = vsub.f32 %v161, %v257
      %v272 = vsub.f32 %v162, %v257
      %v273 = vsub.f32 %v163, %v257
      %v274 = vsub.f32 %v164, %v257
      %v275 = vsub.f32 %v165, %v257
      %v276 = vsub.f32 %v166, %v257
      %v277 = vsub.f32 %v167, %v257
      %v278 = vsub.f32 %v168, %v257
      %v279 = vsub.f32 %v169, %v257
      %v280 = vsub.f32 %v170, %v257
      %v281 = vsub.f32 %v171, %v257
      %v282 = vsub.f32 %v172, %v257
      %v283 = vsub.f32 %v173, %v257
      %v284 = vsub.f32 %v174, %v257
      %v285 = vsub.f32 %v175, %v257
      %v286 = vsub.f32 %v176, %v257
      %v287 = vsub.f32 %v177, %v257
      %v288 = vsub.f32 %v178, %v257
      %v289 = vsub.f32 %v179, %v257
      %v290 = vmul.f32 %v258, %v258
      %v291 = vmul.f32 %v259, %v259
      %v292 = vmul.f32 %v260, %v260
      %v293 = vmul.f32 %v261, %v261
      %v294 = vmul.f32 %v262, %v262
      %v295 = vmul.f32 %v263, %v263
      %v296 = vmul.f32 %v264, %v264
      %v297 = vmul.f32 %v265, %v265
      %v298 = vmul.f32 %v266, %v266
      %v299 = vmul.f32 %v267, %v267
      %v300 = vmul.f32 %v268, %v268
      %v301 = vmul.f32 %v269, %v269
      %v302 = vmul.f32 %v270, %v270
      %v303 = vmul.f32 %v271, %v271
      %v304 = vmul.f32 %v272, %v272
      %v305 = vmul.f32 %v273, %v273
      %v306 = vmul.f32 %v274, %v274
      %v307 = vmul.f32 %v275, %v275
      %v308 = vmul.f32 %v276, %v276
      %v309 = vmul.f32 %v277, %v277
      %v310 = vmul.f32 %v278, %v278
      %v311 = vmul.f32 %v279, %v279
      %v312 = vmul.f32 %v280, %v280
      %v313 = vmul.f32 %v281, %v281
      %v314 = vmul.f32 %v282, %v282
      %v315 = vmul.f32 %v283, %v283
      %v316 = vmul.f32 %v284, %v284
      %v317 = vmul.f32 %v285, %v285
      %v318 = vmul.f32 %v286, %v286
      %v319 = vmul.f32 %v287, %v287
      %v320 = vmul.f32 %v288, %v288
      %v321 = vmul.f32 %v289, %v289
      %v322 = vsel %vm180, %v290, 0.0
      %v323 = vsel %vm180, %v291, 0.0
      %v324 = vadd.f32 %v322, %v323
      %v325 = vsel %vm180, %v292, 0.0
      %v326 = vadd.f32 %v324, %v325
      %v327 = vsel %vm180, %v293, 0.0
      %v328 = vadd.f32 %v326, %v327
      %v329 = vsel %vm180, %v294, 0.0
      %v330 = vadd.f32 %v328, %v329
      %v331 = vsel %vm180, %v295, 0.0
      %v332 = vadd.f32 %v330, %v331
      %v333 = vsel %vm180, %v296, 0.0
      %v334 = vadd.f32 %v332, %v333
      %v335 = vsel %vm180, %v297, 0.0
      %v336 = vadd.f32 %v334, %v335
      %v337 = vsel %vm180, %v298, 0.0
      %v338 = vadd.f32 %v336, %v337
      %v339 = vsel %vm180, %v299, 0.0
      %v340 = vadd.f32 %v338, %v339
      %v341 = vsel %vm180, %v300, 0.0
      %v342 = vadd.f32 %v340, %v341
      %v343 = vsel %vm180, %v301, 0.0
      %v344 = vadd.f32 %v342, %v343
      %v345 = vsel %vm180, %v302, 0.0
      %v346 = vadd.f32 %v344, %v345
      %v347 = vsel %vm180, %v303, 0.0
      %v348 = vadd.f32 %v346, %v347
      %v349 = vsel %vm180, %v304, 0.0
      %v350 = vadd.f32 %v348, %v349
      %v351 = vsel %vm180, %v305, 0.0
      %v352 = vadd.f32 %v350, %v351
      %v353 = vsel %vm180, %v306, 0.0
      %v354 = vadd.f32 %v352, %v353
      %v355 = vsel %vm180, %v307, 0.0
      %v356 = vadd.f32 %v354, %v355
      %v357 = vsel %vm180, %v308, 0.0
      %v358 = vadd.f32 %v356, %v357
      %v359 = vsel %vm180, %v309, 0.0
      %v360 = vadd.f32 %v358, %v359
      %v361 = vsel %vm180, %v310, 0.0
      %v362 = vadd.f32 %v360, %v361
      %v363 = vsel %vm180, %v311, 0.0
      %v364 = vadd.f32 %v362, %v363
      %v365 = vsel %vm180, %v312, 0.0
      %v366 = vadd.f32 %v364, %v365
      %v367 = vsel %vm180, %v313, 0.0
      %v368 = vadd.f32 %v366, %v367
      %v369 = vsel %vm180, %v314, 0.0
      %v370 = vadd.f32 %v368, %v369
      %v371 = vsel %vm180, %v315, 0.0
      %v372 = vadd.f32 %v370, %v371
      %v373 = vsel %vm180, %v316, 0.0
      %v374 = vadd.f32 %v372, %v373
      %v375 = vsel %vm180, %v317, 0.0
      %v376 = vadd.f32 %v374, %v375
      %v377 = vsel %vm180, %v318, 0.0
      %v378 = vadd.f32 %v376, %v377
      %v379 = vsel %vm180, %v319, 0.0
      %v380 = vadd.f32 %v378, %v379
      %v381 = vsel %vm180, %v320, 0.0
      %v382 = vadd.f32 %v380, %v381
      %v383 = vsel %vm180, %v321, 0.0
      %v384 = vadd.f32 %v382, %v383
      %v385 = vrot.slane %v384, 4
      %v386 = vadd.f32 %v384, %v385
      %v387 = vrot.slane %v386, 2
      %v388 = vadd.f32 %v386, %v387
      %v389 = vrot.slane %v388, 1
      %v390 = vadd.f32 %v388, %v389
      %v391 = vmul.f32 %v390, %v256
      %v392 = vadd.f32 %v391, 1e-05
      %v393 = vrsqrt.pop %v392
      %v394 = vmul.f32 %v393, %v392
      %v395 = vmul.f32 %v394, %v393
      %v396 = vmul.f32 0.5, %v395
      %v397 = vsub.f32 1.5, %v396
      %v398 = vmul.f32 %v393, %v397
      %vm399 = vweird.f32 %v392
      %vm400 = vweird.f32 %v393
      %vm401 = vmor %vm399, %vm400
      %v402 = vsel %vm401, %v393, %v398
      %v403 = vmul.f32 %v258, %v402
      %v404 = vmul.f32 %v259, %v402
      %v405 = vmul.f32 %v260, %v402
      %v406 = vmul.f32 %v261, %v402
      %v407 = vmul.f32 %v262, %v402
      %v408 = vmul.f32 %v263, %v402
      %v409 = vmul.f32 %v264, %v402
      %v410 = vmul.f32 %v265, %v402
      %v411 = vmul.f32 %v266, %v402
      %v412 = vmul.f32 %v267, %v402
      %v413 = vmul.f32 %v268, %v402
      %v414 = vmul.f32 %v269, %v402
      %v415 = vmul.f32 %v270, %v402
      %v416 = vmul.f32 %v271, %v402
      %v417 = vmul.f32 %v272, %v402
      %v418 = vmul.f32 %v273, %v402
      %v419 = vmul.f32 %v274, %v402
      %v420 = vmul.f32 %v275, %v402
      %v421 = vmul.f32 %v276, %v402
      %v422 = vmul.f32 %v277, %v402
      %v423 = vmul.f32 %v278, %v402
      %v424 = vmul.f32 %v279, %v402
      %v425 = vmul.f32 %v280, %v402
      %v426 = vmul.f32 %v281, %v402
      %v427 = vmul.f32 %v282, %v402
      %v428 = vmul.f32 %v283, %v402
      %v429 = vmul.f32 %v284, %v402
      %v430 = vmul.f32 %v285, %v402
      %v431 = vmul.f32 %v286, %v402
      %v432 = vmul.f32 %v287, %v402
      %v433 = vmul.f32 %v288, %v402
      %v434 = vmul.f32 %v289, %v402
      %v435 = vmax.f32 %v403, 0.0
      %v436 = vmax.f32 %v404, 0.0
      %v437 = vmax.f32 %v405, 0.0
      %v438 = vmax.f32 %v406, 0.0
      %v439 = vmax.f32 %v407, 0.0
      %v440 = vmax.f32 %v408, 0.0
      %v441 = vmax.f32 %v409, 0.0
      %v442 = vmax.f32 %v410, 0.0
      %v443 = vmax.f32 %v411, 0.0
      %v444 = vmax.f32 %v412, 0.0
      %v445 = vmax.f32 %v413, 0.0
      %v446 = vmax.f32 %v414, 0.0
      %v447 = vmax.f32 %v415, 0.0
      %v448 = vmax.f32 %v416, 0.0
      %v449 = vmax.f32 %v417, 0.0
      %v450 = vmax.f32 %v418, 0.0
      %v451 = vmax.f32 %v419, 0.0
      %v452 = vmax.f32 %v420, 0.0
      %v453 = vmax.f32 %v421, 0.0
      %v454 = vmax.f32 %v422, 0.0
      %v455 = vmax.f32 %v423, 0.0
      %v456 = vmax.f32 %v424, 0.0
      %v457 = vmax.f32 %v425, 0.0
      %v458 = vmax.f32 %v426, 0.0
      %v459 = vmax.f32 %v427, 0.0
      %v460 = vmax.f32 %v428, 0.0
      %v461 = vmax.f32 %v429, 0.0
      %v462 = vmax.f32 %v430, 0.0
      %v463 = vmax.f32 %v431, 0.0
      %v464 = vmax.f32 %v432, 0.0
      %v465 = vmax.f32 %v433, 0.0
      %v466 = vmax.f32 %v434, 0.0
      %467 = vst.msk [vmem:[%s147] sm:$0xff] %vm180, %v435
      %468 = vst.msk [vmem:[%s147 + $0x8] sm:$0xff] %vm180, %v436
      %469 = vst.msk [vmem:[%s147 + $0x10] sm:$0xff] %vm180, %v437
      %470 = vst.msk [vmem:[%s147 + $0x18] sm:$0xff] %vm180, %v438
      %471 = vst.msk [vmem:[%s147 + $0x20] sm:$0xff] %vm180, %v439
      %472 = vst.msk [vmem:[%s147 + $0x28] sm:$0xff] %vm180, %v440
      %473 = vst.msk [vmem:[%s147 + $0x30] sm:$0xff] %vm180, %v441
      %474 = vst.msk [vmem:[%s147 + $0x38] sm:$0xff] %vm180, %v442
      %475 = vst.msk [vmem:[%s147 + $0x40] sm:$0xff] %vm180, %v443
      %476 = vst.msk [vmem:[%s147 + $0x48] sm:$0xff] %vm180, %v444
      %477 = vst.msk [vmem:[%s147 + $0x50] sm:$0xff] %vm180, %v445
      %478 = vst.msk [vmem:[%s147 + $0x58] sm:$0xff] %vm180, %v446
      %479 = vst.msk [vmem:[%s147 + $0x60] sm:$0xff] %vm180, %v447
      %480 = vst.msk [vmem:[%s147 + $0x68] sm:$0xff] %vm180, %v448
      %481 = vst.msk [vmem:[%s147 + $0x70] sm:$0xff] %vm180, %v449
      %482 = vst.msk [vmem:[%s147 + $0x78] sm:$0xff] %vm180, %v450
      %483 = vst.msk [vmem:[%s147 + $0x80] sm:$0xff] %vm180, %v451
      %484 = vst.msk [vmem:[%s147 + $0x88] sm:$0xff] %vm180, %v452
      %485 = vst.msk [vmem:[%s147 + $0x90] sm:$0xff] %vm180, %v453
      %486 = vst.msk [vmem:[%s147 + $0x98] sm:$0xff] %vm180, %v454
      %487 = vst.msk [vmem:[%s147 + $0xa0] sm:$0xff] %vm180, %v455
      %488 = vst.msk [vmem:[%s147 + $0xa8] sm:$0xff] %vm180, %v456
      %489 = vst.msk [vmem:[%s147 + $0xb0] sm:$0xff] %vm180, %v457
      %490 = vst.msk [vmem:[%s147 + $0xb8] sm:$0xff] %vm180, %v458
      %491 = vst.msk [vmem:[%s147 + $0xc0] sm:$0xff] %vm180, %v459
      %492 = vst.msk [vmem:[%s147 + $0xc8] sm:$0xff] %vm180, %v460
      %493 = vst.msk [vmem:[%s147 + $0xd0] sm:$0xff] %vm180, %v461
      %494 = vst.msk [vmem:[%s147 + $0xd8] sm:$0xff] %vm180, %v462
      %495 = vst.msk [vmem:[%s147 + $0xe0] sm:$0xff] %vm180, %v463
      %496 = vst.msk [vmem:[%s147 + $0xe8] sm:$0xff] %vm180, %v464
      %497 = vst.msk [vmem:[%s147 + $0xf0] sm:$0xff] %vm180, %v465
      %498 = vst.msk [vmem:[%s147 + $0xf8] sm:$0xff] %vm180, %v466
      %p499 = scmp.lt.s32.totalorder %s16, 1
      %s500 = scalar_select %p499, %s16, 1
      %p501 = scmp.lt.s32.totalorder %s17, 0
      %s502 = scalar_select %p501, %s17, 0
      %s503 = smul.addr %s500, 32
      %s504 = sadd.s32 %s502, %s503
      %s505 = smul.addr %s504, 8
      %s506 = scalar_lea.vmem %s1, %s505
      // Predicated region
      $region25: #{resnet_generator_forward.49} parent=23 // pred_check
        %p507 = pneg %p72
      $region26: #{resnet_generator_forward.49} parent=23 // pred_check_branch
        %509 = sbr.rel (%p507) target = $region28
      $region27: #{resnet_generator_forward.49} parent=23 // pred_region
        _
      $region28: #{resnet_generator_forward.49} parent=23 // pred_fallthru
        _
    $region24: #{resnet_generator_forward.49} parent=5 // pred_fallthru
      _
    %p510 = scmp.le.s32.totalorder 2, %s7
    // Predicated region
    $region29: #{resnet_generator_forward.49} parent=5 // pred_check
      %p511 = pneg %p510
    $region30: #{resnet_generator_forward.49} parent=5 // pred_check_branch
      %513 = sbr.rel (%p511) target = $region32
    $region31: #{resnet_generator_forward.49} parent=5 // pred_region
      %s514 = ssub.s32 %s7, 2
      // Predicated region
      $region33: #{resnet_generator_forward.49} parent=31 // pred_check
        %p515 = pneg %p78
      $region34: #{resnet_generator_forward.49} parent=31 // pred_check_branch
        %517 = sbr.rel (%p515) target = $region36
      $region35: #{resnet_generator_forward.49} parent=31 // pred_region
        %p518 = scmp.lt.s32.totalorder %s18, 1
        %s519 = scalar_select %p518, %s18, 1
        %p520 = scmp.lt.s32.totalorder %s19, 0
        %s521 = scalar_select %p520, %s19, 0
        %s522 = smul.addr %s519, 32
        %s523 = sadd.s32 %s521, %s522
        %s524 = smul.addr %s523, 8
        %s525 = scalar_lea.vmem %s1, %s524
      $region36: #{resnet_generator_forward.49} parent=31 // pred_fallthru
        _
    $region32: #{resnet_generator_forward.49} parent=5 // pred_fallthru
      _
  $region6: #{resnet_generator_forward.49} parent=0 // loop_footer
    %s11 = sadd.s32 1, %s7
  $region7: #{resnet_generator_forward.49} parent=0 // loop_footer_branch
    %6 = sbr.rel target = $region3
  $region8: #{resnet_generator_forward.49} parent=0 // loop_exit
    _

// kernel: resnet_generator_forward.48
$region0: #{resnet_generator_forward.48}
  #allocation0 [shape = 'u32[]', space=smem, size = 0x4, offset = 0x4, fixed_abs, tag = 'smem constant byte address 0x4 - core index']
  #allocation1 [shape = 'u32[72,128]{1,0:T(1,128)}', space=vmem, size = 0x9000, scoped, tag = 'internal scratch']
  #allocation2 [shape = 'f32[256,128]{1,0:T(8,128)}', space=vmem, size = 0x20000, scoped, tag = 'scratch operand']
  %s0 = inlined_call_operand.vmem [shape: bf16[512,256], index: 0, kind: input, shape index: {}]
  %s1 = inlined_call_operand.vmem [shape: bf16[256,128], index: 1, kind: input, shape index: {}]
  %s2 = inlined_call_operand.vmem [shape: f32[1,128], index: 2, kind: input, shape index: {}]
  %s3 = inlined_call_operand.vmem [shape: f32[512,128], index: 3, kind: output, shape index: {}]
  %s4 = sld [smem:[#allocation0]]
  $region53: #{resnet_generator_forward.48} parent=0
    _
  %s6 = ssub.s32 1, %s4
  %s7 = scalar_select 0, %s6, %s4
  loop: start=0, step=1, limit=4
  $region2: #{resnet_generator_forward.48} parent=0 // loop_pre_header
    _
  $region3: #{resnet_generator_forward.48} parent=0 // loop_header
    %s9 = sphi 0, %s13
    %p10 = scmp.ge.s32.totalorder %s9, 4
    %s16 = sphi 0, %s35
    %s17 = sphi 0, %s31
    %s18 = sphi 0, %s27
    %s19 = sphi 0, %s16
    %s20 = sphi 0, %s17
    %s21 = sphi 0, %s18
    %s22 = sphi 0, %s19
    %s23 = sphi 0, %s20
    %s24 = sphi 0, %s21
    %s40 = sphi 0, %s42
    %s43 = sphi 0, %s40
    %s44 = sphi 0, %s43
    %s60 = sphi 0, %s44
    %s68 = sphi 0, %s70
    %s71 = sphi 0, %s68
    %s72 = sphi 0, %s71
    %s88 = sphi 0, %s72
    %s94 = sphi 0, %s96
    %s97 = sphi 0, %s94
    %s98 = sphi 0, %s97
    %s114 = sphi 0, %s98
    %s122 = sphi 0, %s124
    %s125 = sphi 0, %s122
    %s126 = sphi 0, %s125
    %s142 = sphi 0, %s126
  $region4: #{resnet_generator_forward.48} parent=0 // loop_header_branch
    %12 = sbr.rel (%p10) target = $region8
  $region5: #{resnet_generator_forward.48} parent=0 // loop_body
    %s14 = ssub.s32 %s9, 1
    %s15 = ssub.s32 %s9, 2
    %s25 = sadd.s32 1, %s18
    %p26 = scmp.ge.s32.totalorder %s25, 1
    %s27 = scalar_select %p26, 0, %s25
    %s28 = sadd.s32 1, %s17
    %s29 = scalar_select %p26, %s28, %s17
    %p30 = scmp.ge.s32.totalorder %s29, 1
    %s31 = scalar_select %p30, 0, %s29
    %s32 = sadd.s32 1, %s16
    %s33 = scalar_select %p30, %s32, %s16
    %p34 = scmp.ge.s32.totalorder %s33, 2
    %s35 = scalar_select %p34, 0, %s33
    %s36 = ssub.s32 %s16, %s35
    %s37 = ssub.s32 %s18, %s27
    %s38 = sor.u32 %s36, %s37
    %p39 = scmp.eq.s32.totalorder %s38, 0
    %s41 = sadd.s32 %s40, 1
    %s42 = scalar_select %p39, %s40, %s41
    %p45 = pneg %p39
    %p46 = scmp.eq.s32.totalorder %s9, 1
    %p47 = por %p45, %p46
    %p48 = scmp.ne.s32.totalorder %s40, %s43
    %p49 = scmp.eq.s32.totalorder %s9, 0
    %p50 = por %p48, %p49
    %p51 = scmp.ne.s32.totalorder %s40, %s43
    %p52 = scmp.eq.s32.totalorder %s14, 1
    %p53 = por %p51, %p52
    %p54 = scmp.ne.s32.totalorder %s43, %s44
    %p55 = scmp.eq.s32.totalorder %s14, 0
    %p56 = por %p54, %p55
    %p57 = scmp.ne.s32.totalorder %s43, %s44
    %p58 = scmp.eq.s32.totalorder %s15, 1
    %p59 = por %p57, %p58
    %p61 = scmp.ne.s32.totalorder %s44, %s60
    %p62 = scmp.eq.s32.totalorder %s15, 0
    %p63 = por %p61, %p62
    %s64 = ssub.s32 %s18, %s27
    %s65 = ssub.s32 %s17, %s31
    %s66 = sor.u32 %s64, %s65
    %p67 = scmp.eq.s32.totalorder %s66, 0
    %s69 = sadd.s32 %s68, 1
    %s70 = scalar_select %p67, %s68, %s69
    %p73 = pneg %p67
    %p74 = scmp.eq.s32.totalorder %s9, 1
    %p75 = por %p73, %p74
    %p76 = scmp.ne.s32.totalorder %s68, %s71
    %p77 = scmp.eq.s32.totalorder %s9, 0
    %p78 = por %p76, %p77
    %p79 = scmp.ne.s32.totalorder %s68, %s71
    %p80 = scmp.eq.s32.totalorder %s14, 1
    %p81 = por %p79, %p80
    %p82 = scmp.ne.s32.totalorder %s71, %s72
    %p83 = scmp.eq.s32.totalorder %s14, 0
    %p84 = por %p82, %p83
    %p85 = scmp.ne.s32.totalorder %s71, %s72
    %p86 = scmp.eq.s32.totalorder %s15, 1
    %p87 = por %p85, %p86
    %p89 = scmp.ne.s32.totalorder %s72, %s88
    %p90 = scmp.eq.s32.totalorder %s15, 0
    %p91 = por %p89, %p90
    %s92 = ssub.s32 %s17, %s31
    %p93 = scmp.eq.s32.totalorder %s92, 0
    %s95 = sadd.s32 %s94, 1
    %s96 = scalar_select %p93, %s94, %s95
    %p99 = pneg %p93
    %p100 = scmp.eq.s32.totalorder %s9, 1
    %p101 = por %p99, %p100
    %p102 = scmp.ne.s32.totalorder %s94, %s97
    %p103 = scmp.eq.s32.totalorder %s9, 0
    %p104 = por %p102, %p103
    %p105 = scmp.ne.s32.totalorder %s94, %s97
    %p106 = scmp.eq.s32.totalorder %s14, 1
    %p107 = por %p105, %p106
    %p108 = scmp.ne.s32.totalorder %s97, %s98
    %p109 = scmp.eq.s32.totalorder %s14, 0
    %p110 = por %p108, %p109
    %p111 = scmp.ne.s32.totalorder %s97, %s98
    %p112 = scmp.eq.s32.totalorder %s15, 1
    %p113 = por %p111, %p112
    %p115 = scmp.ne.s32.totalorder %s98, %s114
    %p116 = scmp.eq.s32.totalorder %s15, 0
    %p117 = por %p115, %p116
    %s118 = ssub.s32 %s16, %s35
    %s119 = ssub.s32 %s17, %s31
    %s120 = sor.u32 %s118, %s119
    %p121 = scmp.eq.s32.totalorder %s120, 0
    %s123 = sadd.s32 %s122, 1
    %s124 = scalar_select %p121, %s122, %s123
    %p127 = pneg %p121
    %p128 = scmp.eq.s32.totalorder %s9, 1
    %p129 = por %p127, %p128
    %p130 = scmp.ne.s32.totalorder %s122, %s125
    %p131 = scmp.eq.s32.totalorder %s9, 0
    %p132 = por %p130, %p131
    %p133 = scmp.ne.s32.totalorder %s122, %s125
    %p134 = scmp.eq.s32.totalorder %s14, 1
    %p135 = por %p133, %p134
    %p136 = scmp.ne.s32.totalorder %s125, %s126
    %p137 = scmp.eq.s32.totalorder %s14, 0
    %p138 = por %p136, %p137
    %p139 = scmp.ne.s32.totalorder %s125, %s126
    %p140 = scmp.eq.s32.totalorder %s15, 1
    %p141 = por %p139, %p140
    %p143 = scmp.ne.s32.totalorder %s126, %s142
    %p144 = scmp.eq.s32.totalorder %s15, 0
    %p145 = por %p143, %p144
    %p146 = scmp.le.s32.totalorder 1, %s9
    %p147 = scmp.lt.s32.totalorder %s9, 3
    %p148 = pnand %p146, %p147
    %p149 = pneg %p148
    // Predicated region
    $region9: #{resnet_generator_forward.48} parent=5 // pred_check
      _
    $region10: #{resnet_generator_forward.48} parent=5 // pred_check_branch
      %151 = sbr.rel (%p148) target = $region12
    $region11: #{resnet_generator_forward.48} parent=5 // pred_region
      %s152 = ssub.s32 %s9, 1
      // Predicated region
      $region13: #{resnet_generator_forward.48} parent=11 // pred_check
        %p153 = pneg %p84
      $region14: #{resnet_generator_forward.48} parent=11 // pred_check_branch
        %155 = sbr.rel (%p153) target = $region16
      $region15: #{resnet_generator_forward.48} parent=11 // pred_region
        %s156 = smul.u32 32, %s21
        %p157 = scmp.lt.s32.totalorder %s156, 31
        %s158 = scalar_select %p157, %s156, 31
        %p159 = scmp.lt.s32.totalorder %s20, 0
        %s160 = scalar_select %p159, %s20, 0
        %s161 = sadd.s32 %s160, %s158
        %s162 = smul.addr %s161, 4
        %s163 = scalar_lea.vmem %s1, %s162
        %s164 = smul.u32 32, %s21
      $region16: #{resnet_generator_forward.48} parent=11 // pred_fallthru
        _
      // Predicated region
      $region17: #{resnet_generator_forward.48} parent=11 // pred_check
        %p165 = pneg %p110
      $region18: #{resnet_generator_forward.48} parent=11 // pred_check_branch
        %167 = sbr.rel (%p165) target = $region20
      $region19: #{resnet_generator_forward.48} parent=11 // pred_region
        %p168 = scmp.lt.s32.totalorder %s20, 0
        %s169 = scalar_select %p168, %s20, 0
        %s170 = scalar_lea.vmem %s2, %s169
      $region20: #{resnet_generator_forward.48} parent=11 // pred_fallthru
        _
    $region12: #{resnet_generator_forward.48} parent=5 // pred_fallthru
      _
    %p171 = scmp.lt.s32.totalorder %s9, 2
    // Predicated region
    $region21: #{resnet_generator_forward.48} parent=5 // pred_check
      %p172 = pneg %p171
    $region22: #{resnet_generator_forward.48} parent=5 // pred_check_branch
      %174 = sbr.rel (%p172) target = $region24
    $region23: #{resnet_generator_forward.48} parent=5 // pred_region
      // Predicated region
      $region25: #{resnet_generator_forward.48} parent=23 // pred_check
        %p175 = pneg %p50
      $region26: #{resnet_generator_forward.48} parent=23 // pred_check_branch
        %177 = sbr.rel (%p175) target = $region28
      $region27: #{resnet_generator_forward.48} parent=23 // pred_region
        %s178 = smul.u32 32, %s16
        %s179 = smul.u32 2, %s18
        %p180 = scmp.lt.s32.totalorder %s178, 63
        %s181 = scalar_select %p180, %s178, 63
        %p182 = scmp.lt.s32.totalorder %s179, 1
        %s183 = scalar_select %p182, %s179, 1
        %s184 = smul.addr %s181, 2
        %s185 = sadd.s32 %s183, %s184
        %s186 = smul.addr %s185, 4
        %s187 = scalar_lea.vmem %s0, %s186
        %s188 = smul.u32 32, %s16
        %s189 = smul.u32 2, %s18
      $region28: #{resnet_generator_forward.48} parent=23 // pred_fallthru
        _
    $region24: #{resnet_generator_forward.48} parent=5 // pred_fallthru
      _
    %p190 = scmp.le.s32.totalorder 1, %s9
    %p191 = scmp.lt.s32.totalorder %s9, 3
    %p192 = pnand %p190, %p191
    %p193 = pneg %p192
    // Predicated region
    $region29: #{resnet_generator_forward.48} parent=5 // pred_check
      _
    $region30: #{resnet_generator_forward.48} parent=5 // pred_check_branch
      %195 = sbr.rel (%p192) target = $region32
    $region31: #{resnet_generator_forward.48} parent=5 // pred_region
      %s196 = ssub.s32 %s9, 1
      %s197 = smul.u32 32, %s19
      %s198 = smul.u32 2, %s21
      %p199 = scmp.lt.s32.totalorder %s197, 63
      %s200 = scalar_select %p199, %s197, 63
      %p201 = scmp.lt.s32.totalorder %s198, 1
      %s202 = scalar_select %p201, %s198, 1
      %s203 = smul.addr %s200, 2
      %s204 = sadd.s32 %s202, %s203
      %s205 = smul.addr %s204, 4
      %s206 = scalar_lea.vmem %s0, %s205
      %p207 = pneg %p56
      %p208 = pneg %p53
      %s209 = smul.u32 32, %s21
      %p210 = scmp.lt.s32.totalorder %s209, 31
      %s211 = scalar_select %p210, %s209, 31
      %p212 = scmp.lt.s32.totalorder %s20, 0
      %s213 = scalar_select %p212, %s20, 0
      %s214 = sadd.s32 %s213, %s211
      %s215 = smul.addr %s214, 4
      %s216 = scalar_lea.vmem %s1, %s215
      %p217 = pneg %p84
      %p218 = pneg %p81
      %p219 = scmp.lt.s32.totalorder %s20, 0
      %s220 = scalar_select %p219, %s20, 0
      %s221 = scalar_lea.vmem %s2, %s220
      %p222 = pneg %p110
      %p223 = pneg %p107
      %p224 = pneg %p138
      %p225 = pneg %p135
      %s226 = smul.u32 32, %s19
      %p227 = scmp.lt.s32.totalorder %s226, 63
      %s228 = scalar_select %p227, %s226, 63
      %p229 = scmp.lt.s32.totalorder %s20, 0
      %s230 = scalar_select %p229, %s20, 0
      %s231 = sadd.s32 %s230, %s228
      %s232 = smul.addr %s231, 8
      %s233 = scalar_lea.vmem %s3, %s232
      %s234 = smul.u32 32, %s19
      %s235 = smul.u32 2, %s21
      %p236 = scmp.lt.s32.totalorder %s234, 63
      %s237 = scalar_select %p236, %s234, 63
      %p238 = scmp.lt.s32.totalorder %s235, 1
      %s239 = scalar_select %p238, %s235, 1
      %s240 = smul.addr %s237, 2
      %s241 = sadd.s32 %s239, %s240
      %s242 = smul.addr %s241, 4
      %s243 = scalar_lea.vmem %s0, %s242
      %s244 = smul.u32 32, %s19
      %s245 = smul.u32 2, %s21
      %s246 = smul.u32 32, %s21
      %p247 = scmp.lt.s32.totalorder %s246, 31
      %s248 = scalar_select %p247, %s246, 31
      %p249 = scmp.lt.s32.totalorder %s20, 0
      %s250 = scalar_select %p249, %s20, 0
      %s251 = sadd.s32 %s250, %s248
      %s252 = smul.addr %s251, 4
      %s253 = scalar_lea.vmem %s1, %s252
      %s254 = smul.u32 32, %s21
      %p255 = scmp.lt.s32.totalorder %s20, 0
      %s256 = scalar_select %p255, %s20, 0
      %s257 = scalar_lea.vmem %s2, %s256
      %s258 = smul.u32 32, %s19
      %p259 = scmp.lt.s32.totalorder %s258, 63
      %s260 = scalar_select %p259, %s258, 63
      %p261 = scmp.lt.s32.totalorder %s20, 0
      %s262 = scalar_select %p261, %s20, 0
      %s263 = sadd.s32 %s262, %s260
      %s264 = smul.addr %s263, 8
      %s265 = scalar_lea.vmem %s3, %s264
      %s266 = smul.u32 32, %s19
      %p267 = scmp.eq.s32.totalorder %s21, 0
      // Predicated region
      $region33: #{resnet_generator_forward.48} parent=31 // pred_check
        %p268 = pneg %p267
      $region34: #{resnet_generator_forward.48} parent=31 // pred_check_branch
        %270 = sbr.rel (%p268) target = $region36
      $region35: #{resnet_generator_forward.48} parent=31 // pred_region
        %271 = vst [vmem:[#allocation2] sm:$0xff] 0.0
        %272 = vst [vmem:[#allocation2 + $0x8] sm:$0xff] 0.0
        %273 = vst [vmem:[#allocation2 + $0x10] sm:$0xff] 0.0
        %274 = vst [vmem:[#allocation2 + $0x18] sm:$0xff] 0.0
        %275 = vst [vmem:[#allocation2 + $0x20] sm:$0xff] 0.0
        %276 = vst [vmem:[#allocation2 + $0x28] sm:$0xff] 0.0
        %277 = vst [vmem:[#allocation2 + $0x30] sm:$0xff] 0.0
        %278 = vst [vmem:[#allocation2 + $0x38] sm:$0xff] 0.0
        %279 = vst [vmem:[#allocation2 + $0x40] sm:$0xff] 0.0
        %280 = vst [vmem:[#allocation2 + $0x48] sm:$0xff] 0.0
        %281 = vst [vmem:[#allocation2 + $0x50] sm:$0xff] 0.0
        %282 = vst [vmem:[#allocation2 + $0x58] sm:$0xff] 0.0
        %283 = vst [vmem:[#allocation2 + $0x60] sm:$0xff] 0.0
        %284 = vst [vmem:[#allocation2 + $0x68] sm:$0xff] 0.0
        %285 = vst [vmem:[#allocation2 + $0x70] sm:$0xff] 0.0
        %286 = vst [vmem:[#allocation2 + $0x78] sm:$0xff] 0.0
        %287 = vst [vmem:[#allocation2 + $0x80] sm:$0xff] 0.0
        %288 = vst [vmem:[#allocation2 + $0x88] sm:$0xff] 0.0
        %289 = vst [vmem:[#allocation2 + $0x90] sm:$0xff] 0.0
        %290 = vst [vmem:[#allocation2 + $0x98] sm:$0xff] 0.0
        %291 = vst [vmem:[#allocation2 + $0xa0] sm:$0xff] 0.0
        %292 = vst [vmem:[#allocation2 + $0xa8] sm:$0xff] 0.0
        %293 = vst [vmem:[#allocation2 + $0xb0] sm:$0xff] 0.0
        %294 = vst [vmem:[#allocation2 + $0xb8] sm:$0xff] 0.0
        %295 = vst [vmem:[#allocation2 + $0xc0] sm:$0xff] 0.0
        %296 = vst [vmem:[#allocation2 + $0xc8] sm:$0xff] 0.0
        %297 = vst [vmem:[#allocation2 + $0xd0] sm:$0xff] 0.0
        %298 = vst [vmem:[#allocation2 + $0xd8] sm:$0xff] 0.0
        %299 = vst [vmem:[#allocation2 + $0xe0] sm:$0xff] 0.0
        %300 = vst [vmem:[#allocation2 + $0xe8] sm:$0xff] 0.0
        %301 = vst [vmem:[#allocation2 + $0xf0] sm:$0xff] 0.0
        %302 = vst [vmem:[#allocation2 + $0xf8] sm:$0xff] 0.0
      $region36: #{resnet_generator_forward.48} parent=31 // pred_fallthru
        _
      %v303 = vld [vmem:[#allocation2] sm:$0xff]
      %v304 = vld [vmem:[#allocation2 + $0x8] sm:$0xff]
      %v305 = vld [vmem:[#allocation2 + $0x10] sm:$0xff]
      %v306 = vld [vmem:[#allocation2 + $0x18] sm:$0xff]
      %v307 = vld [vmem:[#allocation2 + $0x20] sm:$0xff]
      %v308 = vld [vmem:[#allocation2 + $0x28] sm:$0xff]
      %v309 = vld [vmem:[#allocation2 + $0x30] sm:$0xff]
      %v310 = vld [vmem:[#allocation2 + $0x38] sm:$0xff]
      %v311 = vld [vmem:[#allocation2 + $0x40] sm:$0xff]
      %v312 = vld [vmem:[#allocation2 + $0x48] sm:$0xff]
      %v313 = vld [vmem:[#allocation2 + $0x50] sm:$0xff]
      %v314 = vld [vmem:[#allocation2 + $0x58] sm:$0xff]
      %v315 = vld [vmem:[#allocation2 + $0x60] sm:$0xff]
      %v316 = vld [vmem:[#allocation2 + $0x68] sm:$0xff]
      %v317 = vld [vmem:[#allocation2 + $0x70] sm:$0xff]
      %v318 = vld [vmem:[#allocation2 + $0x78] sm:$0xff]
      %v319 = vld [vmem:[#allocation2 + $0x80] sm:$0xff]
      %v320 = vld [vmem:[#allocation2 + $0x88] sm:$0xff]
      %v321 = vld [vmem:[#allocation2 + $0x90] sm:$0xff]
      %v322 = vld [vmem:[#allocation2 + $0x98] sm:$0xff]
      %v323 = vld [vmem:[#allocation2 + $0xa0] sm:$0xff]
      %v324 = vld [vmem:[#allocation2 + $0xa8] sm:$0xff]
      %v325 = vld [vmem:[#allocation2 + $0xb0] sm:$0xff]
      %v326 = vld [vmem:[#allocation2 + $0xb8] sm:$0xff]
      %v327 = vld [vmem:[#allocation2 + $0xc0] sm:$0xff]
      %v328 = vld [vmem:[#allocation2 + $0xc8] sm:$0xff]
      %v329 = vld [vmem:[#allocation2 + $0xd0] sm:$0xff]
      %v330 = vld [vmem:[#allocation2 + $0xd8] sm:$0xff]
      %v331 = vld [vmem:[#allocation2 + $0xe0] sm:$0xff]
      %v332 = vld [vmem:[#allocation2 + $0xe8] sm:$0xff]
      %v333 = vld [vmem:[#allocation2 + $0xf0] sm:$0xff]
      %v334 = vld [vmem:[#allocation2 + $0xf8] sm:$0xff]
      %v335 = vld [vmem:[%s243] sm:$0xff]
      %v336 = vld [vmem:[%s243 + $0x8] sm:$0xff]
      %v337 = vld [vmem:[%s243 + $0x10] sm:$0xff]
      %v338 = vld [vmem:[%s243 + $0x18] sm:$0xff]
      %v339 = vld [vmem:[%s243 + $0x20] sm:$0xff]
      %v340 = vld [vmem:[%s243 + $0x28] sm:$0xff]
      %v341 = vld [vmem:[%s243 + $0x30] sm:$0xff]
      %v342 = vld [vmem:[%s243 + $0x38] sm:$0xff]
      %v343 = vld [vmem:[%s243 + $0x40] sm:$0xff]
      %v344 = vld [vmem:[%s243 + $0x48] sm:$0xff]
      %v345 = vld [vmem:[%s243 + $0x50] sm:$0xff]
      %v346 = vld [vmem:[%s243 + $0x58] sm:$0xff]
      %v347 = vld [vmem:[%s243 + $0x60] sm:$0xff]
      %v348 = vld [vmem:[%s243 + $0x68] sm:$0xff]
      %v349 = vld [vmem:[%s243 + $0x70] sm:$0xff]
      %v350 = vld [vmem:[%s243 + $0x78] sm:$0xff]
      %v351 = vld [vmem:[%s243 + $0x80] sm:$0xff]
      %v352 = vld [vmem:[%s243 + $0x88] sm:$0xff]
      %v353 = vld [vmem:[%s243 + $0x90] sm:$0xff]
      %v354 = vld [vmem:[%s243 + $0x98] sm:$0xff]
      %v355 = vld [vmem:[%s243 + $0xa0] sm:$0xff]
      %v356 = vld [vmem:[%s243 + $0xa8] sm:$0xff]
      %v357 = vld [vmem:[%s243 + $0xb0] sm:$0xff]
      %v358 = vld [vmem:[%s243 + $0xb8] sm:$0xff]
      %v359 = vld [vmem:[%s243 + $0xc0] sm:$0xff]
      %v360 = vld [vmem:[%s243 + $0xc8] sm:$0xff]
      %v361 = vld [vmem:[%s243 + $0xd0] sm:$0xff]
      %v362 = vld [vmem:[%s243 + $0xd8] sm:$0xff]
      %v363 = vld [vmem:[%s243 + $0xe0] sm:$0xff]
      %v364 = vld [vmem:[%s243 + $0xe8] sm:$0xff]
      %v365 = vld [vmem:[%s243 + $0xf0] sm:$0xff]
      %v366 = vld [vmem:[%s243 + $0xf8] sm:$0xff]
      %v367 = vld [vmem:[%s253] sm:$0xf]
      %v368 = vld [vmem:[%s253 + $0x4] sm:$0xf]
      %v369 = vld [vmem:[%s253 + $0x8] sm:$0xf]
      %v370 = vld [vmem:[%s253 + $0xc] sm:$0xf]
      %v371 = vld [vmem:[%s253 + $0x10] sm:$0xf]
      %v372 = vld [vmem:[%s253 + $0x14] sm:$0xf]
      %v373 = vld [vmem:[%s253 + $0x18] sm:$0xf]
      %v374 = vld [vmem:[%s253 + $0x1c] sm:$0xf]
      %v375 = vld [vmem:[%s253 + $0x20] sm:$0xf]
      %v376 = vld [vmem:[%s253 + $0x24] sm:$0xf]
      %v377 = vld [vmem:[%s253 + $0x28] sm:$0xf]
      %v378 = vld [vmem:[%s253 + $0x2c] sm:$0xf]
      %v379 = vld [vmem:[%s253 + $0x30] sm:$0xf]
      %v380 = vld [vmem:[%s253 + $0x34] sm:$0xf]
      %v381 = vld [vmem:[%s253 + $0x38] sm:$0xf]
      %v382 = vld [vmem:[%s253 + $0x3c] sm:$0xf]
      %v383 = vld [vmem:[%s253 + $0x40] sm:$0xf]
      %v384 = vld [vmem:[%s253 + $0x44] sm:$0xf]
      %v385 = vld [vmem:[%s253 + $0x48] sm:$0xf]
      %v386 = vld [vmem:[%s253 + $0x4c] sm:$0xf]
      %v387 = vld [vmem:[%s253 + $0x50] sm:$0xf]
      %v388 = vld [vmem:[%s253 + $0x54] sm:$0xf]
      %v389 = vld [vmem:[%s253 + $0x58] sm:$0xf]
      %v390 = vld [vmem:[%s253 + $0x5c] sm:$0xf]
      %v391 = vld [vmem:[%s253 + $0x60] sm:$0xf]
      %v392 = vld [vmem:[%s253 + $0x64] sm:$0xf]
      %v393 = vld [vmem:[%s253 + $0x68] sm:$0xf]
      %v394 = vld [vmem:[%s253 + $0x6c] sm:$0xf]
      %v395 = vld [vmem:[%s253 + $0x70] sm:$0xf]
      %v396 = vld [vmem:[%s253 + $0x74] sm:$0xf]
      %v397 = vld [vmem:[%s253 + $0x78] sm:$0xf]
      %v398 = vld [vmem:[%s253 + $0x7c] sm:$0xf]
      %v431 = vunpack.c.l.b16 %v335
      %v432 = vunpack.c.h.b16 %v335
      %v433 = vunpack.c.l.b16 %v336
      %v434 = vunpack.c.h.b16 %v336
      %v435 = vunpack.c.l.b16 %v337
      %v436 = vunpack.c.h.b16 %v337
      %v437 = vunpack.c.l.b16 %v338
      %v438 = vunpack.c.h.b16 %v338
      %v439 = vunpack.c.l.b16 %v339
      %v440 = vunpack.c.h.b16 %v339
      %v441 = vunpack.c.l.b16 %v340
      %v442 = vunpack.c.h.b16 %v340
      %v443 = vunpack.c.l.b16 %v341
      %v444 = vunpack.c.h.b16 %v341
      %v445 = vunpack.c.l.b16 %v342
      %v446 = vunpack.c.h.b16 %v342
      %v447 = vunpack.c.l.b16 %v343
      %v448 = vunpack.c.h.b16 %v343
      %v449 = vunpack.c.l.b16 %v344
      %v450 = vunpack.c.h.b16 %v344
      %v451 = vunpack.c.l.b16 %v345
      %v452 = vunpack.c.h.b16 %v345
      %v453 = vunpack.c.l.b16 %v346
      %v454 = vunpack.c.h.b16 %v346
      %v455 = vunpack.c.l.b16 %v347
      %v456 = vunpack.c.h.b16 %v347
      %v457 = vunpack.c.l.b16 %v348
      %v458 = vunpack.c.h.b16 %v348
      %v459 = vunpack.c.l.b16 %v349
      %v460 = vunpack.c.h.b16 %v349
      %v461 = vunpack.c.l.b16 %v350
      %v462 = vunpack.c.h.b16 %v350
      %v463 = vunpack.c.l.b16 %v351
      %v464 = vunpack.c.h.b16 %v351
      %v465 = vunpack.c.l.b16 %v352
      %v466 = vunpack.c.h.b16 %v352
      %v467 = vunpack.c.l.b16 %v353
      %v468 = vunpack.c.h.b16 %v353
      %v469 = vunpack.c.l.b16 %v354
      %v470 = vunpack.c.h.b16 %v354
      %v471 = vunpack.c.l.b16 %v355
      %v472 = vunpack.c.h.b16 %v355
      %v473 = vunpack.c.l.b16 %v356
      %v474 = vunpack.c.h.b16 %v356
      %v475 = vunpack.c.l.b16 %v357
      %v476 = vunpack.c.h.b16 %v357
      %v477 = vunpack.c.l.b16 %v358
      %v478 = vunpack.c.h.b16 %v358
      %v479 = vunpack.c.l.b16 %v359
      %v480 = vunpack.c.h.b16 %v359
      %v481 = vunpack.c.l.b16 %v360
      %v482 = vunpack.c.h.b16 %v360
      %v483 = vunpack.c.l.b16 %v361
      %v484 = vunpack.c.h.b16 %v361
      %v485 = vunpack.c.l.b16 %v362
      %v486 = vunpack.c.h.b16 %v362
      %v487 = vunpack.c.l.b16 %v363
      %v488 = vunpack.c.h.b16 %v363
      %v489 = vunpack.c.l.b16 %v364
      %v490 = vunpack.c.h.b16 %v364
      %v491 = vunpack.c.l.b16 %v365
      %v492 = vunpack.c.h.b16 %v365
      %v493 = vunpack.c.l.b16 %v366
      %v494 = vunpack.c.h.b16 %v366
      %v495 = vpack.c.b16 %v433, %v431
      %v496 = vpack.c.b16 %v434, %v432
      %v497 = vpack.c.b16 %v437, %v435
      %v498 = vpack.c.b16 %v438, %v436
      %v499 = vpack.c.b16 %v441, %v439
      %v500 = vpack.c.b16 %v442, %v440
      %v501 = vpack.c.b16 %v445, %v443
      %v502 = vpack.c.b16 %v446, %v444
      %v503 = vpack.c.b16 %v449, %v447
      %v504 = vpack.c.b16 %v450, %v448
      %v505 = vpack.c.b16 %v453, %v451
      %v506 = vpack.c.b16 %v454, %v452
      %v507 = vpack.c.b16 %v457, %v455
      %v508 = vpack.c.b16 %v458, %v456
      %v509 = vpack.c.b16 %v461, %v459
      %v510 = vpack.c.b16 %v462, %v460
      %v511 = vpack.c.b16 %v465, %v463
      %v512 = vpack.c.b16 %v466, %v464
      %v513 = vpack.c.b16 %v469, %v467
      %v514 = vpack.c.b16 %v470, %v468
      %v515 = vpack.c.b16 %v473, %v471
      %v516 = vpack.c.b16 %v474, %v472
      %v517 = vpack.c.b16 %v477, %v475
      %v518 = vpack.c.b16 %v478, %v476
      %v519 = vpack.c.b16 %v481, %v479
      %v520 = vpack.c.b16 %v482, %v480
      %v521 = vpack.c.b16 %v485, %v483
      %v522 = vpack.c.b16 %v486, %v484
      %v523 = vpack.c.b16 %v489, %v487
      %v524 = vpack.c.b16 %v490, %v488
      %v525 = vpack.c.b16 %v493, %v491
      %v526 = vpack.c.b16 %v494, %v492
      %v591 = vunpack.c.l.b16 %v367
      %v592 = vunpack.c.l.b16 %v368
      %v593 = vunpack.c.l.b16 %v369
      %v594 = vunpack.c.l.b16 %v370
      %v595 = vunpack.c.l.b16 %v371
      %v596 = vunpack.c.l.b16 %v372
      %v597 = vunpack.c.l.b16 %v373
      %v598 = vunpack.c.l.b16 %v374
      %v599 = vunpack.c.l.b16 %v375
      %v600 = vunpack.c.l.b16 %v376
      %v601 = vunpack.c.l.b16 %v377
      %v602 = vunpack.c.l.b16 %v378
      %v603 = vunpack.c.l.b16 %v379
      %v604 = vunpack.c.l.b16 %v380
      %v605 = vunpack.c.l.b16 %v381
      %v606 = vunpack.c.l.b16 %v382
      %v607 = vunpack.c.l.b16 %v383
      %v608 = vunpack.c.l.b16 %v384
      %v609 = vunpack.c.l.b16 %v385
      %v610 = vunpack.c.l.b16 %v386
      %v611 = vunpack.c.l.b16 %v387
      %v612 = vunpack.c.l.b16 %v388
      %v613 = vunpack.c.l.b16 %v389
      %v614 = vunpack.c.l.b16 %v390
      %v615 = vunpack.c.l.b16 %v391
      %v616 = vunpack.c.l.b16 %v392
      %v617 = vunpack.c.l.b16 %v393
      %v618 = vunpack.c.l.b16 %v394
      %v619 = vunpack.c.l.b16 %v395
      %v620 = vunpack.c.l.b16 %v396
      %v621 = vunpack.c.l.b16 %v397
      %v622 = vunpack.c.l.b16 %v398
      %v623 = vpack.c.b16 %v592, %v591
      %v624 = vpack.c.b16 %v594, %v593
      %v625 = vpack.c.b16 %v596, %v595
      %v626 = vpack.c.b16 %v598, %v597
      %v627 = vpack.c.b16 %v600, %v599
      %v628 = vpack.c.b16 %v602, %v601
      %v629 = vpack.c.b16 %v604, %v603
      %v630 = vpack.c.b16 %v606, %v605
      %v631 = vpack.c.b16 %v608, %v607
      %v632 = vpack.c.b16 %v610, %v609
      %v633 = vpack.c.b16 %v612, %v611
      %v634 = vpack.c.b16 %v614, %v613
      %v635 = vpack.c.b16 %v616, %v615
      %v636 = vpack.c.b16 %v618, %v617
      %v637 = vpack.c.b16 %v620, %v619
      %v638 = vpack.c.b16 %v622, %v621
      %655 = vmatpush.bf16.msra.mxu0 %v630
      %656 = vmatpush.bf16.msra.mxu0 %v629
      %657 = vmatpush.bf16.msra.mxu0 %v628
      %658 = vmatpush.bf16.msra.mxu0 %v627
      %659 = vmatpush.bf16.msra.mxu0 %v626
      %660 = vmatpush.bf16.msra.mxu0 %v625
      %661 = vmatpush.bf16.msra.mxu0 %v624
      %662 = vmatpush.bf16.msra.mxu0 %v623
      %663 = vmatmul.bf16.gmra.mxu0 %v495
      %v664 = vpop.f32.mrf.mxu0
      %v665 = vadd.f32 0.0, %v664
      %v666 = vpop.f32.mrf.mxu0
      %v667 = vadd.f32 0.0, %v666
      %668 = vmatmul.bf16.gmra.mxu0 %v497
      %v669 = vpop.f32.mrf.mxu0
      %v670 = vadd.f32 0.0, %v669
      %v671 = vpop.f32.mrf.mxu0
      %v672 = vadd.f32 0.0, %v671
      %673 = vmatmul.bf16.gmra.mxu0 %v499
      %v674 = vpop.f32.mrf.mxu0
      %v675 = vadd.f32 0.0, %v674
      %v676 = vpop.f32.mrf.mxu0
      %v677 = vadd.f32 0.0, %v676
      %678 = vmatmul.bf16.gmra.mxu0 %v501
      %v679 = vpop.f32.mrf.mxu0
      %v680 = vadd.f32 0.0, %v679
      %v681 = vpop.f32.mrf.mxu0
      %v682 = vadd.f32 0.0, %v681
      %683 = vmatmul.bf16.gmra.mxu0 %v503
      %v684 = vpop.f32.mrf.mxu0
      %v685 = vadd.f32 0.0, %v684
      %v686 = vpop.f32.mrf.mxu0
      %v687 = vadd.f32 0.0, %v686
      %688 = vmatmul.bf16.gmra.mxu0 %v505
      %v689 = vpop.f32.mrf.mxu0
      %v690 = vadd.f32 0.0, %v689
      %v691 = vpop.f32.mrf.mxu0
      %v692 = vadd.f32 0.0, %v691
      %693 = vmatmul.bf16.gmra.mxu0 %v507
      %v694 = vpop.f32.mrf.mxu0
      %v695 = vadd.f32 0.0, %v694
      %v696 = vpop.f32.mrf.mxu0
      %v697 = vadd.f32 0.0, %v696
      %698 = vmatmul.bf16.gmra.mxu0 %v509
      %v699 = vpop.f32.mrf.mxu0
      %v700 = vadd.f32 0.0, %v699
      %v701 = vpop.f32.mrf.mxu0
      %v702 = vadd.f32 0.0, %v701
      %703 = vmatmul.bf16.gmra.mxu0 %v511
      %v704 = vpop.f32.mrf.mxu0
      %v705 = vadd.f32 0.0, %v704
      %v706 = vpop.f32.mrf.mxu0
      %v707 = vadd.f32 0.0, %v706
      %708 = vmatmul.bf16.gmra.mxu0 %v513
      %v709 = vpop.f32.mrf.mxu0
      %v710 = vadd.f32 0.0, %v709
      %v711 = vpop.f32.mrf.mxu0
      %v712 = vadd.f32 0.0, %v711
      %713 = vmatmul.bf16.gmra.mxu0 %v515
      %v714 = vpop.f32.mrf.mxu0
      %v715 = vadd.f32 0.0, %v714
      %v716 = vpop.f32.mrf.mxu0
      %v717 = vadd.f32 0.0, %v716
      %718 = vmatmul.bf16.gmra.mxu0 %v517
      %v719 = vpop.f32.mrf.mxu0
      %v720 = vadd.f32 0.0, %v719
      %v721 = vpop.f32.mrf.mxu0
      %v722 = vadd.f32 0.0, %v721
      %723 = vmatmul.bf16.gmra.mxu0 %v519
      %v724 = vpop.f32.mrf.mxu0
      %v725 = vadd.f32 0.0, %v724
      %v726 = vpop.f32.mrf.mxu0
      %v727 = vadd.f32 0.0, %v726
      %728 = vmatmul.bf16.gmra.mxu0 %v521
      %v729 = vpop.f32.mrf.mxu0
      %v730 = vadd.f32 0.0, %v729
      %v731 = vpop.f32.mrf.mxu0
      %v732 = vadd.f32 0.0, %v731
      %733 = vmatmul.bf16.gmra.mxu0 %v523
      %v734 = vpop.f32.mrf.mxu0
      %v735 = vadd.f32 0.0, %v734
      %v736 = vpop.f32.mrf.mxu0
      %v737 = vadd.f32 0.0, %v736
      %738 = vmatmul.bf16.gmra.mxu0 %v525
      %v739 = vpop.f32.mrf.mxu0
      %v740 = vadd.f32 0.0, %v739
      %v741 = vpop.f32.mrf.mxu0
      %v742 = vadd.f32 0.0, %v741
      %743 = vdwg.mxu0
      %744 = vmatpush.bf16.msra.mxu0 %v638
      %745 = vmatpush.bf16.msra.mxu0 %v637
      %746 = vmatpush.bf16.msra.mxu0 %v636
      %747 = vmatpush.bf16.msra.mxu0 %v635
      %748 = vmatpush.bf16.msra.mxu0 %v634
      %749 = vmatpush.bf16.msra.mxu0 %v633
      %750 = vmatpush.bf16.msra.mxu0 %v632
      %751 = vmatpush.bf16.msra.mxu0 %v631
      %752 = vmatmul.bf16.gmra.mxu0 %v496
      %v753 = vpop.f32.mrf.mxu0
      %v754 = vadd.f32 %v665, %v753
      %v755 = vpop.f32.mrf.mxu0
      %v756 = vadd.f32 %v667, %v755
      %757 = vmatmul.bf16.gmra.mxu0 %v498
      %v758 = vpop.f32.mrf.mxu0
      %v759 = vadd.f32 %v670, %v758
      %v760 = vpop.f32.mrf.mxu0
      %v761 = vadd.f32 %v672, %v760
      %762 = vmatmul.bf16.gmra.mxu0 %v500
      %v763 = vpop.f32.mrf.mxu0
      %v764 = vadd.f32 %v675, %v763
      %v765 = vpop.f32.mrf.mxu0
      %v766 = vadd.f32 %v677, %v765
      %767 = vmatmul.bf16.gmra.mxu0 %v502
      %v768 = vpop.f32.mrf.mxu0
      %v769 = vadd.f32 %v680, %v768
      %v770 = vpop.f32.mrf.mxu0
      %v771 = vadd.f32 %v682, %v770
      %772 = vmatmul.bf16.gmra.mxu0 %v504
      %v773 = vpop.f32.mrf.mxu0
      %v774 = vadd.f32 %v685, %v773
      %v775 = vpop.f32.mrf.mxu0
      %v776 = vadd.f32 %v687, %v775
      %777 = vmatmul.bf16.gmra.mxu0 %v506
      %v778 = vpop.f32.mrf.mxu0
      %v779 = vadd.f32 %v690, %v778
      %v780 = vpop.f32.mrf.mxu0
      %v781 = vadd.f32 %v692, %v780
      %782 = vmatmul.bf16.gmra.mxu0 %v508
      %v783 = vpop.f32.mrf.mxu0
      %v784 = vadd.f32 %v695, %v783
      %v785 = vpop.f32.mrf.mxu0
      %v786 = vadd.f32 %v697, %v785
      %787 = vmatmul.bf16.gmra.mxu0 %v510
      %v788 = vpop.f32.mrf.mxu0
      %v789 = vadd.f32 %v700, %v788
      %v790 = vpop.f32.mrf.mxu0
      %v791 = vadd.f32 %v702, %v790
      %792 = vmatmul.bf16.gmra.mxu0 %v512
      %v793 = vpop.f32.mrf.mxu0
      %v794 = vadd.f32 %v705, %v793
      %v795 = vpop.f32.mrf.mxu0
      %v796 = vadd.f32 %v707, %v795
      %797 = vmatmul.bf16.gmra.mxu0 %v514
      %v798 = vpop.f32.mrf.mxu0
      %v799 = vadd.f32 %v710, %v798
      %v800 = vpop.f32.mrf.mxu0
      %v801 = vadd.f32 %v712, %v800
      %802 = vmatmul.bf16.gmra.mxu0 %v516
      %v803 = vpop.f32.mrf.mxu0
      %v804 = vadd.f32 %v715, %v803
      %v805 = vpop.f32.mrf.mxu0
      %v806 = vadd.f32 %v717, %v805
      %807 = vmatmul.bf16.gmra.mxu0 %v518
      %v808 = vpop.f32.mrf.mxu0
      %v809 = vadd.f32 %v720, %v808
      %v810 = vpop.f32.mrf.mxu0
      %v811 = vadd.f32 %v722, %v810
      %812 = vmatmul.bf16.gmra.mxu0 %v520
      %v813 = vpop.f32.mrf.mxu0
      %v814 = vadd.f32 %v725, %v813
      %v815 = vpop.f32.mrf.mxu0
      %v816 = vadd.f32 %v727, %v815
      %817 = vmatmul.bf16.gmra.mxu0 %v522
      %v818 = vpop.f32.mrf.mxu0
      %v819 = vadd.f32 %v730, %v818
      %v820 = vpop.f32.mrf.mxu0
      %v821 = vadd.f32 %v732, %v820
      %822 = vmatmul.bf16.gmra.mxu0 %v524
      %v823 = vpop.f32.mrf.mxu0
      %v824 = vadd.f32 %v735, %v823
      %v825 = vpop.f32.mrf.mxu0
      %v826 = vadd.f32 %v737, %v825
      %827 = vmatmul.bf16.gmra.mxu0 %v526
      %v828 = vpop.f32.mrf.mxu0
      %v829 = vadd.f32 %v740, %v828
      %v830 = vpop.f32.mrf.mxu0
      %v831 = vadd.f32 %v742, %v830
      %832 = vdwg.mxu0
      %v833 = vadd.f32 %v303, %v754
      %v834 = vadd.f32 %v304, %v756
      %v835 = vadd.f32 %v305, %v759
      %v836 = vadd.f32 %v306, %v761
      %v837 = vadd.f32 %v307, %v764
      %v838 = vadd.f32 %v308, %v766
      %v839 = vadd.f32 %v309, %v769
      %v840 = vadd.f32 %v310, %v771
      %v841 = vadd.f32 %v311, %v774
      %v842 = vadd.f32 %v312, %v776
      %v843 = vadd.f32 %v313, %v779
      %v844 = vadd.f32 %v314, %v781
      %v845 = vadd.f32 %v315, %v784
      %v846 = vadd.f32 %v316, %v786
      %v847 = vadd.f32 %v317, %v789
      %v848 = vadd.f32 %v318, %v791
      %v849 = vadd.f32 %v319, %v794
      %v850 = vadd.f32 %v320, %v796
      %v851 = vadd.f32 %v321, %v799
      %v852 = vadd.f32 %v322, %v801
      %v853 = vadd.f32 %v323, %v804
      %v854 = vadd.f32 %v324, %v806
      %v855 = vadd.f32 %v325, %v809
      %v856 = vadd.f32 %v326, %v811
      %v857 = vadd.f32 %v327, %v814
      %v858 = vadd.f32 %v328, %v816
      %v859 = vadd.f32 %v329, %v819
      %v860 = vadd.f32 %v330, %v821
      %v861 = vadd.f32 %v331, %v824
      %v862 = vadd.f32 %v332, %v826
      %v863 = vadd.f32 %v333, %v829
      %v864 = vadd.f32 %v334, %v831
      %865 = vst [vmem:[#allocation2] sm:$0xff] %v833
      %866 = vst [vmem:[#allocation2 + $0x8] sm:$0xff] %v834
      %867 = vst [vmem:[#allocation2 + $0x10] sm:$0xff] %v835
      %868 = vst [vmem:[#allocation2 + $0x18] sm:$0xff] %v836
      %869 = vst [vmem:[#allocation2 + $0x20] sm:$0xff] %v837
      %870 = vst [vmem:[#allocation2 + $0x28] sm:$0xff] %v838
      %871 = vst [vmem:[#allocation2 + $0x30] sm:$0xff] %v839
      %872 = vst [vmem:[#allocation2 + $0x38] sm:$0xff] %v840
      %873 = vst [vmem:[#allocation2 + $0x40] sm:$0xff] %v841
      %874 = vst [vmem:[#allocation2 + $0x48] sm:$0xff] %v842
      %875 = vst [vmem:[#allocation2 + $0x50] sm:$0xff] %v843
      %876 = vst [vmem:[#allocation2 + $0x58] sm:$0xff] %v844
      %877 = vst [vmem:[#allocation2 + $0x60] sm:$0xff] %v845
      %878 = vst [vmem:[#allocation2 + $0x68] sm:$0xff] %v846
      %879 = vst [vmem:[#allocation2 + $0x70] sm:$0xff] %v847
      %880 = vst [vmem:[#allocation2 + $0x78] sm:$0xff] %v848
      %881 = vst [vmem:[#allocation2 + $0x80] sm:$0xff] %v849
      %882 = vst [vmem:[#allocation2 + $0x88] sm:$0xff] %v850
      %883 = vst [vmem:[#allocation2 + $0x90] sm:$0xff] %v851
      %884 = vst [vmem:[#allocation2 + $0x98] sm:$0xff] %v852
      %885 = vst [vmem:[#allocation2 + $0xa0] sm:$0xff] %v853
      %886 = vst [vmem:[#allocation2 + $0xa8] sm:$0xff] %v854
      %887 = vst [vmem:[#allocation2 + $0xb0] sm:$0xff] %v855
      %888 = vst [vmem:[#allocation2 + $0xb8] sm:$0xff] %v856
      %889 = vst [vmem:[#allocation2 + $0xc0] sm:$0xff] %v857
      %890 = vst [vmem:[#allocation2 + $0xc8] sm:$0xff] %v858
      %891 = vst [vmem:[#allocation2 + $0xd0] sm:$0xff] %v859
      %892 = vst [vmem:[#allocation2 + $0xd8] sm:$0xff] %v860
      %893 = vst [vmem:[#allocation2 + $0xe0] sm:$0xff] %v861
      %894 = vst [vmem:[#allocation2 + $0xe8] sm:$0xff] %v862
      %895 = vst [vmem:[#allocation2 + $0xf0] sm:$0xff] %v863
      %896 = vst [vmem:[#allocation2 + $0xf8] sm:$0xff] %v864
      // Predicated region
      $region37: #{resnet_generator_forward.48} parent=31 // pred_check
        %p897 = pneg %p267
      $region38: #{resnet_generator_forward.48} parent=31 // pred_check_branch
        %899 = sbr.rel (%p897) target = $region40
      $region39: #{resnet_generator_forward.48} parent=31 // pred_region
        %v900 = vld [vmem:[#allocation2] sm:$0xff]
        %v901 = vld [vmem:[#allocation2 + $0x8] sm:$0xff]
        %v902 = vld [vmem:[#allocation2 + $0x10] sm:$0xff]
        %v903 = vld [vmem:[#allocation2 + $0x18] sm:$0xff]
        %v904 = vld [vmem:[#allocation2 + $0x20] sm:$0xff]
        %v905 = vld [vmem:[#allocation2 + $0x28] sm:$0xff]
        %v906 = vld [vmem:[#allocation2 + $0x30] sm:$0xff]
        %v907 = vld [vmem:[#allocation2 + $0x38] sm:$0xff]
        %v908 = vld [vmem:[#allocation2 + $0x40] sm:$0xff]
        %v909 = vld [vmem:[#allocation2 + $0x48] sm:$0xff]
        %v910 = vld [vmem:[#allocation2 + $0x50] sm:$0xff]
        %v911 = vld [vmem:[#allocation2 + $0x58] sm:$0xff]
        %v912 = vld [vmem:[#allocation2 + $0x60] sm:$0xff]
        %v913 = vld [vmem:[#allocation2 + $0x68] sm:$0xff]
        %v914 = vld [vmem:[#allocation2 + $0x70] sm:$0xff]
        %v915 = vld [vmem:[#allocation2 + $0x78] sm:$0xff]
        %v916 = vld [vmem:[#allocation2 + $0x80] sm:$0xff]
        %v917 = vld [vmem:[#allocation2 + $0x88] sm:$0xff]
        %v918 = vld [vmem:[#allocation2 + $0x90] sm:$0xff]
        %v919 = vld [vmem:[#allocation2 + $0x98] sm:$0xff]
        %v920 = vld [vmem:[#allocation2 + $0xa0] sm:$0xff]
        %v921 = vld [vmem:[#allocation2 + $0xa8] sm:$0xff]
        %v922 = vld [vmem:[#allocation2 + $0xb0] sm:$0xff]
        %v923 = vld [vmem:[#allocation2 + $0xb8] sm:$0xff]
        %v924 = vld [vmem:[#allocation2 + $0xc0] sm:$0xff]
        %v925 = vld [vmem:[#allocation2 + $0xc8] sm:$0xff]
        %v926 = vld [vmem:[#allocation2 + $0xd0] sm:$0xff]
        %v927 = vld [vmem:[#allocation2 + $0xd8] sm:$0xff]
        %v928 = vld [vmem:[#allocation2 + $0xe0] sm:$0xff]
        %v929 = vld [vmem:[#allocation2 + $0xe8] sm:$0xff]
        %v930 = vld [vmem:[#allocation2 + $0xf0] sm:$0xff]
        %v931 = vld [vmem:[#allocation2 + $0xf8] sm:$0xff]
        %v932 = vld [vmem:[%s257] sm:$0x1]
        %v934 = vperm.slane %v932, 0
        %v936 = vadd.f32 %v900, %v934
        %v937 = vadd.f32 %v901, %v934
        %v938 = vadd.f32 %v902, %v934
        %v939 = vadd.f32 %v903, %v934
        %v940 = vadd.f32 %v904, %v934
        %v941 = vadd.f32 %v905, %v934
        %v942 = vadd.f32 %v906, %v934
        %v943 = vadd.f32 %v907, %v934
        %v944 = vadd.f32 %v908, %v934
        %v945 = vadd.f32 %v909, %v934
        %v946 = vadd.f32 %v910, %v934
        %v947 = vadd.f32 %v911, %v934
        %v948 = vadd.f32 %v912, %v934
        %v949 = vadd.f32 %v913, %v934
        %v950 = vadd.f32 %v914, %v934
        %v951 = vadd.f32 %v915, %v934
        %v952 = vadd.f32 %v916, %v934
        %v953 = vadd.f32 %v917, %v934
        %v954 = vadd.f32 %v918, %v934
        %v955 = vadd.f32 %v919, %v934
        %v956 = vadd.f32 %v920, %v934
        %v957 = vadd.f32 %v921, %v934
        %v958 = vadd.f32 %v922, %v934
        %v959 = vadd.f32 %v923, %v934
        %v960 = vadd.f32 %v924, %v934
        %v961 = vadd.f32 %v925, %v934
        %v962 = vadd.f32 %v926, %v934
        %v963 = vadd.f32 %v927, %v934
        %v964 = vadd.f32 %v928, %v934
        %v965 = vadd.f32 %v929, %v934
        %v966 = vadd.f32 %v930, %v934
        %v967 = vadd.f32 %v931, %v934
        %968 = vst [vmem:[%s265] sm:$0xff] %v936
        %969 = vst [vmem:[%s265 + $0x8] sm:$0xff] %v937
        %970 = vst [vmem:[%s265 + $0x10] sm:$0xff] %v938
        %971 = vst [vmem:[%s265 + $0x18] sm:$0xff] %v939
        %972 = vst [vmem:[%s265 + $0x20] sm:$0xff] %v940
        %973 = vst [vmem:[%s265 + $0x28] sm:$0xff] %v941
        %974 = vst [vmem:[%s265 + $0x30] sm:$0xff] %v942
        %975 = vst [vmem:[%s265 + $0x38] sm:$0xff] %v943
        %976 = vst [vmem:[%s265 + $0x40] sm:$0xff] %v944
        %977 = vst [vmem:[%s265 + $0x48] sm:$0xff] %v945
        %978 = vst [vmem:[%s265 + $0x50] sm:$0xff] %v946
        %979 = vst [vmem:[%s265 + $0x58] sm:$0xff] %v947
        %980 = vst [vmem:[%s265 + $0x60] sm:$0xff] %v948
        %981 = vst [vmem:[%s265 + $0x68] sm:$0xff] %v949
        %982 = vst [vmem:[%s265 + $0x70] sm:$0xff] %v950
        %983 = vst [vmem:[%s265 + $0x78] sm:$0xff] %v951
        %984 = vst [vmem:[%s265 + $0x80] sm:$0xff] %v952
        %985 = vst [vmem:[%s265 + $0x88] sm:$0xff] %v953
        %986 = vst [vmem:[%s265 + $0x90] sm:$0xff] %v954
        %987 = vst [vmem:[%s265 + $0x98] sm:$0xff] %v955
        %988 = vst [vmem:[%s265 + $0xa0] sm:$0xff] %v956
        %989 = vst [vmem:[%s265 + $0xa8] sm:$0xff] %v957
        %990 = vst [vmem:[%s265 + $0xb0] sm:$0xff] %v958
        %991 = vst [vmem:[%s265 + $0xb8] sm:$0xff] %v959
        %992 = vst [vmem:[%s265 + $0xc0] sm:$0xff] %v960
        %993 = vst [vmem:[%s265 + $0xc8] sm:$0xff] %v961
        %994 = vst [vmem:[%s265 + $0xd0] sm:$0xff] %v962
        %995 = vst [vmem:[%s265 + $0xd8] sm:$0xff] %v963
        %996 = vst [vmem:[%s265 + $0xe0] sm:$0xff] %v964
        %997 = vst [vmem:[%s265 + $0xe8] sm:$0xff] %v965
        %998 = vst [vmem:[%s265 + $0xf0] sm:$0xff] %v966
        %999 = vst [vmem:[%s265 + $0xf8] sm:$0xff] %v967
      $region40: #{resnet_generator_forward.48} parent=31 // pred_fallthru
        _
      %s1000 = smul.u32 32, %s19
      %p1001 = scmp.lt.s32.totalorder %s1000, 63
      %s1002 = scalar_select %p1001, %s1000, 63
      %p1003 = scmp.lt.s32.totalorder %s20, 0
      %s1004 = scalar_select %p1003, %s20, 0
      %s1005 = sadd.s32 %s1004, %s1002
      %s1006 = smul.addr %s1005, 8
      %s1007 = scalar_lea.vmem %s3, %s1006
      // Predicated region
      $region41: #{resnet_generator_forward.48} parent=31 // pred_check
        %p1008 = pneg %p135
      $region42: #{resnet_generator_forward.48} parent=31 // pred_check_branch
        %1010 = sbr.rel (%p1008) target = $region44
      $region43: #{resnet_generator_forward.48} parent=31 // pred_region
        %s1011 = smul.u32 32, %s19
      $region44: #{resnet_generator_forward.48} parent=31 // pred_fallthru
        _
    $region32: #{resnet_generator_forward.48} parent=5 // pred_fallthru
      _
    %p1012 = scmp.le.s32.totalorder 2, %s9
    // Predicated region
    $region45: #{resnet_generator_forward.48} parent=5 // pred_check
      %p1013 = pneg %p1012
    $region46: #{resnet_generator_forward.48} parent=5 // pred_check_branch
      %1015 = sbr.rel (%p1013) target = $region48
    $region47: #{resnet_generator_forward.48} parent=5 // pred_region
      %s1016 = ssub.s32 %s9, 2
      // Predicated region
      $region49: #{resnet_generator_forward.48} parent=47 // pred_check
        %p1017 = pneg %p141
      $region50: #{resnet_generator_forward.48} parent=47 // pred_check_branch
        %1019 = sbr.rel (%p1017) target = $region52
      $region51: #{resnet_generator_forward.48} parent=47 // pred_region
        %s1020 = smul.u32 32, %s22
        %p1021 = scmp.lt.s32.totalorder %s1020, 63
        %s1022 = scalar_select %p1021, %s1020, 63
        %p1023 = scmp.lt.s32.totalorder %s23, 0
        %s1024 = scalar_select %p1023, %s23, 0
        %s1025 = sadd.s32 %s1024, %s1022
        %s1026 = smul.addr %s1025, 8
        %s1027 = scalar_lea.vmem %s3, %s1026
      $region52: #{resnet_generator_forward.48} parent=47 // pred_fallthru
        _
    $region48: #{resnet_generator_forward.48} parent=5 // pred_fallthru
      _
  $region6: #{resnet_generator_forward.48} parent=0 // loop_footer
    %s13 = sadd.s32 1, %s9
  $region7: #{resnet_generator_forward.48} parent=0 // loop_footer_branch
    %8 = sbr.rel target = $region3
  $region8: #{resnet_generator_forward.48} parent=0 // loop_exit
    _

// kernel: resnet_generator_forward.50
$region0: #{resnet_generator_forward.50}
  #allocation0 [shape = 'u32[]', space=smem, size = 0x4, offset = 0x4, fixed_abs, tag = 'smem constant byte address 0x4 - core index']
  #allocation1 [shape = 'u32[72,128]{1,0:T(1,128)}', space=vmem, size = 0x9000, scoped, tag = 'internal scratch']
  #allocation2 [shape = 'f32[128,128]{1,0:T(8,128)}', space=vmem, size = 0x10000, scoped, tag = 'scratch operand']
  %s0 = inlined_call_operand.vmem [shape: bf16[128,128], index: 0, kind: input, shape index: {}]
  %s1 = inlined_call_operand.vmem [shape: bf16[128,128], index: 1, kind: input, shape index: {}]
  %s2 = inlined_call_operand.vmem [shape: f32[1,128], index: 2, kind: input, shape index: {}]
  %s3 = inlined_call_operand.vmem [shape: f32[128,128], index: 3, kind: output, shape index: {}]
  %s4 = sld [smem:[#allocation0]]
  $region30: #{resnet_generator_forward.50} parent=0
    _
  %s6 = ssub.s32 1, %s4
  %s7 = scalar_select 0, %s6, %s4
  // Predicated region
  $region2: #{resnet_generator_forward.50} parent=0 // pred_check
    _
  $region3: #{resnet_generator_forward.50} parent=0 // pred_check_branch
    %9 = sbr.rel (0) target = $region5
  $region4: #{resnet_generator_forward.50} parent=0 // pred_region
    _
  $region5: #{resnet_generator_forward.50} parent=0 // pred_fallthru
    _
  // Predicated region
  $region6: #{resnet_generator_forward.50} parent=0 // pred_check
    _
  $region7: #{resnet_generator_forward.50} parent=0 // pred_check_branch
    %11 = sbr.rel (0) target = $region9
  $region8: #{resnet_generator_forward.50} parent=0 // pred_region
    _
  $region9: #{resnet_generator_forward.50} parent=0 // pred_fallthru
    _
  // Predicated region
  $region10: #{resnet_generator_forward.50} parent=0 // pred_check
    _
  $region11: #{resnet_generator_forward.50} parent=0 // pred_check_branch
    %13 = sbr.rel (0) target = $region13
  $region12: #{resnet_generator_forward.50} parent=0 // pred_region
    _
  $region13: #{resnet_generator_forward.50} parent=0 // pred_fallthru
    _
  %p14 = scmp.eq.s32.totalorder 0, 0
  // Predicated region
  $region14: #{resnet_generator_forward.50} parent=0 // pred_check
    %p15 = pneg %p14
  $region15: #{resnet_generator_forward.50} parent=0 // pred_check_branch
    %17 = sbr.rel (%p15) target = $region17
  $region16: #{resnet_generator_forward.50} parent=0 // pred_region
    %18 = vst [vmem:[#allocation2] sm:$0xff] 0.0
    %19 = vst [vmem:[#allocation2 + $0x8] sm:$0xff] 0.0
    %20 = vst [vmem:[#allocation2 + $0x10] sm:$0xff] 0.0
    %21 = vst [vmem:[#allocation2 + $0x18] sm:$0xff] 0.0
    %22 = vst [vmem:[#allocation2 + $0x20] sm:$0xff] 0.0
    %23 = vst [vmem:[#allocation2 + $0x28] sm:$0xff] 0.0
    %24 = vst [vmem:[#allocation2 + $0x30] sm:$0xff] 0.0
    %25 = vst [vmem:[#allocation2 + $0x38] sm:$0xff] 0.0
    %26 = vst [vmem:[#allocation2 + $0x40] sm:$0xff] 0.0
    %27 = vst [vmem:[#allocation2 + $0x48] sm:$0xff] 0.0
    %28 = vst [vmem:[#allocation2 + $0x50] sm:$0xff] 0.0
    %29 = vst [vmem:[#allocation2 + $0x58] sm:$0xff] 0.0
    %30 = vst [vmem:[#allocation2 + $0x60] sm:$0xff] 0.0
    %31 = vst [vmem:[#allocation2 + $0x68] sm:$0xff] 0.0
    %32 = vst [vmem:[#allocation2 + $0x70] sm:$0xff] 0.0
    %33 = vst [vmem:[#allocation2 + $0x78] sm:$0xff] 0.0
  $region17: #{resnet_generator_forward.50} parent=0 // pred_fallthru
    _
  %v34 = vld [vmem:[#allocation2] sm:$0xff]
  %v35 = vld [vmem:[#allocation2 + $0x8] sm:$0xff]
  %v36 = vld [vmem:[#allocation2 + $0x10] sm:$0xff]
  %v37 = vld [vmem:[#allocation2 + $0x18] sm:$0xff]
  %v38 = vld [vmem:[#allocation2 + $0x20] sm:$0xff]
  %v39 = vld [vmem:[#allocation2 + $0x28] sm:$0xff]
  %v40 = vld [vmem:[#allocation2 + $0x30] sm:$0xff]
  %v41 = vld [vmem:[#allocation2 + $0x38] sm:$0xff]
  %v42 = vld [vmem:[#allocation2 + $0x40] sm:$0xff]
  %v43 = vld [vmem:[#allocation2 + $0x48] sm:$0xff]
  %v44 = vld [vmem:[#allocation2 + $0x50] sm:$0xff]
  %v45 = vld [vmem:[#allocation2 + $0x58] sm:$0xff]
  %v46 = vld [vmem:[#allocation2 + $0x60] sm:$0xff]
  %v47 = vld [vmem:[#allocation2 + $0x68] sm:$0xff]
  %v48 = vld [vmem:[#allocation2 + $0x70] sm:$0xff]
  %v49 = vld [vmem:[#allocation2 + $0x78] sm:$0xff]
  %v50 = vld [vmem:[%s0] sm:$0xf]
  %v51 = vld [vmem:[%s0 + $0x4] sm:$0xf]
  %v52 = vld [vmem:[%s0 + $0x8] sm:$0xf]
  %v53 = vld [vmem:[%s0 + $0xc] sm:$0xf]
  %v54 = vld [vmem:[%s0 + $0x10] sm:$0xf]
  %v55 = vld [vmem:[%s0 + $0x14] sm:$0xf]
  %v56 = vld [vmem:[%s0 + $0x18] sm:$0xf]
  %v57 = vld [vmem:[%s0 + $0x1c] sm:$0xf]
  %v58 = vld [vmem:[%s0 + $0x20] sm:$0xf]
  %v59 = vld [vmem:[%s0 + $0x24] sm:$0xf]
  %v60 = vld [vmem:[%s0 + $0x28] sm:$0xf]
  %v61 = vld [vmem:[%s0 + $0x2c] sm:$0xf]
  %v62 = vld [vmem:[%s0 + $0x30] sm:$0xf]
  %v63 = vld [vmem:[%s0 + $0x34] sm:$0xf]
  %v64 = vld [vmem:[%s0 + $0x38] sm:$0xf]
  %v65 = vld [vmem:[%s0 + $0x3c] sm:$0xf]
  %v66 = vld [vmem:[%s1] sm:$0xf]
  %v67 = vld [vmem:[%s1 + $0x4] sm:$0xf]
  %v68 = vld [vmem:[%s1 + $0x8] sm:$0xf]
  %v69 = vld [vmem:[%s1 + $0xc] sm:$0xf]
  %v70 = vld [vmem:[%s1 + $0x10] sm:$0xf]
  %v71 = vld [vmem:[%s1 + $0x14] sm:$0xf]
  %v72 = vld [vmem:[%s1 + $0x18] sm:$0xf]
  %v73 = vld [vmem:[%s1 + $0x1c] sm:$0xf]
  %v74 = vld [vmem:[%s1 + $0x20] sm:$0xf]
  %v75 = vld [vmem:[%s1 + $0x24] sm:$0xf]
  %v76 = vld [vmem:[%s1 + $0x28] sm:$0xf]
  %v77 = vld [vmem:[%s1 + $0x2c] sm:$0xf]
  %v78 = vld [vmem:[%s1 + $0x30] sm:$0xf]
  %v79 = vld [vmem:[%s1 + $0x34] sm:$0xf]
  %v80 = vld [vmem:[%s1 + $0x38] sm:$0xf]
  %v81 = vld [vmem:[%s1 + $0x3c] sm:$0xf]
  %v98 = vunpack.c.l.b16 %v50
  %v99 = vunpack.c.l.b16 %v51
  %v100 = vunpack.c.l.b16 %v52
  %v101 = vunpack.c.l.b16 %v53
  %v102 = vunpack.c.l.b16 %v54
  %v103 = vunpack.c.l.b16 %v55
  %v104 = vunpack.c.l.b16 %v56
  %v105 = vunpack.c.l.b16 %v57
  %v106 = vunpack.c.l.b16 %v58
  %v107 = vunpack.c.l.b16 %v59
  %v108 = vunpack.c.l.b16 %v60
  %v109 = vunpack.c.l.b16 %v61
  %v110 = vunpack.c.l.b16 %v62
  %v111 = vunpack.c.l.b16 %v63
  %v112 = vunpack.c.l.b16 %v64
  %v113 = vunpack.c.l.b16 %v65
  %v114 = vpack.c.b16 %v99, %v98
  %v115 = vpack.c.b16 %v101, %v100
  %v116 = vpack.c.b16 %v103, %v102
  %v117 = vpack.c.b16 %v105, %v104
  %v118 = vpack.c.b16 %v107, %v106
  %v119 = vpack.c.b16 %v109, %v108
  %v120 = vpack.c.b16 %v111, %v110
  %v121 = vpack.c.b16 %v113, %v112
  %v146 = vunpack.c.l.b16 %v66
  %v147 = vunpack.c.l.b16 %v67
  %v148 = vunpack.c.l.b16 %v68
  %v149 = vunpack.c.l.b16 %v69
  %v150 = vunpack.c.l.b16 %v70
  %v151 = vunpack.c.l.b16 %v71
  %v152 = vunpack.c.l.b16 %v72
  %v153 = vunpack.c.l.b16 %v73
  %v154 = vunpack.c.l.b16 %v74
  %v155 = vunpack.c.l.b16 %v75
  %v156 = vunpack.c.l.b16 %v76
  %v157 = vunpack.c.l.b16 %v77
  %v158 = vunpack.c.l.b16 %v78
  %v159 = vunpack.c.l.b16 %v79
  %v160 = vunpack.c.l.b16 %v80
  %v161 = vunpack.c.l.b16 %v81
  %v162 = vpack.c.b16 %v147, %v146
  %v163 = vpack.c.b16 %v149, %v148
  %v164 = vpack.c.b16 %v151, %v150
  %v165 = vpack.c.b16 %v153, %v152
  %v166 = vpack.c.b16 %v155, %v154
  %v167 = vpack.c.b16 %v157, %v156
  %v168 = vpack.c.b16 %v159, %v158
  %v169 = vpack.c.b16 %v161, %v160
  %178 = vmatpush.bf16.msra.mxu0 %v169
  %179 = vmatpush.bf16.msra.mxu0 %v168
  %180 = vmatpush.bf16.msra.mxu0 %v167
  %181 = vmatpush.bf16.msra.mxu0 %v166
  %182 = vmatpush.bf16.msra.mxu0 %v165
  %183 = vmatpush.bf16.msra.mxu0 %v164
  %184 = vmatpush.bf16.msra.mxu0 %v163
  %185 = vmatpush.bf16.msra.mxu0 %v162
  %186 = vmatmul.bf16.gmra.mxu0 %v114
  %v187 = vpop.f32.mrf.mxu0
  %v188 = vadd.f32 0.0, %v187
  %v189 = vpop.f32.mrf.mxu0
  %v190 = vadd.f32 0.0, %v189
  %191 = vmatmul.bf16.gmra.mxu0 %v115
  %v192 = vpop.f32.mrf.mxu0
  %v193 = vadd.f32 0.0, %v192
  %v194 = vpop.f32.mrf.mxu0
  %v195 = vadd.f32 0.0, %v194
  %196 = vmatmul.bf16.gmra.mxu0 %v116
  %v197 = vpop.f32.mrf.mxu0
  %v198 = vadd.f32 0.0, %v197
  %v199 = vpop.f32.mrf.mxu0
  %v200 = vadd.f32 0.0, %v199
  %201 = vmatmul.bf16.gmra.mxu0 %v117
  %v202 = vpop.f32.mrf.mxu0
  %v203 = vadd.f32 0.0, %v202
  %v204 = vpop.f32.mrf.mxu0
  %v205 = vadd.f32 0.0, %v204
  %206 = vmatmul.bf16.gmra.mxu0 %v118
  %v207 = vpop.f32.mrf.mxu0
  %v208 = vadd.f32 0.0, %v207
  %v209 = vpop.f32.mrf.mxu0
  %v210 = vadd.f32 0.0, %v209
  %211 = vmatmul.bf16.gmra.mxu0 %v119
  %v212 = vpop.f32.mrf.mxu0
  %v213 = vadd.f32 0.0, %v212
  %v214 = vpop.f32.mrf.mxu0
  %v215 = vadd.f32 0.0, %v214
  %216 = vmatmul.bf16.gmra.mxu0 %v120
  %v217 = vpop.f32.mrf.mxu0
  %v218 = vadd.f32 0.0, %v217
  %v219 = vpop.f32.mrf.mxu0
  %v220 = vadd.f32 0.0, %v219
  %221 = vmatmul.bf16.gmra.mxu0 %v121
  %v222 = vpop.f32.mrf.mxu0
  %v223 = vadd.f32 0.0, %v222
  %v224 = vpop.f32.mrf.mxu0
  %v225 = vadd.f32 0.0, %v224
  %226 = vdwg.mxu0
  %v227 = vadd.f32 %v34, %v188
  %v228 = vadd.f32 %v35, %v190
  %v229 = vadd.f32 %v36, %v193
  %v230 = vadd.f32 %v37, %v195
  %v231 = vadd.f32 %v38, %v198
  %v232 = vadd.f32 %v39, %v200
  %v233 = vadd.f32 %v40, %v203
  %v234 = vadd.f32 %v41, %v205
  %v235 = vadd.f32 %v42, %v208
  %v236 = vadd.f32 %v43, %v210
  %v237 = vadd.f32 %v44, %v213
  %v238 = vadd.f32 %v45, %v215
  %v239 = vadd.f32 %v46, %v218
  %v240 = vadd.f32 %v47, %v220
  %v241 = vadd.f32 %v48, %v223
  %v242 = vadd.f32 %v49, %v225
  %243 = vst [vmem:[#allocation2] sm:$0xff] %v227
  %244 = vst [vmem:[#allocation2 + $0x8] sm:$0xff] %v228
  %245 = vst [vmem:[#allocation2 + $0x10] sm:$0xff] %v229
  %246 = vst [vmem:[#allocation2 + $0x18] sm:$0xff] %v230
  %247 = vst [vmem:[#allocation2 + $0x20] sm:$0xff] %v231
  %248 = vst [vmem:[#allocation2 + $0x28] sm:$0xff] %v232
  %249 = vst [vmem:[#allocation2 + $0x30] sm:$0xff] %v233
  %250 = vst [vmem:[#allocation2 + $0x38] sm:$0xff] %v234
  %251 = vst [vmem:[#allocation2 + $0x40] sm:$0xff] %v235
  %252 = vst [vmem:[#allocation2 + $0x48] sm:$0xff] %v236
  %253 = vst [vmem:[#allocation2 + $0x50] sm:$0xff] %v237
  %254 = vst [vmem:[#allocation2 + $0x58] sm:$0xff] %v238
  %255 = vst [vmem:[#allocation2 + $0x60] sm:$0xff] %v239
  %256 = vst [vmem:[#allocation2 + $0x68] sm:$0xff] %v240
  %257 = vst [vmem:[#allocation2 + $0x70] sm:$0xff] %v241
  %258 = vst [vmem:[#allocation2 + $0x78] sm:$0xff] %v242
  // Predicated region
  $region18: #{resnet_generator_forward.50} parent=0 // pred_check
    %p259 = pneg %p14
  $region19: #{resnet_generator_forward.50} parent=0 // pred_check_branch
    %261 = sbr.rel (%p259) target = $region21
  $region20: #{resnet_generator_forward.50} parent=0 // pred_region
    %v262 = vld [vmem:[#allocation2] sm:$0xff]
    %v263 = vld [vmem:[#allocation2 + $0x8] sm:$0xff]
    %v264 = vld [vmem:[#allocation2 + $0x10] sm:$0xff]
    %v265 = vld [vmem:[#allocation2 + $0x18] sm:$0xff]
    %v266 = vld [vmem:[#allocation2 + $0x20] sm:$0xff]
    %v267 = vld [vmem:[#allocation2 + $0x28] sm:$0xff]
    %v268 = vld [vmem:[#allocation2 + $0x30] sm:$0xff]
    %v269 = vld [vmem:[#allocation2 + $0x38] sm:$0xff]
    %v270 = vld [vmem:[#allocation2 + $0x40] sm:$0xff]
    %v271 = vld [vmem:[#allocation2 + $0x48] sm:$0xff]
    %v272 = vld [vmem:[#allocation2 + $0x50] sm:$0xff]
    %v273 = vld [vmem:[#allocation2 + $0x58] sm:$0xff]
    %v274 = vld [vmem:[#allocation2 + $0x60] sm:$0xff]
    %v275 = vld [vmem:[#allocation2 + $0x68] sm:$0xff]
    %v276 = vld [vmem:[#allocation2 + $0x70] sm:$0xff]
    %v277 = vld [vmem:[#allocation2 + $0x78] sm:$0xff]
    %v278 = vld [vmem:[%s2] sm:$0x1]
    %v280 = vperm.slane %v278, 0
    %v282 = vadd.f32 %v262, %v280
    %v283 = vadd.f32 %v263, %v280
    %v284 = vadd.f32 %v264, %v280
    %v285 = vadd.f32 %v265, %v280
    %v286 = vadd.f32 %v266, %v280
    %v287 = vadd.f32 %v267, %v280
    %v288 = vadd.f32 %v268, %v280
    %v289 = vadd.f32 %v269, %v280
    %v290 = vadd.f32 %v270, %v280
    %v291 = vadd.f32 %v271, %v280
    %v292 = vadd.f32 %v272, %v280
    %v293 = vadd.f32 %v273, %v280
    %v294 = vadd.f32 %v274, %v280
    %v295 = vadd.f32 %v275, %v280
    %v296 = vadd.f32 %v276, %v280
    %v297 = vadd.f32 %v277, %v280
    %298 = vst [vmem:[%s3] sm:$0xff] %v282
    %299 = vst [vmem:[%s3 + $0x8] sm:$0xff] %v283
    %300 = vst [vmem:[%s3 + $0x10] sm:$0xff] %v284
    %301 = vst [vmem:[%s3 + $0x18] sm:$0xff] %v285
    %302 = vst [vmem:[%s3 + $0x20] sm:$0xff] %v286
    %303 = vst [vmem:[%s3 + $0x28] sm:$0xff] %v287
    %304 = vst [vmem:[%s3 + $0x30] sm:$0xff] %v288
    %305 = vst [vmem:[%s3 + $0x38] sm:$0xff] %v289
    %306 = vst [vmem:[%s3 + $0x40] sm:$0xff] %v290
    %307 = vst [vmem:[%s3 + $0x48] sm:$0xff] %v291
    %308 = vst [vmem:[%s3 + $0x50] sm:$0xff] %v292
    %309 = vst [vmem:[%s3 + $0x58] sm:$0xff] %v293
    %310 = vst [vmem:[%s3 + $0x60] sm:$0xff] %v294
    %311 = vst [vmem:[%s3 + $0x68] sm:$0xff] %v295
    %312 = vst [vmem:[%s3 + $0x70] sm:$0xff] %v296
    %313 = vst [vmem:[%s3 + $0x78] sm:$0xff] %v297
  $region21: #{resnet_generator_forward.50} parent=0 // pred_fallthru
    _
  // Predicated region
  $region22: #{resnet_generator_forward.50} parent=0 // pred_check
    _
  $region23: #{resnet_generator_forward.50} parent=0 // pred_check_branch
    %315 = sbr.rel (0) target = $region25
  $region24: #{resnet_generator_forward.50} parent=0 // pred_region
    _
  $region25: #{resnet_generator_forward.50} parent=0 // pred_fallthru
    _
  // Predicated region
  $region26: #{resnet_generator_forward.50} parent=0 // pred_check
    _
  $region27: #{resnet_generator_forward.50} parent=0 // pred_check_branch
    %317 = sbr.rel (0) target = $region29
  $region28: #{resnet_generator_forward.50} parent=0 // pred_region
    _
  $region29: #{resnet_generator_forward.50} parent=0 // pred_fallthru
    _

// kernel: resnet_generator_forward.51
$region0: #{resnet_generator_forward.51}
  #allocation0 [shape = 'u32[]', space=smem, size = 0x4, offset = 0x4, fixed_abs, tag = 'smem constant byte address 0x4 - core index']
  #allocation1 [shape = 'u32[72,128]{1,0:T(1,128)}', space=vmem, size = 0x9000, scoped, tag = 'internal scratch']
  %s0 = inlined_call_operand.vmem [shape: f32[2,64,16], index: 0, kind: input, shape index: {}]
  %s1 = inlined_call_operand.vmem [shape: f32[2,64,16], index: 1, kind: output, shape index: {}]
  %s2 = sld [smem:[#allocation0]]
  $region37: #{resnet_generator_forward.51} parent=0
    _
  %s4 = ssub.s32 1, %s2
  %s5 = scalar_select 0, %s4, %s2
  loop: start=0, step=1, limit=4
  $region2: #{resnet_generator_forward.51} parent=0 // loop_pre_header
    _
  $region3: #{resnet_generator_forward.51} parent=0 // loop_header
    %s7 = sphi 0, %s11
    %p8 = scmp.ge.s32.totalorder %s7, 4
    %s14 = sphi 0, %s26
    %s15 = sphi 0, %s22
    %s16 = sphi 0, %s14
    %s17 = sphi 0, %s15
    %s18 = sphi 0, %s16
    %s19 = sphi 0, %s17
    %s31 = sphi 0, %s33
    %s34 = sphi 0, %s31
    %s35 = sphi 0, %s34
    %s51 = sphi 0, %s35
    %s59 = sphi 0, %s61
    %s62 = sphi 0, %s59
    %s63 = sphi 0, %s62
    %s79 = sphi 0, %s63
  $region4: #{resnet_generator_forward.51} parent=0 // loop_header_branch
    %10 = sbr.rel (%p8) target = $region8
  $region5: #{resnet_generator_forward.51} parent=0 // loop_body
    %s12 = ssub.s32 %s7, 1
    %s13 = ssub.s32 %s7, 2
    %s20 = sadd.s32 1, %s15
    %p21 = scmp.ge.s32.totalorder %s20, 1
    %s22 = scalar_select %p21, 0, %s20
    %s23 = sadd.s32 1, %s14
    %s24 = scalar_select %p21, %s23, %s14
    %p25 = scmp.ge.s32.totalorder %s24, 2
    %s26 = scalar_select %p25, 0, %s24
    %s27 = ssub.s32 %s14, %s26
    %s28 = ssub.s32 %s15, %s22
    %s29 = sor.u32 %s27, %s28
    %p30 = scmp.eq.s32.totalorder %s29, 0
    %s32 = sadd.s32 %s31, 1
    %s33 = scalar_select %p30, %s31, %s32
    %p36 = pneg %p30
    %p37 = scmp.eq.s32.totalorder %s7, 1
    %p38 = por %p36, %p37
    %p39 = scmp.ne.s32.totalorder %s31, %s34
    %p40 = scmp.eq.s32.totalorder %s7, 0
    %p41 = por %p39, %p40
    %p42 = scmp.ne.s32.totalorder %s31, %s34
    %p43 = scmp.eq.s32.totalorder %s12, 1
    %p44 = por %p42, %p43
    %p45 = scmp.ne.s32.totalorder %s34, %s35
    %p46 = scmp.eq.s32.totalorder %s12, 0
    %p47 = por %p45, %p46
    %p48 = scmp.ne.s32.totalorder %s34, %s35
    %p49 = scmp.eq.s32.totalorder %s13, 1
    %p50 = por %p48, %p49
    %p52 = scmp.ne.s32.totalorder %s35, %s51
    %p53 = scmp.eq.s32.totalorder %s13, 0
    %p54 = por %p52, %p53
    %s55 = ssub.s32 %s14, %s26
    %s56 = ssub.s32 %s15, %s22
    %s57 = sor.u32 %s55, %s56
    %p58 = scmp.eq.s32.totalorder %s57, 0
    %s60 = sadd.s32 %s59, 1
    %s61 = scalar_select %p58, %s59, %s60
    %p64 = pneg %p58
    %p65 = scmp.eq.s32.totalorder %s7, 1
    %p66 = por %p64, %p65
    %p67 = scmp.ne.s32.totalorder %s59, %s62
    %p68 = scmp.eq.s32.totalorder %s7, 0
    %p69 = por %p67, %p68
    %p70 = scmp.ne.s32.totalorder %s59, %s62
    %p71 = scmp.eq.s32.totalorder %s12, 1
    %p72 = por %p70, %p71
    %p73 = scmp.ne.s32.totalorder %s62, %s63
    %p74 = scmp.eq.s32.totalorder %s12, 0
    %p75 = por %p73, %p74
    %p76 = scmp.ne.s32.totalorder %s62, %s63
    %p77 = scmp.eq.s32.totalorder %s13, 1
    %p78 = por %p76, %p77
    %p80 = scmp.ne.s32.totalorder %s63, %s79
    %p81 = scmp.eq.s32.totalorder %s13, 0
    %p82 = por %p80, %p81
    %p83 = scmp.le.s32.totalorder 1, %s7
    %p84 = scmp.lt.s32.totalorder %s7, 3
    %p85 = pnand %p83, %p84
    %p86 = pneg %p85
    // Predicated region
    $region9: #{resnet_generator_forward.51} parent=5 // pred_check
      _
    $region10: #{resnet_generator_forward.51} parent=5 // pred_check_branch
      %88 = sbr.rel (%p85) target = $region12
    $region11: #{resnet_generator_forward.51} parent=5 // pred_region
      %s89 = ssub.s32 %s7, 1
    $region12: #{resnet_generator_forward.51} parent=5 // pred_fallthru
      _
    %p90 = scmp.lt.s32.totalorder %s7, 2
    // Predicated region
    $region13: #{resnet_generator_forward.51} parent=5 // pred_check
      %p91 = pneg %p90
    $region14: #{resnet_generator_forward.51} parent=5 // pred_check_branch
      %93 = sbr.rel (%p91) target = $region16
    $region15: #{resnet_generator_forward.51} parent=5 // pred_region
      // Predicated region
      $region17: #{resnet_generator_forward.51} parent=15 // pred_check
        %p94 = pneg %p41
      $region18: #{resnet_generator_forward.51} parent=15 // pred_check_branch
        %96 = sbr.rel (%p94) target = $region20
      $region19: #{resnet_generator_forward.51} parent=15 // pred_region
        %p97 = scmp.lt.s32.totalorder %s14, 1
        %s98 = scalar_select %p97, %s14, 1
        %p99 = scmp.lt.s32.totalorder %s15, 0
        %s100 = scalar_select %p99, %s15, 0
        %s101 = smul.addr %s98, 8
        %s102 = sadd.s32 %s100, %s101
        %s103 = smul.addr %s102, 8
        %s104 = scalar_lea.vmem %s0, %s103
      $region20: #{resnet_generator_forward.51} parent=15 // pred_fallthru
        _
    $region16: #{resnet_generator_forward.51} parent=5 // pred_fallthru
      _
    %p105 = scmp.le.s32.totalorder 1, %s7
    %p106 = scmp.lt.s32.totalorder %s7, 3
    %p107 = pnand %p105, %p106
    %p108 = pneg %p107
    // Predicated region
    $region21: #{resnet_generator_forward.51} parent=5 // pred_check
      _
    $region22: #{resnet_generator_forward.51} parent=5 // pred_check_branch
      %110 = sbr.rel (%p107) target = $region24
    $region23: #{resnet_generator_forward.51} parent=5 // pred_region
      %s111 = ssub.s32 %s7, 1
      %p112 = scmp.lt.s32.totalorder %s16, 1
      %s113 = scalar_select %p112, %s16, 1
      %p114 = scmp.lt.s32.totalorder %s17, 0
      %s115 = scalar_select %p114, %s17, 0
      %s116 = smul.addr %s113, 8
      %s117 = sadd.s32 %s115, %s116
      %s118 = smul.addr %s117, 8
      %s119 = scalar_lea.vmem %s0, %s118
      %p120 = pneg %p47
      %p121 = pneg %p44
      %p122 = pneg %p75
      %p123 = pneg %p72
      %p124 = scmp.lt.s32.totalorder %s16, 1
      %s125 = scalar_select %p124, %s16, 1
      %p126 = scmp.lt.s32.totalorder %s17, 0
      %s127 = scalar_select %p126, %s17, 0
      %s128 = smul.addr %s125, 8
      %s129 = sadd.s32 %s127, %s128
      %s130 = smul.addr %s129, 8
      %s131 = scalar_lea.vmem %s1, %s130
      %p132 = scmp.lt.s32.totalorder %s16, 1
      %s133 = scalar_select %p132, %s16, 1
      %p134 = scmp.lt.s32.totalorder %s17, 0
      %s135 = scalar_select %p134, %s17, 0
      %s136 = smul.addr %s133, 8
      %s137 = sadd.s32 %s135, %s136
      %s138 = smul.addr %s137, 8
      %s139 = scalar_lea.vmem %s0, %s138
      %p140 = scmp.lt.s32.totalorder %s16, 1
      %s141 = scalar_select %p140, %s16, 1
      %p142 = scmp.lt.s32.totalorder %s17, 0
      %s143 = scalar_select %p142, %s17, 0
      %s144 = smul.addr %s141, 8
      %s145 = sadd.s32 %s143, %s144
      %s146 = smul.addr %s145, 8
      %s147 = scalar_lea.vmem %s1, %s146
      %v148 = vld [vmem:[%s139] sm:$0xff]
      %v149 = vld [vmem:[%s139 + $0x8] sm:$0xff]
      %v150 = vld [vmem:[%s139 + $0x10] sm:$0xff]
      %v151 = vld [vmem:[%s139 + $0x18] sm:$0xff]
      %v152 = vld [vmem:[%s139 + $0x20] sm:$0xff]
      %v153 = vld [vmem:[%s139 + $0x28] sm:$0xff]
      %v154 = vld [vmem:[%s139 + $0x30] sm:$0xff]
      %v155 = vld [vmem:[%s139 + $0x38] sm:$0xff]
      %vm156 = vcmask 130048
      %v157 = vsel %vm156, %v148, 0.0
      %v158 = vsel %vm156, %v149, 0.0
      %v159 = vadd.f32 %v157, %v158
      %v160 = vsel %vm156, %v150, 0.0
      %v161 = vadd.f32 %v159, %v160
      %v162 = vsel %vm156, %v151, 0.0
      %v163 = vadd.f32 %v161, %v162
      %v164 = vsel %vm156, %v152, 0.0
      %v165 = vadd.f32 %v163, %v164
      %v166 = vsel %vm156, %v153, 0.0
      %v167 = vadd.f32 %v165, %v166
      %v168 = vsel %vm156, %v154, 0.0
      %v169 = vadd.f32 %v167, %v168
      %v170 = vsel %vm156, %v155, 0.0
      %v171 = vadd.f32 %v169, %v170
      %v172 = vrot.slane %v171, 4
      %v173 = vadd.f32 %v171, %v172
      %v174 = vrot.slane %v173, 2
      %v175 = vadd.f32 %v173, %v174
      %v176 = vrot.slane %v175, 1
      %v177 = vadd.f32 %v175, %v176
      %v178 = vrcp.pop 64.0
      %v179 = vmul.f32 64.0, %v178
      %v180 = vsub.f32 1.0, %v179
      %v181 = vmul.f32 %v178, %v180
      %v182 = vadd.f32 %v178, %v181
      %vm183 = vweird.f32 %v178
      %v184 = vsel %vm183, %v178, %v182
      %v185 = vmul.f32 %v177, %v184
      %v186 = vsub.f32 %v148, %v185
      %v187 = vsub.f32 %v149, %v185
      %v188 = vsub.f32 %v150, %v185
      %v189 = vsub.f32 %v151, %v185
      %v190 = vsub.f32 %v152, %v185
      %v191 = vsub.f32 %v153, %v185
      %v192 = vsub.f32 %v154, %v185
      %v193 = vsub.f32 %v155, %v185
      %v194 = vmul.f32 %v186, %v186
      %v195 = vmul.f32 %v187, %v187
      %v196 = vmul.f32 %v188, %v188
      %v197 = vmul.f32 %v189, %v189
      %v198 = vmul.f32 %v190, %v190
      %v199 = vmul.f32 %v191, %v191
      %v200 = vmul.f32 %v192, %v192
      %v201 = vmul.f32 %v193, %v193
      %v202 = vsel %vm156, %v194, 0.0
      %v203 = vsel %vm156, %v195, 0.0
      %v204 = vadd.f32 %v202, %v203
      %v205 = vsel %vm156, %v196, 0.0
      %v206 = vadd.f32 %v204, %v205
      %v207 = vsel %vm156, %v197, 0.0
      %v208 = vadd.f32 %v206, %v207
      %v209 = vsel %vm156, %v198, 0.0
      %v210 = vadd.f32 %v208, %v209
      %v211 = vsel %vm156, %v199, 0.0
      %v212 = vadd.f32 %v210, %v211
      %v213 = vsel %vm156, %v200, 0.0
      %v214 = vadd.f32 %v212, %v213
      %v215 = vsel %vm156, %v201, 0.0
      %v216 = vadd.f32 %v214, %v215
      %v217 = vrot.slane %v216, 4
      %v218 = vadd.f32 %v216, %v217
      %v219 = vrot.slane %v218, 2
      %v220 = vadd.f32 %v218, %v219
      %v221 = vrot.slane %v220, 1
      %v222 = vadd.f32 %v220, %v221
      %v223 = vmul.f32 %v222, %v184
      %v224 = vadd.f32 %v223, 1e-05
      %v225 = vrsqrt.pop %v224
      %v226 = vmul.f32 %v225, %v224
      %v227 = vmul.f32 %v226, %v225
      %v228 = vmul.f32 0.5, %v227
      %v229 = vsub.f32 1.5, %v228
      %v230 = vmul.f32 %v225, %v229
      %vm231 = vweird.f32 %v224
      %vm232 = vweird.f32 %v225
      %vm233 = vmor %vm231, %vm232
      %v234 = vsel %vm233, %v225, %v230
      %v235 = vmul.f32 %v186, %v234
      %v236 = vmul.f32 %v187, %v234
      %v237 = vmul.f32 %v188, %v234
      %v238 = vmul.f32 %v189, %v234
      %v239 = vmul.f32 %v190, %v234
      %v240 = vmul.f32 %v191, %v234
      %v241 = vmul.f32 %v192, %v234
      %v242 = vmul.f32 %v193, %v234
      %v243 = vmax.f32 %v235, 0.0
      %v244 = vmax.f32 %v236, 0.0
      %v245 = vmax.f32 %v237, 0.0
      %v246 = vmax.f32 %v238, 0.0
      %v247 = vmax.f32 %v239, 0.0
      %v248 = vmax.f32 %v240, 0.0
      %v249 = vmax.f32 %v241, 0.0
      %v250 = vmax.f32 %v242, 0.0
      %251 = vst.msk [vmem:[%s147] sm:$0xff] %vm156, %v243
      %252 = vst.msk [vmem:[%s147 + $0x8] sm:$0xff] %vm156, %v244
      %253 = vst.msk [vmem:[%s147 + $0x10] sm:$0xff] %vm156, %v245
      %254 = vst.msk [vmem:[%s147 + $0x18] sm:$0xff] %vm156, %v246
      %255 = vst.msk [vmem:[%s147 + $0x20] sm:$0xff] %vm156, %v247
      %256 = vst.msk [vmem:[%s147 + $0x28] sm:$0xff] %vm156, %v248
      %257 = vst.msk [vmem:[%s147 + $0x30] sm:$0xff] %vm156, %v249
      %258 = vst.msk [vmem:[%s147 + $0x38] sm:$0xff] %vm156, %v250
      %p259 = scmp.lt.s32.totalorder %s16, 1
      %s260 = scalar_select %p259, %s16, 1
      %p261 = scmp.lt.s32.totalorder %s17, 0
      %s262 = scalar_select %p261, %s17, 0
      %s263 = smul.addr %s260, 8
      %s264 = sadd.s32 %s262, %s263
      %s265 = smul.addr %s264, 8
      %s266 = scalar_lea.vmem %s1, %s265
      // Predicated region
      $region25: #{resnet_generator_forward.51} parent=23 // pred_check
        %p267 = pneg %p72
      $region26: #{resnet_generator_forward.51} parent=23 // pred_check_branch
        %269 = sbr.rel (%p267) target = $region28
      $region27: #{resnet_generator_forward.51} parent=23 // pred_region
        _
      $region28: #{resnet_generator_forward.51} parent=23 // pred_fallthru
        _
    $region24: #{resnet_generator_forward.51} parent=5 // pred_fallthru
      _
    %p270 = scmp.le.s32.totalorder 2, %s7
    // Predicated region
    $region29: #{resnet_generator_forward.51} parent=5 // pred_check
      %p271 = pneg %p270
    $region30: #{resnet_generator_forward.51} parent=5 // pred_check_branch
      %273 = sbr.rel (%p271) target = $region32
    $region31: #{resnet_generator_forward.51} parent=5 // pred_region
      %s274 = ssub.s32 %s7, 2
      // Predicated region
      $region33: #{resnet_generator_forward.51} parent=31 // pred_check
        %p275 = pneg %p78
      $region34: #{resnet_generator_forward.51} parent=31 // pred_check_branch
        %277 = sbr.rel (%p275) target = $region36
      $region35: #{resnet_generator_forward.51} parent=31 // pred_region
        %p278 = scmp.lt.s32.totalorder %s18, 1
        %s279 = scalar_select %p278, %s18, 1
        %p280 = scmp.lt.s32.totalorder %s19, 0
        %s281 = scalar_select %p280, %s19, 0
        %s282 = smul.addr %s279, 8
        %s283 = sadd.s32 %s281, %s282
        %s284 = smul.addr %s283, 8
        %s285 = scalar_lea.vmem %s1, %s284
      $region36: #{resnet_generator_forward.51} parent=31 // pred_fallthru
        _
    $region32: #{resnet_generator_forward.51} parent=5 // pred_fallthru
      _
  $region6: #{resnet_generator_forward.51} parent=0 // loop_footer
    %s11 = sadd.s32 1, %s7
  $region7: #{resnet_generator_forward.51} parent=0 // loop_footer_branch
    %6 = sbr.rel target = $region3
  $region8: #{resnet_generator_forward.51} parent=0 // loop_exit
    _

// kernel: resnet_generator_forward.53
$region0: #{resnet_generator_forward.53}
  #allocation0 [shape = 'u32[]', space=smem, size = 0x4, offset = 0x4, fixed_abs, tag = 'smem constant byte address 0x4 - core index']
  #allocation1 [shape = 'u32[72,128]{1,0:T(1,128)}', space=vmem, size = 0x9000, scoped, tag = 'internal scratch']
  %s0 = inlined_call_operand.vmem [shape: f32[2,16,32], index: 0, kind: input, shape index: {}]
  %s1 = inlined_call_operand.vmem [shape: f32[2,16,32], index: 1, kind: output, shape index: {}]
  %s2 = sld [smem:[#allocation0]]
  $region37: #{resnet_generator_forward.53} parent=0
    _
  %s4 = ssub.s32 1, %s2
  %s5 = scalar_select 0, %s4, %s2
  loop: start=0, step=1, limit=4
  $region2: #{resnet_generator_forward.53} parent=0 // loop_pre_header
    _
  $region3: #{resnet_generator_forward.53} parent=0 // loop_header
    %s7 = sphi 0, %s11
    %p8 = scmp.ge.s32.totalorder %s7, 4
    %s14 = sphi 0, %s26
    %s15 = sphi 0, %s22
    %s16 = sphi 0, %s14
    %s17 = sphi 0, %s15
    %s18 = sphi 0, %s16
    %s19 = sphi 0, %s17
    %s31 = sphi 0, %s33
    %s34 = sphi 0, %s31
    %s35 = sphi 0, %s34
    %s51 = sphi 0, %s35
    %s59 = sphi 0, %s61
    %s62 = sphi 0, %s59
    %s63 = sphi 0, %s62
    %s79 = sphi 0, %s63
  $region4: #{resnet_generator_forward.53} parent=0 // loop_header_branch
    %10 = sbr.rel (%p8) target = $region8
  $region5: #{resnet_generator_forward.53} parent=0 // loop_body
    %s12 = ssub.s32 %s7, 1
    %s13 = ssub.s32 %s7, 2
    %s20 = sadd.s32 1, %s15
    %p21 = scmp.ge.s32.totalorder %s20, 1
    %s22 = scalar_select %p21, 0, %s20
    %s23 = sadd.s32 1, %s14
    %s24 = scalar_select %p21, %s23, %s14
    %p25 = scmp.ge.s32.totalorder %s24, 2
    %s26 = scalar_select %p25, 0, %s24
    %s27 = ssub.s32 %s14, %s26
    %s28 = ssub.s32 %s15, %s22
    %s29 = sor.u32 %s27, %s28
    %p30 = scmp.eq.s32.totalorder %s29, 0
    %s32 = sadd.s32 %s31, 1
    %s33 = scalar_select %p30, %s31, %s32
    %p36 = pneg %p30
    %p37 = scmp.eq.s32.totalorder %s7, 1
    %p38 = por %p36, %p37
    %p39 = scmp.ne.s32.totalorder %s31, %s34
    %p40 = scmp.eq.s32.totalorder %s7, 0
    %p41 = por %p39, %p40
    %p42 = scmp.ne.s32.totalorder %s31, %s34
    %p43 = scmp.eq.s32.totalorder %s12, 1
    %p44 = por %p42, %p43
    %p45 = scmp.ne.s32.totalorder %s34, %s35
    %p46 = scmp.eq.s32.totalorder %s12, 0
    %p47 = por %p45, %p46
    %p48 = scmp.ne.s32.totalorder %s34, %s35
    %p49 = scmp.eq.s32.totalorder %s13, 1
    %p50 = por %p48, %p49
    %p52 = scmp.ne.s32.totalorder %s35, %s51
    %p53 = scmp.eq.s32.totalorder %s13, 0
    %p54 = por %p52, %p53
    %s55 = ssub.s32 %s14, %s26
    %s56 = ssub.s32 %s15, %s22
    %s57 = sor.u32 %s55, %s56
    %p58 = scmp.eq.s32.totalorder %s57, 0
    %s60 = sadd.s32 %s59, 1
    %s61 = scalar_select %p58, %s59, %s60
    %p64 = pneg %p58
    %p65 = scmp.eq.s32.totalorder %s7, 1
    %p66 = por %p64, %p65
    %p67 = scmp.ne.s32.totalorder %s59, %s62
    %p68 = scmp.eq.s32.totalorder %s7, 0
    %p69 = por %p67, %p68
    %p70 = scmp.ne.s32.totalorder %s59, %s62
    %p71 = scmp.eq.s32.totalorder %s12, 1
    %p72 = por %p70, %p71
    %p73 = scmp.ne.s32.totalorder %s62, %s63
    %p74 = scmp.eq.s32.totalorder %s12, 0
    %p75 = por %p73, %p74
    %p76 = scmp.ne.s32.totalorder %s62, %s63
    %p77 = scmp.eq.s32.totalorder %s13, 1
    %p78 = por %p76, %p77
    %p80 = scmp.ne.s32.totalorder %s63, %s79
    %p81 = scmp.eq.s32.totalorder %s13, 0
    %p82 = por %p80, %p81
    %p83 = scmp.le.s32.totalorder 1, %s7
    %p84 = scmp.lt.s32.totalorder %s7, 3
    %p85 = pnand %p83, %p84
    %p86 = pneg %p85
    // Predicated region
    $region9: #{resnet_generator_forward.53} parent=5 // pred_check
      _
    $region10: #{resnet_generator_forward.53} parent=5 // pred_check_branch
      %88 = sbr.rel (%p85) target = $region12
    $region11: #{resnet_generator_forward.53} parent=5 // pred_region
      %s89 = ssub.s32 %s7, 1
    $region12: #{resnet_generator_forward.53} parent=5 // pred_fallthru
      _
    %p90 = scmp.lt.s32.totalorder %s7, 2
    // Predicated region
    $region13: #{resnet_generator_forward.53} parent=5 // pred_check
      %p91 = pneg %p90
    $region14: #{resnet_generator_forward.53} parent=5 // pred_check_branch
      %93 = sbr.rel (%p91) target = $region16
    $region15: #{resnet_generator_forward.53} parent=5 // pred_region
      // Predicated region
      $region17: #{resnet_generator_forward.53} parent=15 // pred_check
        %p94 = pneg %p41
      $region18: #{resnet_generator_forward.53} parent=15 // pred_check_branch
        %96 = sbr.rel (%p94) target = $region20
      $region19: #{resnet_generator_forward.53} parent=15 // pred_region
        %p97 = scmp.lt.s32.totalorder %s14, 1
        %s98 = scalar_select %p97, %s14, 1
        %p99 = scmp.lt.s32.totalorder %s15, 0
        %s100 = scalar_select %p99, %s15, 0
        %s101 = smul.addr %s98, 2
        %s102 = sadd.s32 %s100, %s101
        %s103 = smul.addr %s102, 8
        %s104 = scalar_lea.vmem %s0, %s103
      $region20: #{resnet_generator_forward.53} parent=15 // pred_fallthru
        _
    $region16: #{resnet_generator_forward.53} parent=5 // pred_fallthru
      _
    %p105 = scmp.le.s32.totalorder 1, %s7
    %p106 = scmp.lt.s32.totalorder %s7, 3
    %p107 = pnand %p105, %p106
    %p108 = pneg %p107
    // Predicated region
    $region21: #{resnet_generator_forward.53} parent=5 // pred_check
      _
    $region22: #{resnet_generator_forward.53} parent=5 // pred_check_branch
      %110 = sbr.rel (%p107) target = $region24
    $region23: #{resnet_generator_forward.53} parent=5 // pred_region
      %s111 = ssub.s32 %s7, 1
      %p112 = scmp.lt.s32.totalorder %s16, 1
      %s113 = scalar_select %p112, %s16, 1
      %p114 = scmp.lt.s32.totalorder %s17, 0
      %s115 = scalar_select %p114, %s17, 0
      %s116 = smul.addr %s113, 2
      %s117 = sadd.s32 %s115, %s116
      %s118 = smul.addr %s117, 8
      %s119 = scalar_lea.vmem %s0, %s118
      %p120 = pneg %p47
      %p121 = pneg %p44
      %p122 = pneg %p75
      %p123 = pneg %p72
      %p124 = scmp.lt.s32.totalorder %s16, 1
      %s125 = scalar_select %p124, %s16, 1
      %p126 = scmp.lt.s32.totalorder %s17, 0
      %s127 = scalar_select %p126, %s17, 0
      %s128 = smul.addr %s125, 2
      %s129 = sadd.s32 %s127, %s128
      %s130 = smul.addr %s129, 8
      %s131 = scalar_lea.vmem %s1, %s130
      %p132 = scmp.lt.s32.totalorder %s16, 1
      %s133 = scalar_select %p132, %s16, 1
      %p134 = scmp.lt.s32.totalorder %s17, 0
      %s135 = scalar_select %p134, %s17, 0
      %s136 = smul.addr %s133, 2
      %s137 = sadd.s32 %s135, %s136
      %s138 = smul.addr %s137, 8
      %s139 = scalar_lea.vmem %s0, %s138
      %p140 = scmp.lt.s32.totalorder %s16, 1
      %s141 = scalar_select %p140, %s16, 1
      %p142 = scmp.lt.s32.totalorder %s17, 0
      %s143 = scalar_select %p142, %s17, 0
      %s144 = smul.addr %s141, 2
      %s145 = sadd.s32 %s143, %s144
      %s146 = smul.addr %s145, 8
      %s147 = scalar_lea.vmem %s1, %s146
      %v148 = vld [vmem:[%s139] sm:$0xff]
      %v149 = vld [vmem:[%s139 + $0x8] sm:$0xff]
      %vm150 = vcmask 261120
      %v151 = vsel %vm150, %v148, 0.0
      %v152 = vsel %vm150, %v149, 0.0
      %v153 = vadd.f32 %v151, %v152
      %v154 = vrot.slane %v153, 4
      %v155 = vadd.f32 %v153, %v154
      %v156 = vrot.slane %v155, 2
      %v157 = vadd.f32 %v155, %v156
      %v158 = vrot.slane %v157, 1
      %v159 = vadd.f32 %v157, %v158
      %v160 = vrcp.pop 16.0
      %v161 = vmul.f32 16.0, %v160
      %v162 = vsub.f32 1.0, %v161
      %v163 = vmul.f32 %v160, %v162
      %v164 = vadd.f32 %v160, %v163
      %vm165 = vweird.f32 %v160
      %v166 = vsel %vm165, %v160, %v164
      %v167 = vmul.f32 %v159, %v166
      %v168 = vsub.f32 %v148, %v167
      %v169 = vsub.f32 %v149, %v167
      %v170 = vmul.f32 %v168, %v168
      %v171 = vmul.f32 %v169, %v169
      %v172 = vsel %vm150, %v170, 0.0
      %v173 = vsel %vm150, %v171, 0.0
      %v174 = vadd.f32 %v172, %v173
      %v175 = vrot.slane %v174, 4
      %v176 = vadd.f32 %v174, %v175
      %v177 = vrot.slane %v176, 2
      %v178 = vadd.f32 %v176, %v177
      %v179 = vrot.slane %v178, 1
      %v180 = vadd.f32 %v178, %v179
      %v181 = vmul.f32 %v180, %v166
      %v182 = vadd.f32 %v181, 1e-05
      %v183 = vrsqrt.pop %v182
      %v184 = vmul.f32 %v183, %v182
      %v185 = vmul.f32 %v184, %v183
      %v186 = vmul.f32 0.5, %v185
      %v187 = vsub.f32 1.5, %v186
      %v188 = vmul.f32 %v183, %v187
      %vm189 = vweird.f32 %v182
      %vm190 = vweird.f32 %v183
      %vm191 = vmor %vm189, %vm190
      %v192 = vsel %vm191, %v183, %v188
      %v193 = vmul.f32 %v168, %v192
      %v194 = vmul.f32 %v169, %v192
      %v195 = vmax.f32 %v193, 0.0
      %v196 = vmax.f32 %v194, 0.0
      %197 = vst.msk [vmem:[%s147] sm:$0xff] %vm150, %v195
      %198 = vst.msk [vmem:[%s147 + $0x8] sm:$0xff] %vm150, %v196
      %p199 = scmp.lt.s32.totalorder %s16, 1
      %s200 = scalar_select %p199, %s16, 1
      %p201 = scmp.lt.s32.totalorder %s17, 0
      %s202 = scalar_select %p201, %s17, 0
      %s203 = smul.addr %s200, 2
      %s204 = sadd.s32 %s202, %s203
      %s205 = smul.addr %s204, 8
      %s206 = scalar_lea.vmem %s1, %s205
      // Predicated region
      $region25: #{resnet_generator_forward.53} parent=23 // pred_check
        %p207 = pneg %p72
      $region26: #{resnet_generator_forward.53} parent=23 // pred_check_branch
        %209 = sbr.rel (%p207) target = $region28
      $region27: #{resnet_generator_forward.53} parent=23 // pred_region
        _
      $region28: #{resnet_generator_forward.53} parent=23 // pred_fallthru
        _
    $region24: #{resnet_generator_forward.53} parent=5 // pred_fallthru
      _
    %p210 = scmp.le.s32.totalorder 2, %s7
    // Predicated region
    $region29: #{resnet_generator_forward.53} parent=5 // pred_check
      %p211 = pneg %p210
    $region30: #{resnet_generator_forward.53} parent=5 // pred_check_branch
      %213 = sbr.rel (%p211) target = $region32
    $region31: #{resnet_generator_forward.53} parent=5 // pred_region
      %s214 = ssub.s32 %s7, 2
      // Predicated region
      $region33: #{resnet_generator_forward.53} parent=31 // pred_check
        %p215 = pneg %p78
      $region34: #{resnet_generator_forward.53} parent=31 // pred_check_branch
        %217 = sbr.rel (%p215) target = $region36
      $region35: #{resnet_generator_forward.53} parent=31 // pred_region
        %p218 = scmp.lt.s32.totalorder %s18, 1
        %s219 = scalar_select %p218, %s18, 1
        %p220 = scmp.lt.s32.totalorder %s19, 0
        %s221 = scalar_select %p220, %s19, 0
        %s222 = smul.addr %s219, 2
        %s223 = sadd.s32 %s221, %s222
        %s224 = smul.addr %s223, 8
        %s225 = scalar_lea.vmem %s1, %s224
      $region36: #{resnet_generator_forward.53} parent=31 // pred_fallthru
        _
    $region32: #{resnet_generator_forward.53} parent=5 // pred_fallthru
      _
  $region6: #{resnet_generator_forward.53} parent=0 // loop_footer
    %s11 = sadd.s32 1, %s7
  $region7: #{resnet_generator_forward.53} parent=0 // loop_footer_branch
    %6 = sbr.rel target = $region3
  $region8: #{resnet_generator_forward.53} parent=0 // loop_exit
    _

// kernel: resnet_generator_forward.52
$region0: #{resnet_generator_forward.52}
  #allocation0 [shape = 'u32[]', space=smem, size = 0x4, offset = 0x4, fixed_abs, tag = 'smem constant byte address 0x4 - core index']
  #allocation1 [shape = 'u32[72,128]{1,0:T(1,128)}', space=vmem, size = 0x9000, scoped, tag = 'internal scratch']
  #allocation2 [shape = 'f32[32,128]{1,0:T(8,128)}', space=vmem, size = 0x4000, scoped, tag = 'scratch operand']
  %s0 = inlined_call_operand.vmem [shape: bf16[32,256], index: 0, kind: input, shape index: {}]
  %s1 = inlined_call_operand.vmem [shape: bf16[256,128], index: 1, kind: input, shape index: {}]
  %s2 = inlined_call_operand.vmem [shape: f32[1,128], index: 2, kind: input, shape index: {}]
  %s3 = inlined_call_operand.vmem [shape: f32[32,128], index: 3, kind: output, shape index: {}]
  %s4 = sld [smem:[#allocation0]]
  $region30: #{resnet_generator_forward.52} parent=0
    _
  %s6 = ssub.s32 1, %s4
  %s7 = scalar_select 0, %s6, %s4
  // Predicated region
  $region2: #{resnet_generator_forward.52} parent=0 // pred_check
    _
  $region3: #{resnet_generator_forward.52} parent=0 // pred_check_branch
    %9 = sbr.rel (0) target = $region5
  $region4: #{resnet_generator_forward.52} parent=0 // pred_region
    _
  $region5: #{resnet_generator_forward.52} parent=0 // pred_fallthru
    _
  // Predicated region
  $region6: #{resnet_generator_forward.52} parent=0 // pred_check
    _
  $region7: #{resnet_generator_forward.52} parent=0 // pred_check_branch
    %11 = sbr.rel (0) target = $region9
  $region8: #{resnet_generator_forward.52} parent=0 // pred_region
    _
  $region9: #{resnet_generator_forward.52} parent=0 // pred_fallthru
    _
  // Predicated region
  $region10: #{resnet_generator_forward.52} parent=0 // pred_check
    _
  $region11: #{resnet_generator_forward.52} parent=0 // pred_check_branch
    %13 = sbr.rel (0) target = $region13
  $region12: #{resnet_generator_forward.52} parent=0 // pred_region
    _
  $region13: #{resnet_generator_forward.52} parent=0 // pred_fallthru
    _
  %p14 = scmp.eq.s32.totalorder 0, 0
  // Predicated region
  $region14: #{resnet_generator_forward.52} parent=0 // pred_check
    %p15 = pneg %p14
  $region15: #{resnet_generator_forward.52} parent=0 // pred_check_branch
    %17 = sbr.rel (%p15) target = $region17
  $region16: #{resnet_generator_forward.52} parent=0 // pred_region
    %18 = vst [vmem:[#allocation2] sm:$0xff] 0.0
    %19 = vst [vmem:[#allocation2 + $0x8] sm:$0xff] 0.0
    %20 = vst [vmem:[#allocation2 + $0x10] sm:$0xff] 0.0
    %21 = vst [vmem:[#allocation2 + $0x18] sm:$0xff] 0.0
  $region17: #{resnet_generator_forward.52} parent=0 // pred_fallthru
    _
  %v22 = vld [vmem:[#allocation2] sm:$0xff]
  %v23 = vld [vmem:[#allocation2 + $0x8] sm:$0xff]
  %v24 = vld [vmem:[#allocation2 + $0x10] sm:$0xff]
  %v25 = vld [vmem:[#allocation2 + $0x18] sm:$0xff]
  %v26 = vld [vmem:[%s0] sm:$0xff]
  %v27 = vld [vmem:[%s0 + $0x8] sm:$0xff]
  %v28 = vld [vmem:[%s0 + $0x10] sm:$0xff]
  %v29 = vld [vmem:[%s0 + $0x18] sm:$0xff]
  %v30 = vld [vmem:[%s1] sm:$0xf]
  %v31 = vld [vmem:[%s1 + $0x4] sm:$0xf]
  %v32 = vld [vmem:[%s1 + $0x8] sm:$0xf]
  %v33 = vld [vmem:[%s1 + $0xc] sm:$0xf]
  %v34 = vld [vmem:[%s1 + $0x10] sm:$0xf]
  %v35 = vld [vmem:[%s1 + $0x14] sm:$0xf]
  %v36 = vld [vmem:[%s1 + $0x18] sm:$0xf]
  %v37 = vld [vmem:[%s1 + $0x1c] sm:$0xf]
  %v38 = vld [vmem:[%s1 + $0x20] sm:$0xf]
  %v39 = vld [vmem:[%s1 + $0x24] sm:$0xf]
  %v40 = vld [vmem:[%s1 + $0x28] sm:$0xf]
  %v41 = vld [vmem:[%s1 + $0x2c] sm:$0xf]
  %v42 = vld [vmem:[%s1 + $0x30] sm:$0xf]
  %v43 = vld [vmem:[%s1 + $0x34] sm:$0xf]
  %v44 = vld [vmem:[%s1 + $0x38] sm:$0xf]
  %v45 = vld [vmem:[%s1 + $0x3c] sm:$0xf]
  %v46 = vld [vmem:[%s1 + $0x40] sm:$0xf]
  %v47 = vld [vmem:[%s1 + $0x44] sm:$0xf]
  %v48 = vld [vmem:[%s1 + $0x48] sm:$0xf]
  %v49 = vld [vmem:[%s1 + $0x4c] sm:$0xf]
  %v50 = vld [vmem:[%s1 + $0x50] sm:$0xf]
  %v51 = vld [vmem:[%s1 + $0x54] sm:$0xf]
  %v52 = vld [vmem:[%s1 + $0x58] sm:$0xf]
  %v53 = vld [vmem:[%s1 + $0x5c] sm:$0xf]
  %v54 = vld [vmem:[%s1 + $0x60] sm:$0xf]
  %v55 = vld [vmem:[%s1 + $0x64] sm:$0xf]
  %v56 = vld [vmem:[%s1 + $0x68] sm:$0xf]
  %v57 = vld [vmem:[%s1 + $0x6c] sm:$0xf]
  %v58 = vld [vmem:[%s1 + $0x70] sm:$0xf]
  %v59 = vld [vmem:[%s1 + $0x74] sm:$0xf]
  %v60 = vld [vmem:[%s1 + $0x78] sm:$0xf]
  %v61 = vld [vmem:[%s1 + $0x7c] sm:$0xf]
  %v66 = vunpack.c.l.b16 %v26
  %v67 = vunpack.c.h.b16 %v26
  %v68 = vunpack.c.l.b16 %v27
  %v69 = vunpack.c.h.b16 %v27
  %v70 = vunpack.c.l.b16 %v28
  %v71 = vunpack.c.h.b16 %v28
  %v72 = vunpack.c.l.b16 %v29
  %v73 = vunpack.c.h.b16 %v29
  %v74 = vpack.c.b16 %v68, %v66
  %v75 = vpack.c.b16 %v69, %v67
  %v76 = vpack.c.b16 %v72, %v70
  %v77 = vpack.c.b16 %v73, %v71
  %v114 = vunpack.c.l.b16 %v30
  %v115 = vunpack.c.l.b16 %v31
  %v116 = vunpack.c.l.b16 %v32
  %v117 = vunpack.c.l.b16 %v33
  %v118 = vunpack.c.l.b16 %v34
  %v119 = vunpack.c.l.b16 %v35
  %v120 = vunpack.c.l.b16 %v36
  %v121 = vunpack.c.l.b16 %v37
  %v122 = vunpack.c.l.b16 %v38
  %v123 = vunpack.c.l.b16 %v39
  %v124 = vunpack.c.l.b16 %v40
  %v125 = vunpack.c.l.b16 %v41
  %v126 = vunpack.c.l.b16 %v42
  %v127 = vunpack.c.l.b16 %v43
  %v128 = vunpack.c.l.b16 %v44
  %v129 = vunpack.c.l.b16 %v45
  %v130 = vunpack.c.l.b16 %v46
  %v131 = vunpack.c.l.b16 %v47
  %v132 = vunpack.c.l.b16 %v48
  %v133 = vunpack.c.l.b16 %v49
  %v134 = vunpack.c.l.b16 %v50
  %v135 = vunpack.c.l.b16 %v51
  %v136 = vunpack.c.l.b16 %v52
  %v137 = vunpack.c.l.b16 %v53
  %v138 = vunpack.c.l.b16 %v54
  %v139 = vunpack.c.l.b16 %v55
  %v140 = vunpack.c.l.b16 %v56
  %v141 = vunpack.c.l.b16 %v57
  %v142 = vunpack.c.l.b16 %v58
  %v143 = vunpack.c.l.b16 %v59
  %v144 = vunpack.c.l.b16 %v60
  %v145 = vunpack.c.l.b16 %v61
  %v146 = vpack.c.b16 %v115, %v114
  %v147 = vpack.c.b16 %v117, %v116
  %v148 = vpack.c.b16 %v119, %v118
  %v149 = vpack.c.b16 %v121, %v120
  %v150 = vpack.c.b16 %v123, %v122
  %v151 = vpack.c.b16 %v125, %v124
  %v152 = vpack.c.b16 %v127, %v126
  %v153 = vpack.c.b16 %v129, %v128
  %v154 = vpack.c.b16 %v131, %v130
  %v155 = vpack.c.b16 %v133, %v132
  %v156 = vpack.c.b16 %v135, %v134
  %v157 = vpack.c.b16 %v137, %v136
  %v158 = vpack.c.b16 %v139, %v138
  %v159 = vpack.c.b16 %v141, %v140
  %v160 = vpack.c.b16 %v143, %v142
  %v161 = vpack.c.b16 %v145, %v144
  %178 = vmatpush.bf16.msra.mxu0 %v153
  %179 = vmatpush.bf16.msra.mxu0 %v152
  %180 = vmatpush.bf16.msra.mxu0 %v151
  %181 = vmatpush.bf16.msra.mxu0 %v150
  %182 = vmatpush.bf16.msra.mxu0 %v149
  %183 = vmatpush.bf16.msra.mxu0 %v148
  %184 = vmatpush.bf16.msra.mxu0 %v147
  %185 = vmatpush.bf16.msra.mxu0 %v146
  %186 = vmatmul.bf16.gmra.mxu0 %v74
  %v187 = vpop.f32.mrf.mxu0
  %v188 = vadd.f32 0.0, %v187
  %v189 = vpop.f32.mrf.mxu0
  %v190 = vadd.f32 0.0, %v189
  %191 = vmatmul.bf16.gmra.mxu0 %v76
  %v192 = vpop.f32.mrf.mxu0
  %v193 = vadd.f32 0.0, %v192
  %v194 = vpop.f32.mrf.mxu0
  %v195 = vadd.f32 0.0, %v194
  %196 = vdwg.mxu0
  %197 = vmatpush.bf16.msra.mxu0 %v161
  %198 = vmatpush.bf16.msra.mxu0 %v160
  %199 = vmatpush.bf16.msra.mxu0 %v159
  %200 = vmatpush.bf16.msra.mxu0 %v158
  %201 = vmatpush.bf16.msra.mxu0 %v157
  %202 = vmatpush.bf16.msra.mxu0 %v156
  %203 = vmatpush.bf16.msra.mxu0 %v155
  %204 = vmatpush.bf16.msra.mxu0 %v154
  %205 = vmatmul.bf16.gmra.mxu0 %v75
  %v206 = vpop.f32.mrf.mxu0
  %v207 = vadd.f32 %v188, %v206
  %v208 = vpop.f32.mrf.mxu0
  %v209 = vadd.f32 %v190, %v208
  %210 = vmatmul.bf16.gmra.mxu0 %v77
  %v211 = vpop.f32.mrf.mxu0
  %v212 = vadd.f32 %v193, %v211
  %v213 = vpop.f32.mrf.mxu0
  %v214 = vadd.f32 %v195, %v213
  %215 = vdwg.mxu0
  %v216 = vadd.f32 %v22, %v207
  %v217 = vadd.f32 %v23, %v209
  %v218 = vadd.f32 %v24, %v212
  %v219 = vadd.f32 %v25, %v214
  %220 = vst [vmem:[#allocation2] sm:$0xff] %v216
  %221 = vst [vmem:[#allocation2 + $0x8] sm:$0xff] %v217
  %222 = vst [vmem:[#allocation2 + $0x10] sm:$0xff] %v218
  %223 = vst [vmem:[#allocation2 + $0x18] sm:$0xff] %v219
  // Predicated region
  $region18: #{resnet_generator_forward.52} parent=0 // pred_check
    %p224 = pneg %p14
  $region19: #{resnet_generator_forward.52} parent=0 // pred_check_branch
    %226 = sbr.rel (%p224) target = $region21
  $region20: #{resnet_generator_forward.52} parent=0 // pred_region
    %v227 = vld [vmem:[#allocation2] sm:$0xff]
    %v228 = vld [vmem:[#allocation2 + $0x8] sm:$0xff]
    %v229 = vld [vmem:[#allocation2 + $0x10] sm:$0xff]
    %v230 = vld [vmem:[#allocation2 + $0x18] sm:$0xff]
    %v231 = vld [vmem:[%s2] sm:$0x1]
    %v233 = vperm.slane %v231, 0
    %v235 = vadd.f32 %v227, %v233
    %v236 = vadd.f32 %v228, %v233
    %v237 = vadd.f32 %v229, %v233
    %v238 = vadd.f32 %v230, %v233
    %239 = vst [vmem:[%s3] sm:$0xff] %v235
    %240 = vst [vmem:[%s3 + $0x8] sm:$0xff] %v236
    %241 = vst [vmem:[%s3 + $0x10] sm:$0xff] %v237
    %242 = vst [vmem:[%s3 + $0x18] sm:$0xff] %v238
  $region21: #{resnet_generator_forward.52} parent=0 // pred_fallthru
    _
  // Predicated region
  $region22: #{resnet_generator_forward.52} parent=0 // pred_check
    _
  $region23: #{resnet_generator_forward.52} parent=0 // pred_check_branch
    %244 = sbr.rel (0) target = $region25
  $region24: #{resnet_generator_forward.52} parent=0 // pred_region
    _
  $region25: #{resnet_generator_forward.52} parent=0 // pred_fallthru
    _
  // Predicated region
  $region26: #{resnet_generator_forward.52} parent=0 // pred_check
    _
  $region27: #{resnet_generator_forward.52} parent=0 // pred_check_branch
    %246 = sbr.rel (0) target = $region29
  $region28: #{resnet_generator_forward.52} parent=0 // pred_region
    _
  $region29: #{resnet_generator_forward.52} parent=0 // pred_fallthru
    _

// kernel: resnet_generator_forward.57
$region0: #{resnet_generator_forward.57}
  #allocation0 [shape = 'u32[]', space=smem, size = 0x4, offset = 0x4, fixed_abs, tag = 'smem constant byte address 0x4 - core index']
  #allocation1 [shape = 'u32[72,128]{1,0:T(1,128)}', space=vmem, size = 0x9000, scoped, tag = 'internal scratch']
  %s0 = inlined_call_operand.vmem [shape: f32[2,16,32], index: 0, kind: input, shape index: {}]
  %s1 = inlined_call_operand.vmem [shape: f32[2,16,32], index: 1, kind: input, shape index: {}]
  %s2 = inlined_call_operand.vmem [shape: f32[2,16,32], index: 2, kind: output, shape index: {}]
  %s3 = sld [smem:[#allocation0]]
  $region41: #{resnet_generator_forward.57} parent=0
    _
  %s5 = ssub.s32 1, %s3
  %s6 = scalar_select 0, %s5, %s3
  loop: start=0, step=1, limit=4
  $region2: #{resnet_generator_forward.57} parent=0 // loop_pre_header
    _
  $region3: #{resnet_generator_forward.57} parent=0 // loop_header
    %s8 = sphi 0, %s12
    %p9 = scmp.ge.s32.totalorder %s8, 4
    %s15 = sphi 0, %s27
    %s16 = sphi 0, %s23
    %s17 = sphi 0, %s15
    %s18 = sphi 0, %s16
    %s19 = sphi 0, %s17
    %s20 = sphi 0, %s18
    %s32 = sphi 0, %s34
    %s35 = sphi 0, %s32
    %s36 = sphi 0, %s35
    %s52 = sphi 0, %s36
    %s60 = sphi 0, %s62
    %s63 = sphi 0, %s60
    %s64 = sphi 0, %s63
    %s80 = sphi 0, %s64
    %s88 = sphi 0, %s90
    %s91 = sphi 0, %s88
    %s92 = sphi 0, %s91
    %s108 = sphi 0, %s92
  $region4: #{resnet_generator_forward.57} parent=0 // loop_header_branch
    %11 = sbr.rel (%p9) target = $region8
  $region5: #{resnet_generator_forward.57} parent=0 // loop_body
    %s13 = ssub.s32 %s8, 1
    %s14 = ssub.s32 %s8, 2
    %s21 = sadd.s32 1, %s16
    %p22 = scmp.ge.s32.totalorder %s21, 1
    %s23 = scalar_select %p22, 0, %s21
    %s24 = sadd.s32 1, %s15
    %s25 = scalar_select %p22, %s24, %s15
    %p26 = scmp.ge.s32.totalorder %s25, 2
    %s27 = scalar_select %p26, 0, %s25
    %s28 = ssub.s32 %s15, %s27
    %s29 = ssub.s32 %s16, %s23
    %s30 = sor.u32 %s28, %s29
    %p31 = scmp.eq.s32.totalorder %s30, 0
    %s33 = sadd.s32 %s32, 1
    %s34 = scalar_select %p31, %s32, %s33
    %p37 = pneg %p31
    %p38 = scmp.eq.s32.totalorder %s8, 1
    %p39 = por %p37, %p38
    %p40 = scmp.ne.s32.totalorder %s32, %s35
    %p41 = scmp.eq.s32.totalorder %s8, 0
    %p42 = por %p40, %p41
    %p43 = scmp.ne.s32.totalorder %s32, %s35
    %p44 = scmp.eq.s32.totalorder %s13, 1
    %p45 = por %p43, %p44
    %p46 = scmp.ne.s32.totalorder %s35, %s36
    %p47 = scmp.eq.s32.totalorder %s13, 0
    %p48 = por %p46, %p47
    %p49 = scmp.ne.s32.totalorder %s35, %s36
    %p50 = scmp.eq.s32.totalorder %s14, 1
    %p51 = por %p49, %p50
    %p53 = scmp.ne.s32.totalorder %s36, %s52
    %p54 = scmp.eq.s32.totalorder %s14, 0
    %p55 = por %p53, %p54
    %s56 = ssub.s32 %s15, %s27
    %s57 = ssub.s32 %s16, %s23
    %s58 = sor.u32 %s56, %s57
    %p59 = scmp.eq.s32.totalorder %s58, 0
    %s61 = sadd.s32 %s60, 1
    %s62 = scalar_select %p59, %s60, %s61
    %p65 = pneg %p59
    %p66 = scmp.eq.s32.totalorder %s8, 1
    %p67 = por %p65, %p66
    %p68 = scmp.ne.s32.totalorder %s60, %s63
    %p69 = scmp.eq.s32.totalorder %s8, 0
    %p70 = por %p68, %p69
    %p71 = scmp.ne.s32.totalorder %s60, %s63
    %p72 = scmp.eq.s32.totalorder %s13, 1
    %p73 = por %p71, %p72
    %p74 = scmp.ne.s32.totalorder %s63, %s64
    %p75 = scmp.eq.s32.totalorder %s13, 0
    %p76 = por %p74, %p75
    %p77 = scmp.ne.s32.totalorder %s63, %s64
    %p78 = scmp.eq.s32.totalorder %s14, 1
    %p79 = por %p77, %p78
    %p81 = scmp.ne.s32.totalorder %s64, %s80
    %p82 = scmp.eq.s32.totalorder %s14, 0
    %p83 = por %p81, %p82
    %s84 = ssub.s32 %s15, %s27
    %s85 = ssub.s32 %s16, %s23
    %s86 = sor.u32 %s84, %s85
    %p87 = scmp.eq.s32.totalorder %s86, 0
    %s89 = sadd.s32 %s88, 1
    %s90 = scalar_select %p87, %s88, %s89
    %p93 = pneg %p87
    %p94 = scmp.eq.s32.totalorder %s8, 1
    %p95 = por %p93, %p94
    %p96 = scmp.ne.s32.totalorder %s88, %s91
    %p97 = scmp.eq.s32.totalorder %s8, 0
    %p98 = por %p96, %p97
    %p99 = scmp.ne.s32.totalorder %s88, %s91
    %p100 = scmp.eq.s32.totalorder %s13, 1
    %p101 = por %p99, %p100
    %p102 = scmp.ne.s32.totalorder %s91, %s92
    %p103 = scmp.eq.s32.totalorder %s13, 0
    %p104 = por %p102, %p103
    %p105 = scmp.ne.s32.totalorder %s91, %s92
    %p106 = scmp.eq.s32.totalorder %s14, 1
    %p107 = por %p105, %p106
    %p109 = scmp.ne.s32.totalorder %s92, %s108
    %p110 = scmp.eq.s32.totalorder %s14, 0
    %p111 = por %p109, %p110
    %p112 = scmp.le.s32.totalorder 1, %s8
    %p113 = scmp.lt.s32.totalorder %s8, 3
    %p114 = pnand %p112, %p113
    %p115 = pneg %p114
    // Predicated region
    $region9: #{resnet_generator_forward.57} parent=5 // pred_check
      _
    $region10: #{resnet_generator_forward.57} parent=5 // pred_check_branch
      %117 = sbr.rel (%p114) target = $region12
    $region11: #{resnet_generator_forward.57} parent=5 // pred_region
      %s118 = ssub.s32 %s8, 1
    $region12: #{resnet_generator_forward.57} parent=5 // pred_fallthru
      _
    %p119 = scmp.lt.s32.totalorder %s8, 2
    // Predicated region
    $region13: #{resnet_generator_forward.57} parent=5 // pred_check
      %p120 = pneg %p119
    $region14: #{resnet_generator_forward.57} parent=5 // pred_check_branch
      %122 = sbr.rel (%p120) target = $region16
    $region15: #{resnet_generator_forward.57} parent=5 // pred_region
      // Predicated region
      $region17: #{resnet_generator_forward.57} parent=15 // pred_check
        %p123 = pneg %p42
      $region18: #{resnet_generator_forward.57} parent=15 // pred_check_branch
        %125 = sbr.rel (%p123) target = $region20
      $region19: #{resnet_generator_forward.57} parent=15 // pred_region
        %p126 = scmp.lt.s32.totalorder %s15, 1
        %s127 = scalar_select %p126, %s15, 1
        %p128 = scmp.lt.s32.totalorder %s16, 0
        %s129 = scalar_select %p128, %s16, 0
        %s130 = smul.addr %s127, 2
        %s131 = sadd.s32 %s129, %s130
        %s132 = smul.addr %s131, 8
        %s133 = scalar_lea.vmem %s0, %s132
      $region20: #{resnet_generator_forward.57} parent=15 // pred_fallthru
        _
      // Predicated region
      $region21: #{resnet_generator_forward.57} parent=15 // pred_check
        %p134 = pneg %p70
      $region22: #{resnet_generator_forward.57} parent=15 // pred_check_branch
        %136 = sbr.rel (%p134) target = $region24
      $region23: #{resnet_generator_forward.57} parent=15 // pred_region
        %p137 = scmp.lt.s32.totalorder %s15, 1
        %s138 = scalar_select %p137, %s15, 1
        %p139 = scmp.lt.s32.totalorder %s16, 0
        %s140 = scalar_select %p139, %s16, 0
        %s141 = smul.addr %s138, 2
        %s142 = sadd.s32 %s140, %s141
        %s143 = smul.addr %s142, 8
        %s144 = scalar_lea.vmem %s1, %s143
      $region24: #{resnet_generator_forward.57} parent=15 // pred_fallthru
        _
    $region16: #{resnet_generator_forward.57} parent=5 // pred_fallthru
      _
    %p145 = scmp.le.s32.totalorder 1, %s8
    %p146 = scmp.lt.s32.totalorder %s8, 3
    %p147 = pnand %p145, %p146
    %p148 = pneg %p147
    // Predicated region
    $region25: #{resnet_generator_forward.57} parent=5 // pred_check
      _
    $region26: #{resnet_generator_forward.57} parent=5 // pred_check_branch
      %150 = sbr.rel (%p147) target = $region28
    $region27: #{resnet_generator_forward.57} parent=5 // pred_region
      %s151 = ssub.s32 %s8, 1
      %p152 = scmp.lt.s32.totalorder %s17, 1
      %s153 = scalar_select %p152, %s17, 1
      %p154 = scmp.lt.s32.totalorder %s18, 0
      %s155 = scalar_select %p154, %s18, 0
      %s156 = smul.addr %s153, 2
      %s157 = sadd.s32 %s155, %s156
      %s158 = smul.addr %s157, 8
      %s159 = scalar_lea.vmem %s0, %s158
      %p160 = pneg %p48
      %p161 = pneg %p45
      %p162 = scmp.lt.s32.totalorder %s17, 1
      %s163 = scalar_select %p162, %s17, 1
      %p164 = scmp.lt.s32.totalorder %s18, 0
      %s165 = scalar_select %p164, %s18, 0
      %s166 = smul.addr %s163, 2
      %s167 = sadd.s32 %s165, %s166
      %s168 = smul.addr %s167, 8
      %s169 = scalar_lea.vmem %s1, %s168
      %p170 = pneg %p76
      %p171 = pneg %p73
      %p172 = pneg %p104
      %p173 = pneg %p101
      %p174 = scmp.lt.s32.totalorder %s17, 1
      %s175 = scalar_select %p174, %s17, 1
      %p176 = scmp.lt.s32.totalorder %s18, 0
      %s177 = scalar_select %p176, %s18, 0
      %s178 = smul.addr %s175, 2
      %s179 = sadd.s32 %s177, %s178
      %s180 = smul.addr %s179, 8
      %s181 = scalar_lea.vmem %s2, %s180
      %p182 = scmp.lt.s32.totalorder %s17, 1
      %s183 = scalar_select %p182, %s17, 1
      %p184 = scmp.lt.s32.totalorder %s18, 0
      %s185 = scalar_select %p184, %s18, 0
      %s186 = smul.addr %s183, 2
      %s187 = sadd.s32 %s185, %s186
      %s188 = smul.addr %s187, 8
      %s189 = scalar_lea.vmem %s0, %s188
      %p190 = scmp.lt.s32.totalorder %s17, 1
      %s191 = scalar_select %p190, %s17, 1
      %p192 = scmp.lt.s32.totalorder %s18, 0
      %s193 = scalar_select %p192, %s18, 0
      %s194 = smul.addr %s191, 2
      %s195 = sadd.s32 %s193, %s194
      %s196 = smul.addr %s195, 8
      %s197 = scalar_lea.vmem %s1, %s196
      %p198 = scmp.lt.s32.totalorder %s17, 1
      %s199 = scalar_select %p198, %s17, 1
      %p200 = scmp.lt.s32.totalorder %s18, 0
      %s201 = scalar_select %p200, %s18, 0
      %s202 = smul.addr %s199, 2
      %s203 = sadd.s32 %s201, %s202
      %s204 = smul.addr %s203, 8
      %s205 = scalar_lea.vmem %s2, %s204
      %v206 = vld [vmem:[%s189] sm:$0xff]
      %v207 = vld [vmem:[%s189 + $0x8] sm:$0xff]
      %vm208 = vcmask 261120
      %v209 = vsel %vm208, %v206, 0.0
      %v210 = vsel %vm208, %v207, 0.0
      %v211 = vadd.f32 %v209, %v210
      %v212 = vrot.slane %v211, 4
      %v213 = vadd.f32 %v211, %v212
      %v214 = vrot.slane %v213, 2
      %v215 = vadd.f32 %v213, %v214
      %v216 = vrot.slane %v215, 1
      %v217 = vadd.f32 %v215, %v216
      %v218 = vrcp.pop 16.0
      %v219 = vmul.f32 16.0, %v218
      %v220 = vsub.f32 1.0, %v219
      %v221 = vmul.f32 %v218, %v220
      %v222 = vadd.f32 %v218, %v221
      %vm223 = vweird.f32 %v218
      %v224 = vsel %vm223, %v218, %v222
      %v225 = vmul.f32 %v217, %v224
      %v226 = vsub.f32 %v206, %v225
      %v227 = vsub.f32 %v207, %v225
      %v228 = vmul.f32 %v226, %v226
      %v229 = vmul.f32 %v227, %v227
      %v230 = vsel %vm208, %v228, 0.0
      %v231 = vsel %vm208, %v229, 0.0
      %v232 = vadd.f32 %v230, %v231
      %v233 = vrot.slane %v232, 4
      %v234 = vadd.f32 %v232, %v233
      %v235 = vrot.slane %v234, 2
      %v236 = vadd.f32 %v234, %v235
      %v237 = vrot.slane %v236, 1
      %v238 = vadd.f32 %v236, %v237
      %v239 = vmul.f32 %v238, %v224
      %v240 = vadd.f32 %v239, 1e-05
      %v241 = vrsqrt.pop %v240
      %v242 = vmul.f32 %v241, %v240
      %v243 = vmul.f32 %v242, %v241
      %v244 = vmul.f32 0.5, %v243
      %v245 = vsub.f32 1.5, %v244
      %v246 = vmul.f32 %v241, %v245
      %vm247 = vweird.f32 %v240
      %vm248 = vweird.f32 %v241
      %vm249 = vmor %vm247, %vm248
      %v250 = vsel %vm249, %v241, %v246
      %v251 = vmul.f32 %v226, %v250
      %v252 = vmul.f32 %v227, %v250
      %v253 = vld [vmem:[%s197] sm:$0xff]
      %v254 = vld [vmem:[%s197 + $0x8] sm:$0xff]
      %v255 = vadd.f32 %v251, %v253
      %v256 = vadd.f32 %v252, %v254
      %v257 = vmax.f32 %v255, 0.0
      %v258 = vmax.f32 %v256, 0.0
      %259 = vst.msk [vmem:[%s205] sm:$0xff] %vm208, %v257
      %260 = vst.msk [vmem:[%s205 + $0x8] sm:$0xff] %vm208, %v258
      %p261 = scmp.lt.s32.totalorder %s17, 1
      %s262 = scalar_select %p261, %s17, 1
      %p263 = scmp.lt.s32.totalorder %s18, 0
      %s264 = scalar_select %p263, %s18, 0
      %s265 = smul.addr %s262, 2
      %s266 = sadd.s32 %s264, %s265
      %s267 = smul.addr %s266, 8
      %s268 = scalar_lea.vmem %s2, %s267
      // Predicated region
      $region29: #{resnet_generator_forward.57} parent=27 // pred_check
        %p269 = pneg %p101
      $region30: #{resnet_generator_forward.57} parent=27 // pred_check_branch
        %271 = sbr.rel (%p269) target = $region32
      $region31: #{resnet_generator_forward.57} parent=27 // pred_region
        _
      $region32: #{resnet_generator_forward.57} parent=27 // pred_fallthru
        _
    $region28: #{resnet_generator_forward.57} parent=5 // pred_fallthru
      _
    %p272 = scmp.le.s32.totalorder 2, %s8
    // Predicated region
    $region33: #{resnet_generator_forward.57} parent=5 // pred_check
      %p273 = pneg %p272
    $region34: #{resnet_generator_forward.57} parent=5 // pred_check_branch
      %275 = sbr.rel (%p273) target = $region36
    $region35: #{resnet_generator_forward.57} parent=5 // pred_region
      %s276 = ssub.s32 %s8, 2
      // Predicated region
      $region37: #{resnet_generator_forward.57} parent=35 // pred_check
        %p277 = pneg %p107
      $region38: #{resnet_generator_forward.57} parent=35 // pred_check_branch
        %279 = sbr.rel (%p277) target = $region40
      $region39: #{resnet_generator_forward.57} parent=35 // pred_region
        %p280 = scmp.lt.s32.totalorder %s19, 1
        %s281 = scalar_select %p280, %s19, 1
        %p282 = scmp.lt.s32.totalorder %s20, 0
        %s283 = scalar_select %p282, %s20, 0
        %s284 = smul.addr %s281, 2
        %s285 = sadd.s32 %s283, %s284
        %s286 = smul.addr %s285, 8
        %s287 = scalar_lea.vmem %s2, %s286
      $region40: #{resnet_generator_forward.57} parent=35 // pred_fallthru
        _
    $region36: #{resnet_generator_forward.57} parent=5 // pred_fallthru
      _
  $region6: #{resnet_generator_forward.57} parent=0 // loop_footer
    %s12 = sadd.s32 1, %s8
  $region7: #{resnet_generator_forward.57} parent=0 // loop_footer_branch
    %7 = sbr.rel target = $region3
  $region8: #{resnet_generator_forward.57} parent=0 // loop_exit
    _

// kernel: resnet_generator_forward.54
$region0: #{resnet_generator_forward.54}
  #allocation0 [shape = 'u32[]', space=smem, size = 0x4, offset = 0x4, fixed_abs, tag = 'smem constant byte address 0x4 - core index']
  #allocation1 [shape = 'u32[72,128]{1,0:T(1,128)}', space=vmem, size = 0x9000, scoped, tag = 'internal scratch']
  #allocation2 [shape = 'f32[32,128]{1,0:T(8,128)}', space=vmem, size = 0x4000, scoped, tag = 'scratch operand']
  %s0 = inlined_call_operand.vmem [shape: bf16[32,384], index: 0, kind: input, shape index: {}]
  %s1 = inlined_call_operand.vmem [shape: bf16[384,128], index: 1, kind: input, shape index: {}]
  %s2 = inlined_call_operand.vmem [shape: f32[1,128], index: 2, kind: input, shape index: {}]
  %s3 = inlined_call_operand.vmem [shape: f32[32,128], index: 3, kind: output, shape index: {}]
  %s4 = sld [smem:[#allocation0]]
  $region30: #{resnet_generator_forward.54} parent=0
    _
  %s6 = ssub.s32 1, %s4
  %s7 = scalar_select 0, %s6, %s4
  // Predicated region
  $region2: #{resnet_generator_forward.54} parent=0 // pred_check
    _
  $region3: #{resnet_generator_forward.54} parent=0 // pred_check_branch
    %9 = sbr.rel (0) target = $region5
  $region4: #{resnet_generator_forward.54} parent=0 // pred_region
    _
  $region5: #{resnet_generator_forward.54} parent=0 // pred_fallthru
    _
  // Predicated region
  $region6: #{resnet_generator_forward.54} parent=0 // pred_check
    _
  $region7: #{resnet_generator_forward.54} parent=0 // pred_check_branch
    %11 = sbr.rel (0) target = $region9
  $region8: #{resnet_generator_forward.54} parent=0 // pred_region
    _
  $region9: #{resnet_generator_forward.54} parent=0 // pred_fallthru
    _
  // Predicated region
  $region10: #{resnet_generator_forward.54} parent=0 // pred_check
    _
  $region11: #{resnet_generator_forward.54} parent=0 // pred_check_branch
    %13 = sbr.rel (0) target = $region13
  $region12: #{resnet_generator_forward.54} parent=0 // pred_region
    _
  $region13: #{resnet_generator_forward.54} parent=0 // pred_fallthru
    _
  %p14 = scmp.eq.s32.totalorder 0, 0
  // Predicated region
  $region14: #{resnet_generator_forward.54} parent=0 // pred_check
    %p15 = pneg %p14
  $region15: #{resnet_generator_forward.54} parent=0 // pred_check_branch
    %17 = sbr.rel (%p15) target = $region17
  $region16: #{resnet_generator_forward.54} parent=0 // pred_region
    %18 = vst [vmem:[#allocation2] sm:$0xff] 0.0
    %19 = vst [vmem:[#allocation2 + $0x8] sm:$0xff] 0.0
    %20 = vst [vmem:[#allocation2 + $0x10] sm:$0xff] 0.0
    %21 = vst [vmem:[#allocation2 + $0x18] sm:$0xff] 0.0
  $region17: #{resnet_generator_forward.54} parent=0 // pred_fallthru
    _
  %v22 = vld [vmem:[#allocation2] sm:$0xff]
  %v23 = vld [vmem:[#allocation2 + $0x8] sm:$0xff]
  %v24 = vld [vmem:[#allocation2 + $0x10] sm:$0xff]
  %v25 = vld [vmem:[#allocation2 + $0x18] sm:$0xff]
  %v26 = vld [vmem:[%s0] sm:$0xff]
  %v27 = vld [vmem:[%s0 + $0x8] sm:$0xf]
  %v28 = vld [vmem:[%s0 + $0xc] sm:$0xff]
  %v29 = vld [vmem:[%s0 + $0x14] sm:$0xf]
  %v30 = vld [vmem:[%s0 + $0x18] sm:$0xff]
  %v31 = vld [vmem:[%s0 + $0x20] sm:$0xf]
  %v32 = vld [vmem:[%s0 + $0x24] sm:$0xff]
  %v33 = vld [vmem:[%s0 + $0x2c] sm:$0xf]
  %v34 = vld [vmem:[%s1] sm:$0xf]
  %v35 = vld [vmem:[%s1 + $0x4] sm:$0xf]
  %v36 = vld [vmem:[%s1 + $0x8] sm:$0xf]
  %v37 = vld [vmem:[%s1 + $0xc] sm:$0xf]
  %v38 = vld [vmem:[%s1 + $0x10] sm:$0xf]
  %v39 = vld [vmem:[%s1 + $0x14] sm:$0xf]
  %v40 = vld [vmem:[%s1 + $0x18] sm:$0xf]
  %v41 = vld [vmem:[%s1 + $0x1c] sm:$0xf]
  %v42 = vld [vmem:[%s1 + $0x20] sm:$0xf]
  %v43 = vld [vmem:[%s1 + $0x24] sm:$0xf]
  %v44 = vld [vmem:[%s1 + $0x28] sm:$0xf]
  %v45 = vld [vmem:[%s1 + $0x2c] sm:$0xf]
  %v46 = vld [vmem:[%s1 + $0x30] sm:$0xf]
  %v47 = vld [vmem:[%s1 + $0x34] sm:$0xf]
  %v48 = vld [vmem:[%s1 + $0x38] sm:$0xf]
  %v49 = vld [vmem:[%s1 + $0x3c] sm:$0xf]
  %v50 = vld [vmem:[%s1 + $0x40] sm:$0xf]
  %v51 = vld [vmem:[%s1 + $0x44] sm:$0xf]
  %v52 = vld [vmem:[%s1 + $0x48] sm:$0xf]
  %v53 = vld [vmem:[%s1 + $0x4c] sm:$0xf]
  %v54 = vld [vmem:[%s1 + $0x50] sm:$0xf]
  %v55 = vld [vmem:[%s1 + $0x54] sm:$0xf]
  %v56 = vld [vmem:[%s1 + $0x58] sm:$0xf]
  %v57 = vld [vmem:[%s1 + $0x5c] sm:$0xf]
  %v58 = vld [vmem:[%s1 + $0x60] sm:$0xf]
  %v59 = vld [vmem:[%s1 + $0x64] sm:$0xf]
  %v60 = vld [vmem:[%s1 + $0x68] sm:$0xf]
  %v61 = vld [vmem:[%s1 + $0x6c] sm:$0xf]
  %v62 = vld [vmem:[%s1 + $0x70] sm:$0xf]
  %v63 = vld [vmem:[%s1 + $0x74] sm:$0xf]
  %v64 = vld [vmem:[%s1 + $0x78] sm:$0xf]
  %v65 = vld [vmem:[%s1 + $0x7c] sm:$0xf]
  %v66 = vld [vmem:[%s1 + $0x80] sm:$0xf]
  %v67 = vld [vmem:[%s1 + $0x84] sm:$0xf]
  %v68 = vld [vmem:[%s1 + $0x88] sm:$0xf]
  %v69 = vld [vmem:[%s1 + $0x8c] sm:$0xf]
  %v70 = vld [vmem:[%s1 + $0x90] sm:$0xf]
  %v71 = vld [vmem:[%s1 + $0x94] sm:$0xf]
  %v72 = vld [vmem:[%s1 + $0x98] sm:$0xf]
  %v73 = vld [vmem:[%s1 + $0x9c] sm:$0xf]
  %v74 = vld [vmem:[%s1 + $0xa0] sm:$0xf]
  %v75 = vld [vmem:[%s1 + $0xa4] sm:$0xf]
  %v76 = vld [vmem:[%s1 + $0xa8] sm:$0xf]
  %v77 = vld [vmem:[%s1 + $0xac] sm:$0xf]
  %v78 = vld [vmem:[%s1 + $0xb0] sm:$0xf]
  %v79 = vld [vmem:[%s1 + $0xb4] sm:$0xf]
  %v80 = vld [vmem:[%s1 + $0xb8] sm:$0xf]
  %v81 = vld [vmem:[%s1 + $0xbc] sm:$0xf]
  %v90 = vunpack.c.l.b16 %v26
  %v91 = vunpack.c.h.b16 %v26
  %v92 = vunpack.c.l.b16 %v27
  %v93 = vunpack.c.l.b16 %v28
  %v94 = vunpack.c.h.b16 %v28
  %v95 = vunpack.c.l.b16 %v29
  %v96 = vunpack.c.l.b16 %v30
  %v97 = vunpack.c.h.b16 %v30
  %v98 = vunpack.c.l.b16 %v31
  %v99 = vunpack.c.l.b16 %v32
  %v100 = vunpack.c.h.b16 %v32
  %v101 = vunpack.c.l.b16 %v33
  %v102 = vpack.c.b16 %v93, %v90
  %v103 = vpack.c.b16 %v94, %v91
  %v104 = vpack.c.b16 %v95, %v92
  %v105 = vpack.c.b16 %v99, %v96
  %v106 = vpack.c.b16 %v100, %v97
  %v107 = vpack.c.b16 %v101, %v98
  %v162 = vunpack.c.l.b16 %v34
  %v163 = vunpack.c.l.b16 %v35
  %v164 = vunpack.c.l.b16 %v36
  %v165 = vunpack.c.l.b16 %v37
  %v166 = vunpack.c.l.b16 %v38
  %v167 = vunpack.c.l.b16 %v39
  %v168 = vunpack.c.l.b16 %v40
  %v169 = vunpack.c.l.b16 %v41
  %v170 = vunpack.c.l.b16 %v42
  %v171 = vunpack.c.l.b16 %v43
  %v172 = vunpack.c.l.b16 %v44
  %v173 = vunpack.c.l.b16 %v45
  %v174 = vunpack.c.l.b16 %v46
  %v175 = vunpack.c.l.b16 %v47
  %v176 = vunpack.c.l.b16 %v48
  %v177 = vunpack.c.l.b16 %v49
  %v178 = vunpack.c.l.b16 %v50
  %v179 = vunpack.c.l.b16 %v51
  %v180 = vunpack.c.l.b16 %v52
  %v181 = vunpack.c.l.b16 %v53
  %v182 = vunpack.c.l.b16 %v54
  %v183 = vunpack.c.l.b16 %v55
  %v184 = vunpack.c.l.b16 %v56
  %v185 = vunpack.c.l.b16 %v57
  %v186 = vunpack.c.l.b16 %v58
  %v187 = vunpack.c.l.b16 %v59
  %v188 = vunpack.c.l.b16 %v60
  %v189 = vunpack.c.l.b16 %v61
  %v190 = vunpack.c.l.b16 %v62
  %v191 = vunpack.c.l.b16 %v63
  %v192 = vunpack.c.l.b16 %v64
  %v193 = vunpack.c.l.b16 %v65
  %v194 = vunpack.c.l.b16 %v66
  %v195 = vunpack.c.l.b16 %v67
  %v196 = vunpack.c.l.b16 %v68
  %v197 = vunpack.c.l.b16 %v69
  %v198 = vunpack.c.l.b16 %v70
  %v199 = vunpack.c.l.b16 %v71
  %v200 = vunpack.c.l.b16 %v72
  %v201 = vunpack.c.l.b16 %v73
  %v202 = vunpack.c.l.b16 %v74
  %v203 = vunpack.c.l.b16 %v75
  %v204 = vunpack.c.l.b16 %v76
  %v205 = vunpack.c.l.b16 %v77
  %v206 = vunpack.c.l.b16 %v78
  %v207 = vunpack.c.l.b16 %v79
  %v208 = vunpack.c.l.b16 %v80
  %v209 = vunpack.c.l.b16 %v81
  %v210 = vpack.c.b16 %v163, %v162
  %v211 = vpack.c.b16 %v165, %v164
  %v212 = vpack.c.b16 %v167, %v166
  %v213 = vpack.c.b16 %v169, %v168
  %v214 = vpack.c.b16 %v171, %v170
  %v215 = vpack.c.b16 %v173, %v172
  %v216 = vpack.c.b16 %v175, %v174
  %v217 = vpack.c.b16 %v177, %v176
  %v218 = vpack.c.b16 %v179, %v178
  %v219 = vpack.c.b16 %v181, %v180
  %v220 = vpack.c.b16 %v183, %v182
  %v221 = vpack.c.b16 %v185, %v184
  %v222 = vpack.c.b16 %v187, %v186
  %v223 = vpack.c.b16 %v189, %v188
  %v224 = vpack.c.b16 %v191, %v190
  %v225 = vpack.c.b16 %v193, %v192
  %v226 = vpack.c.b16 %v195, %v194
  %v227 = vpack.c.b16 %v197, %v196
  %v228 = vpack.c.b16 %v199, %v198
  %v229 = vpack.c.b16 %v201, %v200
  %v230 = vpack.c.b16 %v203, %v202
  %v231 = vpack.c.b16 %v205, %v204
  %v232 = vpack.c.b16 %v207, %v206
  %v233 = vpack.c.b16 %v209, %v208
  %258 = vmatpush.bf16.msra.mxu0 %v217
  %259 = vmatpush.bf16.msra.mxu0 %v216
  %260 = vmatpush.bf16.msra.mxu0 %v215
  %261 = vmatpush.bf16.msra.mxu0 %v214
  %262 = vmatpush.bf16.msra.mxu0 %v213
  %263 = vmatpush.bf16.msra.mxu0 %v212
  %264 = vmatpush.bf16.msra.mxu0 %v211
  %265 = vmatpush.bf16.msra.mxu0 %v210
  %266 = vmatmul.bf16.gmra.mxu0 %v102
  %v267 = vpop.f32.mrf.mxu0
  %v268 = vadd.f32 0.0, %v267
  %v269 = vpop.f32.mrf.mxu0
  %v270 = vadd.f32 0.0, %v269
  %271 = vmatmul.bf16.gmra.mxu0 %v105
  %v272 = vpop.f32.mrf.mxu0
  %v273 = vadd.f32 0.0, %v272
  %v274 = vpop.f32.mrf.mxu0
  %v275 = vadd.f32 0.0, %v274
  %276 = vdwg.mxu0
  %277 = vmatpush.bf16.msra.mxu0 %v225
  %278 = vmatpush.bf16.msra.mxu0 %v224
  %279 = vmatpush.bf16.msra.mxu0 %v223
  %280 = vmatpush.bf16.msra.mxu0 %v222
  %281 = vmatpush.bf16.msra.mxu0 %v221
  %282 = vmatpush.bf16.msra.mxu0 %v220
  %283 = vmatpush.bf16.msra.mxu0 %v219
  %284 = vmatpush.bf16.msra.mxu0 %v218
  %285 = vmatmul.bf16.gmra.mxu0 %v103
  %v286 = vpop.f32.mrf.mxu0
  %v287 = vadd.f32 %v268, %v286
  %v288 = vpop.f32.mrf.mxu0
  %v289 = vadd.f32 %v270, %v288
  %290 = vmatmul.bf16.gmra.mxu0 %v106
  %v291 = vpop.f32.mrf.mxu0
  %v292 = vadd.f32 %v273, %v291
  %v293 = vpop.f32.mrf.mxu0
  %v294 = vadd.f32 %v275, %v293
  %295 = vdwg.mxu0
  %296 = vmatpush.bf16.msra.mxu0 %v233
  %297 = vmatpush.bf16.msra.mxu0 %v232
  %298 = vmatpush.bf16.msra.mxu0 %v231
  %299 = vmatpush.bf16.msra.mxu0 %v230
  %300 = vmatpush.bf16.msra.mxu0 %v229
  %301 = vmatpush.bf16.msra.mxu0 %v228
  %302 = vmatpush.bf16.msra.mxu0 %v227
  %303 = vmatpush.bf16.msra.mxu0 %v226
  %304 = vmatmul.bf16.gmra.mxu0 %v104
  %v305 = vpop.f32.mrf.mxu0
  %v306 = vadd.f32 %v287, %v305
  %v307 = vpop.f32.mrf.mxu0
  %v308 = vadd.f32 %v289, %v307
  %309 = vmatmul.bf16.gmra.mxu0 %v107
  %v310 = vpop.f32.mrf.mxu0
  %v311 = vadd.f32 %v292, %v310
  %v312 = vpop.f32.mrf.mxu0
  %v313 = vadd.f32 %v294, %v312
  %314 = vdwg.mxu0
  %v315 = vadd.f32 %v22, %v306
  %v316 = vadd.f32 %v23, %v308
  %v317 = vadd.f32 %v24, %v311
  %v318 = vadd.f32 %v25, %v313
  %319 = vst [vmem:[#allocation2] sm:$0xff] %v315
  %320 = vst [vmem:[#allocation2 + $0x8] sm:$0xff] %v316
  %321 = vst [vmem:[#allocation2 + $0x10] sm:$0xff] %v317
  %322 = vst [vmem:[#allocation2 + $0x18] sm:$0xff] %v318
  // Predicated region
  $region18: #{resnet_generator_forward.54} parent=0 // pred_check
    %p323 = pneg %p14
  $region19: #{resnet_generator_forward.54} parent=0 // pred_check_branch
    %325 = sbr.rel (%p323) target = $region21
  $region20: #{resnet_generator_forward.54} parent=0 // pred_region
    %v326 = vld [vmem:[#allocation2] sm:$0xff]
    %v327 = vld [vmem:[#allocation2 + $0x8] sm:$0xff]
    %v328 = vld [vmem:[#allocation2 + $0x10] sm:$0xff]
    %v329 = vld [vmem:[#allocation2 + $0x18] sm:$0xff]
    %v330 = vld [vmem:[%s2] sm:$0x1]
    %v332 = vperm.slane %v330, 0
    %v334 = vadd.f32 %v326, %v332
    %v335 = vadd.f32 %v327, %v332
    %v336 = vadd.f32 %v328, %v332
    %v337 = vadd.f32 %v329, %v332
    %338 = vst [vmem:[%s3] sm:$0xff] %v334
    %339 = vst [vmem:[%s3 + $0x8] sm:$0xff] %v335
    %340 = vst [vmem:[%s3 + $0x10] sm:$0xff] %v336
    %341 = vst [vmem:[%s3 + $0x18] sm:$0xff] %v337
  $region21: #{resnet_generator_forward.54} parent=0 // pred_fallthru
    _
  // Predicated region
  $region22: #{resnet_generator_forward.54} parent=0 // pred_check
    _
  $region23: #{resnet_generator_forward.54} parent=0 // pred_check_branch
    %343 = sbr.rel (0) target = $region25
  $region24: #{resnet_generator_forward.54} parent=0 // pred_region
    _
  $region25: #{resnet_generator_forward.54} parent=0 // pred_fallthru
    _
  // Predicated region
  $region26: #{resnet_generator_forward.54} parent=0 // pred_check
    _
  $region27: #{resnet_generator_forward.54} parent=0 // pred_check_branch
    %345 = sbr.rel (0) target = $region29
  $region28: #{resnet_generator_forward.54} parent=0 // pred_region
    _
  $region29: #{resnet_generator_forward.54} parent=0 // pred_fallthru
    _

// kernel: resnet_generator_forward.91
$region0: #{resnet_generator_forward.91}
  #allocation0 [shape = 'u32[]', space=smem, size = 0x4, offset = 0x4, fixed_abs, tag = 'smem constant byte address 0x4 - core index']
  #allocation1 [shape = 'u32[72,128]{1,0:T(1,128)}', space=vmem, size = 0x9000, scoped, tag = 'internal scratch']
  %s0 = inlined_call_operand.vmem [shape: f32[2,49,16], index: 0, kind: input, shape index: {}]
  %s1 = inlined_call_operand.vmem [shape: f32[2,49,16], index: 1, kind: output, shape index: {}]
  %s2 = sld [smem:[#allocation0]]
  $region37: #{resnet_generator_forward.91} parent=0
    _
  %s4 = ssub.s32 1, %s2
  %s5 = scalar_select 0, %s4, %s2
  loop: start=0, step=1, limit=4
  $region2: #{resnet_generator_forward.91} parent=0 // loop_pre_header
    _
  $region3: #{resnet_generator_forward.91} parent=0 // loop_header
    %s7 = sphi 0, %s11
    %p8 = scmp.ge.s32.totalorder %s7, 4
    %s14 = sphi 0, %s26
    %s15 = sphi 0, %s22
    %s16 = sphi 0, %s14
    %s17 = sphi 0, %s15
    %s18 = sphi 0, %s16
    %s19 = sphi 0, %s17
    %s31 = sphi 0, %s33
    %s34 = sphi 0, %s31
    %s35 = sphi 0, %s34
    %s51 = sphi 0, %s35
    %s59 = sphi 0, %s61
    %s62 = sphi 0, %s59
    %s63 = sphi 0, %s62
    %s79 = sphi 0, %s63
  $region4: #{resnet_generator_forward.91} parent=0 // loop_header_branch
    %10 = sbr.rel (%p8) target = $region8
  $region5: #{resnet_generator_forward.91} parent=0 // loop_body
    %s12 = ssub.s32 %s7, 1
    %s13 = ssub.s32 %s7, 2
    %s20 = sadd.s32 1, %s15
    %p21 = scmp.ge.s32.totalorder %s20, 1
    %s22 = scalar_select %p21, 0, %s20
    %s23 = sadd.s32 1, %s14
    %s24 = scalar_select %p21, %s23, %s14
    %p25 = scmp.ge.s32.totalorder %s24, 2
    %s26 = scalar_select %p25, 0, %s24
    %s27 = ssub.s32 %s14, %s26
    %s28 = ssub.s32 %s15, %s22
    %s29 = sor.u32 %s27, %s28
    %p30 = scmp.eq.s32.totalorder %s29, 0
    %s32 = sadd.s32 %s31, 1
    %s33 = scalar_select %p30, %s31, %s32
    %p36 = pneg %p30
    %p37 = scmp.eq.s32.totalorder %s7, 1
    %p38 = por %p36, %p37
    %p39 = scmp.ne.s32.totalorder %s31, %s34
    %p40 = scmp.eq.s32.totalorder %s7, 0
    %p41 = por %p39, %p40
    %p42 = scmp.ne.s32.totalorder %s31, %s34
    %p43 = scmp.eq.s32.totalorder %s12, 1
    %p44 = por %p42, %p43
    %p45 = scmp.ne.s32.totalorder %s34, %s35
    %p46 = scmp.eq.s32.totalorder %s12, 0
    %p47 = por %p45, %p46
    %p48 = scmp.ne.s32.totalorder %s34, %s35
    %p49 = scmp.eq.s32.totalorder %s13, 1
    %p50 = por %p48, %p49
    %p52 = scmp.ne.s32.totalorder %s35, %s51
    %p53 = scmp.eq.s32.totalorder %s13, 0
    %p54 = por %p52, %p53
    %s55 = ssub.s32 %s14, %s26
    %s56 = ssub.s32 %s15, %s22
    %s57 = sor.u32 %s55, %s56
    %p58 = scmp.eq.s32.totalorder %s57, 0
    %s60 = sadd.s32 %s59, 1
    %s61 = scalar_select %p58, %s59, %s60
    %p64 = pneg %p58
    %p65 = scmp.eq.s32.totalorder %s7, 1
    %p66 = por %p64, %p65
    %p67 = scmp.ne.s32.totalorder %s59, %s62
    %p68 = scmp.eq.s32.totalorder %s7, 0
    %p69 = por %p67, %p68
    %p70 = scmp.ne.s32.totalorder %s59, %s62
    %p71 = scmp.eq.s32.totalorder %s12, 1
    %p72 = por %p70, %p71
    %p73 = scmp.ne.s32.totalorder %s62, %s63
    %p74 = scmp.eq.s32.totalorder %s12, 0
    %p75 = por %p73, %p74
    %p76 = scmp.ne.s32.totalorder %s62, %s63
    %p77 = scmp.eq.s32.totalorder %s13, 1
    %p78 = por %p76, %p77
    %p80 = scmp.ne.s32.totalorder %s63, %s79
    %p81 = scmp.eq.s32.totalorder %s13, 0
    %p82 = por %p80, %p81
    %p83 = scmp.le.s32.totalorder 1, %s7
    %p84 = scmp.lt.s32.totalorder %s7, 3
    %p85 = pnand %p83, %p84
    %p86 = pneg %p85
    // Predicated region
    $region9: #{resnet_generator_forward.91} parent=5 // pred_check
      _
    $region10: #{resnet_generator_forward.91} parent=5 // pred_check_branch
      %88 = sbr.rel (%p85) target = $region12
    $region11: #{resnet_generator_forward.91} parent=5 // pred_region
      %s89 = ssub.s32 %s7, 1
    $region12: #{resnet_generator_forward.91} parent=5 // pred_fallthru
      _
    %p90 = scmp.lt.s32.totalorder %s7, 2
    // Predicated region
    $region13: #{resnet_generator_forward.91} parent=5 // pred_check
      %p91 = pneg %p90
    $region14: #{resnet_generator_forward.91} parent=5 // pred_check_branch
      %93 = sbr.rel (%p91) target = $region16
    $region15: #{resnet_generator_forward.91} parent=5 // pred_region
      // Predicated region
      $region17: #{resnet_generator_forward.91} parent=15 // pred_check
        %p94 = pneg %p41
      $region18: #{resnet_generator_forward.91} parent=15 // pred_check_branch
        %96 = sbr.rel (%p94) target = $region20
      $region19: #{resnet_generator_forward.91} parent=15 // pred_region
        %p97 = scmp.lt.s32.totalorder %s14, 1
        %s98 = scalar_select %p97, %s14, 1
        %p99 = scmp.lt.s32.totalorder %s15, 0
        %s100 = scalar_select %p99, %s15, 0
        %s101 = smul.addr %s98, 7
        %s102 = sadd.s32 %s100, %s101
        %s103 = smul.addr %s102, 8
        %s104 = scalar_lea.vmem %s0, %s103
      $region20: #{resnet_generator_forward.91} parent=15 // pred_fallthru
        _
    $region16: #{resnet_generator_forward.91} parent=5 // pred_fallthru
      _
    %p105 = scmp.le.s32.totalorder 1, %s7
    %p106 = scmp.lt.s32.totalorder %s7, 3
    %p107 = pnand %p105, %p106
    %p108 = pneg %p107
    // Predicated region
    $region21: #{resnet_generator_forward.91} parent=5 // pred_check
      _
    $region22: #{resnet_generator_forward.91} parent=5 // pred_check_branch
      %110 = sbr.rel (%p107) target = $region24
    $region23: #{resnet_generator_forward.91} parent=5 // pred_region
      %s111 = ssub.s32 %s7, 1
      %p112 = scmp.lt.s32.totalorder %s16, 1
      %s113 = scalar_select %p112, %s16, 1
      %p114 = scmp.lt.s32.totalorder %s17, 0
      %s115 = scalar_select %p114, %s17, 0
      %s116 = smul.addr %s113, 7
      %s117 = sadd.s32 %s115, %s116
      %s118 = smul.addr %s117, 8
      %s119 = scalar_lea.vmem %s0, %s118
      %p120 = pneg %p47
      %p121 = pneg %p44
      %p122 = pneg %p75
      %p123 = pneg %p72
      %p124 = scmp.lt.s32.totalorder %s16, 1
      %s125 = scalar_select %p124, %s16, 1
      %p126 = scmp.lt.s32.totalorder %s17, 0
      %s127 = scalar_select %p126, %s17, 0
      %s128 = smul.addr %s125, 7
      %s129 = sadd.s32 %s127, %s128
      %s130 = smul.addr %s129, 8
      %s131 = scalar_lea.vmem %s1, %s130
      %p132 = scmp.lt.s32.totalorder %s16, 1
      %s133 = scalar_select %p132, %s16, 1
      %p134 = scmp.lt.s32.totalorder %s17, 0
      %s135 = scalar_select %p134, %s17, 0
      %s136 = smul.addr %s133, 7
      %s137 = sadd.s32 %s135, %s136
      %s138 = smul.addr %s137, 8
      %s139 = scalar_lea.vmem %s0, %s138
      %p140 = scmp.lt.s32.totalorder %s16, 1
      %s141 = scalar_select %p140, %s16, 1
      %p142 = scmp.lt.s32.totalorder %s17, 0
      %s143 = scalar_select %p142, %s17, 0
      %s144 = smul.addr %s141, 7
      %s145 = sadd.s32 %s143, %s144
      %s146 = smul.addr %s145, 8
      %s147 = scalar_lea.vmem %s1, %s146
      %v148 = vld [vmem:[%s139] sm:$0xff]
      %v149 = vld [vmem:[%s139 + $0x8] sm:$0xff]
      %v150 = vld [vmem:[%s139 + $0x10] sm:$0xff]
      %v151 = vld [vmem:[%s139 + $0x18] sm:$0xff]
      %v152 = vld [vmem:[%s139 + $0x20] sm:$0xff]
      %v153 = vld [vmem:[%s139 + $0x28] sm:$0xff]
      %v154 = vld [vmem:[%s139 + $0x30] sm:$0x1]
      %vm155 = vcmask 130048
      %v156 = vsel %vm155, %v148, 0.0
      %v157 = vsel %vm155, %v149, 0.0
      %v158 = vadd.f32 %v156, %v157
      %v159 = vsel %vm155, %v150, 0.0
      %v160 = vadd.f32 %v158, %v159
      %v161 = vsel %vm155, %v151, 0.0
      %v162 = vadd.f32 %v160, %v161
      %v163 = vsel %vm155, %v152, 0.0
      %v164 = vadd.f32 %v162, %v163
      %v165 = vsel %vm155, %v153, 0.0
      %v166 = vadd.f32 %v164, %v165
      %vm167 = vcmask 122880
      %v168 = vsel %vm167, %v154, 0.0
      %v169 = vadd.f32 %v166, %v168
      %v170 = vrot.slane %v169, 4
      %v171 = vadd.f32 %v169, %v170
      %v172 = vrot.slane %v171, 2
      %v173 = vadd.f32 %v171, %v172
      %v174 = vrot.slane %v173, 1
      %v175 = vadd.f32 %v173, %v174
      %v176 = vrcp.pop 49.0
      %v177 = vmul.f32 49.0, %v176
      %v178 = vsub.f32 1.0, %v177
      %v179 = vmul.f32 %v176, %v178
      %v180 = vadd.f32 %v176, %v179
      %vm181 = vweird.f32 %v176
      %v182 = vsel %vm181, %v176, %v180
      %v183 = vmul.f32 %v175, %v182
      %v184 = vsub.f32 %v148, %v183
      %v185 = vsub.f32 %v149, %v183
      %v186 = vsub.f32 %v150, %v183
      %v187 = vsub.f32 %v151, %v183
      %v188 = vsub.f32 %v152, %v183
      %v189 = vsub.f32 %v153, %v183
      %v190 = vsub.f32 %v154, %v183
      %v191 = vmul.f32 %v184, %v184
      %v192 = vmul.f32 %v185, %v185
      %v193 = vmul.f32 %v186, %v186
      %v194 = vmul.f32 %v187, %v187
      %v195 = vmul.f32 %v188, %v188
      %v196 = vmul.f32 %v189, %v189
      %v197 = vmul.f32 %v190, %v190
      %v198 = vsel %vm155, %v191, 0.0
      %v199 = vsel %vm155, %v192, 0.0
      %v200 = vadd.f32 %v198, %v199
      %v201 = vsel %vm155, %v193, 0.0
      %v202 = vadd.f32 %v200, %v201
      %v203 = vsel %vm155, %v194, 0.0
      %v204 = vadd.f32 %v202, %v203
      %v205 = vsel %vm155, %v195, 0.0
      %v206 = vadd.f32 %v204, %v205
      %v207 = vsel %vm155, %v196, 0.0
      %v208 = vadd.f32 %v206, %v207
      %v209 = vsel %vm167, %v197, 0.0
      %v210 = vadd.f32 %v208, %v209
      %v211 = vrot.slane %v210, 4
      %v212 = vadd.f32 %v210, %v211
      %v213 = vrot.slane %v212, 2
      %v214 = vadd.f32 %v212, %v213
      %v215 = vrot.slane %v214, 1
      %v216 = vadd.f32 %v214, %v215
      %v217 = vmul.f32 %v216, %v182
      %v218 = vadd.f32 %v217, 1e-05
      %v219 = vrsqrt.pop %v218
      %v220 = vmul.f32 %v219, %v218
      %v221 = vmul.f32 %v220, %v219
      %v222 = vmul.f32 0.5, %v221
      %v223 = vsub.f32 1.5, %v222
      %v224 = vmul.f32 %v219, %v223
      %vm225 = vweird.f32 %v218
      %vm226 = vweird.f32 %v219
      %vm227 = vmor %vm225, %vm226
      %v228 = vsel %vm227, %v219, %v224
      %v229 = vmul.f32 %v184, %v228
      %v230 = vmul.f32 %v185, %v228
      %v231 = vmul.f32 %v186, %v228
      %v232 = vmul.f32 %v187, %v228
      %v233 = vmul.f32 %v188, %v228
      %v234 = vmul.f32 %v189, %v228
      %v235 = vmul.f32 %v190, %v228
      %v236 = vmax.f32 %v229, 0.0
      %v237 = vmax.f32 %v230, 0.0
      %v238 = vmax.f32 %v231, 0.0
      %v239 = vmax.f32 %v232, 0.0
      %v240 = vmax.f32 %v233, 0.0
      %v241 = vmax.f32 %v234, 0.0
      %v242 = vmax.f32 %v235, 0.0
      %243 = vst.msk [vmem:[%s147] sm:$0xff] %vm155, %v236
      %244 = vst.msk [vmem:[%s147 + $0x8] sm:$0xff] %vm155, %v237
      %245 = vst.msk [vmem:[%s147 + $0x10] sm:$0xff] %vm155, %v238
      %246 = vst.msk [vmem:[%s147 + $0x18] sm:$0xff] %vm155, %v239
      %247 = vst.msk [vmem:[%s147 + $0x20] sm:$0xff] %vm155, %v240
      %248 = vst.msk [vmem:[%s147 + $0x28] sm:$0xff] %vm155, %v241
      %249 = vst.msk [vmem:[%s147 + $0x30] sm:$0x1] %vm167, %v242
      %p250 = scmp.lt.s32.totalorder %s16, 1
      %s251 = scalar_select %p250, %s16, 1
      %p252 = scmp.lt.s32.totalorder %s17, 0
      %s253 = scalar_select %p252, %s17, 0
      %s254 = smul.addr %s251, 7
      %s255 = sadd.s32 %s253, %s254
      %s256 = smul.addr %s255, 8
      %s257 = scalar_lea.vmem %s1, %s256
      // Predicated region
      $region25: #{resnet_generator_forward.91} parent=23 // pred_check
        %p258 = pneg %p72
      $region26: #{resnet_generator_forward.91} parent=23 // pred_check_branch
        %260 = sbr.rel (%p258) target = $region28
      $region27: #{resnet_generator_forward.91} parent=23 // pred_region
        _
      $region28: #{resnet_generator_forward.91} parent=23 // pred_fallthru
        _
    $region24: #{resnet_generator_forward.91} parent=5 // pred_fallthru
      _
    %p261 = scmp.le.s32.totalorder 2, %s7
    // Predicated region
    $region29: #{resnet_generator_forward.91} parent=5 // pred_check
      %p262 = pneg %p261
    $region30: #{resnet_generator_forward.91} parent=5 // pred_check_branch
      %264 = sbr.rel (%p262) target = $region32
    $region31: #{resnet_generator_forward.91} parent=5 // pred_region
      %s265 = ssub.s32 %s7, 2
      // Predicated region
      $region33: #{resnet_generator_forward.91} parent=31 // pred_check
        %p266 = pneg %p78
      $region34: #{resnet_generator_forward.91} parent=31 // pred_check_branch
        %268 = sbr.rel (%p266) target = $region36
      $region35: #{resnet_generator_forward.91} parent=31 // pred_region
        %p269 = scmp.lt.s32.totalorder %s18, 1
        %s270 = scalar_select %p269, %s18, 1
        %p271 = scmp.lt.s32.totalorder %s19, 0
        %s272 = scalar_select %p271, %s19, 0
        %s273 = smul.addr %s270, 7
        %s274 = sadd.s32 %s272, %s273
        %s275 = smul.addr %s274, 8
        %s276 = scalar_lea.vmem %s1, %s275
      $region36: #{resnet_generator_forward.91} parent=31 // pred_fallthru
        _
    $region32: #{resnet_generator_forward.91} parent=5 // pred_fallthru
      _
  $region6: #{resnet_generator_forward.91} parent=0 // loop_footer
    %s11 = sadd.s32 1, %s7
  $region7: #{resnet_generator_forward.91} parent=0 // loop_footer_branch
    %6 = sbr.rel target = $region3
  $region8: #{resnet_generator_forward.91} parent=0 // loop_exit
    _

// kernel: resnet_generator_forward.90
$region0: #{resnet_generator_forward.90}
  #allocation0 [shape = 'u32[]', space=smem, size = 0x4, offset = 0x4, fixed_abs, tag = 'smem constant byte address 0x4 - core index']
  #allocation1 [shape = 'u32[72,128]{1,0:T(1,128)}', space=vmem, size = 0x9000, scoped, tag = 'internal scratch']
  #allocation2 [shape = 'f32[104,128]{1,0:T(8,128)}', space=vmem, size = 0xd000, scoped, tag = 'scratch operand']
  %s0 = inlined_call_operand.vmem [shape: bf16[104,384], index: 0, kind: input, shape index: {}]
  %s1 = inlined_call_operand.vmem [shape: bf16[384,128], index: 1, kind: input, shape index: {}]
  %s2 = inlined_call_operand.vmem [shape: f32[1,128], index: 2, kind: input, shape index: {}]
  %s3 = inlined_call_operand.vmem [shape: f32[104,128], index: 3, kind: output, shape index: {}]
  %s4 = sld [smem:[#allocation0]]
  $region30: #{resnet_generator_forward.90} parent=0
    _
  %s6 = ssub.s32 1, %s4
  %s7 = scalar_select 0, %s6, %s4
  // Predicated region
  $region2: #{resnet_generator_forward.90} parent=0 // pred_check
    _
  $region3: #{resnet_generator_forward.90} parent=0 // pred_check_branch
    %9 = sbr.rel (0) target = $region5
  $region4: #{resnet_generator_forward.90} parent=0 // pred_region
    _
  $region5: #{resnet_generator_forward.90} parent=0 // pred_fallthru
    _
  // Predicated region
  $region6: #{resnet_generator_forward.90} parent=0 // pred_check
    _
  $region7: #{resnet_generator_forward.90} parent=0 // pred_check_branch
    %11 = sbr.rel (0) target = $region9
  $region8: #{resnet_generator_forward.90} parent=0 // pred_region
    _
  $region9: #{resnet_generator_forward.90} parent=0 // pred_fallthru
    _
  // Predicated region
  $region10: #{resnet_generator_forward.90} parent=0 // pred_check
    _
  $region11: #{resnet_generator_forward.90} parent=0 // pred_check_branch
    %13 = sbr.rel (0) target = $region13
  $region12: #{resnet_generator_forward.90} parent=0 // pred_region
    _
  $region13: #{resnet_generator_forward.90} parent=0 // pred_fallthru
    _
  %p14 = scmp.eq.s32.totalorder 0, 0
  // Predicated region
  $region14: #{resnet_generator_forward.90} parent=0 // pred_check
    %p15 = pneg %p14
  $region15: #{resnet_generator_forward.90} parent=0 // pred_check_branch
    %17 = sbr.rel (%p15) target = $region17
  $region16: #{resnet_generator_forward.90} parent=0 // pred_region
    %18 = vst [vmem:[#allocation2] sm:$0xff] 0.0
    %19 = vst [vmem:[#allocation2 + $0x8] sm:$0xff] 0.0
    %20 = vst [vmem:[#allocation2 + $0x10] sm:$0xff] 0.0
    %21 = vst [vmem:[#allocation2 + $0x18] sm:$0xff] 0.0
    %22 = vst [vmem:[#allocation2 + $0x20] sm:$0xff] 0.0
    %23 = vst [vmem:[#allocation2 + $0x28] sm:$0xff] 0.0
    %24 = vst [vmem:[#allocation2 + $0x30] sm:$0xff] 0.0
    %25 = vst [vmem:[#allocation2 + $0x38] sm:$0xff] 0.0
    %26 = vst [vmem:[#allocation2 + $0x40] sm:$0xff] 0.0
    %27 = vst [vmem:[#allocation2 + $0x48] sm:$0xff] 0.0
    %28 = vst [vmem:[#allocation2 + $0x50] sm:$0xff] 0.0
    %29 = vst [vmem:[#allocation2 + $0x58] sm:$0xff] 0.0
    %30 = vst [vmem:[#allocation2 + $0x60] sm:$0xff] 0.0
  $region17: #{resnet_generator_forward.90} parent=0 // pred_fallthru
    _
  %v31 = vld [vmem:[#allocation2] sm:$0xff]
  %v32 = vld [vmem:[#allocation2 + $0x8] sm:$0xff]
  %v33 = vld [vmem:[#allocation2 + $0x10] sm:$0xff]
  %v34 = vld [vmem:[#allocation2 + $0x18] sm:$0xff]
  %v35 = vld [vmem:[#allocation2 + $0x20] sm:$0xff]
  %v36 = vld [vmem:[#allocation2 + $0x28] sm:$0xff]
  %v37 = vld [vmem:[#allocation2 + $0x30] sm:$0xff]
  %v38 = vld [vmem:[#allocation2 + $0x38] sm:$0xff]
  %v39 = vld [vmem:[#allocation2 + $0x40] sm:$0xff]
  %v40 = vld [vmem:[#allocation2 + $0x48] sm:$0xff]
  %v41 = vld [vmem:[#allocation2 + $0x50] sm:$0xff]
  %v42 = vld [vmem:[#allocation2 + $0x58] sm:$0xff]
  %v43 = vld [vmem:[#allocation2 + $0x60] sm:$0xff]
  %v44 = vld [vmem:[%s0] sm:$0xff]
  %v45 = vld [vmem:[%s0 + $0x8] sm:$0xf]
  %v46 = vld [vmem:[%s0 + $0xc] sm:$0xff]
  %v47 = vld [vmem:[%s0 + $0x14] sm:$0xf]
  %v48 = vld [vmem:[%s0 + $0x18] sm:$0xff]
  %v49 = vld [vmem:[%s0 + $0x20] sm:$0xf]
  %v50 = vld [vmem:[%s0 + $0x24] sm:$0xff]
  %v51 = vld [vmem:[%s0 + $0x2c] sm:$0xf]
  %v52 = vld [vmem:[%s0 + $0x30] sm:$0xff]
  %v53 = vld [vmem:[%s0 + $0x38] sm:$0xf]
  %v54 = vld [vmem:[%s0 + $0x3c] sm:$0xff]
  %v55 = vld [vmem:[%s0 + $0x44] sm:$0xf]
  %v56 = vld [vmem:[%s0 + $0x48] sm:$0xff]
  %v57 = vld [vmem:[%s0 + $0x50] sm:$0xf]
  %v58 = vld [vmem:[%s0 + $0x54] sm:$0xff]
  %v59 = vld [vmem:[%s0 + $0x5c] sm:$0xf]
  %v60 = vld [vmem:[%s0 + $0x60] sm:$0xff]
  %v61 = vld [vmem:[%s0 + $0x68] sm:$0xf]
  %v62 = vld [vmem:[%s0 + $0x6c] sm:$0xff]
  %v63 = vld [vmem:[%s0 + $0x74] sm:$0xf]
  %v64 = vld [vmem:[%s0 + $0x78] sm:$0xff]
  %v65 = vld [vmem:[%s0 + $0x80] sm:$0xf]
  %v66 = vld [vmem:[%s0 + $0x84] sm:$0xff]
  %v67 = vld [vmem:[%s0 + $0x8c] sm:$0xf]
  %v68 = vld [vmem:[%s0 + $0x90] sm:$0xff]
  %v69 = vld [vmem:[%s0 + $0x98] sm:$0xf]
  %v70 = vld [vmem:[%s1] sm:$0xf]
  %v71 = vld [vmem:[%s1 + $0x4] sm:$0xf]
  %v72 = vld [vmem:[%s1 + $0x8] sm:$0xf]
  %v73 = vld [vmem:[%s1 + $0xc] sm:$0xf]
  %v74 = vld [vmem:[%s1 + $0x10] sm:$0xf]
  %v75 = vld [vmem:[%s1 + $0x14] sm:$0xf]
  %v76 = vld [vmem:[%s1 + $0x18] sm:$0xf]
  %v77 = vld [vmem:[%s1 + $0x1c] sm:$0xf]
  %v78 = vld [vmem:[%s1 + $0x20] sm:$0xf]
  %v79 = vld [vmem:[%s1 + $0x24] sm:$0xf]
  %v80 = vld [vmem:[%s1 + $0x28] sm:$0xf]
  %v81 = vld [vmem:[%s1 + $0x2c] sm:$0xf]
  %v82 = vld [vmem:[%s1 + $0x30] sm:$0xf]
  %v83 = vld [vmem:[%s1 + $0x34] sm:$0xf]
  %v84 = vld [vmem:[%s1 + $0x38] sm:$0xf]
  %v85 = vld [vmem:[%s1 + $0x3c] sm:$0xf]
  %v86 = vld [vmem:[%s1 + $0x40] sm:$0xf]
  %v87 = vld [vmem:[%s1 + $0x44] sm:$0xf]
  %v88 = vld [vmem:[%s1 + $0x48] sm:$0xf]
  %v89 = vld [vmem:[%s1 + $0x4c] sm:$0xf]
  %v90 = vld [vmem:[%s1 + $0x50] sm:$0xf]
  %v91 = vld [vmem:[%s1 + $0x54] sm:$0xf]
  %v92 = vld [vmem:[%s1 + $0x58] sm:$0xf]
  %v93 = vld [vmem:[%s1 + $0x5c] sm:$0xf]
  %v94 = vld [vmem:[%s1 + $0x60] sm:$0xf]
  %v95 = vld [vmem:[%s1 + $0x64] sm:$0xf]
  %v96 = vld [vmem:[%s1 + $0x68] sm:$0xf]
  %v97 = vld [vmem:[%s1 + $0x6c] sm:$0xf]
  %v98 = vld [vmem:[%s1 + $0x70] sm:$0xf]
  %v99 = vld [vmem:[%s1 + $0x74] sm:$0xf]
  %v100 = vld [vmem:[%s1 + $0x78] sm:$0xf]
  %v101 = vld [vmem:[%s1 + $0x7c] sm:$0xf]
  %v102 = vld [vmem:[%s1 + $0x80] sm:$0xf]
  %v103 = vld [vmem:[%s1 + $0x84] sm:$0xf]
  %v104 = vld [vmem:[%s1 + $0x88] sm:$0xf]
  %v105 = vld [vmem:[%s1 + $0x8c] sm:$0xf]
  %v106 = vld [vmem:[%s1 + $0x90] sm:$0xf]
  %v107 = vld [vmem:[%s1 + $0x94] sm:$0xf]
  %v108 = vld [vmem:[%s1 + $0x98] sm:$0xf]
  %v109 = vld [vmem:[%s1 + $0x9c] sm:$0xf]
  %v110 = vld [vmem:[%s1 + $0xa0] sm:$0xf]
  %v111 = vld [vmem:[%s1 + $0xa4] sm:$0xf]
  %v112 = vld [vmem:[%s1 + $0xa8] sm:$0xf]
  %v113 = vld [vmem:[%s1 + $0xac] sm:$0xf]
  %v114 = vld [vmem:[%s1 + $0xb0] sm:$0xf]
  %v115 = vld [vmem:[%s1 + $0xb4] sm:$0xf]
  %v116 = vld [vmem:[%s1 + $0xb8] sm:$0xf]
  %v117 = vld [vmem:[%s1 + $0xbc] sm:$0xf]
  %v144 = vunpack.c.l.b16 %v44
  %v145 = vunpack.c.h.b16 %v44
  %v146 = vunpack.c.l.b16 %v45
  %v147 = vunpack.c.l.b16 %v46
  %v148 = vunpack.c.h.b16 %v46
  %v149 = vunpack.c.l.b16 %v47
  %v150 = vunpack.c.l.b16 %v48
  %v151 = vunpack.c.h.b16 %v48
  %v152 = vunpack.c.l.b16 %v49
  %v153 = vunpack.c.l.b16 %v50
  %v154 = vunpack.c.h.b16 %v50
  %v155 = vunpack.c.l.b16 %v51
  %v156 = vunpack.c.l.b16 %v52
  %v157 = vunpack.c.h.b16 %v52
  %v158 = vunpack.c.l.b16 %v53
  %v159 = vunpack.c.l.b16 %v54
  %v160 = vunpack.c.h.b16 %v54
  %v161 = vunpack.c.l.b16 %v55
  %v162 = vunpack.c.l.b16 %v56
  %v163 = vunpack.c.h.b16 %v56
  %v164 = vunpack.c.l.b16 %v57
  %v165 = vunpack.c.l.b16 %v58
  %v166 = vunpack.c.h.b16 %v58
  %v167 = vunpack.c.l.b16 %v59
  %v168 = vunpack.c.l.b16 %v60
  %v169 = vunpack.c.h.b16 %v60
  %v170 = vunpack.c.l.b16 %v61
  %v171 = vunpack.c.l.b16 %v62
  %v172 = vunpack.c.h.b16 %v62
  %v173 = vunpack.c.l.b16 %v63
  %v174 = vunpack.c.l.b16 %v64
  %v175 = vunpack.c.h.b16 %v64
  %v176 = vunpack.c.l.b16 %v65
  %v177 = vunpack.c.l.b16 %v66
  %v178 = vunpack.c.h.b16 %v66
  %v179 = vunpack.c.l.b16 %v67
  %v180 = vunpack.c.l.b16 %v68
  %v181 = vunpack.c.h.b16 %v68
  %v182 = vunpack.c.l.b16 %v69
  %v183 = vpack.c.b16 %v147, %v144
  %v184 = vpack.c.b16 %v148, %v145
  %v185 = vpack.c.b16 %v149, %v146
  %v186 = vpack.c.b16 %v153, %v150
  %v187 = vpack.c.b16 %v154, %v151
  %v188 = vpack.c.b16 %v155, %v152
  %v189 = vpack.c.b16 %v159, %v156
  %v190 = vpack.c.b16 %v160, %v157
  %v191 = vpack.c.b16 %v161, %v158
  %v192 = vpack.c.b16 %v165, %v162
  %v193 = vpack.c.b16 %v166, %v163
  %v194 = vpack.c.b16 %v167, %v164
  %v195 = vpack.c.b16 %v171, %v168
  %v196 = vpack.c.b16 %v172, %v169
  %v197 = vpack.c.b16 %v173, %v170
  %v198 = vpack.c.b16 %v177, %v174
  %v199 = vpack.c.b16 %v178, %v175
  %v200 = vpack.c.b16 %v179, %v176
  %v201 = vpack.c.b16 %v180, %v180
  %v202 = vpack.c.b16 %v181, %v181
  %v203 = vpack.c.b16 %v182, %v182
  %v273 = vunpack.c.l.b16 %v70
  %v274 = vunpack.c.l.b16 %v71
  %v275 = vunpack.c.l.b16 %v72
  %v276 = vunpack.c.l.b16 %v73
  %v277 = vunpack.c.l.b16 %v74
  %v278 = vunpack.c.l.b16 %v75
  %v279 = vunpack.c.l.b16 %v76
  %v280 = vunpack.c.l.b16 %v77
  %v281 = vunpack.c.l.b16 %v78
  %v282 = vunpack.c.l.b16 %v79
  %v283 = vunpack.c.l.b16 %v80
  %v284 = vunpack.c.l.b16 %v81
  %v285 = vunpack.c.l.b16 %v82
  %v286 = vunpack.c.l.b16 %v83
  %v287 = vunpack.c.l.b16 %v84
  %v288 = vunpack.c.l.b16 %v85
  %v289 = vunpack.c.l.b16 %v86
  %v290 = vunpack.c.l.b16 %v87
  %v291 = vunpack.c.l.b16 %v88
  %v292 = vunpack.c.l.b16 %v89
  %v293 = vunpack.c.l.b16 %v90
  %v294 = vunpack.c.l.b16 %v91
  %v295 = vunpack.c.l.b16 %v92
  %v296 = vunpack.c.l.b16 %v93
  %v297 = vunpack.c.l.b16 %v94
  %v298 = vunpack.c.l.b16 %v95
  %v299 = vunpack.c.l.b16 %v96
  %v300 = vunpack.c.l.b16 %v97
  %v301 = vunpack.c.l.b16 %v98
  %v302 = vunpack.c.l.b16 %v99
  %v303 = vunpack.c.l.b16 %v100
  %v304 = vunpack.c.l.b16 %v101
  %v305 = vunpack.c.l.b16 %v102
  %v306 = vunpack.c.l.b16 %v103
  %v307 = vunpack.c.l.b16 %v104
  %v308 = vunpack.c.l.b16 %v105
  %v309 = vunpack.c.l.b16 %v106
  %v310 = vunpack.c.l.b16 %v107
  %v311 = vunpack.c.l.b16 %v108
  %v312 = vunpack.c.l.b16 %v109
  %v313 = vunpack.c.l.b16 %v110
  %v314 = vunpack.c.l.b16 %v111
  %v315 = vunpack.c.l.b16 %v112
  %v316 = vunpack.c.l.b16 %v113
  %v317 = vunpack.c.l.b16 %v114
  %v318 = vunpack.c.l.b16 %v115
  %v319 = vunpack.c.l.b16 %v116
  %v320 = vunpack.c.l.b16 %v117
  %v321 = vpack.c.b16 %v274, %v273
  %v322 = vpack.c.b16 %v276, %v275
  %v323 = vpack.c.b16 %v278, %v277
  %v324 = vpack.c.b16 %v280, %v279
  %v325 = vpack.c.b16 %v282, %v281
  %v326 = vpack.c.b16 %v284, %v283
  %v327 = vpack.c.b16 %v286, %v285
  %v328 = vpack.c.b16 %v288, %v287
  %v329 = vpack.c.b16 %v290, %v289
  %v330 = vpack.c.b16 %v292, %v291
  %v331 = vpack.c.b16 %v294, %v293
  %v332 = vpack.c.b16 %v296, %v295
  %v333 = vpack.c.b16 %v298, %v297
  %v334 = vpack.c.b16 %v300, %v299
  %v335 = vpack.c.b16 %v302, %v301
  %v336 = vpack.c.b16 %v304, %v303
  %v337 = vpack.c.b16 %v306, %v305
  %v338 = vpack.c.b16 %v308, %v307
  %v339 = vpack.c.b16 %v310, %v309
  %v340 = vpack.c.b16 %v312, %v311
  %v341 = vpack.c.b16 %v314, %v313
  %v342 = vpack.c.b16 %v316, %v315
  %v343 = vpack.c.b16 %v318, %v317
  %v344 = vpack.c.b16 %v320, %v319
  %369 = vmatpush.bf16.msra.mxu0 %v328
  %370 = vmatpush.bf16.msra.mxu0 %v327
  %371 = vmatpush.bf16.msra.mxu0 %v326
  %372 = vmatpush.bf16.msra.mxu0 %v325
  %373 = vmatpush.bf16.msra.mxu0 %v324
  %374 = vmatpush.bf16.msra.mxu0 %v323
  %375 = vmatpush.bf16.msra.mxu0 %v322
  %376 = vmatpush.bf16.msra.mxu0 %v321
  %377 = vmatmul.bf16.gmra.mxu0 %v183
  %v378 = vpop.f32.mrf.mxu0
  %v379 = vadd.f32 0.0, %v378
  %v380 = vpop.f32.mrf.mxu0
  %v381 = vadd.f32 0.0, %v380
  %382 = vmatmul.bf16.gmra.mxu0 %v186
  %v383 = vpop.f32.mrf.mxu0
  %v384 = vadd.f32 0.0, %v383
  %v385 = vpop.f32.mrf.mxu0
  %v386 = vadd.f32 0.0, %v385
  %387 = vmatmul.bf16.gmra.mxu0 %v189
  %v388 = vpop.f32.mrf.mxu0
  %v389 = vadd.f32 0.0, %v388
  %v390 = vpop.f32.mrf.mxu0
  %v391 = vadd.f32 0.0, %v390
  %392 = vmatmul.bf16.gmra.mxu0 %v192
  %v393 = vpop.f32.mrf.mxu0
  %v394 = vadd.f32 0.0, %v393
  %v395 = vpop.f32.mrf.mxu0
  %v396 = vadd.f32 0.0, %v395
  %397 = vmatmul.bf16.gmra.mxu0 %v195
  %v398 = vpop.f32.mrf.mxu0
  %v399 = vadd.f32 0.0, %v398
  %v400 = vpop.f32.mrf.mxu0
  %v401 = vadd.f32 0.0, %v400
  %402 = vmatmul.bf16.gmra.mxu0 %v198
  %v403 = vpop.f32.mrf.mxu0
  %v404 = vadd.f32 0.0, %v403
  %v405 = vpop.f32.mrf.mxu0
  %v406 = vadd.f32 0.0, %v405
  %407 = vmatmul.bf16.gmra.mxu0 %v201
  %v408 = vpop.f32.mrf.mxu0
  %v409 = vadd.f32 0.0, %v408
  %v410 = vpop.f32.mrf.mxu0
  %411 = vdwg.mxu0
  %412 = vmatpush.bf16.msra.mxu0 %v336
  %413 = vmatpush.bf16.msra.mxu0 %v335
  %414 = vmatpush.bf16.msra.mxu0 %v334
  %415 = vmatpush.bf16.msra.mxu0 %v333
  %416 = vmatpush.bf16.msra.mxu0 %v332
  %417 = vmatpush.bf16.msra.mxu0 %v331
  %418 = vmatpush.bf16.msra.mxu0 %v330
  %419 = vmatpush.bf16.msra.mxu0 %v329
  %420 = vmatmul.bf16.gmra.mxu0 %v184
  %v421 = vpop.f32.mrf.mxu0
  %v422 = vadd.f32 %v379, %v421
  %v423 = vpop.f32.mrf.mxu0
  %v424 = vadd.f32 %v381, %v423
  %425 = vmatmul.bf16.gmra.mxu0 %v187
  %v426 = vpop.f32.mrf.mxu0
  %v427 = vadd.f32 %v384, %v426
  %v428 = vpop.f32.mrf.mxu0
  %v429 = vadd.f32 %v386, %v428
  %430 = vmatmul.bf16.gmra.mxu0 %v190
  %v431 = vpop.f32.mrf.mxu0
  %v432 = vadd.f32 %v389, %v431
  %v433 = vpop.f32.mrf.mxu0
  %v434 = vadd.f32 %v391, %v433
  %435 = vmatmul.bf16.gmra.mxu0 %v193
  %v436 = vpop.f32.mrf.mxu0
  %v437 = vadd.f32 %v394, %v436
  %v438 = vpop.f32.mrf.mxu0
  %v439 = vadd.f32 %v396, %v438
  %440 = vmatmul.bf16.gmra.mxu0 %v196
  %v441 = vpop.f32.mrf.mxu0
  %v442 = vadd.f32 %v399, %v441
  %v443 = vpop.f32.mrf.mxu0
  %v444 = vadd.f32 %v401, %v443
  %445 = vmatmul.bf16.gmra.mxu0 %v199
  %v446 = vpop.f32.mrf.mxu0
  %v447 = vadd.f32 %v404, %v446
  %v448 = vpop.f32.mrf.mxu0
  %v449 = vadd.f32 %v406, %v448
  %450 = vmatmul.bf16.gmra.mxu0 %v202
  %v451 = vpop.f32.mrf.mxu0
  %v452 = vadd.f32 %v409, %v451
  %v453 = vpop.f32.mrf.mxu0
  %454 = vdwg.mxu0
  %455 = vmatpush.bf16.msra.mxu0 %v344
  %456 = vmatpush.bf16.msra.mxu0 %v343
  %457 = vmatpush.bf16.msra.mxu0 %v342
  %458 = vmatpush.bf16.msra.mxu0 %v341
  %459 = vmatpush.bf16.msra.mxu0 %v340
  %460 = vmatpush.bf16.msra.mxu0 %v339
  %461 = vmatpush.bf16.msra.mxu0 %v338
  %462 = vmatpush.bf16.msra.mxu0 %v337
  %463 = vmatmul.bf16.gmra.mxu0 %v185
  %v464 = vpop.f32.mrf.mxu0
  %v465 = vadd.f32 %v422, %v464
  %v466 = vpop.f32.mrf.mxu0
  %v467 = vadd.f32 %v424, %v466
  %468 = vmatmul.bf16.gmra.mxu0 %v188
  %v469 = vpop.f32.mrf.mxu0
  %v470 = vadd.f32 %v427, %v469
  %v471 = vpop.f32.mrf.mxu0
  %v472 = vadd.f32 %v429, %v471
  %473 = vmatmul.bf16.gmra.mxu0 %v191
  %v474 = vpop.f32.mrf.mxu0
  %v475 = vadd.f32 %v432, %v474
  %v476 = vpop.f32.mrf.mxu0
  %v477 = vadd.f32 %v434, %v476
  %478 = vmatmul.bf16.gmra.mxu0 %v194
  %v479 = vpop.f32.mrf.mxu0
  %v480 = vadd.f32 %v437, %v479
  %v481 = vpop.f32.mrf.mxu0
  %v482 = vadd.f32 %v439, %v481
  %483 = vmatmul.bf16.gmra.mxu0 %v197
  %v484 = vpop.f32.mrf.mxu0
  %v485 = vadd.f32 %v442, %v484
  %v486 = vpop.f32.mrf.mxu0
  %v487 = vadd.f32 %v444, %v486
  %488 = vmatmul.bf16.gmra.mxu0 %v200
  %v489 = vpop.f32.mrf.mxu0
  %v490 = vadd.f32 %v447, %v489
  %v491 = vpop.f32.mrf.mxu0
  %v492 = vadd.f32 %v449, %v491
  %493 = vmatmul.bf16.gmra.mxu0 %v203
  %v494 = vpop.f32.mrf.mxu0
  %v495 = vadd.f32 %v452, %v494
  %v496 = vpop.f32.mrf.mxu0
  %497 = vdwg.mxu0
  %v498 = vadd.f32 %v31, %v465
  %v499 = vadd.f32 %v32, %v467
  %v500 = vadd.f32 %v33, %v470
  %v501 = vadd.f32 %v34, %v472
  %v502 = vadd.f32 %v35, %v475
  %v503 = vadd.f32 %v36, %v477
  %v504 = vadd.f32 %v37, %v480
  %v505 = vadd.f32 %v38, %v482
  %v506 = vadd.f32 %v39, %v485
  %v507 = vadd.f32 %v40, %v487
  %v508 = vadd.f32 %v41, %v490
  %v509 = vadd.f32 %v42, %v492
  %v510 = vadd.f32 %v43, %v495
  %511 = vst [vmem:[#allocation2] sm:$0xff] %v498
  %512 = vst [vmem:[#allocation2 + $0x8] sm:$0xff] %v499
  %513 = vst [vmem:[#allocation2 + $0x10] sm:$0xff] %v500
  %514 = vst [vmem:[#allocation2 + $0x18] sm:$0xff] %v501
  %515 = vst [vmem:[#allocation2 + $0x20] sm:$0xff] %v502
  %516 = vst [vmem:[#allocation2 + $0x28] sm:$0xff] %v503
  %517 = vst [vmem:[#allocation2 + $0x30] sm:$0xff] %v504
  %518 = vst [vmem:[#allocation2 + $0x38] sm:$0xff] %v505
  %519 = vst [vmem:[#allocation2 + $0x40] sm:$0xff] %v506
  %520 = vst [vmem:[#allocation2 + $0x48] sm:$0xff] %v507
  %521 = vst [vmem:[#allocation2 + $0x50] sm:$0xff] %v508
  %522 = vst [vmem:[#allocation2 + $0x58] sm:$0xff] %v509
  %523 = vst [vmem:[#allocation2 + $0x60] sm:$0xff] %v510
  // Predicated region
  $region18: #{resnet_generator_forward.90} parent=0 // pred_check
    %p524 = pneg %p14
  $region19: #{resnet_generator_forward.90} parent=0 // pred_check_branch
    %526 = sbr.rel (%p524) target = $region21
  $region20: #{resnet_generator_forward.90} parent=0 // pred_region
    %v527 = vld [vmem:[#allocation2] sm:$0xff]
    %v528 = vld [vmem:[#allocation2 + $0x8] sm:$0xff]
    %v529 = vld [vmem:[#allocation2 + $0x10] sm:$0xff]
    %v530 = vld [vmem:[#allocation2 + $0x18] sm:$0xff]
    %v531 = vld [vmem:[#allocation2 + $0x20] sm:$0xff]
    %v532 = vld [vmem:[#allocation2 + $0x28] sm:$0xff]
    %v533 = vld [vmem:[#allocation2 + $0x30] sm:$0xff]
    %v534 = vld [vmem:[#allocation2 + $0x38] sm:$0xff]
    %v535 = vld [vmem:[#allocation2 + $0x40] sm:$0xff]
    %v536 = vld [vmem:[#allocation2 + $0x48] sm:$0xff]
    %v537 = vld [vmem:[#allocation2 + $0x50] sm:$0xff]
    %v538 = vld [vmem:[#allocation2 + $0x58] sm:$0xff]
    %v539 = vld [vmem:[#allocation2 + $0x60] sm:$0xff]
    %v540 = vld [vmem:[%s2] sm:$0x1]
    %v542 = vperm.slane %v540, 0
    %v544 = vadd.f32 %v527, %v542
    %v545 = vadd.f32 %v528, %v542
    %v546 = vadd.f32 %v529, %v542
    %v547 = vadd.f32 %v530, %v542
    %v548 = vadd.f32 %v531, %v542
    %v549 = vadd.f32 %v532, %v542
    %v550 = vadd.f32 %v533, %v542
    %v551 = vadd.f32 %v534, %v542
    %v552 = vadd.f32 %v535, %v542
    %v553 = vadd.f32 %v536, %v542
    %v554 = vadd.f32 %v537, %v542
    %v555 = vadd.f32 %v538, %v542
    %v556 = vadd.f32 %v539, %v542
    %557 = vst [vmem:[%s3] sm:$0xff] %v544
    %558 = vst [vmem:[%s3 + $0x8] sm:$0xff] %v545
    %559 = vst [vmem:[%s3 + $0x10] sm:$0xff] %v546
    %560 = vst [vmem:[%s3 + $0x18] sm:$0xff] %v547
    %561 = vst [vmem:[%s3 + $0x20] sm:$0xff] %v548
    %562 = vst [vmem:[%s3 + $0x28] sm:$0xff] %v549
    %563 = vst [vmem:[%s3 + $0x30] sm:$0xff] %v550
    %564 = vst [vmem:[%s3 + $0x38] sm:$0xff] %v551
    %565 = vst [vmem:[%s3 + $0x40] sm:$0xff] %v552
    %566 = vst [vmem:[%s3 + $0x48] sm:$0xff] %v553
    %567 = vst [vmem:[%s3 + $0x50] sm:$0xff] %v554
    %568 = vst [vmem:[%s3 + $0x58] sm:$0xff] %v555
    %569 = vst [vmem:[%s3 + $0x60] sm:$0xff] %v556
  $region21: #{resnet_generator_forward.90} parent=0 // pred_fallthru
    _
  // Predicated region
  $region22: #{resnet_generator_forward.90} parent=0 // pred_check
    _
  $region23: #{resnet_generator_forward.90} parent=0 // pred_check_branch
    %571 = sbr.rel (0) target = $region25
  $region24: #{resnet_generator_forward.90} parent=0 // pred_region
    _
  $region25: #{resnet_generator_forward.90} parent=0 // pred_fallthru
    _
  // Predicated region
  $region26: #{resnet_generator_forward.90} parent=0 // pred_check
    _
  $region27: #{resnet_generator_forward.90} parent=0 // pred_check_branch
    %573 = sbr.rel (0) target = $region29
  $region28: #{resnet_generator_forward.90} parent=0 // pred_region
    _
  $region29: #{resnet_generator_forward.90} parent=0 // pred_fallthru
    _

// kernel: resnet_generator_forward.93
$region0: #{resnet_generator_forward.93}
  #allocation0 [shape = 'u32[]', space=smem, size = 0x4, offset = 0x4, fixed_abs, tag = 'smem constant byte address 0x4 - core index']
  #allocation1 [shape = 'u32[72,128]{1,0:T(1,128)}', space=vmem, size = 0x9000, scoped, tag = 'internal scratch']
  %s0 = inlined_call_operand.vmem [shape: f32[2,169,8], index: 0, kind: input, shape index: {}]
  %s1 = inlined_call_operand.vmem [shape: f32[2,169,8], index: 1, kind: output, shape index: {}]
  %s2 = sld [smem:[#allocation0]]
  $region37: #{resnet_generator_forward.93} parent=0
    _
  %s4 = ssub.s32 1, %s2
  %s5 = scalar_select 0, %s4, %s2
  loop: start=0, step=1, limit=4
  $region2: #{resnet_generator_forward.93} parent=0 // loop_pre_header
    _
  $region3: #{resnet_generator_forward.93} parent=0 // loop_header
    %s7 = sphi 0, %s11
    %p8 = scmp.ge.s32.totalorder %s7, 4
    %s14 = sphi 0, %s26
    %s15 = sphi 0, %s22
    %s16 = sphi 0, %s14
    %s17 = sphi 0, %s15
    %s18 = sphi 0, %s16
    %s19 = sphi 0, %s17
    %s31 = sphi 0, %s33
    %s34 = sphi 0, %s31
    %s35 = sphi 0, %s34
    %s51 = sphi 0, %s35
    %s59 = sphi 0, %s61
    %s62 = sphi 0, %s59
    %s63 = sphi 0, %s62
    %s79 = sphi 0, %s63
  $region4: #{resnet_generator_forward.93} parent=0 // loop_header_branch
    %10 = sbr.rel (%p8) target = $region8
  $region5: #{resnet_generator_forward.93} parent=0 // loop_body
    %s12 = ssub.s32 %s7, 1
    %s13 = ssub.s32 %s7, 2
    %s20 = sadd.s32 1, %s15
    %p21 = scmp.ge.s32.totalorder %s20, 1
    %s22 = scalar_select %p21, 0, %s20
    %s23 = sadd.s32 1, %s14
    %s24 = scalar_select %p21, %s23, %s14
    %p25 = scmp.ge.s32.totalorder %s24, 2
    %s26 = scalar_select %p25, 0, %s24
    %s27 = ssub.s32 %s14, %s26
    %s28 = ssub.s32 %s15, %s22
    %s29 = sor.u32 %s27, %s28
    %p30 = scmp.eq.s32.totalorder %s29, 0
    %s32 = sadd.s32 %s31, 1
    %s33 = scalar_select %p30, %s31, %s32
    %p36 = pneg %p30
    %p37 = scmp.eq.s32.totalorder %s7, 1
    %p38 = por %p36, %p37
    %p39 = scmp.ne.s32.totalorder %s31, %s34
    %p40 = scmp.eq.s32.totalorder %s7, 0
    %p41 = por %p39, %p40
    %p42 = scmp.ne.s32.totalorder %s31, %s34
    %p43 = scmp.eq.s32.totalorder %s12, 1
    %p44 = por %p42, %p43
    %p45 = scmp.ne.s32.totalorder %s34, %s35
    %p46 = scmp.eq.s32.totalorder %s12, 0
    %p47 = por %p45, %p46
    %p48 = scmp.ne.s32.totalorder %s34, %s35
    %p49 = scmp.eq.s32.totalorder %s13, 1
    %p50 = por %p48, %p49
    %p52 = scmp.ne.s32.totalorder %s35, %s51
    %p53 = scmp.eq.s32.totalorder %s13, 0
    %p54 = por %p52, %p53
    %s55 = ssub.s32 %s14, %s26
    %s56 = ssub.s32 %s15, %s22
    %s57 = sor.u32 %s55, %s56
    %p58 = scmp.eq.s32.totalorder %s57, 0
    %s60 = sadd.s32 %s59, 1
    %s61 = scalar_select %p58, %s59, %s60
    %p64 = pneg %p58
    %p65 = scmp.eq.s32.totalorder %s7, 1
    %p66 = por %p64, %p65
    %p67 = scmp.ne.s32.totalorder %s59, %s62
    %p68 = scmp.eq.s32.totalorder %s7, 0
    %p69 = por %p67, %p68
    %p70 = scmp.ne.s32.totalorder %s59, %s62
    %p71 = scmp.eq.s32.totalorder %s12, 1
    %p72 = por %p70, %p71
    %p73 = scmp.ne.s32.totalorder %s62, %s63
    %p74 = scmp.eq.s32.totalorder %s12, 0
    %p75 = por %p73, %p74
    %p76 = scmp.ne.s32.totalorder %s62, %s63
    %p77 = scmp.eq.s32.totalorder %s13, 1
    %p78 = por %p76, %p77
    %p80 = scmp.ne.s32.totalorder %s63, %s79
    %p81 = scmp.eq.s32.totalorder %s13, 0
    %p82 = por %p80, %p81
    %p83 = scmp.le.s32.totalorder 1, %s7
    %p84 = scmp.lt.s32.totalorder %s7, 3
    %p85 = pnand %p83, %p84
    %p86 = pneg %p85
    // Predicated region
    $region9: #{resnet_generator_forward.93} parent=5 // pred_check
      _
    $region10: #{resnet_generator_forward.93} parent=5 // pred_check_branch
      %88 = sbr.rel (%p85) target = $region12
    $region11: #{resnet_generator_forward.93} parent=5 // pred_region
      %s89 = ssub.s32 %s7, 1
    $region12: #{resnet_generator_forward.93} parent=5 // pred_fallthru
      _
    %p90 = scmp.lt.s32.totalorder %s7, 2
    // Predicated region
    $region13: #{resnet_generator_forward.93} parent=5 // pred_check
      %p91 = pneg %p90
    $region14: #{resnet_generator_forward.93} parent=5 // pred_check_branch
      %93 = sbr.rel (%p91) target = $region16
    $region15: #{resnet_generator_forward.93} parent=5 // pred_region
      // Predicated region
      $region17: #{resnet_generator_forward.93} parent=15 // pred_check
        %p94 = pneg %p41
      $region18: #{resnet_generator_forward.93} parent=15 // pred_check_branch
        %96 = sbr.rel (%p94) target = $region20
      $region19: #{resnet_generator_forward.93} parent=15 // pred_region
        %p97 = scmp.lt.s32.totalorder %s14, 1
        %s98 = scalar_select %p97, %s14, 1
        %p99 = scmp.lt.s32.totalorder %s15, 0
        %s100 = scalar_select %p99, %s15, 0
        %s101 = smul.addr %s98, 22
        %s102 = sadd.s32 %s100, %s101
        %s103 = smul.addr %s102, 8
        %s104 = scalar_lea.vmem %s0, %s103
      $region20: #{resnet_generator_forward.93} parent=15 // pred_fallthru
        _
    $region16: #{resnet_generator_forward.93} parent=5 // pred_fallthru
      _
    %p105 = scmp.le.s32.totalorder 1, %s7
    %p106 = scmp.lt.s32.totalorder %s7, 3
    %p107 = pnand %p105, %p106
    %p108 = pneg %p107
    // Predicated region
    $region21: #{resnet_generator_forward.93} parent=5 // pred_check
      _
    $region22: #{resnet_generator_forward.93} parent=5 // pred_check_branch
      %110 = sbr.rel (%p107) target = $region24
    $region23: #{resnet_generator_forward.93} parent=5 // pred_region
      %s111 = ssub.s32 %s7, 1
      %p112 = scmp.lt.s32.totalorder %s16, 1
      %s113 = scalar_select %p112, %s16, 1
      %p114 = scmp.lt.s32.totalorder %s17, 0
      %s115 = scalar_select %p114, %s17, 0
      %s116 = smul.addr %s113, 22
      %s117 = sadd.s32 %s115, %s116
      %s118 = smul.addr %s117, 8
      %s119 = scalar_lea.vmem %s0, %s118
      %p120 = pneg %p47
      %p121 = pneg %p44
      %p122 = pneg %p75
      %p123 = pneg %p72
      %p124 = scmp.lt.s32.totalorder %s16, 1
      %s125 = scalar_select %p124, %s16, 1
      %p126 = scmp.lt.s32.totalorder %s17, 0
      %s127 = scalar_select %p126, %s17, 0
      %s128 = smul.addr %s125, 22
      %s129 = sadd.s32 %s127, %s128
      %s130 = smul.addr %s129, 8
      %s131 = scalar_lea.vmem %s1, %s130
      %p132 = scmp.lt.s32.totalorder %s16, 1
      %s133 = scalar_select %p132, %s16, 1
      %p134 = scmp.lt.s32.totalorder %s17, 0
      %s135 = scalar_select %p134, %s17, 0
      %s136 = smul.addr %s133, 22
      %s137 = sadd.s32 %s135, %s136
      %s138 = smul.addr %s137, 8
      %s139 = scalar_lea.vmem %s0, %s138
      %p140 = scmp.lt.s32.totalorder %s16, 1
      %s141 = scalar_select %p140, %s16, 1
      %p142 = scmp.lt.s32.totalorder %s17, 0
      %s143 = scalar_select %p142, %s17, 0
      %s144 = smul.addr %s141, 22
      %s145 = sadd.s32 %s143, %s144
      %s146 = smul.addr %s145, 8
      %s147 = scalar_lea.vmem %s1, %s146
      %v148 = vld [vmem:[%s139] sm:$0xff]
      %v149 = vld [vmem:[%s139 + $0x8] sm:$0xff]
      %v150 = vld [vmem:[%s139 + $0x10] sm:$0xff]
      %v151 = vld [vmem:[%s139 + $0x18] sm:$0xff]
      %v152 = vld [vmem:[%s139 + $0x20] sm:$0xff]
      %v153 = vld [vmem:[%s139 + $0x28] sm:$0xff]
      %v154 = vld [vmem:[%s139 + $0x30] sm:$0xff]
      %v155 = vld [vmem:[%s139 + $0x38] sm:$0xff]
      %v156 = vld [vmem:[%s139 + $0x40] sm:$0xff]
      %v157 = vld [vmem:[%s139 + $0x48] sm:$0xff]
      %v158 = vld [vmem:[%s139 + $0x50] sm:$0xff]
      %v159 = vld [vmem:[%s139 + $0x58] sm:$0xff]
      %v160 = vld [vmem:[%s139 + $0x60] sm:$0xff]
      %v161 = vld [vmem:[%s139 + $0x68] sm:$0xff]
      %v162 = vld [vmem:[%s139 + $0x70] sm:$0xff]
      %v163 = vld [vmem:[%s139 + $0x78] sm:$0xff]
      %v164 = vld [vmem:[%s139 + $0x80] sm:$0xff]
      %v165 = vld [vmem:[%s139 + $0x88] sm:$0xff]
      %v166 = vld [vmem:[%s139 + $0x90] sm:$0xff]
      %v167 = vld [vmem:[%s139 + $0x98] sm:$0xff]
      %v168 = vld [vmem:[%s139 + $0xa0] sm:$0xff]
      %v169 = vld [vmem:[%s139 + $0xa8] sm:$0x1]
      %vm170 = vcmask 64512
      %v171 = vsel %vm170, %v148, 0.0
      %v172 = vsel %vm170, %v149, 0.0
      %v173 = vadd.f32 %v171, %v172
      %v174 = vsel %vm170, %v150, 0.0
      %v175 = vadd.f32 %v173, %v174
      %v176 = vsel %vm170, %v151, 0.0
      %v177 = vadd.f32 %v175, %v176
      %v178 = vsel %vm170, %v152, 0.0
      %v179 = vadd.f32 %v177, %v178
      %v180 = vsel %vm170, %v153, 0.0
      %v181 = vadd.f32 %v179, %v180
      %v182 = vsel %vm170, %v154, 0.0
      %v183 = vadd.f32 %v181, %v182
      %v184 = vsel %vm170, %v155, 0.0
      %v185 = vadd.f32 %v183, %v184
      %v186 = vsel %vm170, %v156, 0.0
      %v187 = vadd.f32 %v185, %v186
      %v188 = vsel %vm170, %v157, 0.0
      %v189 = vadd.f32 %v187, %v188
      %v190 = vsel %vm170, %v158, 0.0
      %v191 = vadd.f32 %v189, %v190
      %v192 = vsel %vm170, %v159, 0.0
      %v193 = vadd.f32 %v191, %v192
      %v194 = vsel %vm170, %v160, 0.0
      %v195 = vadd.f32 %v193, %v194
      %v196 = vsel %vm170, %v161, 0.0
      %v197 = vadd.f32 %v195, %v196
      %v198 = vsel %vm170, %v162, 0.0
      %v199 = vadd.f32 %v197, %v198
      %v200 = vsel %vm170, %v163, 0.0
      %v201 = vadd.f32 %v199, %v200
      %v202 = vsel %vm170, %v164, 0.0
      %v203 = vadd.f32 %v201, %v202
      %v204 = vsel %vm170, %v165, 0.0
      %v205 = vadd.f32 %v203, %v204
      %v206 = vsel %vm170, %v166, 0.0
      %v207 = vadd.f32 %v205, %v206
      %v208 = vsel %vm170, %v167, 0.0
      %v209 = vadd.f32 %v207, %v208
      %v210 = vsel %vm170, %v168, 0.0
      %v211 = vadd.f32 %v209, %v210
      %vm212 = vcmask 57344
      %v213 = vsel %vm212, %v169, 0.0
      %v214 = vadd.f32 %v211, %v213
      %v215 = vrot.slane %v214, 4
      %v216 = vadd.f32 %v214, %v215
      %v217 = vrot.slane %v216, 2
      %v218 = vadd.f32 %v216, %v217
      %v219 = vrot.slane %v218, 1
      %v220 = vadd.f32 %v218, %v219
      %v221 = vrcp.pop 169.0
      %v222 = vmul.f32 169.0, %v221
      %v223 = vsub.f32 1.0, %v222
      %v224 = vmul.f32 %v221, %v223
      %v225 = vadd.f32 %v221, %v224
      %vm226 = vweird.f32 %v221
      %v227 = vsel %vm226, %v221, %v225
      %v228 = vmul.f32 %v220, %v227
      %v229 = vsub.f32 %v148, %v228
      %v230 = vsub.f32 %v149, %v228
      %v231 = vsub.f32 %v150, %v228
      %v232 = vsub.f32 %v151, %v228
      %v233 = vsub.f32 %v152, %v228
      %v234 = vsub.f32 %v153, %v228
      %v235 = vsub.f32 %v154, %v228
      %v236 = vsub.f32 %v155, %v228
      %v237 = vsub.f32 %v156, %v228
      %v238 = vsub.f32 %v157, %v228
      %v239 = vsub.f32 %v158, %v228
      %v240 = vsub.f32 %v159, %v228
      %v241 = vsub.f32 %v160, %v228
      %v242 = vsub.f32 %v161, %v228
      %v243 = vsub.f32 %v162, %v228
      %v244 = vsub.f32 %v163, %v228
      %v245 = vsub.f32 %v164, %v228
      %v246 = vsub.f32 %v165, %v228
      %v247 = vsub.f32 %v166, %v228
      %v248 = vsub.f32 %v167, %v228
      %v249 = vsub.f32 %v168, %v228
      %v250 = vsub.f32 %v169, %v228
      %v251 = vmul.f32 %v229, %v229
      %v252 = vmul.f32 %v230, %v230
      %v253 = vmul.f32 %v231, %v231
      %v254 = vmul.f32 %v232, %v232
      %v255 = vmul.f32 %v233, %v233
      %v256 = vmul.f32 %v234, %v234
      %v257 = vmul.f32 %v235, %v235
      %v258 = vmul.f32 %v236, %v236
      %v259 = vmul.f32 %v237, %v237
      %v260 = vmul.f32 %v238, %v238
      %v261 = vmul.f32 %v239, %v239
      %v262 = vmul.f32 %v240, %v240
      %v263 = vmul.f32 %v241, %v241
      %v264 = vmul.f32 %v242, %v242
      %v265 = vmul.f32 %v243, %v243
      %v266 = vmul.f32 %v244, %v244
      %v267 = vmul.f32 %v245, %v245
      %v268 = vmul.f32 %v246, %v246
      %v269 = vmul.f32 %v247, %v247
      %v270 = vmul.f32 %v248, %v248
      %v271 = vmul.f32 %v249, %v249
      %v272 = vmul.f32 %v250, %v250
      %v273 = vsel %vm170, %v251, 0.0
      %v274 = vsel %vm170, %v252, 0.0
      %v275 = vadd.f32 %v273, %v274
      %v276 = vsel %vm170, %v253, 0.0
      %v277 = vadd.f32 %v275, %v276
      %v278 = vsel %vm170, %v254, 0.0
      %v279 = vadd.f32 %v277, %v278
      %v280 = vsel %vm170, %v255, 0.0
      %v281 = vadd.f32 %v279, %v280
      %v282 = vsel %vm170, %v256, 0.0
      %v283 = vadd.f32 %v281, %v282
      %v284 = vsel %vm170, %v257, 0.0
      %v285 = vadd.f32 %v283, %v284
      %v286 = vsel %vm170, %v258, 0.0
      %v287 = vadd.f32 %v285, %v286
      %v288 = vsel %vm170, %v259, 0.0
      %v289 = vadd.f32 %v287, %v288
      %v290 = vsel %vm170, %v260, 0.0
      %v291 = vadd.f32 %v289, %v290
      %v292 = vsel %vm170, %v261, 0.0
      %v293 = vadd.f32 %v291, %v292
      %v294 = vsel %vm170, %v262, 0.0
      %v295 = vadd.f32 %v293, %v294
      %v296 = vsel %vm170, %v263, 0.0
      %v297 = vadd.f32 %v295, %v296
      %v298 = vsel %vm170, %v264, 0.0
      %v299 = vadd.f32 %v297, %v298
      %v300 = vsel %vm170, %v265, 0.0
      %v301 = vadd.f32 %v299, %v300
      %v302 = vsel %vm170, %v266, 0.0
      %v303 = vadd.f32 %v301, %v302
      %v304 = vsel %vm170, %v267, 0.0
      %v305 = vadd.f32 %v303, %v304
      %v306 = vsel %vm170, %v268, 0.0
      %v307 = vadd.f32 %v305, %v306
      %v308 = vsel %vm170, %v269, 0.0
      %v309 = vadd.f32 %v307, %v308
      %v310 = vsel %vm170, %v270, 0.0
      %v311 = vadd.f32 %v309, %v310
      %v312 = vsel %vm170, %v271, 0.0
      %v313 = vadd.f32 %v311, %v312
      %v314 = vsel %vm212, %v272, 0.0
      %v315 = vadd.f32 %v313, %v314
      %v316 = vrot.slane %v315, 4
      %v317 = vadd.f32 %v315, %v316
      %v318 = vrot.slane %v317, 2
      %v319 = vadd.f32 %v317, %v318
      %v320 = vrot.slane %v319, 1
      %v321 = vadd.f32 %v319, %v320
      %v322 = vmul.f32 %v321, %v227
      %v323 = vadd.f32 %v322, 1e-05
      %v324 = vrsqrt.pop %v323
      %v325 = vmul.f32 %v324, %v323
      %v326 = vmul.f32 %v325, %v324
      %v327 = vmul.f32 0.5, %v326
      %v328 = vsub.f32 1.5, %v327
      %v329 = vmul.f32 %v324, %v328
      %vm330 = vweird.f32 %v323
      %vm331 = vweird.f32 %v324
      %vm332 = vmor %vm330, %vm331
      %v333 = vsel %vm332, %v324, %v329
      %v334 = vmul.f32 %v229, %v333
      %v335 = vmul.f32 %v230, %v333
      %v336 = vmul.f32 %v231, %v333
      %v337 = vmul.f32 %v232, %v333
      %v338 = vmul.f32 %v233, %v333
      %v339 = vmul.f32 %v234, %v333
      %v340 = vmul.f32 %v235, %v333
      %v341 = vmul.f32 %v236, %v333
      %v342 = vmul.f32 %v237, %v333
      %v343 = vmul.f32 %v238, %v333
      %v344 = vmul.f32 %v239, %v333
      %v345 = vmul.f32 %v240, %v333
      %v346 = vmul.f32 %v241, %v333
      %v347 = vmul.f32 %v242, %v333
      %v348 = vmul.f32 %v243, %v333
      %v349 = vmul.f32 %v244, %v333
      %v350 = vmul.f32 %v245, %v333
      %v351 = vmul.f32 %v246, %v333
      %v352 = vmul.f32 %v247, %v333
      %v353 = vmul.f32 %v248, %v333
      %v354 = vmul.f32 %v249, %v333
      %v355 = vmul.f32 %v250, %v333
      %v356 = vmax.f32 %v334, 0.0
      %v357 = vmax.f32 %v335, 0.0
      %v358 = vmax.f32 %v336, 0.0
      %v359 = vmax.f32 %v337, 0.0
      %v360 = vmax.f32 %v338, 0.0
      %v361 = vmax.f32 %v339, 0.0
      %v362 = vmax.f32 %v340, 0.0
      %v363 = vmax.f32 %v341, 0.0
      %v364 = vmax.f32 %v342, 0.0
      %v365 = vmax.f32 %v343, 0.0
      %v366 = vmax.f32 %v344, 0.0
      %v367 = vmax.f32 %v345, 0.0
      %v368 = vmax.f32 %v346, 0.0
      %v369 = vmax.f32 %v347, 0.0
      %v370 = vmax.f32 %v348, 0.0
      %v371 = vmax.f32 %v349, 0.0
      %v372 = vmax.f32 %v350, 0.0
      %v373 = vmax.f32 %v351, 0.0
      %v374 = vmax.f32 %v352, 0.0
      %v375 = vmax.f32 %v353, 0.0
      %v376 = vmax.f32 %v354, 0.0
      %v377 = vmax.f32 %v355, 0.0
      %378 = vst.msk [vmem:[%s147] sm:$0xff] %vm170, %v356
      %379 = vst.msk [vmem:[%s147 + $0x8] sm:$0xff] %vm170, %v357
      %380 = vst.msk [vmem:[%s147 + $0x10] sm:$0xff] %vm170, %v358
      %381 = vst.msk [vmem:[%s147 + $0x18] sm:$0xff] %vm170, %v359
      %382 = vst.msk [vmem:[%s147 + $0x20] sm:$0xff] %vm170, %v360
      %383 = vst.msk [vmem:[%s147 + $0x28] sm:$0xff] %vm170, %v361
      %384 = vst.msk [vmem:[%s147 + $0x30] sm:$0xff] %vm170, %v362
      %385 = vst.msk [vmem:[%s147 + $0x38] sm:$0xff] %vm170, %v363
      %386 = vst.msk [vmem:[%s147 + $0x40] sm:$0xff] %vm170, %v364
      %387 = vst.msk [vmem:[%s147 + $0x48] sm:$0xff] %vm170, %v365
      %388 = vst.msk [vmem:[%s147 + $0x50] sm:$0xff] %vm170, %v366
      %389 = vst.msk [vmem:[%s147 + $0x58] sm:$0xff] %vm170, %v367
      %390 = vst.msk [vmem:[%s147 + $0x60] sm:$0xff] %vm170, %v368
      %391 = vst.msk [vmem:[%s147 + $0x68] sm:$0xff] %vm170, %v369
      %392 = vst.msk [vmem:[%s147 + $0x70] sm:$0xff] %vm170, %v370
      %393 = vst.msk [vmem:[%s147 + $0x78] sm:$0xff] %vm170, %v371
      %394 = vst.msk [vmem:[%s147 + $0x80] sm:$0xff] %vm170, %v372
      %395 = vst.msk [vmem:[%s147 + $0x88] sm:$0xff] %vm170, %v373
      %396 = vst.msk [vmem:[%s147 + $0x90] sm:$0xff] %vm170, %v374
      %397 = vst.msk [vmem:[%s147 + $0x98] sm:$0xff] %vm170, %v375
      %398 = vst.msk [vmem:[%s147 + $0xa0] sm:$0xff] %vm170, %v376
      %399 = vst.msk [vmem:[%s147 + $0xa8] sm:$0x1] %vm212, %v377
      %p400 = scmp.lt.s32.totalorder %s16, 1
      %s401 = scalar_select %p400, %s16, 1
      %p402 = scmp.lt.s32.totalorder %s17, 0
      %s403 = scalar_select %p402, %s17, 0
      %s404 = smul.addr %s401, 22
      %s405 = sadd.s32 %s403, %s404
      %s406 = smul.addr %s405, 8
      %s407 = scalar_lea.vmem %s1, %s406
      // Predicated region
      $region25: #{resnet_generator_forward.93} parent=23 // pred_check
        %p408 = pneg %p72
      $region26: #{resnet_generator_forward.93} parent=23 // pred_check_branch
        %410 = sbr.rel (%p408) target = $region28
      $region27: #{resnet_generator_forward.93} parent=23 // pred_region
        _
      $region28: #{resnet_generator_forward.93} parent=23 // pred_fallthru
        _
    $region24: #{resnet_generator_forward.93} parent=5 // pred_fallthru
      _
    %p411 = scmp.le.s32.totalorder 2, %s7
    // Predicated region
    $region29: #{resnet_generator_forward.93} parent=5 // pred_check
      %p412 = pneg %p411
    $region30: #{resnet_generator_forward.93} parent=5 // pred_check_branch
      %414 = sbr.rel (%p412) target = $region32
    $region31: #{resnet_generator_forward.93} parent=5 // pred_region
      %s415 = ssub.s32 %s7, 2
      // Predicated region
      $region33: #{resnet_generator_forward.93} parent=31 // pred_check
        %p416 = pneg %p78
      $region34: #{resnet_generator_forward.93} parent=31 // pred_check_branch
        %418 = sbr.rel (%p416) target = $region36
      $region35: #{resnet_generator_forward.93} parent=31 // pred_region
        %p419 = scmp.lt.s32.totalorder %s18, 1
        %s420 = scalar_select %p419, %s18, 1
        %p421 = scmp.lt.s32.totalorder %s19, 0
        %s422 = scalar_select %p421, %s19, 0
        %s423 = smul.addr %s420, 22
        %s424 = sadd.s32 %s422, %s423
        %s425 = smul.addr %s424, 8
        %s426 = scalar_lea.vmem %s1, %s425
      $region36: #{resnet_generator_forward.93} parent=31 // pred_fallthru
        _
    $region32: #{resnet_generator_forward.93} parent=5 // pred_fallthru
      _
  $region6: #{resnet_generator_forward.93} parent=0 // loop_footer
    %s11 = sadd.s32 1, %s7
  $region7: #{resnet_generator_forward.93} parent=0 // loop_footer_branch
    %6 = sbr.rel target = $region3
  $region8: #{resnet_generator_forward.93} parent=0 // loop_exit
    _

// kernel: resnet_generator_forward.95
$region0: #{resnet_generator_forward.95}
  #allocation0 [shape = 'u32[]', space=smem, size = 0x4, offset = 0x4, fixed_abs, tag = 'smem constant byte address 0x4 - core index']
  #allocation1 [shape = 'u32[72,128]{1,0:T(1,128)}', space=vmem, size = 0x9000, scoped, tag = 'internal scratch']
  %s0 = inlined_call_operand.vmem [shape: f32[2,169,3], index: 0, kind: input, shape index: {}]
  %s1 = inlined_call_operand.vmem [shape: f32[2,169,3], index: 1, kind: output, shape index: {}]
  %s2 = sld [smem:[#allocation0]]
  $region37: #{resnet_generator_forward.95} parent=0
    _
  %s4 = ssub.s32 1, %s2
  %s5 = scalar_select 0, %s4, %s2
  loop: start=0, step=1, limit=4
  $region2: #{resnet_generator_forward.95} parent=0 // loop_pre_header
    _
  $region3: #{resnet_generator_forward.95} parent=0 // loop_header
    %s7 = sphi 0, %s11
    %p8 = scmp.ge.s32.totalorder %s7, 4
    %s14 = sphi 0, %s26
    %s15 = sphi 0, %s22
    %s16 = sphi 0, %s14
    %s17 = sphi 0, %s15
    %s18 = sphi 0, %s16
    %s19 = sphi 0, %s17
    %s31 = sphi 0, %s33
    %s34 = sphi 0, %s31
    %s35 = sphi 0, %s34
    %s51 = sphi 0, %s35
    %s59 = sphi 0, %s61
    %s62 = sphi 0, %s59
    %s63 = sphi 0, %s62
    %s79 = sphi 0, %s63
  $region4: #{resnet_generator_forward.95} parent=0 // loop_header_branch
    %10 = sbr.rel (%p8) target = $region8
  $region5: #{resnet_generator_forward.95} parent=0 // loop_body
    %s12 = ssub.s32 %s7, 1
    %s13 = ssub.s32 %s7, 2
    %s20 = sadd.s32 1, %s15
    %p21 = scmp.ge.s32.totalorder %s20, 1
    %s22 = scalar_select %p21, 0, %s20
    %s23 = sadd.s32 1, %s14
    %s24 = scalar_select %p21, %s23, %s14
    %p25 = scmp.ge.s32.totalorder %s24, 2
    %s26 = scalar_select %p25, 0, %s24
    %s27 = ssub.s32 %s14, %s26
    %s28 = ssub.s32 %s15, %s22
    %s29 = sor.u32 %s27, %s28
    %p30 = scmp.eq.s32.totalorder %s29, 0
    %s32 = sadd.s32 %s31, 1
    %s33 = scalar_select %p30, %s31, %s32
    %p36 = pneg %p30
    %p37 = scmp.eq.s32.totalorder %s7, 1
    %p38 = por %p36, %p37
    %p39 = scmp.ne.s32.totalorder %s31, %s34
    %p40 = scmp.eq.s32.totalorder %s7, 0
    %p41 = por %p39, %p40
    %p42 = scmp.ne.s32.totalorder %s31, %s34
    %p43 = scmp.eq.s32.totalorder %s12, 1
    %p44 = por %p42, %p43
    %p45 = scmp.ne.s32.totalorder %s34, %s35
    %p46 = scmp.eq.s32.totalorder %s12, 0
    %p47 = por %p45, %p46
    %p48 = scmp.ne.s32.totalorder %s34, %s35
    %p49 = scmp.eq.s32.totalorder %s13, 1
    %p50 = por %p48, %p49
    %p52 = scmp.ne.s32.totalorder %s35, %s51
    %p53 = scmp.eq.s32.totalorder %s13, 0
    %p54 = por %p52, %p53
    %s55 = ssub.s32 %s14, %s26
    %s56 = ssub.s32 %s15, %s22
    %s57 = sor.u32 %s55, %s56
    %p58 = scmp.eq.s32.totalorder %s57, 0
    %s60 = sadd.s32 %s59, 1
    %s61 = scalar_select %p58, %s59, %s60
    %p64 = pneg %p58
    %p65 = scmp.eq.s32.totalorder %s7, 1
    %p66 = por %p64, %p65
    %p67 = scmp.ne.s32.totalorder %s59, %s62
    %p68 = scmp.eq.s32.totalorder %s7, 0
    %p69 = por %p67, %p68
    %p70 = scmp.ne.s32.totalorder %s59, %s62
    %p71 = scmp.eq.s32.totalorder %s12, 1
    %p72 = por %p70, %p71
    %p73 = scmp.ne.s32.totalorder %s62, %s63
    %p74 = scmp.eq.s32.totalorder %s12, 0
    %p75 = por %p73, %p74
    %p76 = scmp.ne.s32.totalorder %s62, %s63
    %p77 = scmp.eq.s32.totalorder %s13, 1
    %p78 = por %p76, %p77
    %p80 = scmp.ne.s32.totalorder %s63, %s79
    %p81 = scmp.eq.s32.totalorder %s13, 0
    %p82 = por %p80, %p81
    %p83 = scmp.le.s32.totalorder 1, %s7
    %p84 = scmp.lt.s32.totalorder %s7, 3
    %p85 = pnand %p83, %p84
    %p86 = pneg %p85
    // Predicated region
    $region9: #{resnet_generator_forward.95} parent=5 // pred_check
      _
    $region10: #{resnet_generator_forward.95} parent=5 // pred_check_branch
      %88 = sbr.rel (%p85) target = $region12
    $region11: #{resnet_generator_forward.95} parent=5 // pred_region
      %s89 = ssub.s32 %s7, 1
    $region12: #{resnet_generator_forward.95} parent=5 // pred_fallthru
      _
    %p90 = scmp.lt.s32.totalorder %s7, 2
    // Predicated region
    $region13: #{resnet_generator_forward.95} parent=5 // pred_check
      %p91 = pneg %p90
    $region14: #{resnet_generator_forward.95} parent=5 // pred_check_branch
      %93 = sbr.rel (%p91) target = $region16
    $region15: #{resnet_generator_forward.95} parent=5 // pred_region
      // Predicated region
      $region17: #{resnet_generator_forward.95} parent=15 // pred_check
        %p94 = pneg %p41
      $region18: #{resnet_generator_forward.95} parent=15 // pred_check_branch
        %96 = sbr.rel (%p94) target = $region20
      $region19: #{resnet_generator_forward.95} parent=15 // pred_region
        %p97 = scmp.lt.s32.totalorder %s14, 1
        %s98 = scalar_select %p97, %s14, 1
        %p99 = scmp.lt.s32.totalorder %s15, 0
        %s100 = scalar_select %p99, %s15, 0
        %s101 = smul.addr %s98, 22
        %s102 = sadd.s32 %s100, %s101
        %s103 = smul.addr %s102, 8
        %s104 = scalar_lea.vmem %s0, %s103
      $region20: #{resnet_generator_forward.95} parent=15 // pred_fallthru
        _
    $region16: #{resnet_generator_forward.95} parent=5 // pred_fallthru
      _
    %p105 = scmp.le.s32.totalorder 1, %s7
    %p106 = scmp.lt.s32.totalorder %s7, 3
    %p107 = pnand %p105, %p106
    %p108 = pneg %p107
    // Predicated region
    $region21: #{resnet_generator_forward.95} parent=5 // pred_check
      _
    $region22: #{resnet_generator_forward.95} parent=5 // pred_check_branch
      %110 = sbr.rel (%p107) target = $region24
    $region23: #{resnet_generator_forward.95} parent=5 // pred_region
      %s111 = ssub.s32 %s7, 1
      %p112 = scmp.lt.s32.totalorder %s16, 1
      %s113 = scalar_select %p112, %s16, 1
      %p114 = scmp.lt.s32.totalorder %s17, 0
      %s115 = scalar_select %p114, %s17, 0
      %s116 = smul.addr %s113, 22
      %s117 = sadd.s32 %s115, %s116
      %s118 = smul.addr %s117, 8
      %s119 = scalar_lea.vmem %s0, %s118
      %p120 = pneg %p47
      %p121 = pneg %p44
      %p122 = pneg %p75
      %p123 = pneg %p72
      %p124 = scmp.lt.s32.totalorder %s16, 1
      %s125 = scalar_select %p124, %s16, 1
      %p126 = scmp.lt.s32.totalorder %s17, 0
      %s127 = scalar_select %p126, %s17, 0
      %s128 = smul.addr %s125, 22
      %s129 = sadd.s32 %s127, %s128
      %s130 = smul.addr %s129, 8
      %s131 = scalar_lea.vmem %s1, %s130
      %p132 = scmp.lt.s32.totalorder %s16, 1
      %s133 = scalar_select %p132, %s16, 1
      %p134 = scmp.lt.s32.totalorder %s17, 0
      %s135 = scalar_select %p134, %s17, 0
      %s136 = smul.addr %s133, 22
      %s137 = sadd.s32 %s135, %s136
      %s138 = smul.addr %s137, 8
      %s139 = scalar_lea.vmem %s0, %s138
      %p140 = scmp.lt.s32.totalorder %s16, 1
      %s141 = scalar_select %p140, %s16, 1
      %p142 = scmp.lt.s32.totalorder %s17, 0
      %s143 = scalar_select %p142, %s17, 0
      %s144 = smul.addr %s141, 22
      %s145 = sadd.s32 %s143, %s144
      %s146 = smul.addr %s145, 8
      %s147 = scalar_lea.vmem %s1, %s146
      %v148 = vld [vmem:[%s139] sm:$0xff]
      %v149 = vld [vmem:[%s139 + $0x8] sm:$0xff]
      %v150 = vld [vmem:[%s139 + $0x10] sm:$0xff]
      %v151 = vld [vmem:[%s139 + $0x18] sm:$0xff]
      %v152 = vld [vmem:[%s139 + $0x20] sm:$0xff]
      %v153 = vld [vmem:[%s139 + $0x28] sm:$0xff]
      %v154 = vld [vmem:[%s139 + $0x30] sm:$0xff]
      %v155 = vld [vmem:[%s139 + $0x38] sm:$0xff]
      %v156 = vld [vmem:[%s139 + $0x40] sm:$0xff]
      %v157 = vld [vmem:[%s139 + $0x48] sm:$0xff]
      %v158 = vld [vmem:[%s139 + $0x50] sm:$0xff]
      %v159 = vld [vmem:[%s139 + $0x58] sm:$0xff]
      %v160 = vld [vmem:[%s139 + $0x60] sm:$0xff]
      %v161 = vld [vmem:[%s139 + $0x68] sm:$0xff]
      %v162 = vld [vmem:[%s139 + $0x70] sm:$0xff]
      %v163 = vld [vmem:[%s139 + $0x78] sm:$0xff]
      %v164 = vld [vmem:[%s139 + $0x80] sm:$0xff]
      %v165 = vld [vmem:[%s139 + $0x88] sm:$0xff]
      %v166 = vld [vmem:[%s139 + $0x90] sm:$0xff]
      %v167 = vld [vmem:[%s139 + $0x98] sm:$0xff]
      %v168 = vld [vmem:[%s139 + $0xa0] sm:$0xff]
      %v169 = vld [vmem:[%s139 + $0xa8] sm:$0x1]
      %vm170 = vcmask 23552
      %v171 = vsel %vm170, %v148, 0.0
      %v172 = vsel %vm170, %v149, 0.0
      %v173 = vadd.f32 %v171, %v172
      %v174 = vsel %vm170, %v150, 0.0
      %v175 = vadd.f32 %v173, %v174
      %v176 = vsel %vm170, %v151, 0.0
      %v177 = vadd.f32 %v175, %v176
      %v178 = vsel %vm170, %v152, 0.0
      %v179 = vadd.f32 %v177, %v178
      %v180 = vsel %vm170, %v153, 0.0
      %v181 = vadd.f32 %v179, %v180
      %v182 = vsel %vm170, %v154, 0.0
      %v183 = vadd.f32 %v181, %v182
      %v184 = vsel %vm170, %v155, 0.0
      %v185 = vadd.f32 %v183, %v184
      %v186 = vsel %vm170, %v156, 0.0
      %v187 = vadd.f32 %v185, %v186
      %v188 = vsel %vm170, %v157, 0.0
      %v189 = vadd.f32 %v187, %v188
      %v190 = vsel %vm170, %v158, 0.0
      %v191 = vadd.f32 %v189, %v190
      %v192 = vsel %vm170, %v159, 0.0
      %v193 = vadd.f32 %v191, %v192
      %v194 = vsel %vm170, %v160, 0.0
      %v195 = vadd.f32 %v193, %v194
      %v196 = vsel %vm170, %v161, 0.0
      %v197 = vadd.f32 %v195, %v196
      %v198 = vsel %vm170, %v162, 0.0
      %v199 = vadd.f32 %v197, %v198
      %v200 = vsel %vm170, %v163, 0.0
      %v201 = vadd.f32 %v199, %v200
      %v202 = vsel %vm170, %v164, 0.0
      %v203 = vadd.f32 %v201, %v202
      %v204 = vsel %vm170, %v165, 0.0
      %v205 = vadd.f32 %v203, %v204
      %v206 = vsel %vm170, %v166, 0.0
      %v207 = vadd.f32 %v205, %v206
      %v208 = vsel %vm170, %v167, 0.0
      %v209 = vadd.f32 %v207, %v208
      %v210 = vsel %vm170, %v168, 0.0
      %v211 = vadd.f32 %v209, %v210
      %vm212 = vcmask 16384
      %v213 = vsel %vm212, %v169, 0.0
      %v214 = vadd.f32 %v211, %v213
      %v215 = vrot.slane %v214, 4
      %v216 = vadd.f32 %v214, %v215
      %v217 = vrot.slane %v216, 2
      %v218 = vadd.f32 %v216, %v217
      %v219 = vrot.slane %v218, 1
      %v220 = vadd.f32 %v218, %v219
      %v221 = vrcp.pop 169.0
      %v222 = vmul.f32 169.0, %v221
      %v223 = vsub.f32 1.0, %v222
      %v224 = vmul.f32 %v221, %v223
      %v225 = vadd.f32 %v221, %v224
      %vm226 = vweird.f32 %v221
      %v227 = vsel %vm226, %v221, %v225
      %v228 = vmul.f32 %v220, %v227
      %v229 = vsub.f32 %v148, %v228
      %v230 = vsub.f32 %v149, %v228
      %v231 = vsub.f32 %v150, %v228
      %v232 = vsub.f32 %v151, %v228
      %v233 = vsub.f32 %v152, %v228
      %v234 = vsub.f32 %v153, %v228
      %v235 = vsub.f32 %v154, %v228
      %v236 = vsub.f32 %v155, %v228
      %v237 = vsub.f32 %v156, %v228
      %v238 = vsub.f32 %v157, %v228
      %v239 = vsub.f32 %v158, %v228
      %v240 = vsub.f32 %v159, %v228
      %v241 = vsub.f32 %v160, %v228
      %v242 = vsub.f32 %v161, %v228
      %v243 = vsub.f32 %v162, %v228
      %v244 = vsub.f32 %v163, %v228
      %v245 = vsub.f32 %v164, %v228
      %v246 = vsub.f32 %v165, %v228
      %v247 = vsub.f32 %v166, %v228
      %v248 = vsub.f32 %v167, %v228
      %v249 = vsub.f32 %v168, %v228
      %v250 = vsub.f32 %v169, %v228
      %v251 = vmul.f32 %v229, %v229
      %v252 = vmul.f32 %v230, %v230
      %v253 = vmul.f32 %v231, %v231
      %v254 = vmul.f32 %v232, %v232
      %v255 = vmul.f32 %v233, %v233
      %v256 = vmul.f32 %v234, %v234
      %v257 = vmul.f32 %v235, %v235
      %v258 = vmul.f32 %v236, %v236
      %v259 = vmul.f32 %v237, %v237
      %v260 = vmul.f32 %v238, %v238
      %v261 = vmul.f32 %v239, %v239
      %v262 = vmul.f32 %v240, %v240
      %v263 = vmul.f32 %v241, %v241
      %v264 = vmul.f32 %v242, %v242
      %v265 = vmul.f32 %v243, %v243
      %v266 = vmul.f32 %v244, %v244
      %v267 = vmul.f32 %v245, %v245
      %v268 = vmul.f32 %v246, %v246
      %v269 = vmul.f32 %v247, %v247
      %v270 = vmul.f32 %v248, %v248
      %v271 = vmul.f32 %v249, %v249
      %v272 = vmul.f32 %v250, %v250
      %v273 = vsel %vm170, %v251, 0.0
      %v274 = vsel %vm170, %v252, 0.0
      %v275 = vadd.f32 %v273, %v274
      %v276 = vsel %vm170, %v253, 0.0
      %v277 = vadd.f32 %v275, %v276
      %v278 = vsel %vm170, %v254, 0.0
      %v279 = vadd.f32 %v277, %v278
      %v280 = vsel %vm170, %v255, 0.0
      %v281 = vadd.f32 %v279, %v280
      %v282 = vsel %vm170, %v256, 0.0
      %v283 = vadd.f32 %v281, %v282
      %v284 = vsel %vm170, %v257, 0.0
      %v285 = vadd.f32 %v283, %v284
      %v286 = vsel %vm170, %v258, 0.0
      %v287 = vadd.f32 %v285, %v286
      %v288 = vsel %vm170, %v259, 0.0
      %v289 = vadd.f32 %v287, %v288
      %v290 = vsel %vm170, %v260, 0.0
      %v291 = vadd.f32 %v289, %v290
      %v292 = vsel %vm170, %v261, 0.0
      %v293 = vadd.f32 %v291, %v292
      %v294 = vsel %vm170, %v262, 0.0
      %v295 = vadd.f32 %v293, %v294
      %v296 = vsel %vm170, %v263, 0.0
      %v297 = vadd.f32 %v295, %v296
      %v298 = vsel %vm170, %v264, 0.0
      %v299 = vadd.f32 %v297, %v298
      %v300 = vsel %vm170, %v265, 0.0
      %v301 = vadd.f32 %v299, %v300
      %v302 = vsel %vm170, %v266, 0.0
      %v303 = vadd.f32 %v301, %v302
      %v304 = vsel %vm170, %v267, 0.0
      %v305 = vadd.f32 %v303, %v304
      %v306 = vsel %vm170, %v268, 0.0
      %v307 = vadd.f32 %v305, %v306
      %v308 = vsel %vm170, %v269, 0.0
      %v309 = vadd.f32 %v307, %v308
      %v310 = vsel %vm170, %v270, 0.0
      %v311 = vadd.f32 %v309, %v310
      %v312 = vsel %vm170, %v271, 0.0
      %v313 = vadd.f32 %v311, %v312
      %v314 = vsel %vm212, %v272, 0.0
      %v315 = vadd.f32 %v313, %v314
      %v316 = vrot.slane %v315, 4
      %v317 = vadd.f32 %v315, %v316
      %v318 = vrot.slane %v317, 2
      %v319 = vadd.f32 %v317, %v318
      %v320 = vrot.slane %v319, 1
      %v321 = vadd.f32 %v319, %v320
      %v322 = vmul.f32 %v321, %v227
      %v323 = vadd.f32 %v322, 1e-05
      %v324 = vrsqrt.pop %v323
      %v325 = vmul.f32 %v324, %v323
      %v326 = vmul.f32 %v325, %v324
      %v327 = vmul.f32 0.5, %v326
      %v328 = vsub.f32 1.5, %v327
      %v329 = vmul.f32 %v324, %v328
      %vm330 = vweird.f32 %v323
      %vm331 = vweird.f32 %v324
      %vm332 = vmor %vm330, %vm331
      %v333 = vsel %vm332, %v324, %v329
      %v334 = vmul.f32 %v229, %v333
      %v335 = vmul.f32 %v230, %v333
      %v336 = vmul.f32 %v231, %v333
      %v337 = vmul.f32 %v232, %v333
      %v338 = vmul.f32 %v233, %v333
      %v339 = vmul.f32 %v234, %v333
      %v340 = vmul.f32 %v235, %v333
      %v341 = vmul.f32 %v236, %v333
      %v342 = vmul.f32 %v237, %v333
      %v343 = vmul.f32 %v238, %v333
      %v344 = vmul.f32 %v239, %v333
      %v345 = vmul.f32 %v240, %v333
      %v346 = vmul.f32 %v241, %v333
      %v347 = vmul.f32 %v242, %v333
      %v348 = vmul.f32 %v243, %v333
      %v349 = vmul.f32 %v244, %v333
      %v350 = vmul.f32 %v245, %v333
      %v351 = vmul.f32 %v246, %v333
      %v352 = vmul.f32 %v247, %v333
      %v353 = vmul.f32 %v248, %v333
      %v354 = vmul.f32 %v249, %v333
      %v355 = vmul.f32 %v250, %v333
      %v356 = vtanh.pop %v334
      %v357 = vtanh.pop %v335
      %v358 = vtanh.pop %v336
      %v359 = vtanh.pop %v337
      %v360 = vtanh.pop %v338
      %v361 = vtanh.pop %v339
      %v362 = vtanh.pop %v340
      %v363 = vtanh.pop %v341
      %v364 = vtanh.pop %v342
      %v365 = vtanh.pop %v343
      %v366 = vtanh.pop %v344
      %v367 = vtanh.pop %v345
      %v368 = vtanh.pop %v346
      %v369 = vtanh.pop %v347
      %v370 = vtanh.pop %v348
      %v371 = vtanh.pop %v349
      %v372 = vtanh.pop %v350
      %v373 = vtanh.pop %v351
      %v374 = vtanh.pop %v352
      %v375 = vtanh.pop %v353
      %v376 = vtanh.pop %v354
      %v377 = vtanh.pop %v355
      %378 = vst.msk [vmem:[%s147] sm:$0xff] %vm170, %v356
      %379 = vst.msk [vmem:[%s147 + $0x8] sm:$0xff] %vm170, %v357
      %380 = vst.msk [vmem:[%s147 + $0x10] sm:$0xff] %vm170, %v358
      %381 = vst.msk [vmem:[%s147 + $0x18] sm:$0xff] %vm170, %v359
      %382 = vst.msk [vmem:[%s147 + $0x20] sm:$0xff] %vm170, %v360
      %383 = vst.msk [vmem:[%s147 + $0x28] sm:$0xff] %vm170, %v361
      %384 = vst.msk [vmem:[%s147 + $0x30] sm:$0xff] %vm170, %v362
      %385 = vst.msk [vmem:[%s147 + $0x38] sm:$0xff] %vm170, %v363
      %386 = vst.msk [vmem:[%s147 + $0x40] sm:$0xff] %vm170, %v364
      %387 = vst.msk [vmem:[%s147 + $0x48] sm:$0xff] %vm170, %v365
      %388 = vst.msk [vmem:[%s147 + $0x50] sm:$0xff] %vm170, %v366
      %389 = vst.msk [vmem:[%s147 + $0x58] sm:$0xff] %vm170, %v367
      %390 = vst.msk [vmem:[%s147 + $0x60] sm:$0xff] %vm170, %v368
      %391 = vst.msk [vmem:[%s147 + $0x68] sm:$0xff] %vm170, %v369
      %392 = vst.msk [vmem:[%s147 + $0x70] sm:$0xff] %vm170, %v370
      %393 = vst.msk [vmem:[%s147 + $0x78] sm:$0xff] %vm170, %v371
      %394 = vst.msk [vmem:[%s147 + $0x80] sm:$0xff] %vm170, %v372
      %395 = vst.msk [vmem:[%s147 + $0x88] sm:$0xff] %vm170, %v373
      %396 = vst.msk [vmem:[%s147 + $0x90] sm:$0xff] %vm170, %v374
      %397 = vst.msk [vmem:[%s147 + $0x98] sm:$0xff] %vm170, %v375
      %398 = vst.msk [vmem:[%s147 + $0xa0] sm:$0xff] %vm170, %v376
      %399 = vst.msk [vmem:[%s147 + $0xa8] sm:$0x1] %vm212, %v377
      %p400 = scmp.lt.s32.totalorder %s16, 1
      %s401 = scalar_select %p400, %s16, 1
      %p402 = scmp.lt.s32.totalorder %s17, 0
      %s403 = scalar_select %p402, %s17, 0
      %s404 = smul.addr %s401, 22
      %s405 = sadd.s32 %s403, %s404
      %s406 = smul.addr %s405, 8
      %s407 = scalar_lea.vmem %s1, %s406
      // Predicated region
      $region25: #{resnet_generator_forward.95} parent=23 // pred_check
        %p408 = pneg %p72
      $region26: #{resnet_generator_forward.95} parent=23 // pred_check_branch
        %410 = sbr.rel (%p408) target = $region28
      $region27: #{resnet_generator_forward.95} parent=23 // pred_region
        _
      $region28: #{resnet_generator_forward.95} parent=23 // pred_fallthru
        _
    $region24: #{resnet_generator_forward.95} parent=5 // pred_fallthru
      _
    %p411 = scmp.le.s32.totalorder 2, %s7
    // Predicated region
    $region29: #{resnet_generator_forward.95} parent=5 // pred_check
      %p412 = pneg %p411
    $region30: #{resnet_generator_forward.95} parent=5 // pred_check_branch
      %414 = sbr.rel (%p412) target = $region32
    $region31: #{resnet_generator_forward.95} parent=5 // pred_region
      %s415 = ssub.s32 %s7, 2
      // Predicated region
      $region33: #{resnet_generator_forward.95} parent=31 // pred_check
        %p416 = pneg %p78
      $region34: #{resnet_generator_forward.95} parent=31 // pred_check_branch
        %418 = sbr.rel (%p416) target = $region36
      $region35: #{resnet_generator_forward.95} parent=31 // pred_region
        %p419 = scmp.lt.s32.totalorder %s18, 1
        %s420 = scalar_select %p419, %s18, 1
        %p421 = scmp.lt.s32.totalorder %s19, 0
        %s422 = scalar_select %p421, %s19, 0
        %s423 = smul.addr %s420, 22
        %s424 = sadd.s32 %s422, %s423
        %s425 = smul.addr %s424, 8
        %s426 = scalar_lea.vmem %s1, %s425
      $region36: #{resnet_generator_forward.95} parent=31 // pred_fallthru
        _
    $region32: #{resnet_generator_forward.95} parent=5 // pred_fallthru
      _
  $region6: #{resnet_generator_forward.95} parent=0 // loop_footer
    %s11 = sadd.s32 1, %s7
  $region7: #{resnet_generator_forward.95} parent=0 // loop_footer_branch
    %6 = sbr.rel target = $region3
  $region8: #{resnet_generator_forward.95} parent=0 // loop_exit
    _

// kernel: resnet_generator_forward.94
$region0: #{resnet_generator_forward.94}
  #allocation0 [shape = 'u32[]', space=smem, size = 0x4, offset = 0x4, fixed_abs, tag = 'smem constant byte address 0x4 - core index']
  #allocation1 [shape = 'u32[72,128]{1,0:T(1,128)}', space=vmem, size = 0x9000, scoped, tag = 'internal scratch']
  #allocation2 [shape = 'f32[256,128]{1,0:T(8,128)}', space=vmem, size = 0x20000, scoped, tag = 'scratch operand']
  %s0 = inlined_call_operand.vmem [shape: bf16[512,512], index: 0, kind: input, shape index: {}]
  %s1 = inlined_call_operand.vmem [shape: bf16[512,128], index: 1, kind: input, shape index: {}]
  %s2 = inlined_call_operand.vmem [shape: f32[1,128], index: 2, kind: input, shape index: {}]
  %s3 = inlined_call_operand.vmem [shape: f32[512,128], index: 3, kind: output, shape index: {}]
  %s4 = sld [smem:[#allocation0]]
  $region53: #{resnet_generator_forward.94} parent=0
    _
  %s6 = ssub.s32 1, %s4
  %s7 = scalar_select 0, %s6, %s4
  loop: start=0, step=1, limit=4
  $region2: #{resnet_generator_forward.94} parent=0 // loop_pre_header
    _
  $region3: #{resnet_generator_forward.94} parent=0 // loop_header
    %s9 = sphi 0, %s13
    %p10 = scmp.ge.s32.totalorder %s9, 4
    %s16 = sphi 0, %s35
    %s17 = sphi 0, %s31
    %s18 = sphi 0, %s27
    %s19 = sphi 0, %s16
    %s20 = sphi 0, %s17
    %s21 = sphi 0, %s18
    %s22 = sphi 0, %s19
    %s23 = sphi 0, %s20
    %s24 = sphi 0, %s21
    %s40 = sphi 0, %s42
    %s43 = sphi 0, %s40
    %s44 = sphi 0, %s43
    %s60 = sphi 0, %s44
    %s68 = sphi 0, %s70
    %s71 = sphi 0, %s68
    %s72 = sphi 0, %s71
    %s88 = sphi 0, %s72
    %s94 = sphi 0, %s96
    %s97 = sphi 0, %s94
    %s98 = sphi 0, %s97
    %s114 = sphi 0, %s98
    %s122 = sphi 0, %s124
    %s125 = sphi 0, %s122
    %s126 = sphi 0, %s125
    %s142 = sphi 0, %s126
  $region4: #{resnet_generator_forward.94} parent=0 // loop_header_branch
    %12 = sbr.rel (%p10) target = $region8
  $region5: #{resnet_generator_forward.94} parent=0 // loop_body
    %s14 = ssub.s32 %s9, 1
    %s15 = ssub.s32 %s9, 2
    %s25 = sadd.s32 1, %s18
    %p26 = scmp.ge.s32.totalorder %s25, 1
    %s27 = scalar_select %p26, 0, %s25
    %s28 = sadd.s32 1, %s17
    %s29 = scalar_select %p26, %s28, %s17
    %p30 = scmp.ge.s32.totalorder %s29, 1
    %s31 = scalar_select %p30, 0, %s29
    %s32 = sadd.s32 1, %s16
    %s33 = scalar_select %p30, %s32, %s16
    %p34 = scmp.ge.s32.totalorder %s33, 2
    %s35 = scalar_select %p34, 0, %s33
    %s36 = ssub.s32 %s16, %s35
    %s37 = ssub.s32 %s18, %s27
    %s38 = sor.u32 %s36, %s37
    %p39 = scmp.eq.s32.totalorder %s38, 0
    %s41 = sadd.s32 %s40, 1
    %s42 = scalar_select %p39, %s40, %s41
    %p45 = pneg %p39
    %p46 = scmp.eq.s32.totalorder %s9, 1
    %p47 = por %p45, %p46
    %p48 = scmp.ne.s32.totalorder %s40, %s43
    %p49 = scmp.eq.s32.totalorder %s9, 0
    %p50 = por %p48, %p49
    %p51 = scmp.ne.s32.totalorder %s40, %s43
    %p52 = scmp.eq.s32.totalorder %s14, 1
    %p53 = por %p51, %p52
    %p54 = scmp.ne.s32.totalorder %s43, %s44
    %p55 = scmp.eq.s32.totalorder %s14, 0
    %p56 = por %p54, %p55
    %p57 = scmp.ne.s32.totalorder %s43, %s44
    %p58 = scmp.eq.s32.totalorder %s15, 1
    %p59 = por %p57, %p58
    %p61 = scmp.ne.s32.totalorder %s44, %s60
    %p62 = scmp.eq.s32.totalorder %s15, 0
    %p63 = por %p61, %p62
    %s64 = ssub.s32 %s18, %s27
    %s65 = ssub.s32 %s17, %s31
    %s66 = sor.u32 %s64, %s65
    %p67 = scmp.eq.s32.totalorder %s66, 0
    %s69 = sadd.s32 %s68, 1
    %s70 = scalar_select %p67, %s68, %s69
    %p73 = pneg %p67
    %p74 = scmp.eq.s32.totalorder %s9, 1
    %p75 = por %p73, %p74
    %p76 = scmp.ne.s32.totalorder %s68, %s71
    %p77 = scmp.eq.s32.totalorder %s9, 0
    %p78 = por %p76, %p77
    %p79 = scmp.ne.s32.totalorder %s68, %s71
    %p80 = scmp.eq.s32.totalorder %s14, 1
    %p81 = por %p79, %p80
    %p82 = scmp.ne.s32.totalorder %s71, %s72
    %p83 = scmp.eq.s32.totalorder %s14, 0
    %p84 = por %p82, %p83
    %p85 = scmp.ne.s32.totalorder %s71, %s72
    %p86 = scmp.eq.s32.totalorder %s15, 1
    %p87 = por %p85, %p86
    %p89 = scmp.ne.s32.totalorder %s72, %s88
    %p90 = scmp.eq.s32.totalorder %s15, 0
    %p91 = por %p89, %p90
    %s92 = ssub.s32 %s17, %s31
    %p93 = scmp.eq.s32.totalorder %s92, 0
    %s95 = sadd.s32 %s94, 1
    %s96 = scalar_select %p93, %s94, %s95
    %p99 = pneg %p93
    %p100 = scmp.eq.s32.totalorder %s9, 1
    %p101 = por %p99, %p100
    %p102 = scmp.ne.s32.totalorder %s94, %s97
    %p103 = scmp.eq.s32.totalorder %s9, 0
    %p104 = por %p102, %p103
    %p105 = scmp.ne.s32.totalorder %s94, %s97
    %p106 = scmp.eq.s32.totalorder %s14, 1
    %p107 = por %p105, %p106
    %p108 = scmp.ne.s32.totalorder %s97, %s98
    %p109 = scmp.eq.s32.totalorder %s14, 0
    %p110 = por %p108, %p109
    %p111 = scmp.ne.s32.totalorder %s97, %s98
    %p112 = scmp.eq.s32.totalorder %s15, 1
    %p113 = por %p111, %p112
    %p115 = scmp.ne.s32.totalorder %s98, %s114
    %p116 = scmp.eq.s32.totalorder %s15, 0
    %p117 = por %p115, %p116
    %s118 = ssub.s32 %s16, %s35
    %s119 = ssub.s32 %s17, %s31
    %s120 = sor.u32 %s118, %s119
    %p121 = scmp.eq.s32.totalorder %s120, 0
    %s123 = sadd.s32 %s122, 1
    %s124 = scalar_select %p121, %s122, %s123
    %p127 = pneg %p121
    %p128 = scmp.eq.s32.totalorder %s9, 1
    %p129 = por %p127, %p128
    %p130 = scmp.ne.s32.totalorder %s122, %s125
    %p131 = scmp.eq.s32.totalorder %s9, 0
    %p132 = por %p130, %p131
    %p133 = scmp.ne.s32.totalorder %s122, %s125
    %p134 = scmp.eq.s32.totalorder %s14, 1
    %p135 = por %p133, %p134
    %p136 = scmp.ne.s32.totalorder %s125, %s126
    %p137 = scmp.eq.s32.totalorder %s14, 0
    %p138 = por %p136, %p137
    %p139 = scmp.ne.s32.totalorder %s125, %s126
    %p140 = scmp.eq.s32.totalorder %s15, 1
    %p141 = por %p139, %p140
    %p143 = scmp.ne.s32.totalorder %s126, %s142
    %p144 = scmp.eq.s32.totalorder %s15, 0
    %p145 = por %p143, %p144
    %p146 = scmp.le.s32.totalorder 1, %s9
    %p147 = scmp.lt.s32.totalorder %s9, 3
    %p148 = pnand %p146, %p147
    %p149 = pneg %p148
    // Predicated region
    $region9: #{resnet_generator_forward.94} parent=5 // pred_check
      _
    $region10: #{resnet_generator_forward.94} parent=5 // pred_check_branch
      %151 = sbr.rel (%p148) target = $region12
    $region11: #{resnet_generator_forward.94} parent=5 // pred_region
      %s152 = ssub.s32 %s9, 1
      // Predicated region
      $region13: #{resnet_generator_forward.94} parent=11 // pred_check
        %p153 = pneg %p84
      $region14: #{resnet_generator_forward.94} parent=11 // pred_check_branch
        %155 = sbr.rel (%p153) target = $region16
      $region15: #{resnet_generator_forward.94} parent=11 // pred_region
        %s156 = smul.u32 64, %s21
        %p157 = scmp.lt.s32.totalorder %s156, 63
        %s158 = scalar_select %p157, %s156, 63
        %p159 = scmp.lt.s32.totalorder %s20, 0
        %s160 = scalar_select %p159, %s20, 0
        %s161 = sadd.s32 %s160, %s158
        %s162 = smul.addr %s161, 4
        %s163 = scalar_lea.vmem %s1, %s162
        %s164 = smul.u32 64, %s21
      $region16: #{resnet_generator_forward.94} parent=11 // pred_fallthru
        _
      // Predicated region
      $region17: #{resnet_generator_forward.94} parent=11 // pred_check
        %p165 = pneg %p110
      $region18: #{resnet_generator_forward.94} parent=11 // pred_check_branch
        %167 = sbr.rel (%p165) target = $region20
      $region19: #{resnet_generator_forward.94} parent=11 // pred_region
        %p168 = scmp.lt.s32.totalorder %s20, 0
        %s169 = scalar_select %p168, %s20, 0
        %s170 = scalar_lea.vmem %s2, %s169
      $region20: #{resnet_generator_forward.94} parent=11 // pred_fallthru
        _
    $region12: #{resnet_generator_forward.94} parent=5 // pred_fallthru
      _
    %p171 = scmp.lt.s32.totalorder %s9, 2
    // Predicated region
    $region21: #{resnet_generator_forward.94} parent=5 // pred_check
      %p172 = pneg %p171
    $region22: #{resnet_generator_forward.94} parent=5 // pred_check_branch
      %174 = sbr.rel (%p172) target = $region24
    $region23: #{resnet_generator_forward.94} parent=5 // pred_region
      // Predicated region
      $region25: #{resnet_generator_forward.94} parent=23 // pred_check
        %p175 = pneg %p50
      $region26: #{resnet_generator_forward.94} parent=23 // pred_check_branch
        %177 = sbr.rel (%p175) target = $region28
      $region27: #{resnet_generator_forward.94} parent=23 // pred_region
        %s178 = smul.u32 32, %s16
        %s179 = smul.u32 4, %s18
        %p180 = scmp.lt.s32.totalorder %s178, 63
        %s181 = scalar_select %p180, %s178, 63
        %p182 = scmp.lt.s32.totalorder %s179, 3
        %s183 = scalar_select %p182, %s179, 3
        %s184 = smul.addr %s181, 4
        %s185 = sadd.s32 %s183, %s184
        %s186 = smul.addr %s185, 4
        %s187 = scalar_lea.vmem %s0, %s186
        %s188 = smul.u32 32, %s16
        %s189 = smul.u32 4, %s18
      $region28: #{resnet_generator_forward.94} parent=23 // pred_fallthru
        _
    $region24: #{resnet_generator_forward.94} parent=5 // pred_fallthru
      _
    %p190 = scmp.le.s32.totalorder 1, %s9
    %p191 = scmp.lt.s32.totalorder %s9, 3
    %p192 = pnand %p190, %p191
    %p193 = pneg %p192
    // Predicated region
    $region29: #{resnet_generator_forward.94} parent=5 // pred_check
      _
    $region30: #{resnet_generator_forward.94} parent=5 // pred_check_branch
      %195 = sbr.rel (%p192) target = $region32
    $region31: #{resnet_generator_forward.94} parent=5 // pred_region
      %s196 = ssub.s32 %s9, 1
      %s197 = smul.u32 32, %s19
      %s198 = smul.u32 4, %s21
      %p199 = scmp.lt.s32.totalorder %s197, 63
      %s200 = scalar_select %p199, %s197, 63
      %p201 = scmp.lt.s32.totalorder %s198, 3
      %s202 = scalar_select %p201, %s198, 3
      %s203 = smul.addr %s200, 4
      %s204 = sadd.s32 %s202, %s203
      %s205 = smul.addr %s204, 4
      %s206 = scalar_lea.vmem %s0, %s205
      %p207 = pneg %p56
      %p208 = pneg %p53
      %s209 = smul.u32 64, %s21
      %p210 = scmp.lt.s32.totalorder %s209, 63
      %s211 = scalar_select %p210, %s209, 63
      %p212 = scmp.lt.s32.totalorder %s20, 0
      %s213 = scalar_select %p212, %s20, 0
      %s214 = sadd.s32 %s213, %s211
      %s215 = smul.addr %s214, 4
      %s216 = scalar_lea.vmem %s1, %s215
      %p217 = pneg %p84
      %p218 = pneg %p81
      %p219 = scmp.lt.s32.totalorder %s20, 0
      %s220 = scalar_select %p219, %s20, 0
      %s221 = scalar_lea.vmem %s2, %s220
      %p222 = pneg %p110
      %p223 = pneg %p107
      %p224 = pneg %p138
      %p225 = pneg %p135
      %s226 = smul.u32 32, %s19
      %p227 = scmp.lt.s32.totalorder %s226, 63
      %s228 = scalar_select %p227, %s226, 63
      %p229 = scmp.lt.s32.totalorder %s20, 0
      %s230 = scalar_select %p229, %s20, 0
      %s231 = sadd.s32 %s230, %s228
      %s232 = smul.addr %s231, 8
      %s233 = scalar_lea.vmem %s3, %s232
      %s234 = smul.u32 32, %s19
      %s235 = smul.u32 4, %s21
      %p236 = scmp.lt.s32.totalorder %s234, 63
      %s237 = scalar_select %p236, %s234, 63
      %p238 = scmp.lt.s32.totalorder %s235, 3
      %s239 = scalar_select %p238, %s235, 3
      %s240 = smul.addr %s237, 4
      %s241 = sadd.s32 %s239, %s240
      %s242 = smul.addr %s241, 4
      %s243 = scalar_lea.vmem %s0, %s242
      %s244 = smul.u32 32, %s19
      %s245 = smul.u32 4, %s21
      %s246 = smul.u32 64, %s21
      %p247 = scmp.lt.s32.totalorder %s246, 63
      %s248 = scalar_select %p247, %s246, 63
      %p249 = scmp.lt.s32.totalorder %s20, 0
      %s250 = scalar_select %p249, %s20, 0
      %s251 = sadd.s32 %s250, %s248
      %s252 = smul.addr %s251, 4
      %s253 = scalar_lea.vmem %s1, %s252
      %s254 = smul.u32 64, %s21
      %p255 = scmp.lt.s32.totalorder %s20, 0
      %s256 = scalar_select %p255, %s20, 0
      %s257 = scalar_lea.vmem %s2, %s256
      %s258 = smul.u32 32, %s19
      %p259 = scmp.lt.s32.totalorder %s258, 63
      %s260 = scalar_select %p259, %s258, 63
      %p261 = scmp.lt.s32.totalorder %s20, 0
      %s262 = scalar_select %p261, %s20, 0
      %s263 = sadd.s32 %s262, %s260
      %s264 = smul.addr %s263, 8
      %s265 = scalar_lea.vmem %s3, %s264
      %s266 = smul.u32 32, %s19
      %p267 = scmp.eq.s32.totalorder %s21, 0
      // Predicated region
      $region33: #{resnet_generator_forward.94} parent=31 // pred_check
        %p268 = pneg %p267
      $region34: #{resnet_generator_forward.94} parent=31 // pred_check_branch
        %270 = sbr.rel (%p268) target = $region36
      $region35: #{resnet_generator_forward.94} parent=31 // pred_region
        %271 = vst [vmem:[#allocation2] sm:$0xff] 0.0
        %272 = vst [vmem:[#allocation2 + $0x8] sm:$0xff] 0.0
        %273 = vst [vmem:[#allocation2 + $0x10] sm:$0xff] 0.0
        %274 = vst [vmem:[#allocation2 + $0x18] sm:$0xff] 0.0
        %275 = vst [vmem:[#allocation2 + $0x20] sm:$0xff] 0.0
        %276 = vst [vmem:[#allocation2 + $0x28] sm:$0xff] 0.0
        %277 = vst [vmem:[#allocation2 + $0x30] sm:$0xff] 0.0
        %278 = vst [vmem:[#allocation2 + $0x38] sm:$0xff] 0.0
        %279 = vst [vmem:[#allocation2 + $0x40] sm:$0xff] 0.0
        %280 = vst [vmem:[#allocation2 + $0x48] sm:$0xff] 0.0
        %281 = vst [vmem:[#allocation2 + $0x50] sm:$0xff] 0.0
        %282 = vst [vmem:[#allocation2 + $0x58] sm:$0xff] 0.0
        %283 = vst [vmem:[#allocation2 + $0x60] sm:$0xff] 0.0
        %284 = vst [vmem:[#allocation2 + $0x68] sm:$0xff] 0.0
        %285 = vst [vmem:[#allocation2 + $0x70] sm:$0xff] 0.0
        %286 = vst [vmem:[#allocation2 + $0x78] sm:$0xff] 0.0
        %287 = vst [vmem:[#allocation2 + $0x80] sm:$0xff] 0.0
        %288 = vst [vmem:[#allocation2 + $0x88] sm:$0xff] 0.0
        %289 = vst [vmem:[#allocation2 + $0x90] sm:$0xff] 0.0
        %290 = vst [vmem:[#allocation2 + $0x98] sm:$0xff] 0.0
        %291 = vst [vmem:[#allocation2 + $0xa0] sm:$0xff] 0.0
        %292 = vst [vmem:[#allocation2 + $0xa8] sm:$0xff] 0.0
        %293 = vst [vmem:[#allocation2 + $0xb0] sm:$0xff] 0.0
        %294 = vst [vmem:[#allocation2 + $0xb8] sm:$0xff] 0.0
        %295 = vst [vmem:[#allocation2 + $0xc0] sm:$0xff] 0.0
        %296 = vst [vmem:[#allocation2 + $0xc8] sm:$0xff] 0.0
        %297 = vst [vmem:[#allocation2 + $0xd0] sm:$0xff] 0.0
        %298 = vst [vmem:[#allocation2 + $0xd8] sm:$0xff] 0.0
        %299 = vst [vmem:[#allocation2 + $0xe0] sm:$0xff] 0.0
        %300 = vst [vmem:[#allocation2 + $0xe8] sm:$0xff] 0.0
        %301 = vst [vmem:[#allocation2 + $0xf0] sm:$0xff] 0.0
        %302 = vst [vmem:[#allocation2 + $0xf8] sm:$0xff] 0.0
      $region36: #{resnet_generator_forward.94} parent=31 // pred_fallthru
        _
      %v303 = vld [vmem:[#allocation2] sm:$0xff]
      %v304 = vld [vmem:[#allocation2 + $0x8] sm:$0xff]
      %v305 = vld [vmem:[#allocation2 + $0x10] sm:$0xff]
      %v306 = vld [vmem:[#allocation2 + $0x18] sm:$0xff]
      %v307 = vld [vmem:[#allocation2 + $0x20] sm:$0xff]
      %v308 = vld [vmem:[#allocation2 + $0x28] sm:$0xff]
      %v309 = vld [vmem:[#allocation2 + $0x30] sm:$0xff]
      %v310 = vld [vmem:[#allocation2 + $0x38] sm:$0xff]
      %v311 = vld [vmem:[#allocation2 + $0x40] sm:$0xff]
      %v312 = vld [vmem:[#allocation2 + $0x48] sm:$0xff]
      %v313 = vld [vmem:[#allocation2 + $0x50] sm:$0xff]
      %v314 = vld [vmem:[#allocation2 + $0x58] sm:$0xff]
      %v315 = vld [vmem:[#allocation2 + $0x60] sm:$0xff]
      %v316 = vld [vmem:[#allocation2 + $0x68] sm:$0xff]
      %v317 = vld [vmem:[#allocation2 + $0x70] sm:$0xff]
      %v318 = vld [vmem:[#allocation2 + $0x78] sm:$0xff]
      %v319 = vld [vmem:[#allocation2 + $0x80] sm:$0xff]
      %v320 = vld [vmem:[#allocation2 + $0x88] sm:$0xff]
      %v321 = vld [vmem:[#allocation2 + $0x90] sm:$0xff]
      %v322 = vld [vmem:[#allocation2 + $0x98] sm:$0xff]
      %v323 = vld [vmem:[#allocation2 + $0xa0] sm:$0xff]
      %v324 = vld [vmem:[#allocation2 + $0xa8] sm:$0xff]
      %v325 = vld [vmem:[#allocation2 + $0xb0] sm:$0xff]
      %v326 = vld [vmem:[#allocation2 + $0xb8] sm:$0xff]
      %v327 = vld [vmem:[#allocation2 + $0xc0] sm:$0xff]
      %v328 = vld [vmem:[#allocation2 + $0xc8] sm:$0xff]
      %v329 = vld [vmem:[#allocation2 + $0xd0] sm:$0xff]
      %v330 = vld [vmem:[#allocation2 + $0xd8] sm:$0xff]
      %v331 = vld [vmem:[#allocation2 + $0xe0] sm:$0xff]
      %v332 = vld [vmem:[#allocation2 + $0xe8] sm:$0xff]
      %v333 = vld [vmem:[#allocation2 + $0xf0] sm:$0xff]
      %v334 = vld [vmem:[#allocation2 + $0xf8] sm:$0xff]
      %v335 = vld [vmem:[%s243] sm:$0xff]
      %v336 = vld [vmem:[%s243 + $0x8] sm:$0xff]
      %v337 = vld [vmem:[%s243 + $0x10] sm:$0xff]
      %v338 = vld [vmem:[%s243 + $0x18] sm:$0xff]
      %v339 = vld [vmem:[%s243 + $0x20] sm:$0xff]
      %v340 = vld [vmem:[%s243 + $0x28] sm:$0xff]
      %v341 = vld [vmem:[%s243 + $0x30] sm:$0xff]
      %v342 = vld [vmem:[%s243 + $0x38] sm:$0xff]
      %v343 = vld [vmem:[%s243 + $0x40] sm:$0xff]
      %v344 = vld [vmem:[%s243 + $0x48] sm:$0xff]
      %v345 = vld [vmem:[%s243 + $0x50] sm:$0xff]
      %v346 = vld [vmem:[%s243 + $0x58] sm:$0xff]
      %v347 = vld [vmem:[%s243 + $0x60] sm:$0xff]
      %v348 = vld [vmem:[%s243 + $0x68] sm:$0xff]
      %v349 = vld [vmem:[%s243 + $0x70] sm:$0xff]
      %v350 = vld [vmem:[%s243 + $0x78] sm:$0xff]
      %v351 = vld [vmem:[%s243 + $0x80] sm:$0xff]
      %v352 = vld [vmem:[%s243 + $0x88] sm:$0xff]
      %v353 = vld [vmem:[%s243 + $0x90] sm:$0xff]
      %v354 = vld [vmem:[%s243 + $0x98] sm:$0xff]
      %v355 = vld [vmem:[%s243 + $0xa0] sm:$0xff]
      %v356 = vld [vmem:[%s243 + $0xa8] sm:$0xff]
      %v357 = vld [vmem:[%s243 + $0xb0] sm:$0xff]
      %v358 = vld [vmem:[%s243 + $0xb8] sm:$0xff]
      %v359 = vld [vmem:[%s243 + $0xc0] sm:$0xff]
      %v360 = vld [vmem:[%s243 + $0xc8] sm:$0xff]
      %v361 = vld [vmem:[%s243 + $0xd0] sm:$0xff]
      %v362 = vld [vmem:[%s243 + $0xd8] sm:$0xff]
      %v363 = vld [vmem:[%s243 + $0xe0] sm:$0xff]
      %v364 = vld [vmem:[%s243 + $0xe8] sm:$0xff]
      %v365 = vld [vmem:[%s243 + $0xf0] sm:$0xff]
      %v366 = vld [vmem:[%s243 + $0xf8] sm:$0xff]
      %v367 = vld [vmem:[%s243 + $0x100] sm:$0xff]
      %v368 = vld [vmem:[%s243 + $0x108] sm:$0xff]
      %v369 = vld [vmem:[%s243 + $0x110] sm:$0xff]
      %v370 = vld [vmem:[%s243 + $0x118] sm:$0xff]
      %v371 = vld [vmem:[%s243 + $0x120] sm:$0xff]
      %v372 = vld [vmem:[%s243 + $0x128] sm:$0xff]
      %v373 = vld [vmem:[%s243 + $0x130] sm:$0xff]
      %v374 = vld [vmem:[%s243 + $0x138] sm:$0xff]
      %v375 = vld [vmem:[%s243 + $0x140] sm:$0xff]
      %v376 = vld [vmem:[%s243 + $0x148] sm:$0xff]
      %v377 = vld [vmem:[%s243 + $0x150] sm:$0xff]
      %v378 = vld [vmem:[%s243 + $0x158] sm:$0xff]
      %v379 = vld [vmem:[%s243 + $0x160] sm:$0xff]
      %v380 = vld [vmem:[%s243 + $0x168] sm:$0xff]
      %v381 = vld [vmem:[%s243 + $0x170] sm:$0xff]
      %v382 = vld [vmem:[%s243 + $0x178] sm:$0xff]
      %v383 = vld [vmem:[%s243 + $0x180] sm:$0xff]
      %v384 = vld [vmem:[%s243 + $0x188] sm:$0xff]
      %v385 = vld [vmem:[%s243 + $0x190] sm:$0xff]
      %v386 = vld [vmem:[%s243 + $0x198] sm:$0xff]
      %v387 = vld [vmem:[%s243 + $0x1a0] sm:$0xff]
      %v388 = vld [vmem:[%s243 + $0x1a8] sm:$0xff]
      %v389 = vld [vmem:[%s243 + $0x1b0] sm:$0xff]
      %v390 = vld [vmem:[%s243 + $0x1b8] sm:$0xff]
      %v391 = vld [vmem:[%s243 + $0x1c0] sm:$0xff]
      %v392 = vld [vmem:[%s243 + $0x1c8] sm:$0xff]
      %v393 = vld [vmem:[%s243 + $0x1d0] sm:$0xff]
      %v394 = vld [vmem:[%s243 + $0x1d8] sm:$0xff]
      %v395 = vld [vmem:[%s243 + $0x1e0] sm:$0xff]
      %v396 = vld [vmem:[%s243 + $0x1e8] sm:$0xff]
      %v397 = vld [vmem:[%s243 + $0x1f0] sm:$0xff]
      %v398 = vld [vmem:[%s243 + $0x1f8] sm:$0xff]
      %v399 = vld [vmem:[%s253] sm:$0xf]
      %v400 = vld [vmem:[%s253 + $0x4] sm:$0xf]
      %v401 = vld [vmem:[%s253 + $0x8] sm:$0xf]
      %v402 = vld [vmem:[%s253 + $0xc] sm:$0xf]
      %v403 = vld [vmem:[%s253 + $0x10] sm:$0xf]
      %v404 = vld [vmem:[%s253 + $0x14] sm:$0xf]
      %v405 = vld [vmem:[%s253 + $0x18] sm:$0xf]
      %v406 = vld [vmem:[%s253 + $0x1c] sm:$0xf]
      %v407 = vld [vmem:[%s253 + $0x20] sm:$0xf]
      %v408 = vld [vmem:[%s253 + $0x24] sm:$0xf]
      %v409 = vld [vmem:[%s253 + $0x28] sm:$0xf]
      %v410 = vld [vmem:[%s253 + $0x2c] sm:$0xf]
      %v411 = vld [vmem:[%s253 + $0x30] sm:$0xf]
      %v412 = vld [vmem:[%s253 + $0x34] sm:$0xf]
      %v413 = vld [vmem:[%s253 + $0x38] sm:$0xf]
      %v414 = vld [vmem:[%s253 + $0x3c] sm:$0xf]
      %v415 = vld [vmem:[%s253 + $0x40] sm:$0xf]
      %v416 = vld [vmem:[%s253 + $0x44] sm:$0xf]
      %v417 = vld [vmem:[%s253 + $0x48] sm:$0xf]
      %v418 = vld [vmem:[%s253 + $0x4c] sm:$0xf]
      %v419 = vld [vmem:[%s253 + $0x50] sm:$0xf]
      %v420 = vld [vmem:[%s253 + $0x54] sm:$0xf]
      %v421 = vld [vmem:[%s253 + $0x58] sm:$0xf]
      %v422 = vld [vmem:[%s253 + $0x5c] sm:$0xf]
      %v423 = vld [vmem:[%s253 + $0x60] sm:$0xf]
      %v424 = vld [vmem:[%s253 + $0x64] sm:$0xf]
      %v425 = vld [vmem:[%s253 + $0x68] sm:$0xf]
      %v426 = vld [vmem:[%s253 + $0x6c] sm:$0xf]
      %v427 = vld [vmem:[%s253 + $0x70] sm:$0xf]
      %v428 = vld [vmem:[%s253 + $0x74] sm:$0xf]
      %v429 = vld [vmem:[%s253 + $0x78] sm:$0xf]
      %v430 = vld [vmem:[%s253 + $0x7c] sm:$0xf]
      %v431 = vld [vmem:[%s253 + $0x80] sm:$0xf]
      %v432 = vld [vmem:[%s253 + $0x84] sm:$0xf]
      %v433 = vld [vmem:[%s253 + $0x88] sm:$0xf]
      %v434 = vld [vmem:[%s253 + $0x8c] sm:$0xf]
      %v435 = vld [vmem:[%s253 + $0x90] sm:$0xf]
      %v436 = vld [vmem:[%s253 + $0x94] sm:$0xf]
      %v437 = vld [vmem:[%s253 + $0x98] sm:$0xf]
      %v438 = vld [vmem:[%s253 + $0x9c] sm:$0xf]
      %v439 = vld [vmem:[%s253 + $0xa0] sm:$0xf]
      %v440 = vld [vmem:[%s253 + $0xa4] sm:$0xf]
      %v441 = vld [vmem:[%s253 + $0xa8] sm:$0xf]
      %v442 = vld [vmem:[%s253 + $0xac] sm:$0xf]
      %v443 = vld [vmem:[%s253 + $0xb0] sm:$0xf]
      %v444 = vld [vmem:[%s253 + $0xb4] sm:$0xf]
      %v445 = vld [vmem:[%s253 + $0xb8] sm:$0xf]
      %v446 = vld [vmem:[%s253 + $0xbc] sm:$0xf]
      %v447 = vld [vmem:[%s253 + $0xc0] sm:$0xf]
      %v448 = vld [vmem:[%s253 + $0xc4] sm:$0xf]
      %v449 = vld [vmem:[%s253 + $0xc8] sm:$0xf]
      %v450 = vld [vmem:[%s253 + $0xcc] sm:$0xf]
      %v451 = vld [vmem:[%s253 + $0xd0] sm:$0xf]
      %v452 = vld [vmem:[%s253 + $0xd4] sm:$0xf]
      %v453 = vld [vmem:[%s253 + $0xd8] sm:$0xf]
      %v454 = vld [vmem:[%s253 + $0xdc] sm:$0xf]
      %v455 = vld [vmem:[%s253 + $0xe0] sm:$0xf]
      %v456 = vld [vmem:[%s253 + $0xe4] sm:$0xf]
      %v457 = vld [vmem:[%s253 + $0xe8] sm:$0xf]
      %v458 = vld [vmem:[%s253 + $0xec] sm:$0xf]
      %v459 = vld [vmem:[%s253 + $0xf0] sm:$0xf]
      %v460 = vld [vmem:[%s253 + $0xf4] sm:$0xf]
      %v461 = vld [vmem:[%s253 + $0xf8] sm:$0xf]
      %v462 = vld [vmem:[%s253 + $0xfc] sm:$0xf]
      %v527 = vunpack.c.l.b16 %v335
      %v528 = vunpack.c.h.b16 %v335
      %v529 = vunpack.c.l.b16 %v336
      %v530 = vunpack.c.h.b16 %v336
      %v531 = vunpack.c.l.b16 %v337
      %v532 = vunpack.c.h.b16 %v337
      %v533 = vunpack.c.l.b16 %v338
      %v534 = vunpack.c.h.b16 %v338
      %v535 = vunpack.c.l.b16 %v339
      %v536 = vunpack.c.h.b16 %v339
      %v537 = vunpack.c.l.b16 %v340
      %v538 = vunpack.c.h.b16 %v340
      %v539 = vunpack.c.l.b16 %v341
      %v540 = vunpack.c.h.b16 %v341
      %v541 = vunpack.c.l.b16 %v342
      %v542 = vunpack.c.h.b16 %v342
      %v543 = vunpack.c.l.b16 %v343
      %v544 = vunpack.c.h.b16 %v343
      %v545 = vunpack.c.l.b16 %v344
      %v546 = vunpack.c.h.b16 %v344
      %v547 = vunpack.c.l.b16 %v345
      %v548 = vunpack.c.h.b16 %v345
      %v549 = vunpack.c.l.b16 %v346
      %v550 = vunpack.c.h.b16 %v346
      %v551 = vunpack.c.l.b16 %v347
      %v552 = vunpack.c.h.b16 %v347
      %v553 = vunpack.c.l.b16 %v348
      %v554 = vunpack.c.h.b16 %v348
      %v555 = vunpack.c.l.b16 %v349
      %v556 = vunpack.c.h.b16 %v349
      %v557 = vunpack.c.l.b16 %v350
      %v558 = vunpack.c.h.b16 %v350
      %v559 = vunpack.c.l.b16 %v351
      %v560 = vunpack.c.h.b16 %v351
      %v561 = vunpack.c.l.b16 %v352
      %v562 = vunpack.c.h.b16 %v352
      %v563 = vunpack.c.l.b16 %v353
      %v564 = vunpack.c.h.b16 %v353
      %v565 = vunpack.c.l.b16 %v354
      %v566 = vunpack.c.h.b16 %v354
      %v567 = vunpack.c.l.b16 %v355
      %v568 = vunpack.c.h.b16 %v355
      %v569 = vunpack.c.l.b16 %v356
      %v570 = vunpack.c.h.b16 %v356
      %v571 = vunpack.c.l.b16 %v357
      %v572 = vunpack.c.h.b16 %v357
      %v573 = vunpack.c.l.b16 %v358
      %v574 = vunpack.c.h.b16 %v358
      %v575 = vunpack.c.l.b16 %v359
      %v576 = vunpack.c.h.b16 %v359
      %v577 = vunpack.c.l.b16 %v360
      %v578 = vunpack.c.h.b16 %v360
      %v579 = vunpack.c.l.b16 %v361
      %v580 = vunpack.c.h.b16 %v361
      %v581 = vunpack.c.l.b16 %v362
      %v582 = vunpack.c.h.b16 %v362
      %v583 = vunpack.c.l.b16 %v363
      %v584 = vunpack.c.h.b16 %v363
      %v585 = vunpack.c.l.b16 %v364
      %v586 = vunpack.c.h.b16 %v364
      %v587 = vunpack.c.l.b16 %v365
      %v588 = vunpack.c.h.b16 %v365
      %v589 = vunpack.c.l.b16 %v366
      %v590 = vunpack.c.h.b16 %v366
      %v591 = vunpack.c.l.b16 %v367
      %v592 = vunpack.c.h.b16 %v367
      %v593 = vunpack.c.l.b16 %v368
      %v594 = vunpack.c.h.b16 %v368
      %v595 = vunpack.c.l.b16 %v369
      %v596 = vunpack.c.h.b16 %v369
      %v597 = vunpack.c.l.b16 %v370
      %v598 = vunpack.c.h.b16 %v370
      %v599 = vunpack.c.l.b16 %v371
      %v600 = vunpack.c.h.b16 %v371
      %v601 = vunpack.c.l.b16 %v372
      %v602 = vunpack.c.h.b16 %v372
      %v603 = vunpack.c.l.b16 %v373
      %v604 = vunpack.c.h.b16 %v373
      %v605 = vunpack.c.l.b16 %v374
      %v606 = vunpack.c.h.b16 %v374
      %v607 = vunpack.c.l.b16 %v375
      %v608 = vunpack.c.h.b16 %v375
      %v609 = vunpack.c.l.b16 %v376
      %v610 = vunpack.c.h.b16 %v376
      %v611 = vunpack.c.l.b16 %v377
      %v612 = vunpack.c.h.b16 %v377
      %v613 = vunpack.c.l.b16 %v378
      %v614 = vunpack.c.h.b16 %v378
      %v615 = vunpack.c.l.b16 %v379
      %v616 = vunpack.c.h.b16 %v379
      %v617 = vunpack.c.l.b16 %v380
      %v618 = vunpack.c.h.b16 %v380
      %v619 = vunpack.c.l.b16 %v381
      %v620 = vunpack.c.h.b16 %v381
      %v621 = vunpack.c.l.b16 %v382
      %v622 = vunpack.c.h.b16 %v382
      %v623 = vunpack.c.l.b16 %v383
      %v624 = vunpack.c.h.b16 %v383
      %v625 = vunpack.c.l.b16 %v384
      %v626 = vunpack.c.h.b16 %v384
      %v627 = vunpack.c.l.b16 %v385
      %v628 = vunpack.c.h.b16 %v385
      %v629 = vunpack.c.l.b16 %v386
      %v630 = vunpack.c.h.b16 %v386
      %v631 = vunpack.c.l.b16 %v387
      %v632 = vunpack.c.h.b16 %v387
      %v633 = vunpack.c.l.b16 %v388
      %v634 = vunpack.c.h.b16 %v388
      %v635 = vunpack.c.l.b16 %v389
      %v636 = vunpack.c.h.b16 %v389
      %v637 = vunpack.c.l.b16 %v390
      %v638 = vunpack.c.h.b16 %v390
      %v639 = vunpack.c.l.b16 %v391
      %v640 = vunpack.c.h.b16 %v391
      %v641 = vunpack.c.l.b16 %v392
      %v642 = vunpack.c.h.b16 %v392
      %v643 = vunpack.c.l.b16 %v393
      %v644 = vunpack.c.h.b16 %v393
      %v645 = vunpack.c.l.b16 %v394
      %v646 = vunpack.c.h.b16 %v394
      %v647 = vunpack.c.l.b16 %v395
      %v648 = vunpack.c.h.b16 %v395
      %v649 = vunpack.c.l.b16 %v396
      %v650 = vunpack.c.h.b16 %v396
      %v651 = vunpack.c.l.b16 %v397
      %v652 = vunpack.c.h.b16 %v397
      %v653 = vunpack.c.l.b16 %v398
      %v654 = vunpack.c.h.b16 %v398
      %v655 = vpack.c.b16 %v531, %v527
      %v656 = vpack.c.b16 %v532, %v528
      %v657 = vpack.c.b16 %v533, %v529
      %v658 = vpack.c.b16 %v534, %v530
      %v659 = vpack.c.b16 %v539, %v535
      %v660 = vpack.c.b16 %v540, %v536
      %v661 = vpack.c.b16 %v541, %v537
      %v662 = vpack.c.b16 %v542, %v538
      %v663 = vpack.c.b16 %v547, %v543
      %v664 = vpack.c.b16 %v548, %v544
      %v665 = vpack.c.b16 %v549, %v545
      %v666 = vpack.c.b16 %v550, %v546
      %v667 = vpack.c.b16 %v555, %v551
      %v668 = vpack.c.b16 %v556, %v552
      %v669 = vpack.c.b16 %v557, %v553
      %v670 = vpack.c.b16 %v558, %v554
      %v671 = vpack.c.b16 %v563, %v559
      %v672 = vpack.c.b16 %v564, %v560
      %v673 = vpack.c.b16 %v565, %v561
      %v674 = vpack.c.b16 %v566, %v562
      %v675 = vpack.c.b16 %v571, %v567
      %v676 = vpack.c.b16 %v572, %v568
      %v677 = vpack.c.b16 %v573, %v569
      %v678 = vpack.c.b16 %v574, %v570
      %v679 = vpack.c.b16 %v579, %v575
      %v680 = vpack.c.b16 %v580, %v576
      %v681 = vpack.c.b16 %v581, %v577
      %v682 = vpack.c.b16 %v582, %v578
      %v683 = vpack.c.b16 %v587, %v583
      %v684 = vpack.c.b16 %v588, %v584
      %v685 = vpack.c.b16 %v589, %v585
      %v686 = vpack.c.b16 %v590, %v586
      %v687 = vpack.c.b16 %v595, %v591
      %v688 = vpack.c.b16 %v596, %v592
      %v689 = vpack.c.b16 %v597, %v593
      %v690 = vpack.c.b16 %v598, %v594
      %v691 = vpack.c.b16 %v603, %v599
      %v692 = vpack.c.b16 %v604, %v600
      %v693 = vpack.c.b16 %v605, %v601
      %v694 = vpack.c.b16 %v606, %v602
      %v695 = vpack.c.b16 %v611, %v607
      %v696 = vpack.c.b16 %v612, %v608
      %v697 = vpack.c.b16 %v613, %v609
      %v698 = vpack.c.b16 %v614, %v610
      %v699 = vpack.c.b16 %v619, %v615
      %v700 = vpack.c.b16 %v620, %v616
      %v701 = vpack.c.b16 %v621, %v617
      %v702 = vpack.c.b16 %v622, %v618
      %v703 = vpack.c.b16 %v627, %v623
      %v704 = vpack.c.b16 %v628, %v624
      %v705 = vpack.c.b16 %v629, %v625
      %v706 = vpack.c.b16 %v630, %v626
      %v707 = vpack.c.b16 %v635, %v631
      %v708 = vpack.c.b16 %v636, %v632
      %v709 = vpack.c.b16 %v637, %v633
      %v710 = vpack.c.b16 %v638, %v634
      %v711 = vpack.c.b16 %v643, %v639
      %v712 = vpack.c.b16 %v644, %v640
      %v713 = vpack.c.b16 %v645, %v641
      %v714 = vpack.c.b16 %v646, %v642
      %v715 = vpack.c.b16 %v651, %v647
      %v716 = vpack.c.b16 %v652, %v648
      %v717 = vpack.c.b16 %v653, %v649
      %v718 = vpack.c.b16 %v654, %v650
      %v847 = vunpack.c.l.b16 %v399
      %v848 = vunpack.c.l.b16 %v400
      %v849 = vunpack.c.l.b16 %v401
      %v850 = vunpack.c.l.b16 %v402
      %v851 = vunpack.c.l.b16 %v403
      %v852 = vunpack.c.l.b16 %v404
      %v853 = vunpack.c.l.b16 %v405
      %v854 = vunpack.c.l.b16 %v406
      %v855 = vunpack.c.l.b16 %v407
      %v856 = vunpack.c.l.b16 %v408
      %v857 = vunpack.c.l.b16 %v409
      %v858 = vunpack.c.l.b16 %v410
      %v859 = vunpack.c.l.b16 %v411
      %v860 = vunpack.c.l.b16 %v412
      %v861 = vunpack.c.l.b16 %v413
      %v862 = vunpack.c.l.b16 %v414
      %v863 = vunpack.c.l.b16 %v415
      %v864 = vunpack.c.l.b16 %v416
      %v865 = vunpack.c.l.b16 %v417
      %v866 = vunpack.c.l.b16 %v418
      %v867 = vunpack.c.l.b16 %v419
      %v868 = vunpack.c.l.b16 %v420
      %v869 = vunpack.c.l.b16 %v421
      %v870 = vunpack.c.l.b16 %v422
      %v871 = vunpack.c.l.b16 %v423
      %v872 = vunpack.c.l.b16 %v424
      %v873 = vunpack.c.l.b16 %v425
      %v874 = vunpack.c.l.b16 %v426
      %v875 = vunpack.c.l.b16 %v427
      %v876 = vunpack.c.l.b16 %v428
      %v877 = vunpack.c.l.b16 %v429
      %v878 = vunpack.c.l.b16 %v430
      %v879 = vunpack.c.l.b16 %v431
      %v880 = vunpack.c.l.b16 %v432
      %v881 = vunpack.c.l.b16 %v433
      %v882 = vunpack.c.l.b16 %v434
      %v883 = vunpack.c.l.b16 %v435
      %v884 = vunpack.c.l.b16 %v436
      %v885 = vunpack.c.l.b16 %v437
      %v886 = vunpack.c.l.b16 %v438
      %v887 = vunpack.c.l.b16 %v439
      %v888 = vunpack.c.l.b16 %v440
      %v889 = vunpack.c.l.b16 %v441
      %v890 = vunpack.c.l.b16 %v442
      %v891 = vunpack.c.l.b16 %v443
      %v892 = vunpack.c.l.b16 %v444
      %v893 = vunpack.c.l.b16 %v445
      %v894 = vunpack.c.l.b16 %v446
      %v895 = vunpack.c.l.b16 %v447
      %v896 = vunpack.c.l.b16 %v448
      %v897 = vunpack.c.l.b16 %v449
      %v898 = vunpack.c.l.b16 %v450
      %v899 = vunpack.c.l.b16 %v451
      %v900 = vunpack.c.l.b16 %v452
      %v901 = vunpack.c.l.b16 %v453
      %v902 = vunpack.c.l.b16 %v454
      %v903 = vunpack.c.l.b16 %v455
      %v904 = vunpack.c.l.b16 %v456
      %v905 = vunpack.c.l.b16 %v457
      %v906 = vunpack.c.l.b16 %v458
      %v907 = vunpack.c.l.b16 %v459
      %v908 = vunpack.c.l.b16 %v460
      %v909 = vunpack.c.l.b16 %v461
      %v910 = vunpack.c.l.b16 %v462
      %v911 = vpack.c.b16 %v848, %v847
      %v912 = vpack.c.b16 %v850, %v849
      %v913 = vpack.c.b16 %v852, %v851
      %v914 = vpack.c.b16 %v854, %v853
      %v915 = vpack.c.b16 %v856, %v855
      %v916 = vpack.c.b16 %v858, %v857
      %v917 = vpack.c.b16 %v860, %v859
      %v918 = vpack.c.b16 %v862, %v861
      %v919 = vpack.c.b16 %v864, %v863
      %v920 = vpack.c.b16 %v866, %v865
      %v921 = vpack.c.b16 %v868, %v867
      %v922 = vpack.c.b16 %v870, %v869
      %v923 = vpack.c.b16 %v872, %v871
      %v924 = vpack.c.b16 %v874, %v873
      %v925 = vpack.c.b16 %v876, %v875
      %v926 = vpack.c.b16 %v878, %v877
      %v927 = vpack.c.b16 %v880, %v879
      %v928 = vpack.c.b16 %v882, %v881
      %v929 = vpack.c.b16 %v884, %v883
      %v930 = vpack.c.b16 %v886, %v885
      %v931 = vpack.c.b16 %v888, %v887
      %v932 = vpack.c.b16 %v890, %v889
      %v933 = vpack.c.b16 %v892, %v891
      %v934 = vpack.c.b16 %v894, %v893
      %v935 = vpack.c.b16 %v896, %v895
      %v936 = vpack.c.b16 %v898, %v897
      %v937 = vpack.c.b16 %v900, %v899
      %v938 = vpack.c.b16 %v902, %v901
      %v939 = vpack.c.b16 %v904, %v903
      %v940 = vpack.c.b16 %v906, %v905
      %v941 = vpack.c.b16 %v908, %v907
      %v942 = vpack.c.b16 %v910, %v909
      %975 = vmatpush.bf16.msra.mxu0 %v918
      %976 = vmatpush.bf16.msra.mxu0 %v917
      %977 = vmatpush.bf16.msra.mxu0 %v916
      %978 = vmatpush.bf16.msra.mxu0 %v915
      %979 = vmatpush.bf16.msra.mxu0 %v914
      %980 = vmatpush.bf16.msra.mxu0 %v913
      %981 = vmatpush.bf16.msra.mxu0 %v912
      %982 = vmatpush.bf16.msra.mxu0 %v911
      %983 = vmatmul.bf16.gmra.mxu0 %v655
      %v984 = vpop.f32.mrf.mxu0
      %v985 = vadd.f32 0.0, %v984
      %v986 = vpop.f32.mrf.mxu0
      %v987 = vadd.f32 0.0, %v986
      %988 = vmatmul.bf16.gmra.mxu0 %v659
      %v989 = vpop.f32.mrf.mxu0
      %v990 = vadd.f32 0.0, %v989
      %v991 = vpop.f32.mrf.mxu0
      %v992 = vadd.f32 0.0, %v991
      %993 = vmatmul.bf16.gmra.mxu0 %v663
      %v994 = vpop.f32.mrf.mxu0
      %v995 = vadd.f32 0.0, %v994
      %v996 = vpop.f32.mrf.mxu0
      %v997 = vadd.f32 0.0, %v996
      %998 = vmatmul.bf16.gmra.mxu0 %v667
      %v999 = vpop.f32.mrf.mxu0
      %v1000 = vadd.f32 0.0, %v999
      %v1001 = vpop.f32.mrf.mxu0
      %v1002 = vadd.f32 0.0, %v1001
      %1003 = vmatmul.bf16.gmra.mxu0 %v671
      %v1004 = vpop.f32.mrf.mxu0
      %v1005 = vadd.f32 0.0, %v1004
      %v1006 = vpop.f32.mrf.mxu0
      %v1007 = vadd.f32 0.0, %v1006
      %1008 = vmatmul.bf16.gmra.mxu0 %v675
      %v1009 = vpop.f32.mrf.mxu0
      %v1010 = vadd.f32 0.0, %v1009
      %v1011 = vpop.f32.mrf.mxu0
      %v1012 = vadd.f32 0.0, %v1011
      %1013 = vmatmul.bf16.gmra.mxu0 %v679
      %v1014 = vpop.f32.mrf.mxu0
      %v1015 = vadd.f32 0.0, %v1014
      %v1016 = vpop.f32.mrf.mxu0
      %v1017 = vadd.f32 0.0, %v1016
      %1018 = vmatmul.bf16.gmra.mxu0 %v683
      %v1019 = vpop.f32.mrf.mxu0
      %v1020 = vadd.f32 0.0, %v1019
      %v1021 = vpop.f32.mrf.mxu0
      %v1022 = vadd.f32 0.0, %v1021
      %1023 = vmatmul.bf16.gmra.mxu0 %v687
      %v1024 = vpop.f32.mrf.mxu0
      %v1025 = vadd.f32 0.0, %v1024
      %v1026 = vpop.f32.mrf.mxu0
      %v1027 = vadd.f32 0.0, %v1026
      %1028 = vmatmul.bf16.gmra.mxu0 %v691
      %v1029 = vpop.f32.mrf.mxu0
      %v1030 = vadd.f32 0.0, %v1029
      %v1031 = vpop.f32.mrf.mxu0
      %v1032 = vadd.f32 0.0, %v1031
      %1033 = vmatmul.bf16.gmra.mxu0 %v695
      %v1034 = vpop.f32.mrf.mxu0
      %v1035 = vadd.f32 0.0, %v1034
      %v1036 = vpop.f32.mrf.mxu0
      %v1037 = vadd.f32 0.0, %v1036
      %1038 = vmatmul.bf16.gmra.mxu0 %v699
      %v1039 = vpop.f32.mrf.mxu0
      %v1040 = vadd.f32 0.0, %v1039
      %v1041 = vpop.f32.mrf.mxu0
      %v1042 = vadd.f32 0.0, %v1041
      %1043 = vmatmul.bf16.gmra.mxu0 %v703
      %v1044 = vpop.f32.mrf.mxu0
      %v1045 = vadd.f32 0.0, %v1044
      %v1046 = vpop.f32.mrf.mxu0
      %v1047 = vadd.f32 0.0, %v1046
      %1048 = vmatmul.bf16.gmra.mxu0 %v707
      %v1049 = vpop.f32.mrf.mxu0
      %v1050 = vadd.f32 0.0, %v1049
      %v1051 = vpop.f32.mrf.mxu0
      %v1052 = vadd.f32 0.0, %v1051
      %1053 = vmatmul.bf16.gmra.mxu0 %v711
      %v1054 = vpop.f32.mrf.mxu0
      %v1055 = vadd.f32 0.0, %v1054
      %v1056 = vpop.f32.mrf.mxu0
      %v1057 = vadd.f32 0.0, %v1056
      %1058 = vmatmul.bf16.gmra.mxu0 %v715
      %v1059 = vpop.f32.mrf.mxu0
      %v1060 = vadd.f32 0.0, %v1059
      %v1061 = vpop.f32.mrf.mxu0
      %v1062 = vadd.f32 0.0, %v1061
      %1063 = vdwg.mxu0
      %1064 = vmatpush.bf16.msra.mxu0 %v926
      %1065 = vmatpush.bf16.msra.mxu0 %v925
      %1066 = vmatpush.bf16.msra.mxu0 %v924
      %1067 = vmatpush.bf16.msra.mxu0 %v923
      %1068 = vmatpush.bf16.msra.mxu0 %v922
      %1069 = vmatpush.bf16.msra.mxu0 %v921
      %1070 = vmatpush.bf16.msra.mxu0 %v920
      %1071 = vmatpush.bf16.msra.mxu0 %v919
      %1072 = vmatmul.bf16.gmra.mxu0 %v656
      %v1073 = vpop.f32.mrf.mxu0
      %v1074 = vadd.f32 %v985, %v1073
      %v1075 = vpop.f32.mrf.mxu0
      %v1076 = vadd.f32 %v987, %v1075
      %1077 = vmatmul.bf16.gmra.mxu0 %v660
      %v1078 = vpop.f32.mrf.mxu0
      %v1079 = vadd.f32 %v990, %v1078
      %v1080 = vpop.f32.mrf.mxu0
      %v1081 = vadd.f32 %v992, %v1080
      %1082 = vmatmul.bf16.gmra.mxu0 %v664
      %v1083 = vpop.f32.mrf.mxu0
      %v1084 = vadd.f32 %v995, %v1083
      %v1085 = vpop.f32.mrf.mxu0
      %v1086 = vadd.f32 %v997, %v1085
      %1087 = vmatmul.bf16.gmra.mxu0 %v668
      %v1088 = vpop.f32.mrf.mxu0
      %v1089 = vadd.f32 %v1000, %v1088
      %v1090 = vpop.f32.mrf.mxu0
      %v1091 = vadd.f32 %v1002, %v1090
      %1092 = vmatmul.bf16.gmra.mxu0 %v672
      %v1093 = vpop.f32.mrf.mxu0
      %v1094 = vadd.f32 %v1005, %v1093
      %v1095 = vpop.f32.mrf.mxu0
      %v1096 = vadd.f32 %v1007, %v1095
      %1097 = vmatmul.bf16.gmra.mxu0 %v676
      %v1098 = vpop.f32.mrf.mxu0
      %v1099 = vadd.f32 %v1010, %v1098
      %v1100 = vpop.f32.mrf.mxu0
      %v1101 = vadd.f32 %v1012, %v1100
      %1102 = vmatmul.bf16.gmra.mxu0 %v680
      %v1103 = vpop.f32.mrf.mxu0
      %v1104 = vadd.f32 %v1015, %v1103
      %v1105 = vpop.f32.mrf.mxu0
      %v1106 = vadd.f32 %v1017, %v1105
      %1107 = vmatmul.bf16.gmra.mxu0 %v684
      %v1108 = vpop.f32.mrf.mxu0
      %v1109 = vadd.f32 %v1020, %v1108
      %v1110 = vpop.f32.mrf.mxu0
      %v1111 = vadd.f32 %v1022, %v1110
      %1112 = vmatmul.bf16.gmra.mxu0 %v688
      %v1113 = vpop.f32.mrf.mxu0
      %v1114 = vadd.f32 %v1025, %v1113
      %v1115 = vpop.f32.mrf.mxu0
      %v1116 = vadd.f32 %v1027, %v1115
      %1117 = vmatmul.bf16.gmra.mxu0 %v692
      %v1118 = vpop.f32.mrf.mxu0
      %v1119 = vadd.f32 %v1030, %v1118
      %v1120 = vpop.f32.mrf.mxu0
      %v1121 = vadd.f32 %v1032, %v1120
      %1122 = vmatmul.bf16.gmra.mxu0 %v696
      %v1123 = vpop.f32.mrf.mxu0
      %v1124 = vadd.f32 %v1035, %v1123
      %v1125 = vpop.f32.mrf.mxu0
      %v1126 = vadd.f32 %v1037, %v1125
      %1127 = vmatmul.bf16.gmra.mxu0 %v700
      %v1128 = vpop.f32.mrf.mxu0
      %v1129 = vadd.f32 %v1040, %v1128
      %v1130 = vpop.f32.mrf.mxu0
      %v1131 = vadd.f32 %v1042, %v1130
      %1132 = vmatmul.bf16.gmra.mxu0 %v704
      %v1133 = vpop.f32.mrf.mxu0
      %v1134 = vadd.f32 %v1045, %v1133
      %v1135 = vpop.f32.mrf.mxu0
      %v1136 = vadd.f32 %v1047, %v1135
      %1137 = vmatmul.bf16.gmra.mxu0 %v708
      %v1138 = vpop.f32.mrf.mxu0
      %v1139 = vadd.f32 %v1050, %v1138
      %v1140 = vpop.f32.mrf.mxu0
      %v1141 = vadd.f32 %v1052, %v1140
      %1142 = vmatmul.bf16.gmra.mxu0 %v712
      %v1143 = vpop.f32.mrf.mxu0
      %v1144 = vadd.f32 %v1055, %v1143
      %v1145 = vpop.f32.mrf.mxu0
      %v1146 = vadd.f32 %v1057, %v1145
      %1147 = vmatmul.bf16.gmra.mxu0 %v716
      %v1148 = vpop.f32.mrf.mxu0
      %v1149 = vadd.f32 %v1060, %v1148
      %v1150 = vpop.f32.mrf.mxu0
      %v1151 = vadd.f32 %v1062, %v1150
      %1152 = vdwg.mxu0
      %1153 = vmatpush.bf16.msra.mxu0 %v934
      %1154 = vmatpush.bf16.msra.mxu0 %v933
      %1155 = vmatpush.bf16.msra.mxu0 %v932
      %1156 = vmatpush.bf16.msra.mxu0 %v931
      %1157 = vmatpush.bf16.msra.mxu0 %v930
      %1158 = vmatpush.bf16.msra.mxu0 %v929
      %1159 = vmatpush.bf16.msra.mxu0 %v928
      %1160 = vmatpush.bf16.msra.mxu0 %v927
      %1161 = vmatmul.bf16.gmra.mxu0 %v657
      %v1162 = vpop.f32.mrf.mxu0
      %v1163 = vadd.f32 %v1074, %v1162
      %v1164 = vpop.f32.mrf.mxu0
      %v1165 = vadd.f32 %v1076, %v1164
      %1166 = vmatmul.bf16.gmra.mxu0 %v661
      %v1167 = vpop.f32.mrf.mxu0
      %v1168 = vadd.f32 %v1079, %v1167
      %v1169 = vpop.f32.mrf.mxu0
      %v1170 = vadd.f32 %v1081, %v1169
      %1171 = vmatmul.bf16.gmra.mxu0 %v665
      %v1172 = vpop.f32.mrf.mxu0
      %v1173 = vadd.f32 %v1084, %v1172
      %v1174 = vpop.f32.mrf.mxu0
      %v1175 = vadd.f32 %v1086, %v1174
      %1176 = vmatmul.bf16.gmra.mxu0 %v669
      %v1177 = vpop.f32.mrf.mxu0
      %v1178 = vadd.f32 %v1089, %v1177
      %v1179 = vpop.f32.mrf.mxu0
      %v1180 = vadd.f32 %v1091, %v1179
      %1181 = vmatmul.bf16.gmra.mxu0 %v673
      %v1182 = vpop.f32.mrf.mxu0
      %v1183 = vadd.f32 %v1094, %v1182
      %v1184 = vpop.f32.mrf.mxu0
      %v1185 = vadd.f32 %v1096, %v1184
      %1186 = vmatmul.bf16.gmra.mxu0 %v677
      %v1187 = vpop.f32.mrf.mxu0
      %v1188 = vadd.f32 %v1099, %v1187
      %v1189 = vpop.f32.mrf.mxu0
      %v1190 = vadd.f32 %v1101, %v1189
      %1191 = vmatmul.bf16.gmra.mxu0 %v681
      %v1192 = vpop.f32.mrf.mxu0
      %v1193 = vadd.f32 %v1104, %v1192
      %v1194 = vpop.f32.mrf.mxu0
      %v1195 = vadd.f32 %v1106, %v1194
      %1196 = vmatmul.bf16.gmra.mxu0 %v685
      %v1197 = vpop.f32.mrf.mxu0
      %v1198 = vadd.f32 %v1109, %v1197
      %v1199 = vpop.f32.mrf.mxu0
      %v1200 = vadd.f32 %v1111, %v1199
      %1201 = vmatmul.bf16.gmra.mxu0 %v689
      %v1202 = vpop.f32.mrf.mxu0
      %v1203 = vadd.f32 %v1114, %v1202
      %v1204 = vpop.f32.mrf.mxu0
      %v1205 = vadd.f32 %v1116, %v1204
      %1206 = vmatmul.bf16.gmra.mxu0 %v693
      %v1207 = vpop.f32.mrf.mxu0
      %v1208 = vadd.f32 %v1119, %v1207
      %v1209 = vpop.f32.mrf.mxu0
      %v1210 = vadd.f32 %v1121, %v1209
      %1211 = vmatmul.bf16.gmra.mxu0 %v697
      %v1212 = vpop.f32.mrf.mxu0
      %v1213 = vadd.f32 %v1124, %v1212
      %v1214 = vpop.f32.mrf.mxu0
      %v1215 = vadd.f32 %v1126, %v1214
      %1216 = vmatmul.bf16.gmra.mxu0 %v701
      %v1217 = vpop.f32.mrf.mxu0
      %v1218 = vadd.f32 %v1129, %v1217
      %v1219 = vpop.f32.mrf.mxu0
      %v1220 = vadd.f32 %v1131, %v1219
      %1221 = vmatmul.bf16.gmra.mxu0 %v705
      %v1222 = vpop.f32.mrf.mxu0
      %v1223 = vadd.f32 %v1134, %v1222
      %v1224 = vpop.f32.mrf.mxu0
      %v1225 = vadd.f32 %v1136, %v1224
      %1226 = vmatmul.bf16.gmra.mxu0 %v709
      %v1227 = vpop.f32.mrf.mxu0
      %v1228 = vadd.f32 %v1139, %v1227
      %v1229 = vpop.f32.mrf.mxu0
      %v1230 = vadd.f32 %v1141, %v1229
      %1231 = vmatmul.bf16.gmra.mxu0 %v713
      %v1232 = vpop.f32.mrf.mxu0
      %v1233 = vadd.f32 %v1144, %v1232
      %v1234 = vpop.f32.mrf.mxu0
      %v1235 = vadd.f32 %v1146, %v1234
      %1236 = vmatmul.bf16.gmra.mxu0 %v717
      %v1237 = vpop.f32.mrf.mxu0
      %v1238 = vadd.f32 %v1149, %v1237
      %v1239 = vpop.f32.mrf.mxu0
      %v1240 = vadd.f32 %v1151, %v1239
      %1241 = vdwg.mxu0
      %1242 = vmatpush.bf16.msra.mxu0 %v942
      %1243 = vmatpush.bf16.msra.mxu0 %v941
      %1244 = vmatpush.bf16.msra.mxu0 %v940
      %1245 = vmatpush.bf16.msra.mxu0 %v939
      %1246 = vmatpush.bf16.msra.mxu0 %v938
      %1247 = vmatpush.bf16.msra.mxu0 %v937
      %1248 = vmatpush.bf16.msra.mxu0 %v936
      %1249 = vmatpush.bf16.msra.mxu0 %v935
      %1250 = vmatmul.bf16.gmra.mxu0 %v658
      %v1251 = vpop.f32.mrf.mxu0
      %v1252 = vadd.f32 %v1163, %v1251
      %v1253 = vpop.f32.mrf.mxu0
      %v1254 = vadd.f32 %v1165, %v1253
      %1255 = vmatmul.bf16.gmra.mxu0 %v662
      %v1256 = vpop.f32.mrf.mxu0
      %v1257 = vadd.f32 %v1168, %v1256
      %v1258 = vpop.f32.mrf.mxu0
      %v1259 = vadd.f32 %v1170, %v1258
      %1260 = vmatmul.bf16.gmra.mxu0 %v666
      %v1261 = vpop.f32.mrf.mxu0
      %v1262 = vadd.f32 %v1173, %v1261
      %v1263 = vpop.f32.mrf.mxu0
      %v1264 = vadd.f32 %v1175, %v1263
      %1265 = vmatmul.bf16.gmra.mxu0 %v670
      %v1266 = vpop.f32.mrf.mxu0
      %v1267 = vadd.f32 %v1178, %v1266
      %v1268 = vpop.f32.mrf.mxu0
      %v1269 = vadd.f32 %v1180, %v1268
      %1270 = vmatmul.bf16.gmra.mxu0 %v674
      %v1271 = vpop.f32.mrf.mxu0
      %v1272 = vadd.f32 %v1183, %v1271
      %v1273 = vpop.f32.mrf.mxu0
      %v1274 = vadd.f32 %v1185, %v1273
      %1275 = vmatmul.bf16.gmra.mxu0 %v678
      %v1276 = vpop.f32.mrf.mxu0
      %v1277 = vadd.f32 %v1188, %v1276
      %v1278 = vpop.f32.mrf.mxu0
      %v1279 = vadd.f32 %v1190, %v1278
      %1280 = vmatmul.bf16.gmra.mxu0 %v682
      %v1281 = vpop.f32.mrf.mxu0
      %v1282 = vadd.f32 %v1193, %v1281
      %v1283 = vpop.f32.mrf.mxu0
      %v1284 = vadd.f32 %v1195, %v1283
      %1285 = vmatmul.bf16.gmra.mxu0 %v686
      %v1286 = vpop.f32.mrf.mxu0
      %v1287 = vadd.f32 %v1198, %v1286
      %v1288 = vpop.f32.mrf.mxu0
      %v1289 = vadd.f32 %v1200, %v1288
      %1290 = vmatmul.bf16.gmra.mxu0 %v690
      %v1291 = vpop.f32.mrf.mxu0
      %v1292 = vadd.f32 %v1203, %v1291
      %v1293 = vpop.f32.mrf.mxu0
      %v1294 = vadd.f32 %v1205, %v1293
      %1295 = vmatmul.bf16.gmra.mxu0 %v694
      %v1296 = vpop.f32.mrf.mxu0
      %v1297 = vadd.f32 %v1208, %v1296
      %v1298 = vpop.f32.mrf.mxu0
      %v1299 = vadd.f32 %v1210, %v1298
      %1300 = vmatmul.bf16.gmra.mxu0 %v698
      %v1301 = vpop.f32.mrf.mxu0
      %v1302 = vadd.f32 %v1213, %v1301
      %v1303 = vpop.f32.mrf.mxu0
      %v1304 = vadd.f32 %v1215, %v1303
      %1305 = vmatmul.bf16.gmra.mxu0 %v702
      %v1306 = vpop.f32.mrf.mxu0
      %v1307 = vadd.f32 %v1218, %v1306
      %v1308 = vpop.f32.mrf.mxu0
      %v1309 = vadd.f32 %v1220, %v1308
      %1310 = vmatmul.bf16.gmra.mxu0 %v706
      %v1311 = vpop.f32.mrf.mxu0
      %v1312 = vadd.f32 %v1223, %v1311
      %v1313 = vpop.f32.mrf.mxu0
      %v1314 = vadd.f32 %v1225, %v1313
      %1315 = vmatmul.bf16.gmra.mxu0 %v710
      %v1316 = vpop.f32.mrf.mxu0
      %v1317 = vadd.f32 %v1228, %v1316
      %v1318 = vpop.f32.mrf.mxu0
      %v1319 = vadd.f32 %v1230, %v1318
      %1320 = vmatmul.bf16.gmra.mxu0 %v714
      %v1321 = vpop.f32.mrf.mxu0
      %v1322 = vadd.f32 %v1233, %v1321
      %v1323 = vpop.f32.mrf.mxu0
      %v1324 = vadd.f32 %v1235, %v1323
      %1325 = vmatmul.bf16.gmra.mxu0 %v718
      %v1326 = vpop.f32.mrf.mxu0
      %v1327 = vadd.f32 %v1238, %v1326
      %v1328 = vpop.f32.mrf.mxu0
      %v1329 = vadd.f32 %v1240, %v1328
      %1330 = vdwg.mxu0
      %v1331 = vadd.f32 %v303, %v1252
      %v1332 = vadd.f32 %v304, %v1254
      %v1333 = vadd.f32 %v305, %v1257
      %v1334 = vadd.f32 %v306, %v1259
      %v1335 = vadd.f32 %v307, %v1262
      %v1336 = vadd.f32 %v308, %v1264
      %v1337 = vadd.f32 %v309, %v1267
      %v1338 = vadd.f32 %v310, %v1269
      %v1339 = vadd.f32 %v311, %v1272
      %v1340 = vadd.f32 %v312, %v1274
      %v1341 = vadd.f32 %v313, %v1277
      %v1342 = vadd.f32 %v314, %v1279
      %v1343 = vadd.f32 %v315, %v1282
      %v1344 = vadd.f32 %v316, %v1284
      %v1345 = vadd.f32 %v317, %v1287
      %v1346 = vadd.f32 %v318, %v1289
      %v1347 = vadd.f32 %v319, %v1292
      %v1348 = vadd.f32 %v320, %v1294
      %v1349 = vadd.f32 %v321, %v1297
      %v1350 = vadd.f32 %v322, %v1299
      %v1351 = vadd.f32 %v323, %v1302
      %v1352 = vadd.f32 %v324, %v1304
      %v1353 = vadd.f32 %v325, %v1307
      %v1354 = vadd.f32 %v326, %v1309
      %v1355 = vadd.f32 %v327, %v1312
      %v1356 = vadd.f32 %v328, %v1314
      %v1357 = vadd.f32 %v329, %v1317
      %v1358 = vadd.f32 %v330, %v1319
      %v1359 = vadd.f32 %v331, %v1322
      %v1360 = vadd.f32 %v332, %v1324
      %v1361 = vadd.f32 %v333, %v1327
      %v1362 = vadd.f32 %v334, %v1329
      %1363 = vst [vmem:[#allocation2] sm:$0xff] %v1331
      %1364 = vst [vmem:[#allocation2 + $0x8] sm:$0xff] %v1332
      %1365 = vst [vmem:[#allocation2 + $0x10] sm:$0xff] %v1333
      %1366 = vst [vmem:[#allocation2 + $0x18] sm:$0xff] %v1334
      %1367 = vst [vmem:[#allocation2 + $0x20] sm:$0xff] %v1335
      %1368 = vst [vmem:[#allocation2 + $0x28] sm:$0xff] %v1336
      %1369 = vst [vmem:[#allocation2 + $0x30] sm:$0xff] %v1337
      %1370 = vst [vmem:[#allocation2 + $0x38] sm:$0xff] %v1338
      %1371 = vst [vmem:[#allocation2 + $0x40] sm:$0xff] %v1339
      %1372 = vst [vmem:[#allocation2 + $0x48] sm:$0xff] %v1340
      %1373 = vst [vmem:[#allocation2 + $0x50] sm:$0xff] %v1341
      %1374 = vst [vmem:[#allocation2 + $0x58] sm:$0xff] %v1342
      %1375 = vst [vmem:[#allocation2 + $0x60] sm:$0xff] %v1343
      %1376 = vst [vmem:[#allocation2 + $0x68] sm:$0xff] %v1344
      %1377 = vst [vmem:[#allocation2 + $0x70] sm:$0xff] %v1345
      %1378 = vst [vmem:[#allocation2 + $0x78] sm:$0xff] %v1346
      %1379 = vst [vmem:[#allocation2 + $0x80] sm:$0xff] %v1347
      %1380 = vst [vmem:[#allocation2 + $0x88] sm:$0xff] %v1348
      %1381 = vst [vmem:[#allocation2 + $0x90] sm:$0xff] %v1349
      %1382 = vst [vmem:[#allocation2 + $0x98] sm:$0xff] %v1350
      %1383 = vst [vmem:[#allocation2 + $0xa0] sm:$0xff] %v1351
      %1384 = vst [vmem:[#allocation2 + $0xa8] sm:$0xff] %v1352
      %1385 = vst [vmem:[#allocation2 + $0xb0] sm:$0xff] %v1353
      %1386 = vst [vmem:[#allocation2 + $0xb8] sm:$0xff] %v1354
      %1387 = vst [vmem:[#allocation2 + $0xc0] sm:$0xff] %v1355
      %1388 = vst [vmem:[#allocation2 + $0xc8] sm:$0xff] %v1356
      %1389 = vst [vmem:[#allocation2 + $0xd0] sm:$0xff] %v1357
      %1390 = vst [vmem:[#allocation2 + $0xd8] sm:$0xff] %v1358
      %1391 = vst [vmem:[#allocation2 + $0xe0] sm:$0xff] %v1359
      %1392 = vst [vmem:[#allocation2 + $0xe8] sm:$0xff] %v1360
      %1393 = vst [vmem:[#allocation2 + $0xf0] sm:$0xff] %v1361
      %1394 = vst [vmem:[#allocation2 + $0xf8] sm:$0xff] %v1362
      // Predicated region
      $region37: #{resnet_generator_forward.94} parent=31 // pred_check
        %p1395 = pneg %p267
      $region38: #{resnet_generator_forward.94} parent=31 // pred_check_branch
        %1397 = sbr.rel (%p1395) target = $region40
      $region39: #{resnet_generator_forward.94} parent=31 // pred_region
        %v1398 = vld [vmem:[#allocation2] sm:$0xff]
        %v1399 = vld [vmem:[#allocation2 + $0x8] sm:$0xff]
        %v1400 = vld [vmem:[#allocation2 + $0x10] sm:$0xff]
        %v1401 = vld [vmem:[#allocation2 + $0x18] sm:$0xff]
        %v1402 = vld [vmem:[#allocation2 + $0x20] sm:$0xff]
        %v1403 = vld [vmem:[#allocation2 + $0x28] sm:$0xff]
        %v1404 = vld [vmem:[#allocation2 + $0x30] sm:$0xff]
        %v1405 = vld [vmem:[#allocation2 + $0x38] sm:$0xff]
        %v1406 = vld [vmem:[#allocation2 + $0x40] sm:$0xff]
        %v1407 = vld [vmem:[#allocation2 + $0x48] sm:$0xff]
        %v1408 = vld [vmem:[#allocation2 + $0x50] sm:$0xff]
        %v1409 = vld [vmem:[#allocation2 + $0x58] sm:$0xff]
        %v1410 = vld [vmem:[#allocation2 + $0x60] sm:$0xff]
        %v1411 = vld [vmem:[#allocation2 + $0x68] sm:$0xff]
        %v1412 = vld [vmem:[#allocation2 + $0x70] sm:$0xff]
        %v1413 = vld [vmem:[#allocation2 + $0x78] sm:$0xff]
        %v1414 = vld [vmem:[#allocation2 + $0x80] sm:$0xff]
        %v1415 = vld [vmem:[#allocation2 + $0x88] sm:$0xff]
        %v1416 = vld [vmem:[#allocation2 + $0x90] sm:$0xff]
        %v1417 = vld [vmem:[#allocation2 + $0x98] sm:$0xff]
        %v1418 = vld [vmem:[#allocation2 + $0xa0] sm:$0xff]
        %v1419 = vld [vmem:[#allocation2 + $0xa8] sm:$0xff]
        %v1420 = vld [vmem:[#allocation2 + $0xb0] sm:$0xff]
        %v1421 = vld [vmem:[#allocation2 + $0xb8] sm:$0xff]
        %v1422 = vld [vmem:[#allocation2 + $0xc0] sm:$0xff]
        %v1423 = vld [vmem:[#allocation2 + $0xc8] sm:$0xff]
        %v1424 = vld [vmem:[#allocation2 + $0xd0] sm:$0xff]
        %v1425 = vld [vmem:[#allocation2 + $0xd8] sm:$0xff]
        %v1426 = vld [vmem:[#allocation2 + $0xe0] sm:$0xff]
        %v1427 = vld [vmem:[#allocation2 + $0xe8] sm:$0xff]
        %v1428 = vld [vmem:[#allocation2 + $0xf0] sm:$0xff]
        %v1429 = vld [vmem:[#allocation2 + $0xf8] sm:$0xff]
        %v1430 = vld [vmem:[%s257] sm:$0x1]
        %v1432 = vperm.slane %v1430, 0
        %v1434 = vadd.f32 %v1398, %v1432
        %v1435 = vadd.f32 %v1399, %v1432
        %v1436 = vadd.f32 %v1400, %v1432
        %v1437 = vadd.f32 %v1401, %v1432
        %v1438 = vadd.f32 %v1402, %v1432
        %v1439 = vadd.f32 %v1403, %v1432
        %v1440 = vadd.f32 %v1404, %v1432
        %v1441 = vadd.f32 %v1405, %v1432
        %v1442 = vadd.f32 %v1406, %v1432
        %v1443 = vadd.f32 %v1407, %v1432
        %v1444 = vadd.f32 %v1408, %v1432
        %v1445 = vadd.f32 %v1409, %v1432
        %v1446 = vadd.f32 %v1410, %v1432
        %v1447 = vadd.f32 %v1411, %v1432
        %v1448 = vadd.f32 %v1412, %v1432
        %v1449 = vadd.f32 %v1413, %v1432
        %v1450 = vadd.f32 %v1414, %v1432
        %v1451 = vadd.f32 %v1415, %v1432
        %v1452 = vadd.f32 %v1416, %v1432
        %v1453 = vadd.f32 %v1417, %v1432
        %v1454 = vadd.f32 %v1418, %v1432
        %v1455 = vadd.f32 %v1419, %v1432
        %v1456 = vadd.f32 %v1420, %v1432
        %v1457 = vadd.f32 %v1421, %v1432
        %v1458 = vadd.f32 %v1422, %v1432
        %v1459 = vadd.f32 %v1423, %v1432
        %v1460 = vadd.f32 %v1424, %v1432
        %v1461 = vadd.f32 %v1425, %v1432
        %v1462 = vadd.f32 %v1426, %v1432
        %v1463 = vadd.f32 %v1427, %v1432
        %v1464 = vadd.f32 %v1428, %v1432
        %v1465 = vadd.f32 %v1429, %v1432
        %1466 = vst [vmem:[%s265] sm:$0xff] %v1434
        %1467 = vst [vmem:[%s265 + $0x8] sm:$0xff] %v1435
        %1468 = vst [vmem:[%s265 + $0x10] sm:$0xff] %v1436
        %1469 = vst [vmem:[%s265 + $0x18] sm:$0xff] %v1437
        %1470 = vst [vmem:[%s265 + $0x20] sm:$0xff] %v1438
        %1471 = vst [vmem:[%s265 + $0x28] sm:$0xff] %v1439
        %1472 = vst [vmem:[%s265 + $0x30] sm:$0xff] %v1440
        %1473 = vst [vmem:[%s265 + $0x38] sm:$0xff] %v1441
        %1474 = vst [vmem:[%s265 + $0x40] sm:$0xff] %v1442
        %1475 = vst [vmem:[%s265 + $0x48] sm:$0xff] %v1443
        %1476 = vst [vmem:[%s265 + $0x50] sm:$0xff] %v1444
        %1477 = vst [vmem:[%s265 + $0x58] sm:$0xff] %v1445
        %1478 = vst [vmem:[%s265 + $0x60] sm:$0xff] %v1446
        %1479 = vst [vmem:[%s265 + $0x68] sm:$0xff] %v1447
        %1480 = vst [vmem:[%s265 + $0x70] sm:$0xff] %v1448
        %1481 = vst [vmem:[%s265 + $0x78] sm:$0xff] %v1449
        %1482 = vst [vmem:[%s265 + $0x80] sm:$0xff] %v1450
        %1483 = vst [vmem:[%s265 + $0x88] sm:$0xff] %v1451
        %1484 = vst [vmem:[%s265 + $0x90] sm:$0xff] %v1452
        %1485 = vst [vmem:[%s265 + $0x98] sm:$0xff] %v1453
        %1486 = vst [vmem:[%s265 + $0xa0] sm:$0xff] %v1454
        %1487 = vst [vmem:[%s265 + $0xa8] sm:$0xff] %v1455
        %1488 = vst [vmem:[%s265 + $0xb0] sm:$0xff] %v1456
        %1489 = vst [vmem:[%s265 + $0xb8] sm:$0xff] %v1457
        %1490 = vst [vmem:[%s265 + $0xc0] sm:$0xff] %v1458
        %1491 = vst [vmem:[%s265 + $0xc8] sm:$0xff] %v1459
        %1492 = vst [vmem:[%s265 + $0xd0] sm:$0xff] %v1460
        %1493 = vst [vmem:[%s265 + $0xd8] sm:$0xff] %v1461
        %1494 = vst [vmem:[%s265 + $0xe0] sm:$0xff] %v1462
        %1495 = vst [vmem:[%s265 + $0xe8] sm:$0xff] %v1463
        %1496 = vst [vmem:[%s265 + $0xf0] sm:$0xff] %v1464
        %1497 = vst [vmem:[%s265 + $0xf8] sm:$0xff] %v1465
      $region40: #{resnet_generator_forward.94} parent=31 // pred_fallthru
        _
      %s1498 = smul.u32 32, %s19
      %p1499 = scmp.lt.s32.totalorder %s1498, 63
      %s1500 = scalar_select %p1499, %s1498, 63
      %p1501 = scmp.lt.s32.totalorder %s20, 0
      %s1502 = scalar_select %p1501, %s20, 0
      %s1503 = sadd.s32 %s1502, %s1500
      %s1504 = smul.addr %s1503, 8
      %s1505 = scalar_lea.vmem %s3, %s1504
      // Predicated region
      $region41: #{resnet_generator_forward.94} parent=31 // pred_check
        %p1506 = pneg %p135
      $region42: #{resnet_generator_forward.94} parent=31 // pred_check_branch
        %1508 = sbr.rel (%p1506) target = $region44
      $region43: #{resnet_generator_forward.94} parent=31 // pred_region
        %s1509 = smul.u32 32, %s19
      $region44: #{resnet_generator_forward.94} parent=31 // pred_fallthru
        _
    $region32: #{resnet_generator_forward.94} parent=5 // pred_fallthru
      _
    %p1510 = scmp.le.s32.totalorder 2, %s9
    // Predicated region
    $region45: #{resnet_generator_forward.94} parent=5 // pred_check
      %p1511 = pneg %p1510
    $region46: #{resnet_generator_forward.94} parent=5 // pred_check_branch
      %1513 = sbr.rel (%p1511) target = $region48
    $region47: #{resnet_generator_forward.94} parent=5 // pred_region
      %s1514 = ssub.s32 %s9, 2
      // Predicated region
      $region49: #{resnet_generator_forward.94} parent=47 // pred_check
        %p1515 = pneg %p141
      $region50: #{resnet_generator_forward.94} parent=47 // pred_check_branch
        %1517 = sbr.rel (%p1515) target = $region52
      $region51: #{resnet_generator_forward.94} parent=47 // pred_region
        %s1518 = smul.u32 32, %s22
        %p1519 = scmp.lt.s32.totalorder %s1518, 63
        %s1520 = scalar_select %p1519, %s1518, 63
        %p1521 = scmp.lt.s32.totalorder %s23, 0
        %s1522 = scalar_select %p1521, %s23, 0
        %s1523 = sadd.s32 %s1522, %s1520
        %s1524 = smul.addr %s1523, 8
        %s1525 = scalar_lea.vmem %s3, %s1524
      $region52: #{resnet_generator_forward.94} parent=47 // pred_fallthru
        _
    $region48: #{resnet_generator_forward.94} parent=5 // pred_fallthru
      _
  $region6: #{resnet_generator_forward.94} parent=0 // loop_footer
    %s13 = sadd.s32 1, %s9
  $region7: #{resnet_generator_forward.94} parent=0 // loop_footer_branch
    %8 = sbr.rel target = $region3
  $region8: #{resnet_generator_forward.94} parent=0 // loop_exit
    _

</llo_original>
